<compile_context>
chip_gen: v7x
topology: tpu7x:2x2x1
jax: 0.10.0
libtpu: 0.0.40
codegen_flags: <defaults>
</compile_context>

<pallas_src>
import functools

import jax
import jax.numpy as jnp
from jax import lax
from jax.experimental import pallas as pl
from jax.experimental.pallas import tpu as pltpu


def _round_up(x, m):
    return (x + m - 1) // m * m


def _pick_tm(m, tm_max):
    """Row tile: MXU-friendly (tm_max is a multiple of 128); small M rounds up
    to 16 (bf16 sublane pairs) and gets padded instead of hunting odd divisors."""
    if m >= tm_max:
        return tm_max
    return _round_up(max(m, 1), 16)


# ----------------------------- Pallas kernels -----------------------------

def _fused_matmul_kernel(x_ref, w_ref, b_ref, o_ref, *, nk, activation):
    """o = act(x @ w + b); grid = (M tiles, N tiles, K tiles).

    LHS is cast to bf16 in-kernel (a no-op when it is already bf16) and weights
    are streamed as bf16, so the MXU runs its native bf16 path with f32
    accumulation directly in the resident output block."""

    def epilogue(y):
        y = y + b_ref[...]
        if activation == "relu":
            y = jnp.maximum(y, 0.0)
        return y.astype(o_ref.dtype)

    if nk == 1:
        # Single shot: skip zero-init / accumulate / finalize triple pass.
        o_ref[...] = epilogue(
            jnp.dot(x_ref[...].astype(jnp.bfloat16), w_ref[...],
                    preferred_element_type=jnp.float32))
    else:
        k = pl.program_id(2)

        @pl.when(k == 0)
        def _():
            o_ref[...] = jnp.zeros_like(o_ref)

        o_ref[...] += jnp.dot(x_ref[...].astype(jnp.bfloat16), w_ref[...],
                              preferred_element_type=jnp.float32)

        @pl.when(k == nk - 1)
        def _():
            o_ref[...] = epilogue(o_ref[...])


def fused_matmul(x, w, b, *, activation="none", tk=None, tm_max=256,
                 out_dtype=jnp.float32):
    """x: (M, K), w: (K, N) bf16, b: (N,) f32 -> (M, N) out_dtype."""
    M, K = x.shape
    K2, N = w.shape
    assert K == K2
    assert w.dtype == jnp.bfloat16
    if tk is None:
        tk = K
    assert K % tk == 0
    nk = K // tk
    # K-resident accumulation happens in the output block, which must be f32.
    assert nk == 1 or out_dtype == jnp.float32

    tm = _pick_tm(M, tm_max)
    Mp = _round_up(M, tm)
    if Mp != M:
        x = jnp.pad(x, ((0, Mp - M), (0, 0)))
    nm = Mp // tm

    # Output-column split: when there is only one M tile (small batch) give the
    # second v7x TensorCore a column block; at larger batch the M axis already
    # feeds both cores and a split would only re-stream the LHS.
    tn = N
    if nm == 1 and N >= 512 and N % 256 == 0:
        tn = 256
    nn = N // tn

    out_isz = 2 if out_dtype == jnp.bfloat16 else 4
    est = (2 * tm * tk * x.dtype.itemsize      # double-buffered LHS tiles
           + 2 * tk * tn * 2                   # double-buffered bf16 weight tiles
           + 2 * tm * tn * out_isz             # output blocks
           + tm * tk * 2)                      # in-kernel bf16 LHS temp
    compiler_kwargs = {}
    if est > (8 << 20):
        # keep well under v7x's 64 MiB physical VMEM
        compiler_kwargs["vmem_limit_bytes"] = min(2 * est, 40 << 20)

    kernel = functools.partial(_fused_matmul_kernel, nk=nk, activation=activation)
    out = pl.pallas_call(
        kernel,
        out_shape=jax.ShapeDtypeStruct((Mp, N), out_dtype),
        grid_spec=pltpu.PrefetchScalarGridSpec(
            num_scalar_prefetch=0,
            grid=(nm, nn, nk),
            in_specs=[
                pl.BlockSpec((tm, tk), lambda i, j, k: (i, k)),
                pl.BlockSpec((tk, tn), lambda i, j, k: (k, j)),
                pl.BlockSpec((1, tn), lambda i, j, k: (0, j)),
            ],
            out_specs=pl.BlockSpec((tm, tn), lambda i, j, k: (i, j)),
        ),
        compiler_params=pltpu.CompilerParams(
            dimension_semantics=("parallel", "parallel", "arbitrary"),
            **compiler_kwargs),
    )(x, w, b.reshape(1, N))
    return out if Mp == M else out[:M]


def _head_kernel(x_ref, w2_ref, b2_ref, w3_ref, b3_ref, o_ref):
    """Fused fc2 -> relu -> fc3 -> log_softmax (dropout2/3 identity at eval).

    fc3 is pre-padded to 128 output columns (zero weights, -1e30 bias) so the
    reduction and the output store are lane-dense; the caller slices [:, :10]."""
    h = jnp.dot(x_ref[...].astype(jnp.bfloat16), w2_ref[...],
                preferred_element_type=jnp.float32) + b2_ref[...]
    h = jnp.maximum(h, 0.0)
    # fc3 is tiny (128x128); keep it on the f32 path for logit accuracy.
    y = jnp.dot(h, w3_ref[...], preferred_element_type=jnp.float32) + b3_ref[...]
    m = jnp.max(y, axis=-1, keepdims=True)
    s = y - m
    lse = jnp.log(jnp.sum(jnp.exp(s), axis=-1, keepdims=True))
    o_ref[...] = s - lse


def fused_head(x, w2, b2, w3, b3, *, tm_max=256):
    M, K = x.shape
    _, H = w2.shape
    _, C = w3.shape
    assert w2.dtype == jnp.bfloat16
    tm = _pick_tm(M, tm_max)
    Mp = _round_up(M, tm)
    if Mp != M:
        x = jnp.pad(x, ((0, Mp - M), (0, 0)))
    nm = Mp // tm
    out = pl.pallas_call(
        _head_kernel,
        out_shape=jax.ShapeDtypeStruct((Mp, C), jnp.float32),
        grid_spec=pltpu.PrefetchScalarGridSpec(
            num_scalar_prefetch=0,
            grid=(nm,),
            in_specs=[
                pl.BlockSpec((tm, K), lambda i: (i, 0)),
                pl.BlockSpec((K, H), lambda i: (0, 0)),
                pl.BlockSpec((1, H), lambda i: (0, 0)),
                pl.BlockSpec((H, C), lambda i: (0, 0)),
                pl.BlockSpec((1, C), lambda i: (0, 0)),
            ],
            out_specs=pl.BlockSpec((tm, C), lambda i: (i, 0)),
        ),
        compiler_params=pltpu.CompilerParams(dimension_semantics=("parallel",)),
    )(x, w2, b2.reshape(1, H), w3, b3.reshape(1, C))
    return out if Mp == M else out[:M]


def _maxpool2_kernel(x_ref, o_ref, *, c):
    # x_ref block: (bt, OH, 2, OW, 2*C); element (b, oh, p, ow, q*C + ch) is
    # the NHWC input at (2*oh + p, 2*ow + q, ch). Lane dim is 2*C = 128.
    x = x_ref[...]
    v = jnp.maximum(x[:, :, 0], x[:, :, 1])           # max over p -> (bt,OH,OW,2C)
    o_ref[...] = jnp.maximum(v[..., :c], v[..., c:])  # max over q -> (bt,OH,OW,C)


def maxpool2(x_nhwc):
    """2x2 max pool, stride 2, NHWC, batch-tiled; no XLA transpose."""
    n, h, w, c = x_nhwc.shape
    oh, ow = h // 2, w // 2
    xr = x_nhwc.reshape(n, oh, 2, ow, 2 * c)          # free row-major regroup
    bt = next(t for t in (8, 4, 2, 1) if n % t == 0)  # amortize per-step overhead
    kernel = functools.partial(_maxpool2_kernel, c=c)
    return pl.pallas_call(
        kernel,
        out_shape=jax.ShapeDtypeStruct((n, oh, ow, c), x_nhwc.dtype),
        grid=(n // bt,),
        in_specs=[pl.BlockSpec((bt, oh, 2, ow, 2 * c),
                               lambda i: (i, 0, 0, 0, 0))],
        out_specs=pl.BlockSpec((bt, oh, ow, c), lambda i: (i, 0, 0, 0)),
        compiler_params=pltpu.CompilerParams(dimension_semantics=("parallel",)),
    )(xr)


# ------------------------------- glue ops ---------------------------------

def _im2col(x_nhwc, kh, kw):
    """'valid' conv patches -> (N*OH*OW, kh*kw*C) in (i, j, ci) column order."""
    n, h, w, c = x_nhwc.shape
    oh, ow = h - kh + 1, w - kw + 1
    cols = [x_nhwc[:, i:i + oh, j:j + ow, :] for i in range(kh) for j in range(kw)]
    cols = jnp.concatenate(cols, axis=-1)
    return cols.reshape(n * oh * ow, kh * kw * c), (n, oh, ow)


# TODO(synk): fully fuse the 9 conv taps in-kernel (shifted-window dots over an
# NHWC batch tile) to remove the im2col expansion entirely; interim fix per the
# review: activations and im2col patches stay bf16, halving that HBM traffic.
def conv3x3_relu(x_nhwc, w_mat, b):
    """3x3 valid conv (stride 1) + bias + relu via bf16 im2col + Pallas matmul."""
    cols, (n, oh, ow) = _im2col(x_nhwc, 3, 3)
    cout = w_mat.shape[1]
    y = fused_matmul(cols, w_mat, b, activation="relu", out_dtype=jnp.bfloat16)
    return y.reshape(n, oh, ow, cout)


def svhn_forward(params, x_nchw):
    # NHWC bf16 activations throughout the conv/pool stage.
    x = jnp.transpose(x_nchw, (0, 2, 3, 1)).astype(jnp.bfloat16)  # (N, 32, 32, 3)
    x = conv3x3_relu(x, params["conv1_w"], params["conv1_b"])     # (N, 30, 30, 64)
    x = conv3x3_relu(x, params["conv2_w"], params["conv2_b"])     # (N, 28, 28, 64)
    x = maxpool2(x)                                               # (N, 14, 14, 64)
    # dropout1: identity at inference
    n = x.shape[0]
    # NHWC flatten is a free reshape; fc1_w rows were pre-permuted at init to
    # match torch.flatten's NCHW (channel-major) ordering.
    x = x.reshape(n, -1)                                          # (N, 12544) bf16
    x = fused_matmul(x, params["fc1_w"], params["fc1_b"],
                     activation="relu", tk=1792, tm_max=512)      # (N, 512) f32
    # dropout2/3: identity at inference (handled inside fused_head)
    logp = fused_head(x, params["fc2_w"], params["fc2_b"],
                      params["fc3_w"], params["fc3_b"])           # (N, 128) f32
    return logp[:, :10]                                           # drop pad classes


# ------------------------------- parameters --------------------------------

def init_torch_params(key):
    """Deterministic random params in PyTorch layout (conv OIHW, fc (in,out))."""
    ks = jax.random.split(key, 10)

    def rnd(k, shape, scale):
        return jax.random.normal(k, shape, jnp.float32) * scale

    return {
        "conv1_w": rnd(ks[0], (64, 3, 3, 3), 0.10),
        "conv1_b": rnd(ks[1], (64,), 0.10),
        "conv2_w": rnd(ks[2], (64, 64, 3, 3), 0.05),
        "conv2_b": rnd(ks[3], (64,), 0.05),
        "fc1_w": rnd(ks[4], (12544, 512), 0.01),
        "fc1_b": rnd(ks[5], (512,), 0.01),
        "fc2_w": rnd(ks[6], (512, 128), 0.02),
        "fc2_b": rnd(ks[7], (128,), 0.02),
        "fc3_w": rnd(ks[8], (128, 10), 0.05),
        "fc3_b": rnd(ks[9], (10,), 0.05),
    }


def prepare_params(tp):
    """Torch-layout params -> kernel-ready params.

    - conv weights (Cout,Cin,3,3) -> (9*Cin, Cout) bf16, matching im2col order.
    - fc1 rows permuted from NCHW-flatten (c,oh,ow) to NHWC-flatten (oh,ow,c)
      order (removes the runtime activation transpose); fc1/fc2 stored bf16 so
      the MXU runs natively and the weight stream is halved.
    - fc3 padded to 128 output columns (zero weights, -1e30 bias) so the head's
      log_softmax / output store are lane-dense; pad classes sliced off outside.
    """
    def conv_mat(w):
        cout = w.shape[0]
        return jnp.transpose(w, (2, 3, 1, 0)).reshape(-1, cout).astype(jnp.bfloat16)

    fc1 = tp["fc1_w"].reshape(64, 14, 14, 512).transpose(1, 2, 0, 3)
    fc1 = fc1.reshape(12544, 512)

    c_pad = 128
    w3 = jnp.zeros((tp["fc3_w"].shape[0], c_pad), jnp.float32)
    w3 = w3.at[:, :10].set(tp["fc3_w"])
    b3 = jnp.full((c_pad,), -1e30, jnp.float32).at[:10].set(tp["fc3_b"])

    return {
        "conv1_w": conv_mat(tp["conv1_w"]), "conv1_b": tp["conv1_b"],
        "conv2_w": conv_mat(tp["conv2_w"]), "conv2_b": tp["conv2_b"],
        "fc1_w": fc1.astype(jnp.bfloat16), "fc1_b": tp["fc1_b"],
        "fc2_w": tp["fc2_w"].astype(jnp.bfloat16), "fc2_b": tp["fc2_b"],
        "fc3_w": w3, "fc3_b": b3,
    }


def svhn_reference(tp, x_nchw):
    """Pure-JAX reference of the PyTorch forward (NCHW, f32 activations;
    weights rounded to bf16 exactly where prepare_params rounds them)."""
    def q(w):
        return w.astype(jnp.bfloat16).astype(jnp.float32)

    def conv(x, w, b):
        y = lax.conv_general_dilated(x, q(w), (1, 1), "VALID",
                                     dimension_numbers=("NCHW", "OIHW", "NCHW"))
        return jax.nn.relu(y + b[None, :, None, None])

    x = conv(x_nchw, tp["conv1_w"], tp["conv1_b"])
    x = conv(x, tp["conv2_w"], tp["conv2_b"])
    x = lax.reduce_window(x, -jnp.inf, lax.max, (1, 1, 2, 2), (1, 1, 2, 2), "VALID")
    x = x.reshape(x.shape[0], -1)
    x = jax.nn.relu(x @ q(tp["fc1_w"]) + tp["fc1_b"])
    x = jax.nn.relu(x @ q(tp["fc2_w"]) + tp["fc2_b"])
    x = x @ tp["fc3_w"] + tp["fc3_b"]
    return jax.nn.log_softmax(x, axis=-1)


if __name__ == "__main__":
    key = jax.random.PRNGKey(0)
    pkey, xkey = jax.random.split(key)
    torch_params = init_torch_params(pkey)
    params = prepare_params(torch_params)

    # SVHN inputs are 3x32x32 (fc1 in-features 12544 = 64*14*14 requires 32x32).
    x = jax.random.normal(xkey, (2, 3, 32, 32), jnp.float32)

    out = jax.jit(svhn_forward)(params, x)
    out = jax.block_until_ready(out)

    assert out.shape == (2, 10)
    # log_softmax rows must exponentiate to a probability distribution
    assert jnp.allclose(jnp.sum(jnp.exp(out), axis=1), 1.0, atol=1e-4)
    assert bool(jnp.all(jnp.isfinite(out)))

    # check against a pure-JAX reference of the original PyTorch forward
    ref = svhn_reference(torch_params, x)
    max_diff = jnp.max(jnp.abs(out - ref))
    assert jnp.allclose(out, ref, rtol=2e-2, atol=2e-2), f"max abs diff {max_diff}"

    print("KERNEL_OK")
</pallas_src>

<mosaic_0001>
module attributes {stable_mosaic.version = 11 : i64} {
  func.func @_fused_matmul_kernel(%arg0: i32, %arg1: i32, %arg2: i32, %arg3: memref<256x27xbf16, #tpu.memory_space<vmem>>, %arg4: memref<27x64xbf16, #tpu.memory_space<vmem>>, %arg5: memref<1x64xf32, #tpu.memory_space<vmem>>, %arg6: memref<256x64xbf16, #tpu.memory_space<vmem>>) attributes {dimension_semantics = [#tpu.dimension_semantics<parallel>, #tpu.dimension_semantics<parallel>, #tpu.dimension_semantics<arbitrary>], iteration_bounds = array<i64: 8, 1, 1>, scalar_prefetch = 0 : i64, scratch_operands = 0 : i64, tpu.core_type = #tpu.core_type<tc>, window_params = [{transform_indices = @transform_0, window_bounds = array<i64: 256, 27>}, {transform_indices = @transform_1, window_bounds = array<i64: 27, 64>}, {transform_indices = @transform_2, window_bounds = array<i64: 1, 64>}, {transform_indices = @transform_3, window_bounds = array<i64: 256, 64>}]} {
    %c0 = arith.constant 0 : index
    %c0_0 = arith.constant 0 : index
    %0 = vector.load %arg3[%c0, %c0_0] : memref<256x27xbf16, #tpu.memory_space<vmem>>, vector<256x27xbf16>
    %c0_1 = arith.constant 0 : index
    %c0_2 = arith.constant 0 : index
    %1 = vector.load %arg4[%c0_1, %c0_2] : memref<27x64xbf16, #tpu.memory_space<vmem>>, vector<27x64xbf16>
    %cst = arith.constant dense<0.000000e+00> : vector<256x64xf32>
    %2 = tpu.matmul %0, %1, %cst {dimension_numbers = #tpu.dot_dimension_numbers<[1], [0], [0], [1], [0, 0, 1, 1], [], []>} : vector<256x27xbf16>, vector<27x64xbf16>, vector<256x64xf32> -> vector<256x64xf32>
    %c0_3 = arith.constant 0 : index
    %c0_4 = arith.constant 0 : index
    %3 = vector.load %arg5[%c0_3, %c0_4] : memref<1x64xf32, #tpu.memory_space<vmem>>, vector<1x64xf32>
    %4 = vector.broadcast %3 : vector<1x64xf32> to vector<256x64xf32>
    %5 = arith.addf %2, %4 : vector<256x64xf32>
    %cst_5 = arith.constant 0.000000e+00 : f32
    %6 = vector.broadcast %cst_5 : f32 to vector<256x64xf32>
    %7 = arith.maximumf %5, %6 : vector<256x64xf32>
    %8 = arith.truncf %7 : vector<256x64xf32> to vector<256x64xbf16>
    %c0_6 = arith.constant 0 : index
    %c0_7 = arith.constant 0 : index
    %9 = vector.load %arg6[%c0_6, %c0_7] : memref<256x64xbf16, #tpu.memory_space<vmem>>, vector<256x64xbf16>
    tpu.vector_store %arg6[%c0_6, %c0_7], %8 {strides = array<i32>} : memref<256x64xbf16, #tpu.memory_space<vmem>>, vector<256x64xbf16>,
    return
  }
  func.func @transform_0(%arg0: i32, %arg1: i32, %arg2: i32) -> (i32, i32) {
    %c0_i32 = arith.constant 0 : i32
    return %arg0, %arg2 : i32, i32
  }
  func.func @transform_1(%arg0: i32, %arg1: i32, %arg2: i32) -> (i32, i32) {
    %c0_i32 = arith.constant 0 : i32
    return %arg2, %arg1 : i32, i32
  }
  func.func @transform_2(%arg0: i32, %arg1: i32, %arg2: i32) -> (i32, i32) {
    %c0_i32 = arith.constant 0 : i32
    %c0_i32_0 = arith.constant 0 : i32
    return %c0_i32, %arg1 : i32, i32
  }
  func.func @transform_3(%arg0: i32, %arg1: i32, %arg2: i32) -> (i32, i32) {
    %c0_i32 = arith.constant 0 : i32
    return %arg0, %arg1 : i32, i32
  }
}

module attributes {stable_mosaic.version = 11 : i64} {
  func.func @_fused_matmul_kernel(%arg0: i32, %arg1: i32, %arg2: i32, %arg3: memref<256x576xbf16, #tpu.memory_space<vmem>>, %arg4: memref<576x64xbf16, #tpu.memory_space<vmem>>, %arg5: memref<1x64xf32, #tpu.memory_space<vmem>>, %arg6: memref<256x64xbf16, #tpu.memory_space<vmem>>) attributes {dimension_semantics = [#tpu.dimension_semantics<parallel>, #tpu.dimension_semantics<parallel>, #tpu.dimension_semantics<arbitrary>], iteration_bounds = array<i64: 7, 1, 1>, scalar_prefetch = 0 : i64, scratch_operands = 0 : i64, tpu.core_type = #tpu.core_type<tc>, window_params = [{transform_indices = @transform_0, window_bounds = array<i64: 256, 576>}, {transform_indices = @transform_1, window_bounds = array<i64: 576, 64>}, {transform_indices = @transform_2, window_bounds = array<i64: 1, 64>}, {transform_indices = @transform_3, window_bounds = array<i64: 256, 64>}]} {
    %c0 = arith.constant 0 : index
    %c0_0 = arith.constant 0 : index
    %0 = vector.load %arg3[%c0, %c0_0] : memref<256x576xbf16, #tpu.memory_space<vmem>>, vector<256x576xbf16>
    %c0_1 = arith.constant 0 : index
    %c0_2 = arith.constant 0 : index
    %1 = vector.load %arg4[%c0_1, %c0_2] : memref<576x64xbf16, #tpu.memory_space<vmem>>, vector<576x64xbf16>
    %cst = arith.constant dense<0.000000e+00> : vector<256x64xf32>
    %2 = tpu.matmul %0, %1, %cst {dimension_numbers = #tpu.dot_dimension_numbers<[1], [0], [0], [1], [0, 0, 1, 1], [], []>} : vector<256x576xbf16>, vector<576x64xbf16>, vector<256x64xf32> -> vector<256x64xf32>
    %c0_3 = arith.constant 0 : index
    %c0_4 = arith.constant 0 : index
    %3 = vector.load %arg5[%c0_3, %c0_4] : memref<1x64xf32, #tpu.memory_space<vmem>>, vector<1x64xf32>
    %4 = vector.broadcast %3 : vector<1x64xf32> to vector<256x64xf32>
    %5 = arith.addf %2, %4 : vector<256x64xf32>
    %cst_5 = arith.constant 0.000000e+00 : f32
    %6 = vector.broadcast %cst_5 : f32 to vector<256x64xf32>
    %7 = arith.maximumf %5, %6 : vector<256x64xf32>
    %8 = arith.truncf %7 : vector<256x64xf32> to vector<256x64xbf16>
    %c0_6 = arith.constant 0 : index
    %c0_7 = arith.constant 0 : index
    %9 = vector.load %arg6[%c0_6, %c0_7] : memref<256x64xbf16, #tpu.memory_space<vmem>>, vector<256x64xbf16>
    tpu.vector_store %arg6[%c0_6, %c0_7], %8 {strides = array<i32>} : memref<256x64xbf16, #tpu.memory_space<vmem>>, vector<256x64xbf16>,
    return
  }
  func.func @transform_0(%arg0: i32, %arg1: i32, %arg2: i32) -> (i32, i32) {
    %c0_i32 = arith.constant 0 : i32
    return %arg0, %arg2 : i32, i32
  }
  func.func @transform_1(%arg0: i32, %arg1: i32, %arg2: i32) -> (i32, i32) {
    %c0_i32 = arith.constant 0 : i32
    return %arg2, %arg1 : i32, i32
  }
  func.func @transform_2(%arg0: i32, %arg1: i32, %arg2: i32) -> (i32, i32) {
    %c0_i32 = arith.constant 0 : i32
    %c0_i32_0 = arith.constant 0 : i32
    return %c0_i32, %arg1 : i32, i32
  }
  func.func @transform_3(%arg0: i32, %arg1: i32, %arg2: i32) -> (i32, i32) {
    %c0_i32 = arith.constant 0 : i32
    return %arg0, %arg1 : i32, i32
  }
}

module attributes {stable_mosaic.version = 11 : i64} {
  func.func @_maxpool2_kernel(%arg0: i32, %arg1: memref<2x14x2x14x128xbf16, #tpu.memory_space<vmem>>, %arg2: memref<2x14x14x64xbf16, #tpu.memory_space<vmem>>) attributes {dimension_semantics = [#tpu.dimension_semantics<parallel>], iteration_bounds = array<i64: 1>, scalar_prefetch = 0 : i64, scratch_operands = 0 : i64, tpu.core_type = #tpu.core_type<tc>, window_params = [{transform_indices = @transform_0, window_bounds = array<i64: 2, 14, 2, 14, 128>}, {transform_indices = @transform_1, window_bounds = array<i64: 2, 14, 14, 64>}]} {
    %c0 = arith.constant 0 : index
    %c0_0 = arith.constant 0 : index
    %c0_1 = arith.constant 0 : index
    %c0_2 = arith.constant 0 : index
    %c0_3 = arith.constant 0 : index
    %0 = vector.load %arg1[%c0, %c0_0, %c0_1, %c0_2, %c0_3] : memref<2x14x2x14x128xbf16, #tpu.memory_space<vmem>>, vector<2x14x2x14x128xbf16>
    %1 = vector.extract_strided_slice %0 {offsets = [0, 0, 0, 0, 0], sizes = [2, 14, 1, 14, 128], strides = [1, 1, 1, 1, 1]} : vector<2x14x2x14x128xbf16> to vector<2x14x1x14x128xbf16>
    %2 = vector.shape_cast %1 : vector<2x14x1x14x128xbf16> to vector<2x14x14x128xbf16>
    %3 = vector.extract_strided_slice %0 {offsets = [0, 0, 1, 0, 0], sizes = [2, 14, 1, 14, 128], strides = [1, 1, 1, 1, 1]} : vector<2x14x2x14x128xbf16> to vector<2x14x1x14x128xbf16>
    %4 = vector.shape_cast %3 : vector<2x14x1x14x128xbf16> to vector<2x14x14x128xbf16>
    %5 = arith.maximumf %2, %4 : vector<2x14x14x128xbf16>
    %6 = vector.extract_strided_slice %5 {offsets = [0, 0, 0, 0], sizes = [2, 14, 14, 64], strides = [1, 1, 1, 1]} : vector<2x14x14x128xbf16> to vector<2x14x14x64xbf16>
    %7 = vector.extract_strided_slice %5 {offsets = [0, 0, 0, 64], sizes = [2, 14, 14, 64], strides = [1, 1, 1, 1]} : vector<2x14x14x128xbf16> to vector<2x14x14x64xbf16>
    %8 = arith.maximumf %6, %7 : vector<2x14x14x64xbf16>
    %c0_4 = arith.constant 0 : index
    %c0_5 = arith.constant 0 : index
    %c0_6 = arith.constant 0 : index
    %c0_7 = arith.constant 0 : index
    %9 = vector.load %arg2[%c0_4, %c0_5, %c0_6, %c0_7] : memref<2x14x14x64xbf16, #tpu.memory_space<vmem>>, vector<2x14x14x64xbf16>
    tpu.vector_store %arg2[%c0_4, %c0_5, %c0_6, %c0_7], %8 {strides = array<i32>} : memref<2x14x14x64xbf16, #tpu.memory_space<vmem>>, vector<2x14x14x64xbf16>,
    return
  }
  func.func @transform_0(%arg0: i32) -> (i32, i32, i32, i32, i32) {
    %c0_i32 = arith.constant 0 : i32
    %c0_i32_0 = arith.constant 0 : i32
    %c0_i32_1 = arith.constant 0 : i32
    %c0_i32_2 = arith.constant 0 : i32
    %c0_i32_3 = arith.constant 0 : i32
    return %arg0, %c0_i32, %c0_i32_0, %c0_i32_1, %c0_i32_2 : i32, i32, i32, i32, i32
  }
  func.func @transform_1(%arg0: i32) -> (i32, i32, i32, i32) {
    %c0_i32 = arith.constant 0 : i32
    %c0_i32_0 = arith.constant 0 : i32
    %c0_i32_1 = arith.constant 0 : i32
    %c0_i32_2 = arith.constant 0 : i32
    return %arg0, %c0_i32, %c0_i32_0, %c0_i32_1 : i32, i32, i32, i32
  }
}

module attributes {stable_mosaic.version = 11 : i64} {
  func.func @_fused_matmul_kernel(%arg0: i32, %arg1: i32, %arg2: i32, %arg3: memref<16x1792xbf16, #tpu.memory_space<vmem>>, %arg4: memref<1792x256xbf16, #tpu.memory_space<vmem>>, %arg5: memref<1x256xf32, #tpu.memory_space<vmem>>, %arg6: memref<16x256xf32, #tpu.memory_space<vmem>>) attributes {dimension_semantics = [#tpu.dimension_semantics<parallel>, #tpu.dimension_semantics<parallel>, #tpu.dimension_semantics<arbitrary>], iteration_bounds = array<i64: 1, 2, 7>, scalar_prefetch = 0 : i64, scratch_operands = 0 : i64, tpu.core_type = #tpu.core_type<tc>, window_params = [{transform_indices = @transform_0, window_bounds = array<i64: 16, 1792>}, {transform_indices = @transform_1, window_bounds = array<i64: 1792, 256>}, {transform_indices = @transform_2, window_bounds = array<i64: 1, 256>}, {transform_indices = @transform_3, window_bounds = array<i64: 16, 256>}]} {
    %c0_i32 = arith.constant 0 : i32
    %0 = arith.cmpi eq, %arg2, %c0_i32 : i32
    %1 = arith.extui %0 : i1 to i32
    %c0_i32_0 = arith.constant 0 : i32
    %2 = arith.cmpi ne, %1, %c0_i32_0 : i32
    scf.if %2 {
      %cst_9 = arith.constant 0.000000e+00 : f32
      %12 = vector.broadcast %cst_9 : f32 to vector<16x256xf32>
      %c0_10 = arith.constant 0 : index
      %c0_11 = arith.constant 0 : index
      %13 = vector.load %arg6[%c0_10, %c0_11] : memref<16x256xf32, #tpu.memory_space<vmem>>, vector<16x256xf32>
      tpu.vector_store %arg6[%c0_10, %c0_11], %12 {strides = array<i32>} : memref<16x256xf32, #tpu.memory_space<vmem>>, vector<16x256xf32>,
    } else {
    }
    %c0 = arith.constant 0 : index
    %c0_1 = arith.constant 0 : index
    %3 = vector.load %arg6[%c0, %c0_1] : memref<16x256xf32, #tpu.memory_space<vmem>>, vector<16x256xf32>
    %c0_2 = arith.constant 0 : index
    %c0_3 = arith.constant 0 : index
    %4 = vector.load %arg3[%c0_2, %c0_3] : memref<16x1792xbf16, #tpu.memory_space<vmem>>, vector<16x1792xbf16>
    %c0_4 = arith.constant 0 : index
    %c0_5 = arith.constant 0 : index
    %5 = vector.load %arg4[%c0_4, %c0_5] : memref<1792x256xbf16, #tpu.memory_space<vmem>>, vector<1792x256xbf16>
    %cst = arith.constant dense<0.000000e+00> : vector<16x256xf32>
    %6 = tpu.matmul %4, %5, %cst {dimension_numbers = #tpu.dot_dimension_numbers<[1], [0], [0], [1], [0, 0, 1, 1], [], []>} : vector<16x1792xbf16>, vector<1792x256xbf16>, vector<16x256xf32> -> vector<16x256xf32>
    %7 = arith.addf %3, %6 : vector<16x256xf32>
    %c0_6 = arith.constant 0 : index
    %c0_7 = arith.constant 0 : index
    %8 = vector.load %arg6[%c0_6, %c0_7] : memref<16x256xf32, #tpu.memory_space<vmem>>, vector<16x256xf32>
    tpu.vector_store %arg6[%c0_6, %c0_7], %7 {strides = array<i32>} : memref<16x256xf32, #tpu.memory_space<vmem>>, vector<16x256xf32>,
    %c6_i32 = arith.constant 6 : i32
    %9 = arith.cmpi eq, %arg2, %c6_i32 : i32
    %10 = arith.extui %9 : i1 to i32
    %c0_i32_8 = arith.constant 0 : i32
    %11 = arith.cmpi ne, %10, %c0_i32_8 : i32
    scf.if %11 {
      %c0_9 = arith.constant 0 : index
      %c0_10 = arith.constant 0 : index
      %12 = vector.load %arg6[%c0_9, %c0_10] : memref<16x256xf32, #tpu.memory_space<vmem>>, vector<16x256xf32>
      %c0_11 = arith.constant 0 : index
      %c0_12 = arith.constant 0 : index
      %13 = vector.load %arg5[%c0_11, %c0_12] : memref<1x256xf32, #tpu.memory_space<vmem>>, vector<1x256xf32>
      %14 = vector.broadcast %13 : vector<1x256xf32> to vector<16x256xf32>
      %15 = arith.addf %12, %14 : vector<16x256xf32>
      %cst_13 = arith.constant 0.000000e+00 : f32
      %16 = vector.broadcast %cst_13 : f32 to vector<16x256xf32>
      %17 = arith.maximumf %15, %16 : vector<16x256xf32>
      %c0_14 = arith.constant 0 : index
      %c0_15 = arith.constant 0 : index
      %18 = vector.load %arg6[%c0_14, %c0_15] : memref<16x256xf32, #tpu.memory_space<vmem>>, vector<16x256xf32>
      tpu.vector_store %arg6[%c0_14, %c0_15], %17 {strides = array<i32>} : memref<16x256xf32, #tpu.memory_space<vmem>>, vector<16x256xf32>,
    } else {
    }
    return
  }
  func.func @transform_0(%arg0: i32, %arg1: i32, %arg2: i32) -> (i32, i32) {
    %c0_i32 = arith.constant 0 : i32
    return %arg0, %arg2 : i32, i32
  }
  func.func @transform_1(%arg0: i32, %arg1: i32, %arg2: i32) -> (i32, i32) {
    %c0_i32 = arith.constant 0 : i32
    return %arg2, %arg1 : i32, i32
  }
  func.func @transform_2(%arg0: i32, %arg1: i32, %arg2: i32) -> (i32, i32) {
    %c0_i32 = arith.constant 0 : i32
    %c0_i32_0 = arith.constant 0 : i32
    return %c0_i32, %arg1 : i32, i32
  }
  func.func @transform_3(%arg0: i32, %arg1: i32, %arg2: i32) -> (i32, i32) {
    %c0_i32 = arith.constant 0 : i32
    return %arg0, %arg1 : i32, i32
  }
}

module attributes {stable_mosaic.version = 11 : i64} {
  func.func @_head_kernel(%arg0: i32, %arg1: memref<16x512xf32, #tpu.memory_space<vmem>>, %arg2: memref<512x128xbf16, #tpu.memory_space<vmem>>, %arg3: memref<1x128xf32, #tpu.memory_space<vmem>>, %arg4: memref<128x128xf32, #tpu.memory_space<vmem>>, %arg5: memref<1x128xf32, #tpu.memory_space<vmem>>, %arg6: memref<16x128xf32, #tpu.memory_space<vmem>>) attributes {dimension_semantics = [#tpu.dimension_semantics<parallel>], iteration_bounds = array<i64: 1>, scalar_prefetch = 0 : i64, scratch_operands = 0 : i64, tpu.core_type = #tpu.core_type<tc>, window_params = [{transform_indices = @transform_0, window_bounds = array<i64: 16, 512>}, {pipeline_mode = #tpu.pipeline_mode<synchronous>, transform_indices = @transform_1, window_bounds = array<i64: 512, 128>}, {pipeline_mode = #tpu.pipeline_mode<synchronous>, transform_indices = @transform_2, window_bounds = array<i64: 1, 128>}, {pipeline_mode = #tpu.pipeline_mode<synchronous>, transform_indices = @transform_3, window_bounds = array<i64: 128, 128>}, {pipeline_mode = #tpu.pipeline_mode<synchronous>, transform_indices = @transform_4, window_bounds = array<i64: 1, 128>}, {transform_indices = @transform_5, window_bounds = array<i64: 16, 128>}]} {
    %c0 = arith.constant 0 : index
    %c0_0 = arith.constant 0 : index
    %0 = vector.load %arg1[%c0, %c0_0] : memref<16x512xf32, #tpu.memory_space<vmem>>, vector<16x512xf32>
    %1 = arith.truncf %0 : vector<16x512xf32> to vector<16x512xbf16>
    %c0_1 = arith.constant 0 : index
    %c0_2 = arith.constant 0 : index
    %2 = vector.load %arg2[%c0_1, %c0_2] : memref<512x128xbf16, #tpu.memory_space<vmem>>, vector<512x128xbf16>
    %cst = arith.constant dense<0.000000e+00> : vector<16x128xf32>
    %3 = tpu.matmul %1, %2, %cst {dimension_numbers = #tpu.dot_dimension_numbers<[1], [0], [0], [1], [0, 0, 1, 1], [], []>} : vector<16x512xbf16>, vector<512x128xbf16>, vector<16x128xf32> -> vector<16x128xf32>
    %c0_3 = arith.constant 0 : index
    %c0_4 = arith.constant 0 : index
    %4 = vector.load %arg3[%c0_3, %c0_4] : memref<1x128xf32, #tpu.memory_space<vmem>>, vector<1x128xf32>
    %5 = vector.broadcast %4 : vector<1x128xf32> to vector<16x128xf32>
    %6 = arith.addf %3, %5 : vector<16x128xf32>
    %cst_5 = arith.constant 0.000000e+00 : f32
    %7 = vector.broadcast %cst_5 : f32 to vector<16x128xf32>
    %8 = arith.maximumf %6, %7 : vector<16x128xf32>
    %c0_6 = arith.constant 0 : index
    %c0_7 = arith.constant 0 : index
    %9 = vector.load %arg4[%c0_6, %c0_7] : memref<128x128xf32, #tpu.memory_space<vmem>>, vector<128x128xf32>
    %cst_8 = arith.constant dense<0.000000e+00> : vector<16x128xf32>
    %10 = tpu.matmul %8, %9, %cst_8 {dimension_numbers = #tpu.dot_dimension_numbers<[1], [0], [0], [1], [0, 0, 1, 1], [], []>} : vector<16x128xf32>, vector<128x128xf32>, vector<16x128xf32> -> vector<16x128xf32>
    %c0_9 = arith.constant 0 : index
    %c0_10 = arith.constant 0 : index
    %11 = vector.load %arg5[%c0_9, %c0_10] : memref<1x128xf32, #tpu.memory_space<vmem>>, vector<1x128xf32>
    %12 = vector.broadcast %11 : vector<1x128xf32> to vector<16x128xf32>
    %13 = arith.addf %10, %12 : vector<16x128xf32>
    %cst_11 = arith.constant dense<0xFF800000> : vector<16xf32>
    %14 = vector.multi_reduction <maximumf>, %13, %cst_11 [1] : vector<16x128xf32> to vector<16xf32>
    %15 = vector.shape_cast %14 : vector<16xf32> to vector<16x1xf32>
    %16 = vector.broadcast %15 : vector<16x1xf32> to vector<16x128xf32>
    %17 = arith.subf %13, %16 : vector<16x128xf32>
    %18 = math.exp %17 : vector<16x128xf32>
    %cst_12 = arith.constant dense<0.000000e+00> : vector<16xf32>
    %19 = vector.multi_reduction <add>, %18, %cst_12 [1] : vector<16x128xf32> to vector<16xf32>
    %20 = vector.shape_cast %19 : vector<16xf32> to vector<16x1xf32>
    %21 = math.log %20 : vector<16x1xf32>
    %22 = vector.broadcast %21 : vector<16x1xf32> to vector<16x128xf32>
    %23 = arith.subf %17, %22 : vector<16x128xf32>
    %c0_13 = arith.constant 0 : index
    %c0_14 = arith.constant 0 : index
    %24 = vector.load %arg6[%c0_13, %c0_14] : memref<16x128xf32, #tpu.memory_space<vmem>>, vector<16x128xf32>
    tpu.vector_store %arg6[%c0_13, %c0_14], %23 {strides = array<i32>} : memref<16x128xf32, #tpu.memory_space<vmem>>, vector<16x128xf32>,
    return
  }
  func.func @transform_0(%arg0: i32) -> (i32, i32) {
    %c0_i32 = arith.constant 0 : i32
    %c0_i32_0 = arith.constant 0 : i32
    return %arg0, %c0_i32 : i32, i32
  }
  func.func @transform_1(%arg0: i32) -> (i32, i32) {
    %c0_i32 = arith.constant 0 : i32
    %c0_i32_0 = arith.constant 0 : i32
    %c0_i32_1 = arith.constant 0 : i32
    return %c0_i32, %c0_i32_0 : i32, i32
  }
  func.func @transform_2(%arg0: i32) -> (i32, i32) {
    %c0_i32 = arith.constant 0 : i32
    %c0_i32_0 = arith.constant 0 : i32
    %c0_i32_1 = arith.constant 0 : i32
    return %c0_i32, %c0_i32_0 : i32, i32
  }
  func.func @transform_3(%arg0: i32) -> (i32, i32) {
    %c0_i32 = arith.constant 0 : i32
    %c0_i32_0 = arith.constant 0 : i32
    %c0_i32_1 = arith.constant 0 : i32
    return %c0_i32, %c0_i32_0 : i32, i32
  }
  func.func @transform_4(%arg0: i32) -> (i32, i32) {
    %c0_i32 = arith.constant 0 : i32
    %c0_i32_0 = arith.constant 0 : i32
    %c0_i32_1 = arith.constant 0 : i32
    return %c0_i32, %c0_i32_0 : i32, i32
  }
  func.func @transform_5(%arg0: i32) -> (i32, i32) {
    %c0_i32 = arith.constant 0 : i32
    %c0_i32_0 = arith.constant 0 : i32
    return %arg0, %c0_i32 : i32, i32
  }
}

</mosaic_0001>

<llo_original>
// kernel: svhn_forward.5
$region0: #{svhn_forward.5}
  #allocation0 [shape = 'u32[]', space=smem, size = 0x4, offset = 0x4, fixed_abs, tag = 'smem constant byte address 0x4 - core index']
  #allocation1 [shape = 'u32[144,128]{1,0:T(1,128)}', space=vmem, size = 0x12000, scoped, tag = 'internal scratch']
  %s0 = inlined_call_operand.vmem [shape: bf16[2048,27], index: 0, kind: input, shape index: {}]
  %s1 = inlined_call_operand.vmem [shape: bf16[27,64], index: 1, kind: input, shape index: {}]
  %s2 = inlined_call_operand.vmem [shape: f32[1,64], index: 2, kind: input, shape index: {}]
  %s3 = inlined_call_operand.vmem [shape: bf16[2048,64], index: 3, kind: output, shape index: {}]
  %s4 = sld [smem:[#allocation0]]
  $region45: #{svhn_forward.5} parent=0
    _
  %s6 = ssub.s32 1, %s4
  %s7 = scalar_select 0, %s6, %s4
  loop: start=0, step=1, limit=10
  $region2: #{svhn_forward.5} parent=0 // loop_pre_header
    _
  $region3: #{svhn_forward.5} parent=0 // loop_header
    %s9 = sphi 0, %s13
    %p10 = scmp.ge.s32.totalorder %s9, 10
    %s16 = sphi 0, %s35
    %s17 = sphi 0, %s31
    %s18 = sphi 0, %s27
    %s19 = sphi 0, %s16
    %s20 = sphi 0, %s17
    %s21 = sphi 0, %s18
    %s22 = sphi 0, %s19
    %s23 = sphi 0, %s20
    %s24 = sphi 0, %s21
    %s40 = sphi 0, %s42
    %s43 = sphi 0, %s40
    %s44 = sphi 0, %s43
    %s60 = sphi 0, %s44
    %s68 = sphi 0, %s70
    %s71 = sphi 0, %s68
    %s72 = sphi 0, %s71
    %s88 = sphi 0, %s72
    %s94 = sphi 0, %s96
    %s97 = sphi 0, %s94
    %s98 = sphi 0, %s97
    %s114 = sphi 0, %s98
    %s122 = sphi 0, %s124
    %s125 = sphi 0, %s122
    %s126 = sphi 0, %s125
    %s142 = sphi 0, %s126
  $region4: #{svhn_forward.5} parent=0 // loop_header_branch
    %12 = sbr.rel (%p10) target = $region8
  $region5: #{svhn_forward.5} parent=0 // loop_body
    %s14 = ssub.s32 %s9, 1
    %s15 = ssub.s32 %s9, 2
    %s25 = sadd.s32 1, %s18
    %p26 = scmp.ge.s32.totalorder %s25, 1
    %s27 = scalar_select %p26, 0, %s25
    %s28 = sadd.s32 1, %s17
    %s29 = scalar_select %p26, %s28, %s17
    %p30 = scmp.ge.s32.totalorder %s29, 1
    %s31 = scalar_select %p30, 0, %s29
    %s32 = sadd.s32 1, %s16
    %s33 = scalar_select %p30, %s32, %s16
    %p34 = scmp.ge.s32.totalorder %s33, 8
    %s35 = scalar_select %p34, 0, %s33
    %s36 = ssub.s32 %s16, %s35
    %s37 = ssub.s32 %s18, %s27
    %s38 = sor.u32 %s36, %s37
    %p39 = scmp.eq.s32.totalorder %s38, 0
    %s41 = sadd.s32 %s40, 1
    %s42 = scalar_select %p39, %s40, %s41
    %p45 = pneg %p39
    %p46 = scmp.eq.s32.totalorder %s9, 7
    %p47 = por %p45, %p46
    %p48 = scmp.ne.s32.totalorder %s40, %s43
    %p49 = scmp.eq.s32.totalorder %s9, 0
    %p50 = por %p48, %p49
    %p51 = scmp.ne.s32.totalorder %s40, %s43
    %p52 = scmp.eq.s32.totalorder %s14, 7
    %p53 = por %p51, %p52
    %p54 = scmp.ne.s32.totalorder %s43, %s44
    %p55 = scmp.eq.s32.totalorder %s14, 0
    %p56 = por %p54, %p55
    %p57 = scmp.ne.s32.totalorder %s43, %s44
    %p58 = scmp.eq.s32.totalorder %s15, 7
    %p59 = por %p57, %p58
    %p61 = scmp.ne.s32.totalorder %s44, %s60
    %p62 = scmp.eq.s32.totalorder %s15, 0
    %p63 = por %p61, %p62
    %s64 = ssub.s32 %s18, %s27
    %s65 = ssub.s32 %s17, %s31
    %s66 = sor.u32 %s64, %s65
    %p67 = scmp.eq.s32.totalorder %s66, 0
    %s69 = sadd.s32 %s68, 1
    %s70 = scalar_select %p67, %s68, %s69
    %p73 = pneg %p67
    %p74 = scmp.eq.s32.totalorder %s9, 7
    %p75 = por %p73, %p74
    %p76 = scmp.ne.s32.totalorder %s68, %s71
    %p77 = scmp.eq.s32.totalorder %s9, 0
    %p78 = por %p76, %p77
    %p79 = scmp.ne.s32.totalorder %s68, %s71
    %p80 = scmp.eq.s32.totalorder %s14, 7
    %p81 = por %p79, %p80
    %p82 = scmp.ne.s32.totalorder %s71, %s72
    %p83 = scmp.eq.s32.totalorder %s14, 0
    %p84 = por %p82, %p83
    %p85 = scmp.ne.s32.totalorder %s71, %s72
    %p86 = scmp.eq.s32.totalorder %s15, 7
    %p87 = por %p85, %p86
    %p89 = scmp.ne.s32.totalorder %s72, %s88
    %p90 = scmp.eq.s32.totalorder %s15, 0
    %p91 = por %p89, %p90
    %s92 = ssub.s32 %s17, %s31
    %p93 = scmp.eq.s32.totalorder %s92, 0
    %s95 = sadd.s32 %s94, 1
    %s96 = scalar_select %p93, %s94, %s95
    %p99 = pneg %p93
    %p100 = scmp.eq.s32.totalorder %s9, 7
    %p101 = por %p99, %p100
    %p102 = scmp.ne.s32.totalorder %s94, %s97
    %p103 = scmp.eq.s32.totalorder %s9, 0
    %p104 = por %p102, %p103
    %p105 = scmp.ne.s32.totalorder %s94, %s97
    %p106 = scmp.eq.s32.totalorder %s14, 7
    %p107 = por %p105, %p106
    %p108 = scmp.ne.s32.totalorder %s97, %s98
    %p109 = scmp.eq.s32.totalorder %s14, 0
    %p110 = por %p108, %p109
    %p111 = scmp.ne.s32.totalorder %s97, %s98
    %p112 = scmp.eq.s32.totalorder %s15, 7
    %p113 = por %p111, %p112
    %p115 = scmp.ne.s32.totalorder %s98, %s114
    %p116 = scmp.eq.s32.totalorder %s15, 0
    %p117 = por %p115, %p116
    %s118 = ssub.s32 %s16, %s35
    %s119 = ssub.s32 %s17, %s31
    %s120 = sor.u32 %s118, %s119
    %p121 = scmp.eq.s32.totalorder %s120, 0
    %s123 = sadd.s32 %s122, 1
    %s124 = scalar_select %p121, %s122, %s123
    %p127 = pneg %p121
    %p128 = scmp.eq.s32.totalorder %s9, 7
    %p129 = por %p127, %p128
    %p130 = scmp.ne.s32.totalorder %s122, %s125
    %p131 = scmp.eq.s32.totalorder %s9, 0
    %p132 = por %p130, %p131
    %p133 = scmp.ne.s32.totalorder %s122, %s125
    %p134 = scmp.eq.s32.totalorder %s14, 7
    %p135 = por %p133, %p134
    %p136 = scmp.ne.s32.totalorder %s125, %s126
    %p137 = scmp.eq.s32.totalorder %s14, 0
    %p138 = por %p136, %p137
    %p139 = scmp.ne.s32.totalorder %s125, %s126
    %p140 = scmp.eq.s32.totalorder %s15, 7
    %p141 = por %p139, %p140
    %p143 = scmp.ne.s32.totalorder %s126, %s142
    %p144 = scmp.eq.s32.totalorder %s15, 0
    %p145 = por %p143, %p144
    %p146 = scmp.le.s32.totalorder 1, %s9
    %p147 = scmp.lt.s32.totalorder %s9, 9
    %p148 = pnand %p146, %p147
    %p149 = pneg %p148
    // Predicated region
    $region9: #{svhn_forward.5} parent=5 // pred_check
      _
    $region10: #{svhn_forward.5} parent=5 // pred_check_branch
      %151 = sbr.rel (%p148) target = $region12
    $region11: #{svhn_forward.5} parent=5 // pred_region
      %s152 = ssub.s32 %s9, 1
      // Predicated region
      $region13: #{svhn_forward.5} parent=11 // pred_check
        %p153 = pneg %p84
      $region14: #{svhn_forward.5} parent=11 // pred_check_branch
        %155 = sbr.rel (%p153) target = $region16
      $region15: #{svhn_forward.5} parent=11 // pred_region
        %s156 = smul.u32 4, %s21
        %p157 = scmp.lt.s32.totalorder %s156, 3
        %s158 = scalar_select %p157, %s156, 3
        %p159 = scmp.lt.s32.totalorder %s20, 0
        %s160 = scalar_select %p159, %s20, 0
        %s161 = sadd.s32 %s160, %s158
        %s162 = smul.addr %s161, 4
        %s163 = scalar_lea.vmem %s1, %s162
        %s164 = smul.u32 4, %s21
      $region16: #{svhn_forward.5} parent=11 // pred_fallthru
        _
      // Predicated region
      $region17: #{svhn_forward.5} parent=11 // pred_check
        %p165 = pneg %p110
      $region18: #{svhn_forward.5} parent=11 // pred_check_branch
        %167 = sbr.rel (%p165) target = $region20
      $region19: #{svhn_forward.5} parent=11 // pred_region
        %p168 = scmp.lt.s32.totalorder %s20, 0
        %s169 = scalar_select %p168, %s20, 0
        %s170 = scalar_lea.vmem %s2, %s169
      $region20: #{svhn_forward.5} parent=11 // pred_fallthru
        _
    $region12: #{svhn_forward.5} parent=5 // pred_fallthru
      _
    %p171 = scmp.lt.s32.totalorder %s9, 8
    // Predicated region
    $region21: #{svhn_forward.5} parent=5 // pred_check
      %p172 = pneg %p171
    $region22: #{svhn_forward.5} parent=5 // pred_check_branch
      %174 = sbr.rel (%p172) target = $region24
    $region23: #{svhn_forward.5} parent=5 // pred_region
      // Predicated region
      $region25: #{svhn_forward.5} parent=23 // pred_check
        %p175 = pneg %p50
      $region26: #{svhn_forward.5} parent=23 // pred_check_branch
        %177 = sbr.rel (%p175) target = $region28
      $region27: #{svhn_forward.5} parent=23 // pred_region
        %s178 = smul.u32 32, %s16
        %p179 = scmp.lt.s32.totalorder %s178, 255
        %s180 = scalar_select %p179, %s178, 255
        %p181 = scmp.lt.s32.totalorder %s18, 0
        %s182 = scalar_select %p181, %s18, 0
        %s183 = sadd.s32 %s182, %s180
        %s184 = smul.addr %s183, 4
        %s185 = scalar_lea.vmem %s0, %s184
        %s186 = smul.u32 32, %s16
      $region28: #{svhn_forward.5} parent=23 // pred_fallthru
        _
    $region24: #{svhn_forward.5} parent=5 // pred_fallthru
      _
    %p187 = scmp.le.s32.totalorder 1, %s9
    %p188 = scmp.lt.s32.totalorder %s9, 9
    %p189 = pnand %p187, %p188
    %p190 = pneg %p189
    // Predicated region
    $region29: #{svhn_forward.5} parent=5 // pred_check
      _
    $region30: #{svhn_forward.5} parent=5 // pred_check_branch
      %192 = sbr.rel (%p189) target = $region32
    $region31: #{svhn_forward.5} parent=5 // pred_region
      %s193 = ssub.s32 %s9, 1
      %s194 = smul.u32 32, %s19
      %p195 = scmp.lt.s32.totalorder %s194, 255
      %s196 = scalar_select %p195, %s194, 255
      %p197 = scmp.lt.s32.totalorder %s21, 0
      %s198 = scalar_select %p197, %s21, 0
      %s199 = sadd.s32 %s198, %s196
      %s200 = smul.addr %s199, 4
      %s201 = scalar_lea.vmem %s0, %s200
      %p202 = pneg %p56
      %p203 = pneg %p53
      %s204 = smul.u32 4, %s21
      %p205 = scmp.lt.s32.totalorder %s204, 3
      %s206 = scalar_select %p205, %s204, 3
      %p207 = scmp.lt.s32.totalorder %s20, 0
      %s208 = scalar_select %p207, %s20, 0
      %s209 = sadd.s32 %s208, %s206
      %s210 = smul.addr %s209, 4
      %s211 = scalar_lea.vmem %s1, %s210
      %p212 = pneg %p84
      %p213 = pneg %p81
      %p214 = scmp.lt.s32.totalorder %s20, 0
      %s215 = scalar_select %p214, %s20, 0
      %s216 = scalar_lea.vmem %s2, %s215
      %p217 = pneg %p110
      %p218 = pneg %p107
      %p219 = pneg %p138
      %p220 = pneg %p135
      %s221 = smul.u32 32, %s19
      %p222 = scmp.lt.s32.totalorder %s221, 255
      %s223 = scalar_select %p222, %s221, 255
      %p224 = scmp.lt.s32.totalorder %s20, 0
      %s225 = scalar_select %p224, %s20, 0
      %s226 = sadd.s32 %s225, %s223
      %s227 = smul.addr %s226, 4
      %s228 = scalar_lea.vmem %s3, %s227
      %s229 = smul.u32 32, %s19
      %p230 = scmp.lt.s32.totalorder %s229, 255
      %s231 = scalar_select %p230, %s229, 255
      %p232 = scmp.lt.s32.totalorder %s21, 0
      %s233 = scalar_select %p232, %s21, 0
      %s234 = sadd.s32 %s233, %s231
      %s235 = smul.addr %s234, 4
      %s236 = scalar_lea.vmem %s0, %s235
      %s237 = smul.u32 32, %s19
      %s238 = smul.u32 4, %s21
      %p239 = scmp.lt.s32.totalorder %s238, 3
      %s240 = scalar_select %p239, %s238, 3
      %p241 = scmp.lt.s32.totalorder %s20, 0
      %s242 = scalar_select %p241, %s20, 0
      %s243 = sadd.s32 %s242, %s240
      %s244 = smul.addr %s243, 4
      %s245 = scalar_lea.vmem %s1, %s244
      %s246 = smul.u32 4, %s21
      %p247 = scmp.lt.s32.totalorder %s20, 0
      %s248 = scalar_select %p247, %s20, 0
      %s249 = scalar_lea.vmem %s2, %s248
      %s250 = smul.u32 32, %s19
      %p251 = scmp.lt.s32.totalorder %s250, 255
      %s252 = scalar_select %p251, %s250, 255
      %p253 = scmp.lt.s32.totalorder %s20, 0
      %s254 = scalar_select %p253, %s20, 0
      %s255 = sadd.s32 %s254, %s252
      %s256 = smul.addr %s255, 4
      %s257 = scalar_lea.vmem %s3, %s256
      %s258 = smul.u32 32, %s19
      %v260 = vld [vmem:[%s236] sm:$0xf]
      %v261 = vld [vmem:[%s236 + $0x4] sm:$0xf]
      %v262 = vld [vmem:[%s236 + $0x8] sm:$0xf]
      %v263 = vld [vmem:[%s236 + $0xc] sm:$0xf]
      %v264 = vld [vmem:[%s236 + $0x10] sm:$0xf]
      %v265 = vld [vmem:[%s236 + $0x14] sm:$0xf]
      %v266 = vld [vmem:[%s236 + $0x18] sm:$0xf]
      %v267 = vld [vmem:[%s236 + $0x1c] sm:$0xf]
      %v268 = vld [vmem:[%s236 + $0x20] sm:$0xf]
      %v269 = vld [vmem:[%s236 + $0x24] sm:$0xf]
      %v270 = vld [vmem:[%s236 + $0x28] sm:$0xf]
      %v271 = vld [vmem:[%s236 + $0x2c] sm:$0xf]
      %v272 = vld [vmem:[%s236 + $0x30] sm:$0xf]
      %v273 = vld [vmem:[%s236 + $0x34] sm:$0xf]
      %v274 = vld [vmem:[%s236 + $0x38] sm:$0xf]
      %v275 = vld [vmem:[%s236 + $0x3c] sm:$0xf]
      %v276 = vld [vmem:[%s236 + $0x40] sm:$0xf]
      %v277 = vld [vmem:[%s236 + $0x44] sm:$0xf]
      %v278 = vld [vmem:[%s236 + $0x48] sm:$0xf]
      %v279 = vld [vmem:[%s236 + $0x4c] sm:$0xf]
      %v280 = vld [vmem:[%s236 + $0x50] sm:$0xf]
      %v281 = vld [vmem:[%s236 + $0x54] sm:$0xf]
      %v282 = vld [vmem:[%s236 + $0x58] sm:$0xf]
      %v283 = vld [vmem:[%s236 + $0x5c] sm:$0xf]
      %v284 = vld [vmem:[%s236 + $0x60] sm:$0xf]
      %v285 = vld [vmem:[%s236 + $0x64] sm:$0xf]
      %v286 = vld [vmem:[%s236 + $0x68] sm:$0xf]
      %v287 = vld [vmem:[%s236 + $0x6c] sm:$0xf]
      %v288 = vld [vmem:[%s236 + $0x70] sm:$0xf]
      %v289 = vld [vmem:[%s236 + $0x74] sm:$0xf]
      %v290 = vld [vmem:[%s236 + $0x78] sm:$0xf]
      %v291 = vld [vmem:[%s236 + $0x7c] sm:$0xf]
      %v292 = vld [vmem:[%s245] sm:$0xf]
      %v293 = vld [vmem:[%s245 + $0x4] sm:$0xf]
      %v294 = vld [vmem:[%s245 + $0x8] sm:$0xf]
      %v295 = vld [vmem:[%s245 + $0xc] sm:$0x3]
      %v296 = vld [vmem:[%s249] sm:$0x1]
      %v298 = vlaneseq
      %v299 = vshrl.u32 %v298, 7
      %v300 = vsub.s32 0, %v299
      %v301 = vrot.slane %v296, %v300
      %v335 = vunpack.c.l.b16 %v260
      %v336 = vunpack.c.l.b16 %v261
      %v337 = vunpack.c.l.b16 %v262
      %v338 = vunpack.c.l.b16 %v263
      %v339 = vunpack.c.l.b16 %v264
      %v340 = vunpack.c.l.b16 %v265
      %v341 = vunpack.c.l.b16 %v266
      %v342 = vunpack.c.l.b16 %v267
      %v343 = vunpack.c.l.b16 %v268
      %v344 = vunpack.c.l.b16 %v269
      %v345 = vunpack.c.l.b16 %v270
      %v346 = vunpack.c.l.b16 %v271
      %v347 = vunpack.c.l.b16 %v272
      %v348 = vunpack.c.l.b16 %v273
      %v349 = vunpack.c.l.b16 %v274
      %v350 = vunpack.c.l.b16 %v275
      %v351 = vunpack.c.l.b16 %v276
      %v352 = vunpack.c.l.b16 %v277
      %v353 = vunpack.c.l.b16 %v278
      %v354 = vunpack.c.l.b16 %v279
      %v355 = vunpack.c.l.b16 %v280
      %v356 = vunpack.c.l.b16 %v281
      %v357 = vunpack.c.l.b16 %v282
      %v358 = vunpack.c.l.b16 %v283
      %v359 = vunpack.c.l.b16 %v284
      %v360 = vunpack.c.l.b16 %v285
      %v361 = vunpack.c.l.b16 %v286
      %v362 = vunpack.c.l.b16 %v287
      %v363 = vunpack.c.l.b16 %v288
      %v364 = vunpack.c.l.b16 %v289
      %v365 = vunpack.c.l.b16 %v290
      %v366 = vunpack.c.l.b16 %v291
      %v367 = vpack.c.b16 %v336, %v335
      %v368 = vpack.c.b16 %v338, %v337
      %v369 = vpack.c.b16 %v340, %v339
      %v370 = vpack.c.b16 %v342, %v341
      %v371 = vpack.c.b16 %v344, %v343
      %v372 = vpack.c.b16 %v346, %v345
      %v373 = vpack.c.b16 %v348, %v347
      %v374 = vpack.c.b16 %v350, %v349
      %v375 = vpack.c.b16 %v352, %v351
      %v376 = vpack.c.b16 %v354, %v353
      %v377 = vpack.c.b16 %v356, %v355
      %v378 = vpack.c.b16 %v358, %v357
      %v379 = vpack.c.b16 %v360, %v359
      %v380 = vpack.c.b16 %v362, %v361
      %v381 = vpack.c.b16 %v364, %v363
      %v382 = vpack.c.b16 %v366, %v365
      %v387 = vunpack.c.l.b16 %v292
      %v388 = vunpack.c.l.b16 %v293
      %v389 = vunpack.c.l.b16 %v294
      %v390 = vunpack.c.l.b16 %v295
      %v391 = vpack.c.b16 %v388, %v387
      %v392 = vpack.c.b16 %v390, %v389
      %vm394 = vcmask 220160
      %v396 = vsel %vm394, %v367, 0
      %v399 = vsel %vm394, %v368, 0
      %v402 = vsel %vm394, %v369, 0
      %v405 = vsel %vm394, %v370, 0
      %v408 = vsel %vm394, %v371, 0
      %v411 = vsel %vm394, %v372, 0
      %v414 = vsel %vm394, %v373, 0
      %v417 = vsel %vm394, %v374, 0
      %v420 = vsel %vm394, %v375, 0
      %v423 = vsel %vm394, %v376, 0
      %v426 = vsel %vm394, %v377, 0
      %v429 = vsel %vm394, %v378, 0
      %v432 = vsel %vm394, %v379, 0
      %v435 = vsel %vm394, %v380, 0
      %v438 = vsel %vm394, %v381, 0
      %v441 = vsel %vm394, %v382, 0
      %vm443 = vcmask 1044480
      %vm444 = vcmask 1045504
      %v445 = vsel %vm443, 4294967295, 65535
      %v446 = vsel %vm444, %v445, 0
      %v448 = vand.u32 %v392, %v446
      %450 = vmatprep.subr.bf16.mxu0 0
      %451 = vmatpush1.bf16.msra.mxu0 %v391
      %452 = vmatprep.subr.bf16.mxu0 0
      %453 = vmatpush1.bf16.msra.mxu0 %v448
      %454 = vmatprep.subr.bf16.mxu0 0
      %455 = vmatpush1.bf16.msra.mxu0 0
      %456 = vmatprep.subr.bf16.mxu0 0
      %457 = vmatpush1.bf16.msra.mxu0 0
      %458 = vmatprep.subr.bf16.mxu0 0
      %459 = vmatpush1.bf16.msra.mxu0 0
      %460 = vmatprep.subr.bf16.mxu0 0
      %461 = vmatpush1.bf16.msra.mxu0 0
      %462 = vmatprep.subr.bf16.mxu0 0
      %463 = vmatpush1.bf16.msra.mxu0 0
      %464 = vmatprep.subr.bf16.mxu0 0
      %465 = vmatpush1.bf16.msra.mxu0 0
      %466 = vmatprep.subr.bf16.mxu0 0
      %467 = vmatpush1.bf16.msra.mxu0 0
      %468 = vmatprep.subr.bf16.mxu0 0
      %469 = vmatpush1.bf16.msra.mxu0 0
      %470 = vmatprep.subr.bf16.mxu0 0
      %471 = vmatpush1.bf16.msra.mxu0 0
      %472 = vmatprep.subr.bf16.mxu0 0
      %473 = vmatpush1.bf16.msra.mxu0 0
      %474 = vmatprep.subr.bf16.mxu0 0
      %475 = vmatpush1.bf16.msra.mxu0 0
      %476 = vmatprep.subr.bf16.mxu0 0
      %477 = vmatpush1.bf16.msra.mxu0 0
      %478 = vmatprep.subr.bf16.mxu0 0
      %479 = vmatpush1.bf16.msra.mxu0 0
      %480 = vmatprep.subr.bf16.mxu0 0
      %481 = vmatpush1.bf16.msra.mxu0 0
      %482 = vmatprep.mubr.bf16.mxu0 0
      %483 = vmatmul.mubr.bf16.gmra.mrb[0].mxu0 %v396
      %v484 = vpop.f32.mrb[0].mxu0
      %v485 = vadd.f32 %v301, %v484
      %v486 = vpop.f32.mrb[0].mxu0
      %v487 = vpop.f32.mrb[0].mxu0
      %v488 = vadd.f32 %v301, %v487
      %v489 = vpop.f32.mrb[0].mxu0
      %490 = vmatprep.mubr.bf16.mxu0 0
      %491 = vmatmul.mubr.bf16.gmra.mrb[0].mxu0 %v399
      %v492 = vpop.f32.mrb[0].mxu0
      %v493 = vadd.f32 %v301, %v492
      %v494 = vpop.f32.mrb[0].mxu0
      %v495 = vpop.f32.mrb[0].mxu0
      %v496 = vadd.f32 %v301, %v495
      %v497 = vpop.f32.mrb[0].mxu0
      %498 = vmatprep.mubr.bf16.mxu0 0
      %499 = vmatmul.mubr.bf16.gmra.mrb[0].mxu0 %v402
      %v500 = vpop.f32.mrb[0].mxu0
      %v501 = vadd.f32 %v301, %v500
      %v502 = vpop.f32.mrb[0].mxu0
      %v503 = vpop.f32.mrb[0].mxu0
      %v504 = vadd.f32 %v301, %v503
      %v505 = vpop.f32.mrb[0].mxu0
      %506 = vmatprep.mubr.bf16.mxu0 0
      %507 = vmatmul.mubr.bf16.gmra.mrb[0].mxu0 %v405
      %v508 = vpop.f32.mrb[0].mxu0
      %v509 = vadd.f32 %v301, %v508
      %v510 = vpop.f32.mrb[0].mxu0
      %v511 = vpop.f32.mrb[0].mxu0
      %v512 = vadd.f32 %v301, %v511
      %v513 = vpop.f32.mrb[0].mxu0
      %514 = vmatprep.mubr.bf16.mxu0 0
      %515 = vmatmul.mubr.bf16.gmra.mrb[0].mxu0 %v408
      %v516 = vpop.f32.mrb[0].mxu0
      %v517 = vadd.f32 %v301, %v516
      %v518 = vpop.f32.mrb[0].mxu0
      %v519 = vpop.f32.mrb[0].mxu0
      %v520 = vadd.f32 %v301, %v519
      %v521 = vpop.f32.mrb[0].mxu0
      %522 = vmatprep.mubr.bf16.mxu0 0
      %523 = vmatmul.mubr.bf16.gmra.mrb[0].mxu0 %v411
      %v524 = vpop.f32.mrb[0].mxu0
      %v525 = vadd.f32 %v301, %v524
      %v526 = vpop.f32.mrb[0].mxu0
      %v527 = vpop.f32.mrb[0].mxu0
      %v528 = vadd.f32 %v301, %v527
      %v529 = vpop.f32.mrb[0].mxu0
      %530 = vmatprep.mubr.bf16.mxu0 0
      %531 = vmatmul.mubr.bf16.gmra.mrb[0].mxu0 %v414
      %v532 = vpop.f32.mrb[0].mxu0
      %v533 = vadd.f32 %v301, %v532
      %v534 = vpop.f32.mrb[0].mxu0
      %v535 = vpop.f32.mrb[0].mxu0
      %v536 = vadd.f32 %v301, %v535
      %v537 = vpop.f32.mrb[0].mxu0
      %538 = vmatprep.mubr.bf16.mxu0 0
      %539 = vmatmul.mubr.bf16.gmra.mrb[0].mxu0 %v417
      %v540 = vpop.f32.mrb[0].mxu0
      %v541 = vadd.f32 %v301, %v540
      %v542 = vpop.f32.mrb[0].mxu0
      %v543 = vpop.f32.mrb[0].mxu0
      %v544 = vadd.f32 %v301, %v543
      %v545 = vpop.f32.mrb[0].mxu0
      %546 = vmatprep.mubr.bf16.mxu0 0
      %547 = vmatmul.mubr.bf16.gmra.mrb[0].mxu0 %v420
      %v548 = vpop.f32.mrb[0].mxu0
      %v549 = vadd.f32 %v301, %v548
      %v550 = vpop.f32.mrb[0].mxu0
      %v551 = vpop.f32.mrb[0].mxu0
      %v552 = vadd.f32 %v301, %v551
      %v553 = vpop.f32.mrb[0].mxu0
      %554 = vmatprep.mubr.bf16.mxu0 0
      %555 = vmatmul.mubr.bf16.gmra.mrb[0].mxu0 %v423
      %v556 = vpop.f32.mrb[0].mxu0
      %v557 = vadd.f32 %v301, %v556
      %v558 = vpop.f32.mrb[0].mxu0
      %v559 = vpop.f32.mrb[0].mxu0
      %v560 = vadd.f32 %v301, %v559
      %v561 = vpop.f32.mrb[0].mxu0
      %562 = vmatprep.mubr.bf16.mxu0 0
      %563 = vmatmul.mubr.bf16.gmra.mrb[0].mxu0 %v426
      %v564 = vpop.f32.mrb[0].mxu0
      %v565 = vadd.f32 %v301, %v564
      %v566 = vpop.f32.mrb[0].mxu0
      %v567 = vpop.f32.mrb[0].mxu0
      %v568 = vadd.f32 %v301, %v567
      %v569 = vpop.f32.mrb[0].mxu0
      %570 = vmatprep.mubr.bf16.mxu0 0
      %571 = vmatmul.mubr.bf16.gmra.mrb[0].mxu0 %v429
      %v572 = vpop.f32.mrb[0].mxu0
      %v573 = vadd.f32 %v301, %v572
      %v574 = vpop.f32.mrb[0].mxu0
      %v575 = vpop.f32.mrb[0].mxu0
      %v576 = vadd.f32 %v301, %v575
      %v577 = vpop.f32.mrb[0].mxu0
      %578 = vmatprep.mubr.bf16.mxu0 0
      %579 = vmatmul.mubr.bf16.gmra.mrb[0].mxu0 %v432
      %v580 = vpop.f32.mrb[0].mxu0
      %v581 = vadd.f32 %v301, %v580
      %v582 = vpop.f32.mrb[0].mxu0
      %v583 = vpop.f32.mrb[0].mxu0
      %v584 = vadd.f32 %v301, %v583
      %v585 = vpop.f32.mrb[0].mxu0
      %586 = vmatprep.mubr.bf16.mxu0 0
      %587 = vmatmul.mubr.bf16.gmra.mrb[0].mxu0 %v435
      %v588 = vpop.f32.mrb[0].mxu0
      %v589 = vadd.f32 %v301, %v588
      %v590 = vpop.f32.mrb[0].mxu0
      %v591 = vpop.f32.mrb[0].mxu0
      %v592 = vadd.f32 %v301, %v591
      %v593 = vpop.f32.mrb[0].mxu0
      %594 = vmatprep.mubr.bf16.mxu0 0
      %595 = vmatmul.mubr.bf16.gmra.mrb[0].mxu0 %v438
      %v596 = vpop.f32.mrb[0].mxu0
      %v597 = vadd.f32 %v301, %v596
      %v598 = vpop.f32.mrb[0].mxu0
      %v599 = vpop.f32.mrb[0].mxu0
      %v600 = vadd.f32 %v301, %v599
      %v601 = vpop.f32.mrb[0].mxu0
      %602 = vmatprep.mubr.bf16.mxu0 0
      %603 = vmatmul.mubr.bf16.gmra.mrb[0].mxu0 %v441
      %v604 = vpop.f32.mrb[0].mxu0
      %v605 = vadd.f32 %v301, %v604
      %v606 = vpop.f32.mrb[0].mxu0
      %v607 = vpop.f32.mrb[0].mxu0
      %v608 = vadd.f32 %v301, %v607
      %v609 = vpop.f32.mrb[0].mxu0
      %610 = vdwg.mxu0
      %v611 = vmax.f32 %v485, 0.0
      %v612 = vmax.f32 %v488, 0.0
      %v613 = vmax.f32 %v493, 0.0
      %v614 = vmax.f32 %v496, 0.0
      %v615 = vmax.f32 %v501, 0.0
      %v616 = vmax.f32 %v504, 0.0
      %v617 = vmax.f32 %v509, 0.0
      %v618 = vmax.f32 %v512, 0.0
      %v619 = vmax.f32 %v517, 0.0
      %v620 = vmax.f32 %v520, 0.0
      %v621 = vmax.f32 %v525, 0.0
      %v622 = vmax.f32 %v528, 0.0
      %v623 = vmax.f32 %v533, 0.0
      %v624 = vmax.f32 %v536, 0.0
      %v625 = vmax.f32 %v541, 0.0
      %v626 = vmax.f32 %v544, 0.0
      %v627 = vmax.f32 %v549, 0.0
      %v628 = vmax.f32 %v552, 0.0
      %v629 = vmax.f32 %v557, 0.0
      %v630 = vmax.f32 %v560, 0.0
      %v631 = vmax.f32 %v565, 0.0
      %v632 = vmax.f32 %v568, 0.0
      %v633 = vmax.f32 %v573, 0.0
      %v634 = vmax.f32 %v576, 0.0
      %v635 = vmax.f32 %v581, 0.0
      %v636 = vmax.f32 %v584, 0.0
      %v637 = vmax.f32 %v589, 0.0
      %v638 = vmax.f32 %v592, 0.0
      %v639 = vmax.f32 %v597, 0.0
      %v640 = vmax.f32 %v600, 0.0
      %v641 = vmax.f32 %v605, 0.0
      %v642 = vmax.f32 %v608, 0.0
      %v643 = vpack.c.bf16 %v612, %v611
      %v644 = vpack.c.bf16 %v614, %v613
      %v645 = vpack.c.bf16 %v616, %v615
      %v646 = vpack.c.bf16 %v618, %v617
      %v647 = vpack.c.bf16 %v620, %v619
      %v648 = vpack.c.bf16 %v622, %v621
      %v649 = vpack.c.bf16 %v624, %v623
      %v650 = vpack.c.bf16 %v626, %v625
      %v651 = vpack.c.bf16 %v628, %v627
      %v652 = vpack.c.bf16 %v630, %v629
      %v653 = vpack.c.bf16 %v632, %v631
      %v654 = vpack.c.bf16 %v634, %v633
      %v655 = vpack.c.bf16 %v636, %v635
      %v656 = vpack.c.bf16 %v638, %v637
      %v657 = vpack.c.bf16 %v640, %v639
      %v658 = vpack.c.bf16 %v642, %v641
      %v675 = vunpack.c.l.b16 %v643
      %v676 = vunpack.c.h.b16 %v643
      %v677 = vunpack.c.l.b16 %v644
      %v678 = vunpack.c.h.b16 %v644
      %v679 = vunpack.c.l.b16 %v645
      %v680 = vunpack.c.h.b16 %v645
      %v681 = vunpack.c.l.b16 %v646
      %v682 = vunpack.c.h.b16 %v646
      %v683 = vunpack.c.l.b16 %v647
      %v684 = vunpack.c.h.b16 %v647
      %v685 = vunpack.c.l.b16 %v648
      %v686 = vunpack.c.h.b16 %v648
      %v687 = vunpack.c.l.b16 %v649
      %v688 = vunpack.c.h.b16 %v649
      %v689 = vunpack.c.l.b16 %v650
      %v690 = vunpack.c.h.b16 %v650
      %v691 = vunpack.c.l.b16 %v651
      %v692 = vunpack.c.h.b16 %v651
      %v693 = vunpack.c.l.b16 %v652
      %v694 = vunpack.c.h.b16 %v652
      %v695 = vunpack.c.l.b16 %v653
      %v696 = vunpack.c.h.b16 %v653
      %v697 = vunpack.c.l.b16 %v654
      %v698 = vunpack.c.h.b16 %v654
      %v699 = vunpack.c.l.b16 %v655
      %v700 = vunpack.c.h.b16 %v655
      %v701 = vunpack.c.l.b16 %v656
      %v702 = vunpack.c.h.b16 %v656
      %v703 = vunpack.c.l.b16 %v657
      %v704 = vunpack.c.h.b16 %v657
      %v705 = vunpack.c.l.b16 %v658
      %v706 = vunpack.c.h.b16 %v658
      %v707 = vpack.c.b16 %v675, %v675
      %v708 = vpack.c.b16 %v676, %v676
      %v709 = vpack.c.b16 %v677, %v677
      %v710 = vpack.c.b16 %v678, %v678
      %v711 = vpack.c.b16 %v679, %v679
      %v712 = vpack.c.b16 %v680, %v680
      %v713 = vpack.c.b16 %v681, %v681
      %v714 = vpack.c.b16 %v682, %v682
      %v715 = vpack.c.b16 %v683, %v683
      %v716 = vpack.c.b16 %v684, %v684
      %v717 = vpack.c.b16 %v685, %v685
      %v718 = vpack.c.b16 %v686, %v686
      %v719 = vpack.c.b16 %v687, %v687
      %v720 = vpack.c.b16 %v688, %v688
      %v721 = vpack.c.b16 %v689, %v689
      %v722 = vpack.c.b16 %v690, %v690
      %v723 = vpack.c.b16 %v691, %v691
      %v724 = vpack.c.b16 %v692, %v692
      %v725 = vpack.c.b16 %v693, %v693
      %v726 = vpack.c.b16 %v694, %v694
      %v727 = vpack.c.b16 %v695, %v695
      %v728 = vpack.c.b16 %v696, %v696
      %v729 = vpack.c.b16 %v697, %v697
      %v730 = vpack.c.b16 %v698, %v698
      %v731 = vpack.c.b16 %v699, %v699
      %v732 = vpack.c.b16 %v700, %v700
      %v733 = vpack.c.b16 %v701, %v701
      %v734 = vpack.c.b16 %v702, %v702
      %v735 = vpack.c.b16 %v703, %v703
      %v736 = vpack.c.b16 %v704, %v704
      %v737 = vpack.c.b16 %v705, %v705
      %v738 = vpack.c.b16 %v706, %v706
      %vm771 = vcmask 519168
      %772 = vst.msk [vmem:[%s257] sm:$0xf] %vm771, %v707
      %773 = vst.msk [vmem:[%s257 + $0x4] sm:$0xf] %vm771, %v708
      %774 = vst.msk [vmem:[%s257 + $0x8] sm:$0xf] %vm771, %v709
      %775 = vst.msk [vmem:[%s257 + $0xc] sm:$0xf] %vm771, %v710
      %776 = vst.msk [vmem:[%s257 + $0x10] sm:$0xf] %vm771, %v711
      %777 = vst.msk [vmem:[%s257 + $0x14] sm:$0xf] %vm771, %v712
      %778 = vst.msk [vmem:[%s257 + $0x18] sm:$0xf] %vm771, %v713
      %779 = vst.msk [vmem:[%s257 + $0x1c] sm:$0xf] %vm771, %v714
      %780 = vst.msk [vmem:[%s257 + $0x20] sm:$0xf] %vm771, %v715
      %781 = vst.msk [vmem:[%s257 + $0x24] sm:$0xf] %vm771, %v716
      %782 = vst.msk [vmem:[%s257 + $0x28] sm:$0xf] %vm771, %v717
      %783 = vst.msk [vmem:[%s257 + $0x2c] sm:$0xf] %vm771, %v718
      %784 = vst.msk [vmem:[%s257 + $0x30] sm:$0xf] %vm771, %v719
      %785 = vst.msk [vmem:[%s257 + $0x34] sm:$0xf] %vm771, %v720
      %786 = vst.msk [vmem:[%s257 + $0x38] sm:$0xf] %vm771, %v721
      %787 = vst.msk [vmem:[%s257 + $0x3c] sm:$0xf] %vm771, %v722
      %788 = vst.msk [vmem:[%s257 + $0x40] sm:$0xf] %vm771, %v723
      %789 = vst.msk [vmem:[%s257 + $0x44] sm:$0xf] %vm771, %v724
      %790 = vst.msk [vmem:[%s257 + $0x48] sm:$0xf] %vm771, %v725
      %791 = vst.msk [vmem:[%s257 + $0x4c] sm:$0xf] %vm771, %v726
      %792 = vst.msk [vmem:[%s257 + $0x50] sm:$0xf] %vm771, %v727
      %793 = vst.msk [vmem:[%s257 + $0x54] sm:$0xf] %vm771, %v728
      %794 = vst.msk [vmem:[%s257 + $0x58] sm:$0xf] %vm771, %v729
      %795 = vst.msk [vmem:[%s257 + $0x5c] sm:$0xf] %vm771, %v730
      %796 = vst.msk [vmem:[%s257 + $0x60] sm:$0xf] %vm771, %v731
      %797 = vst.msk [vmem:[%s257 + $0x64] sm:$0xf] %vm771, %v732
      %798 = vst.msk [vmem:[%s257 + $0x68] sm:$0xf] %vm771, %v733
      %799 = vst.msk [vmem:[%s257 + $0x6c] sm:$0xf] %vm771, %v734
      %800 = vst.msk [vmem:[%s257 + $0x70] sm:$0xf] %vm771, %v735
      %801 = vst.msk [vmem:[%s257 + $0x74] sm:$0xf] %vm771, %v736
      %802 = vst.msk [vmem:[%s257 + $0x78] sm:$0xf] %vm771, %v737
      %803 = vst.msk [vmem:[%s257 + $0x7c] sm:$0xf] %vm771, %v738
      %s804 = smul.u32 32, %s19
      %p805 = scmp.lt.s32.totalorder %s804, 255
      %s806 = scalar_select %p805, %s804, 255
      %p807 = scmp.lt.s32.totalorder %s20, 0
      %s808 = scalar_select %p807, %s20, 0
      %s809 = sadd.s32 %s808, %s806
      %s810 = smul.addr %s809, 4
      %s811 = scalar_lea.vmem %s3, %s810
      // Predicated region
      $region33: #{svhn_forward.5} parent=31 // pred_check
        %p812 = pneg %p135
      $region34: #{svhn_forward.5} parent=31 // pred_check_branch
        %814 = sbr.rel (%p812) target = $region36
      $region35: #{svhn_forward.5} parent=31 // pred_region
        %s815 = smul.u32 32, %s19
      $region36: #{svhn_forward.5} parent=31 // pred_fallthru
        _
    $region32: #{svhn_forward.5} parent=5 // pred_fallthru
      _
    %p816 = scmp.le.s32.totalorder 2, %s9
    // Predicated region
    $region37: #{svhn_forward.5} parent=5 // pred_check
      %p817 = pneg %p816
    $region38: #{svhn_forward.5} parent=5 // pred_check_branch
      %819 = sbr.rel (%p817) target = $region40
    $region39: #{svhn_forward.5} parent=5 // pred_region
      %s820 = ssub.s32 %s9, 2
      // Predicated region
      $region41: #{svhn_forward.5} parent=39 // pred_check
        %p821 = pneg %p141
      $region42: #{svhn_forward.5} parent=39 // pred_check_branch
        %823 = sbr.rel (%p821) target = $region44
      $region43: #{svhn_forward.5} parent=39 // pred_region
        %s824 = smul.u32 32, %s22
        %p825 = scmp.lt.s32.totalorder %s824, 255
        %s826 = scalar_select %p825, %s824, 255
        %p827 = scmp.lt.s32.totalorder %s23, 0
        %s828 = scalar_select %p827, %s23, 0
        %s829 = sadd.s32 %s828, %s826
        %s830 = smul.addr %s829, 4
        %s831 = scalar_lea.vmem %s3, %s830
      $region44: #{svhn_forward.5} parent=39 // pred_fallthru
        _
    $region40: #{svhn_forward.5} parent=5 // pred_fallthru
      _
  $region6: #{svhn_forward.5} parent=0 // loop_footer
    %s13 = sadd.s32 1, %s9
  $region7: #{svhn_forward.5} parent=0 // loop_footer_branch
    %8 = sbr.rel target = $region3
  $region8: #{svhn_forward.5} parent=0 // loop_exit
    _

// kernel: svhn_forward.6
$region0: #{svhn_forward.6}
  #allocation0 [shape = 'u32[]', space=smem, size = 0x4, offset = 0x4, fixed_abs, tag = 'smem constant byte address 0x4 - core index']
  #allocation1 [shape = 'u32[144,128]{1,0:T(1,128)}', space=vmem, size = 0x12000, scoped, tag = 'internal scratch']
  %s0 = inlined_call_operand.vmem [shape: bf16[1792,576], index: 0, kind: input, shape index: {}]
  %s1 = inlined_call_operand.vmem [shape: bf16[576,64], index: 1, kind: input, shape index: {}]
  %s2 = inlined_call_operand.vmem [shape: f32[1,64], index: 2, kind: input, shape index: {}]
  %s3 = inlined_call_operand.vmem [shape: bf16[1792,64], index: 3, kind: output, shape index: {}]
  %s4 = sld [smem:[#allocation0]]
  $region45: #{svhn_forward.6} parent=0
    _
  %s6 = ssub.s32 1, %s4
  %s7 = scalar_select 0, %s6, %s4
  loop: start=0, step=1, limit=9
  $region2: #{svhn_forward.6} parent=0 // loop_pre_header
    _
  $region3: #{svhn_forward.6} parent=0 // loop_header
    %s9 = sphi 0, %s13
    %p10 = scmp.ge.s32.totalorder %s9, 9
    %s16 = sphi 0, %s35
    %s17 = sphi 0, %s31
    %s18 = sphi 0, %s27
    %s19 = sphi 0, %s16
    %s20 = sphi 0, %s17
    %s21 = sphi 0, %s18
    %s22 = sphi 0, %s19
    %s23 = sphi 0, %s20
    %s24 = sphi 0, %s21
    %s40 = sphi 0, %s42
    %s43 = sphi 0, %s40
    %s44 = sphi 0, %s43
    %s60 = sphi 0, %s44
    %s68 = sphi 0, %s70
    %s71 = sphi 0, %s68
    %s72 = sphi 0, %s71
    %s88 = sphi 0, %s72
    %s94 = sphi 0, %s96
    %s97 = sphi 0, %s94
    %s98 = sphi 0, %s97
    %s114 = sphi 0, %s98
    %s122 = sphi 0, %s124
    %s125 = sphi 0, %s122
    %s126 = sphi 0, %s125
    %s142 = sphi 0, %s126
  $region4: #{svhn_forward.6} parent=0 // loop_header_branch
    %12 = sbr.rel (%p10) target = $region8
  $region5: #{svhn_forward.6} parent=0 // loop_body
    %s14 = ssub.s32 %s9, 1
    %s15 = ssub.s32 %s9, 2
    %s25 = sadd.s32 1, %s18
    %p26 = scmp.ge.s32.totalorder %s25, 1
    %s27 = scalar_select %p26, 0, %s25
    %s28 = sadd.s32 1, %s17
    %s29 = scalar_select %p26, %s28, %s17
    %p30 = scmp.ge.s32.totalorder %s29, 1
    %s31 = scalar_select %p30, 0, %s29
    %s32 = sadd.s32 1, %s16
    %s33 = scalar_select %p30, %s32, %s16
    %p34 = scmp.ge.s32.totalorder %s33, 7
    %s35 = scalar_select %p34, 0, %s33
    %s36 = ssub.s32 %s16, %s35
    %s37 = ssub.s32 %s18, %s27
    %s38 = sor.u32 %s36, %s37
    %p39 = scmp.eq.s32.totalorder %s38, 0
    %s41 = sadd.s32 %s40, 1
    %s42 = scalar_select %p39, %s40, %s41
    %p45 = pneg %p39
    %p46 = scmp.eq.s32.totalorder %s9, 6
    %p47 = por %p45, %p46
    %p48 = scmp.ne.s32.totalorder %s40, %s43
    %p49 = scmp.eq.s32.totalorder %s9, 0
    %p50 = por %p48, %p49
    %p51 = scmp.ne.s32.totalorder %s40, %s43
    %p52 = scmp.eq.s32.totalorder %s14, 6
    %p53 = por %p51, %p52
    %p54 = scmp.ne.s32.totalorder %s43, %s44
    %p55 = scmp.eq.s32.totalorder %s14, 0
    %p56 = por %p54, %p55
    %p57 = scmp.ne.s32.totalorder %s43, %s44
    %p58 = scmp.eq.s32.totalorder %s15, 6
    %p59 = por %p57, %p58
    %p61 = scmp.ne.s32.totalorder %s44, %s60
    %p62 = scmp.eq.s32.totalorder %s15, 0
    %p63 = por %p61, %p62
    %s64 = ssub.s32 %s18, %s27
    %s65 = ssub.s32 %s17, %s31
    %s66 = sor.u32 %s64, %s65
    %p67 = scmp.eq.s32.totalorder %s66, 0
    %s69 = sadd.s32 %s68, 1
    %s70 = scalar_select %p67, %s68, %s69
    %p73 = pneg %p67
    %p74 = scmp.eq.s32.totalorder %s9, 6
    %p75 = por %p73, %p74
    %p76 = scmp.ne.s32.totalorder %s68, %s71
    %p77 = scmp.eq.s32.totalorder %s9, 0
    %p78 = por %p76, %p77
    %p79 = scmp.ne.s32.totalorder %s68, %s71
    %p80 = scmp.eq.s32.totalorder %s14, 6
    %p81 = por %p79, %p80
    %p82 = scmp.ne.s32.totalorder %s71, %s72
    %p83 = scmp.eq.s32.totalorder %s14, 0
    %p84 = por %p82, %p83
    %p85 = scmp.ne.s32.totalorder %s71, %s72
    %p86 = scmp.eq.s32.totalorder %s15, 6
    %p87 = por %p85, %p86
    %p89 = scmp.ne.s32.totalorder %s72, %s88
    %p90 = scmp.eq.s32.totalorder %s15, 0
    %p91 = por %p89, %p90
    %s92 = ssub.s32 %s17, %s31
    %p93 = scmp.eq.s32.totalorder %s92, 0
    %s95 = sadd.s32 %s94, 1
    %s96 = scalar_select %p93, %s94, %s95
    %p99 = pneg %p93
    %p100 = scmp.eq.s32.totalorder %s9, 6
    %p101 = por %p99, %p100
    %p102 = scmp.ne.s32.totalorder %s94, %s97
    %p103 = scmp.eq.s32.totalorder %s9, 0
    %p104 = por %p102, %p103
    %p105 = scmp.ne.s32.totalorder %s94, %s97
    %p106 = scmp.eq.s32.totalorder %s14, 6
    %p107 = por %p105, %p106
    %p108 = scmp.ne.s32.totalorder %s97, %s98
    %p109 = scmp.eq.s32.totalorder %s14, 0
    %p110 = por %p108, %p109
    %p111 = scmp.ne.s32.totalorder %s97, %s98
    %p112 = scmp.eq.s32.totalorder %s15, 6
    %p113 = por %p111, %p112
    %p115 = scmp.ne.s32.totalorder %s98, %s114
    %p116 = scmp.eq.s32.totalorder %s15, 0
    %p117 = por %p115, %p116
    %s118 = ssub.s32 %s16, %s35
    %s119 = ssub.s32 %s17, %s31
    %s120 = sor.u32 %s118, %s119
    %p121 = scmp.eq.s32.totalorder %s120, 0
    %s123 = sadd.s32 %s122, 1
    %s124 = scalar_select %p121, %s122, %s123
    %p127 = pneg %p121
    %p128 = scmp.eq.s32.totalorder %s9, 6
    %p129 = por %p127, %p128
    %p130 = scmp.ne.s32.totalorder %s122, %s125
    %p131 = scmp.eq.s32.totalorder %s9, 0
    %p132 = por %p130, %p131
    %p133 = scmp.ne.s32.totalorder %s122, %s125
    %p134 = scmp.eq.s32.totalorder %s14, 6
    %p135 = por %p133, %p134
    %p136 = scmp.ne.s32.totalorder %s125, %s126
    %p137 = scmp.eq.s32.totalorder %s14, 0
    %p138 = por %p136, %p137
    %p139 = scmp.ne.s32.totalorder %s125, %s126
    %p140 = scmp.eq.s32.totalorder %s15, 6
    %p141 = por %p139, %p140
    %p143 = scmp.ne.s32.totalorder %s126, %s142
    %p144 = scmp.eq.s32.totalorder %s15, 0
    %p145 = por %p143, %p144
    %p146 = scmp.le.s32.totalorder 1, %s9
    %p147 = scmp.lt.s32.totalorder %s9, 8
    %p148 = pnand %p146, %p147
    %p149 = pneg %p148
    // Predicated region
    $region9: #{svhn_forward.6} parent=5 // pred_check
      _
    $region10: #{svhn_forward.6} parent=5 // pred_check_branch
      %151 = sbr.rel (%p148) target = $region12
    $region11: #{svhn_forward.6} parent=5 // pred_region
      %s152 = ssub.s32 %s9, 1
      // Predicated region
      $region13: #{svhn_forward.6} parent=11 // pred_check
        %p153 = pneg %p84
      $region14: #{svhn_forward.6} parent=11 // pred_check_branch
        %155 = sbr.rel (%p153) target = $region16
      $region15: #{svhn_forward.6} parent=11 // pred_region
        %s156 = smul.u32 72, %s21
        %p157 = scmp.lt.s32.totalorder %s156, 71
        %s158 = scalar_select %p157, %s156, 71
        %p159 = scmp.lt.s32.totalorder %s20, 0
        %s160 = scalar_select %p159, %s20, 0
        %s161 = sadd.s32 %s160, %s158
        %s162 = smul.addr %s161, 4
        %s163 = scalar_lea.vmem %s1, %s162
        %s164 = smul.u32 72, %s21
      $region16: #{svhn_forward.6} parent=11 // pred_fallthru
        _
      // Predicated region
      $region17: #{svhn_forward.6} parent=11 // pred_check
        %p165 = pneg %p110
      $region18: #{svhn_forward.6} parent=11 // pred_check_branch
        %167 = sbr.rel (%p165) target = $region20
      $region19: #{svhn_forward.6} parent=11 // pred_region
        %p168 = scmp.lt.s32.totalorder %s20, 0
        %s169 = scalar_select %p168, %s20, 0
        %s170 = scalar_lea.vmem %s2, %s169
      $region20: #{svhn_forward.6} parent=11 // pred_fallthru
        _
    $region12: #{svhn_forward.6} parent=5 // pred_fallthru
      _
    %p171 = scmp.lt.s32.totalorder %s9, 7
    // Predicated region
    $region21: #{svhn_forward.6} parent=5 // pred_check
      %p172 = pneg %p171
    $region22: #{svhn_forward.6} parent=5 // pred_check_branch
      %174 = sbr.rel (%p172) target = $region24
    $region23: #{svhn_forward.6} parent=5 // pred_region
      // Predicated region
      $region25: #{svhn_forward.6} parent=23 // pred_check
        %p175 = pneg %p50
      $region26: #{svhn_forward.6} parent=23 // pred_check_branch
        %177 = sbr.rel (%p175) target = $region28
      $region27: #{svhn_forward.6} parent=23 // pred_region
        %s178 = smul.u32 32, %s16
        %s179 = smul.u32 5, %s18
        %p180 = scmp.lt.s32.totalorder %s178, 223
        %s181 = scalar_select %p180, %s178, 223
        %p182 = scmp.lt.s32.totalorder %s179, 4
        %s183 = scalar_select %p182, %s179, 4
        %s184 = smul.addr %s181, 5
        %s185 = sadd.s32 %s183, %s184
        %s186 = smul.addr %s185, 4
        %s187 = scalar_lea.vmem %s0, %s186
        %s188 = smul.u32 32, %s16
        %s189 = smul.u32 5, %s18
      $region28: #{svhn_forward.6} parent=23 // pred_fallthru
        _
    $region24: #{svhn_forward.6} parent=5 // pred_fallthru
      _
    %p190 = scmp.le.s32.totalorder 1, %s9
    %p191 = scmp.lt.s32.totalorder %s9, 8
    %p192 = pnand %p190, %p191
    %p193 = pneg %p192
    // Predicated region
    $region29: #{svhn_forward.6} parent=5 // pred_check
      _
    $region30: #{svhn_forward.6} parent=5 // pred_check_branch
      %195 = sbr.rel (%p192) target = $region32
    $region31: #{svhn_forward.6} parent=5 // pred_region
      %s196 = ssub.s32 %s9, 1
      %s197 = smul.u32 32, %s19
      %s198 = smul.u32 5, %s21
      %p199 = scmp.lt.s32.totalorder %s197, 223
      %s200 = scalar_select %p199, %s197, 223
      %p201 = scmp.lt.s32.totalorder %s198, 4
      %s202 = scalar_select %p201, %s198, 4
      %s203 = smul.addr %s200, 5
      %s204 = sadd.s32 %s202, %s203
      %s205 = smul.addr %s204, 4
      %s206 = scalar_lea.vmem %s0, %s205
      %p207 = pneg %p56
      %p208 = pneg %p53
      %s209 = smul.u32 72, %s21
      %p210 = scmp.lt.s32.totalorder %s209, 71
      %s211 = scalar_select %p210, %s209, 71
      %p212 = scmp.lt.s32.totalorder %s20, 0
      %s213 = scalar_select %p212, %s20, 0
      %s214 = sadd.s32 %s213, %s211
      %s215 = smul.addr %s214, 4
      %s216 = scalar_lea.vmem %s1, %s215
      %p217 = pneg %p84
      %p218 = pneg %p81
      %p219 = scmp.lt.s32.totalorder %s20, 0
      %s220 = scalar_select %p219, %s20, 0
      %s221 = scalar_lea.vmem %s2, %s220
      %p222 = pneg %p110
      %p223 = pneg %p107
      %p224 = pneg %p138
      %p225 = pneg %p135
      %s226 = smul.u32 32, %s19
      %p227 = scmp.lt.s32.totalorder %s226, 223
      %s228 = scalar_select %p227, %s226, 223
      %p229 = scmp.lt.s32.totalorder %s20, 0
      %s230 = scalar_select %p229, %s20, 0
      %s231 = sadd.s32 %s230, %s228
      %s232 = smul.addr %s231, 4
      %s233 = scalar_lea.vmem %s3, %s232
      %s234 = smul.u32 32, %s19
      %s235 = smul.u32 5, %s21
      %p236 = scmp.lt.s32.totalorder %s234, 223
      %s237 = scalar_select %p236, %s234, 223
      %p238 = scmp.lt.s32.totalorder %s235, 4
      %s239 = scalar_select %p238, %s235, 4
      %s240 = smul.addr %s237, 5
      %s241 = sadd.s32 %s239, %s240
      %s242 = smul.addr %s241, 4
      %s243 = scalar_lea.vmem %s0, %s242
      %s244 = smul.u32 32, %s19
      %s245 = smul.u32 5, %s21
      %s246 = smul.u32 72, %s21
      %p247 = scmp.lt.s32.totalorder %s246, 71
      %s248 = scalar_select %p247, %s246, 71
      %p249 = scmp.lt.s32.totalorder %s20, 0
      %s250 = scalar_select %p249, %s20, 0
      %s251 = sadd.s32 %s250, %s248
      %s252 = smul.addr %s251, 4
      %s253 = scalar_lea.vmem %s1, %s252
      %s254 = smul.u32 72, %s21
      %p255 = scmp.lt.s32.totalorder %s20, 0
      %s256 = scalar_select %p255, %s20, 0
      %s257 = scalar_lea.vmem %s2, %s256
      %s258 = smul.u32 32, %s19
      %p259 = scmp.lt.s32.totalorder %s258, 223
      %s260 = scalar_select %p259, %s258, 223
      %p261 = scmp.lt.s32.totalorder %s20, 0
      %s262 = scalar_select %p261, %s20, 0
      %s263 = sadd.s32 %s262, %s260
      %s264 = smul.addr %s263, 4
      %s265 = scalar_lea.vmem %s3, %s264
      %s266 = smul.u32 32, %s19
      %v268 = vld [vmem:[%s243] sm:$0xff]
      %v269 = vld [vmem:[%s243 + $0x8] sm:$0xff]
      %v270 = vld [vmem:[%s243 + $0x10] sm:$0xf]
      %v271 = vld [vmem:[%s243 + $0x14] sm:$0xff]
      %v272 = vld [vmem:[%s243 + $0x1c] sm:$0xff]
      %v273 = vld [vmem:[%s243 + $0x24] sm:$0xf]
      %v274 = vld [vmem:[%s243 + $0x28] sm:$0xff]
      %v275 = vld [vmem:[%s243 + $0x30] sm:$0xff]
      %v276 = vld [vmem:[%s243 + $0x38] sm:$0xf]
      %v277 = vld [vmem:[%s243 + $0x3c] sm:$0xff]
      %v278 = vld [vmem:[%s243 + $0x44] sm:$0xff]
      %v279 = vld [vmem:[%s243 + $0x4c] sm:$0xf]
      %v280 = vld [vmem:[%s243 + $0x50] sm:$0xff]
      %v281 = vld [vmem:[%s243 + $0x58] sm:$0xff]
      %v282 = vld [vmem:[%s243 + $0x60] sm:$0xf]
      %v283 = vld [vmem:[%s243 + $0x64] sm:$0xff]
      %v284 = vld [vmem:[%s243 + $0x6c] sm:$0xff]
      %v285 = vld [vmem:[%s243 + $0x74] sm:$0xf]
      %v286 = vld [vmem:[%s243 + $0x78] sm:$0xff]
      %v287 = vld [vmem:[%s243 + $0x80] sm:$0xff]
      %v288 = vld [vmem:[%s243 + $0x88] sm:$0xf]
      %v289 = vld [vmem:[%s243 + $0x8c] sm:$0xff]
      %v290 = vld [vmem:[%s243 + $0x94] sm:$0xff]
      %v291 = vld [vmem:[%s243 + $0x9c] sm:$0xf]
      %v292 = vld [vmem:[%s243 + $0xa0] sm:$0xff]
      %v293 = vld [vmem:[%s243 + $0xa8] sm:$0xff]
      %v294 = vld [vmem:[%s243 + $0xb0] sm:$0xf]
      %v295 = vld [vmem:[%s243 + $0xb4] sm:$0xff]
      %v296 = vld [vmem:[%s243 + $0xbc] sm:$0xff]
      %v297 = vld [vmem:[%s243 + $0xc4] sm:$0xf]
      %v298 = vld [vmem:[%s243 + $0xc8] sm:$0xff]
      %v299 = vld [vmem:[%s243 + $0xd0] sm:$0xff]
      %v300 = vld [vmem:[%s243 + $0xd8] sm:$0xf]
      %v301 = vld [vmem:[%s243 + $0xdc] sm:$0xff]
      %v302 = vld [vmem:[%s243 + $0xe4] sm:$0xff]
      %v303 = vld [vmem:[%s243 + $0xec] sm:$0xf]
      %v304 = vld [vmem:[%s243 + $0xf0] sm:$0xff]
      %v305 = vld [vmem:[%s243 + $0xf8] sm:$0xff]
      %v306 = vld [vmem:[%s243 + $0x100] sm:$0xf]
      %v307 = vld [vmem:[%s243 + $0x104] sm:$0xff]
      %v308 = vld [vmem:[%s243 + $0x10c] sm:$0xff]
      %v309 = vld [vmem:[%s243 + $0x114] sm:$0xf]
      %v310 = vld [vmem:[%s243 + $0x118] sm:$0xff]
      %v311 = vld [vmem:[%s243 + $0x120] sm:$0xff]
      %v312 = vld [vmem:[%s243 + $0x128] sm:$0xf]
      %v313 = vld [vmem:[%s243 + $0x12c] sm:$0xff]
      %v314 = vld [vmem:[%s243 + $0x134] sm:$0xff]
      %v315 = vld [vmem:[%s243 + $0x13c] sm:$0xf]
      %v316 = vld [vmem:[%s243 + $0x140] sm:$0xff]
      %v317 = vld [vmem:[%s243 + $0x148] sm:$0xff]
      %v318 = vld [vmem:[%s243 + $0x150] sm:$0xf]
      %v319 = vld [vmem:[%s243 + $0x154] sm:$0xff]
      %v320 = vld [vmem:[%s243 + $0x15c] sm:$0xff]
      %v321 = vld [vmem:[%s243 + $0x164] sm:$0xf]
      %v322 = vld [vmem:[%s243 + $0x168] sm:$0xff]
      %v323 = vld [vmem:[%s243 + $0x170] sm:$0xff]
      %v324 = vld [vmem:[%s243 + $0x178] sm:$0xf]
      %v325 = vld [vmem:[%s243 + $0x17c] sm:$0xff]
      %v326 = vld [vmem:[%s243 + $0x184] sm:$0xff]
      %v327 = vld [vmem:[%s243 + $0x18c] sm:$0xf]
      %v328 = vld [vmem:[%s243 + $0x190] sm:$0xff]
      %v329 = vld [vmem:[%s243 + $0x198] sm:$0xff]
      %v330 = vld [vmem:[%s243 + $0x1a0] sm:$0xf]
      %v331 = vld [vmem:[%s243 + $0x1a4] sm:$0xff]
      %v332 = vld [vmem:[%s243 + $0x1ac] sm:$0xff]
      %v333 = vld [vmem:[%s243 + $0x1b4] sm:$0xf]
      %v334 = vld [vmem:[%s243 + $0x1b8] sm:$0xff]
      %v335 = vld [vmem:[%s243 + $0x1c0] sm:$0xff]
      %v336 = vld [vmem:[%s243 + $0x1c8] sm:$0xf]
      %v337 = vld [vmem:[%s243 + $0x1cc] sm:$0xff]
      %v338 = vld [vmem:[%s243 + $0x1d4] sm:$0xff]
      %v339 = vld [vmem:[%s243 + $0x1dc] sm:$0xf]
      %v340 = vld [vmem:[%s243 + $0x1e0] sm:$0xff]
      %v341 = vld [vmem:[%s243 + $0x1e8] sm:$0xff]
      %v342 = vld [vmem:[%s243 + $0x1f0] sm:$0xf]
      %v343 = vld [vmem:[%s243 + $0x1f4] sm:$0xff]
      %v344 = vld [vmem:[%s243 + $0x1fc] sm:$0xff]
      %v345 = vld [vmem:[%s243 + $0x204] sm:$0xf]
      %v346 = vld [vmem:[%s243 + $0x208] sm:$0xff]
      %v347 = vld [vmem:[%s243 + $0x210] sm:$0xff]
      %v348 = vld [vmem:[%s243 + $0x218] sm:$0xf]
      %v349 = vld [vmem:[%s243 + $0x21c] sm:$0xff]
      %v350 = vld [vmem:[%s243 + $0x224] sm:$0xff]
      %v351 = vld [vmem:[%s243 + $0x22c] sm:$0xf]
      %v352 = vld [vmem:[%s243 + $0x230] sm:$0xff]
      %v353 = vld [vmem:[%s243 + $0x238] sm:$0xff]
      %v354 = vld [vmem:[%s243 + $0x240] sm:$0xf]
      %v355 = vld [vmem:[%s243 + $0x244] sm:$0xff]
      %v356 = vld [vmem:[%s243 + $0x24c] sm:$0xff]
      %v357 = vld [vmem:[%s243 + $0x254] sm:$0xf]
      %v358 = vld [vmem:[%s243 + $0x258] sm:$0xff]
      %v359 = vld [vmem:[%s243 + $0x260] sm:$0xff]
      %v360 = vld [vmem:[%s243 + $0x268] sm:$0xf]
      %v361 = vld [vmem:[%s243 + $0x26c] sm:$0xff]
      %v362 = vld [vmem:[%s243 + $0x274] sm:$0xff]
      %v363 = vld [vmem:[%s243 + $0x27c] sm:$0xf]
      %v364 = vld [vmem:[%s253] sm:$0xf]
      %v365 = vld [vmem:[%s253 + $0x4] sm:$0xf]
      %v366 = vld [vmem:[%s253 + $0x8] sm:$0xf]
      %v367 = vld [vmem:[%s253 + $0xc] sm:$0xf]
      %v368 = vld [vmem:[%s253 + $0x10] sm:$0xf]
      %v369 = vld [vmem:[%s253 + $0x14] sm:$0xf]
      %v370 = vld [vmem:[%s253 + $0x18] sm:$0xf]
      %v371 = vld [vmem:[%s253 + $0x1c] sm:$0xf]
      %v372 = vld [vmem:[%s253 + $0x20] sm:$0xf]
      %v373 = vld [vmem:[%s253 + $0x24] sm:$0xf]
      %v374 = vld [vmem:[%s253 + $0x28] sm:$0xf]
      %v375 = vld [vmem:[%s253 + $0x2c] sm:$0xf]
      %v376 = vld [vmem:[%s253 + $0x30] sm:$0xf]
      %v377 = vld [vmem:[%s253 + $0x34] sm:$0xf]
      %v378 = vld [vmem:[%s253 + $0x38] sm:$0xf]
      %v379 = vld [vmem:[%s253 + $0x3c] sm:$0xf]
      %v380 = vld [vmem:[%s253 + $0x40] sm:$0xf]
      %v381 = vld [vmem:[%s253 + $0x44] sm:$0xf]
      %v382 = vld [vmem:[%s253 + $0x48] sm:$0xf]
      %v383 = vld [vmem:[%s253 + $0x4c] sm:$0xf]
      %v384 = vld [vmem:[%s253 + $0x50] sm:$0xf]
      %v385 = vld [vmem:[%s253 + $0x54] sm:$0xf]
      %v386 = vld [vmem:[%s253 + $0x58] sm:$0xf]
      %v387 = vld [vmem:[%s253 + $0x5c] sm:$0xf]
      %v388 = vld [vmem:[%s253 + $0x60] sm:$0xf]
      %v389 = vld [vmem:[%s253 + $0x64] sm:$0xf]
      %v390 = vld [vmem:[%s253 + $0x68] sm:$0xf]
      %v391 = vld [vmem:[%s253 + $0x6c] sm:$0xf]
      %v392 = vld [vmem:[%s253 + $0x70] sm:$0xf]
      %v393 = vld [vmem:[%s253 + $0x74] sm:$0xf]
      %v394 = vld [vmem:[%s253 + $0x78] sm:$0xf]
      %v395 = vld [vmem:[%s253 + $0x7c] sm:$0xf]
      %v396 = vld [vmem:[%s253 + $0x80] sm:$0xf]
      %v397 = vld [vmem:[%s253 + $0x84] sm:$0xf]
      %v398 = vld [vmem:[%s253 + $0x88] sm:$0xf]
      %v399 = vld [vmem:[%s253 + $0x8c] sm:$0xf]
      %v400 = vld [vmem:[%s253 + $0x90] sm:$0xf]
      %v401 = vld [vmem:[%s253 + $0x94] sm:$0xf]
      %v402 = vld [vmem:[%s253 + $0x98] sm:$0xf]
      %v403 = vld [vmem:[%s253 + $0x9c] sm:$0xf]
      %v404 = vld [vmem:[%s253 + $0xa0] sm:$0xf]
      %v405 = vld [vmem:[%s253 + $0xa4] sm:$0xf]
      %v406 = vld [vmem:[%s253 + $0xa8] sm:$0xf]
      %v407 = vld [vmem:[%s253 + $0xac] sm:$0xf]
      %v408 = vld [vmem:[%s253 + $0xb0] sm:$0xf]
      %v409 = vld [vmem:[%s253 + $0xb4] sm:$0xf]
      %v410 = vld [vmem:[%s253 + $0xb8] sm:$0xf]
      %v411 = vld [vmem:[%s253 + $0xbc] sm:$0xf]
      %v412 = vld [vmem:[%s253 + $0xc0] sm:$0xf]
      %v413 = vld [vmem:[%s253 + $0xc4] sm:$0xf]
      %v414 = vld [vmem:[%s253 + $0xc8] sm:$0xf]
      %v415 = vld [vmem:[%s253 + $0xcc] sm:$0xf]
      %v416 = vld [vmem:[%s253 + $0xd0] sm:$0xf]
      %v417 = vld [vmem:[%s253 + $0xd4] sm:$0xf]
      %v418 = vld [vmem:[%s253 + $0xd8] sm:$0xf]
      %v419 = vld [vmem:[%s253 + $0xdc] sm:$0xf]
      %v420 = vld [vmem:[%s253 + $0xe0] sm:$0xf]
      %v421 = vld [vmem:[%s253 + $0xe4] sm:$0xf]
      %v422 = vld [vmem:[%s253 + $0xe8] sm:$0xf]
      %v423 = vld [vmem:[%s253 + $0xec] sm:$0xf]
      %v424 = vld [vmem:[%s253 + $0xf0] sm:$0xf]
      %v425 = vld [vmem:[%s253 + $0xf4] sm:$0xf]
      %v426 = vld [vmem:[%s253 + $0xf8] sm:$0xf]
      %v427 = vld [vmem:[%s253 + $0xfc] sm:$0xf]
      %v428 = vld [vmem:[%s253 + $0x100] sm:$0xf]
      %v429 = vld [vmem:[%s253 + $0x104] sm:$0xf]
      %v430 = vld [vmem:[%s253 + $0x108] sm:$0xf]
      %v431 = vld [vmem:[%s253 + $0x10c] sm:$0xf]
      %v432 = vld [vmem:[%s253 + $0x110] sm:$0xf]
      %v433 = vld [vmem:[%s253 + $0x114] sm:$0xf]
      %v434 = vld [vmem:[%s253 + $0x118] sm:$0xf]
      %v435 = vld [vmem:[%s253 + $0x11c] sm:$0xf]
      %v436 = vld [vmem:[%s257] sm:$0x1]
      %v438 = vlaneseq
      %v439 = vshrl.u32 %v438, 7
      %v440 = vsub.s32 0, %v439
      %v441 = vrot.slane %v436, %v440
      %v539 = vunpack.c.l.b16 %v268
      %v540 = vunpack.c.h.b16 %v268
      %v541 = vunpack.c.l.b16 %v269
      %v542 = vunpack.c.h.b16 %v269
      %v543 = vunpack.c.l.b16 %v270
      %v544 = vunpack.c.l.b16 %v271
      %v545 = vunpack.c.h.b16 %v271
      %v546 = vunpack.c.l.b16 %v272
      %v547 = vunpack.c.h.b16 %v272
      %v548 = vunpack.c.l.b16 %v273
      %v549 = vunpack.c.l.b16 %v274
      %v550 = vunpack.c.h.b16 %v274
      %v551 = vunpack.c.l.b16 %v275
      %v552 = vunpack.c.h.b16 %v275
      %v553 = vunpack.c.l.b16 %v276
      %v554 = vunpack.c.l.b16 %v277
      %v555 = vunpack.c.h.b16 %v277
      %v556 = vunpack.c.l.b16 %v278
      %v557 = vunpack.c.h.b16 %v278
      %v558 = vunpack.c.l.b16 %v279
      %v559 = vunpack.c.l.b16 %v280
      %v560 = vunpack.c.h.b16 %v280
      %v561 = vunpack.c.l.b16 %v281
      %v562 = vunpack.c.h.b16 %v281
      %v563 = vunpack.c.l.b16 %v282
      %v564 = vunpack.c.l.b16 %v283
      %v565 = vunpack.c.h.b16 %v283
      %v566 = vunpack.c.l.b16 %v284
      %v567 = vunpack.c.h.b16 %v284
      %v568 = vunpack.c.l.b16 %v285
      %v569 = vunpack.c.l.b16 %v286
      %v570 = vunpack.c.h.b16 %v286
      %v571 = vunpack.c.l.b16 %v287
      %v572 = vunpack.c.h.b16 %v287
      %v573 = vunpack.c.l.b16 %v288
      %v574 = vunpack.c.l.b16 %v289
      %v575 = vunpack.c.h.b16 %v289
      %v576 = vunpack.c.l.b16 %v290
      %v577 = vunpack.c.h.b16 %v290
      %v578 = vunpack.c.l.b16 %v291
      %v579 = vunpack.c.l.b16 %v292
      %v580 = vunpack.c.h.b16 %v292
      %v581 = vunpack.c.l.b16 %v293
      %v582 = vunpack.c.h.b16 %v293
      %v583 = vunpack.c.l.b16 %v294
      %v584 = vunpack.c.l.b16 %v295
      %v585 = vunpack.c.h.b16 %v295
      %v586 = vunpack.c.l.b16 %v296
      %v587 = vunpack.c.h.b16 %v296
      %v588 = vunpack.c.l.b16 %v297
      %v589 = vunpack.c.l.b16 %v298
      %v590 = vunpack.c.h.b16 %v298
      %v591 = vunpack.c.l.b16 %v299
      %v592 = vunpack.c.h.b16 %v299
      %v593 = vunpack.c.l.b16 %v300
      %v594 = vunpack.c.l.b16 %v301
      %v595 = vunpack.c.h.b16 %v301
      %v596 = vunpack.c.l.b16 %v302
      %v597 = vunpack.c.h.b16 %v302
      %v598 = vunpack.c.l.b16 %v303
      %v599 = vunpack.c.l.b16 %v304
      %v600 = vunpack.c.h.b16 %v304
      %v601 = vunpack.c.l.b16 %v305
      %v602 = vunpack.c.h.b16 %v305
      %v603 = vunpack.c.l.b16 %v306
      %v604 = vunpack.c.l.b16 %v307
      %v605 = vunpack.c.h.b16 %v307
      %v606 = vunpack.c.l.b16 %v308
      %v607 = vunpack.c.h.b16 %v308
      %v608 = vunpack.c.l.b16 %v309
      %v609 = vunpack.c.l.b16 %v310
      %v610 = vunpack.c.h.b16 %v310
      %v611 = vunpack.c.l.b16 %v311
      %v612 = vunpack.c.h.b16 %v311
      %v613 = vunpack.c.l.b16 %v312
      %v614 = vunpack.c.l.b16 %v313
      %v615 = vunpack.c.h.b16 %v313
      %v616 = vunpack.c.l.b16 %v314
      %v617 = vunpack.c.h.b16 %v314
      %v618 = vunpack.c.l.b16 %v315
      %v619 = vunpack.c.l.b16 %v316
      %v620 = vunpack.c.h.b16 %v316
      %v621 = vunpack.c.l.b16 %v317
      %v622 = vunpack.c.h.b16 %v317
      %v623 = vunpack.c.l.b16 %v318
      %v624 = vunpack.c.l.b16 %v319
      %v625 = vunpack.c.h.b16 %v319
      %v626 = vunpack.c.l.b16 %v320
      %v627 = vunpack.c.h.b16 %v320
      %v628 = vunpack.c.l.b16 %v321
      %v629 = vunpack.c.l.b16 %v322
      %v630 = vunpack.c.h.b16 %v322
      %v631 = vunpack.c.l.b16 %v323
      %v632 = vunpack.c.h.b16 %v323
      %v633 = vunpack.c.l.b16 %v324
      %v634 = vunpack.c.l.b16 %v325
      %v635 = vunpack.c.h.b16 %v325
      %v636 = vunpack.c.l.b16 %v326
      %v637 = vunpack.c.h.b16 %v326
      %v638 = vunpack.c.l.b16 %v327
      %v639 = vunpack.c.l.b16 %v328
      %v640 = vunpack.c.h.b16 %v328
      %v641 = vunpack.c.l.b16 %v329
      %v642 = vunpack.c.h.b16 %v329
      %v643 = vunpack.c.l.b16 %v330
      %v644 = vunpack.c.l.b16 %v331
      %v645 = vunpack.c.h.b16 %v331
      %v646 = vunpack.c.l.b16 %v332
      %v647 = vunpack.c.h.b16 %v332
      %v648 = vunpack.c.l.b16 %v333
      %v649 = vunpack.c.l.b16 %v334
      %v650 = vunpack.c.h.b16 %v334
      %v651 = vunpack.c.l.b16 %v335
      %v652 = vunpack.c.h.b16 %v335
      %v653 = vunpack.c.l.b16 %v336
      %v654 = vunpack.c.l.b16 %v337
      %v655 = vunpack.c.h.b16 %v337
      %v656 = vunpack.c.l.b16 %v338
      %v657 = vunpack.c.h.b16 %v338
      %v658 = vunpack.c.l.b16 %v339
      %v659 = vunpack.c.l.b16 %v340
      %v660 = vunpack.c.h.b16 %v340
      %v661 = vunpack.c.l.b16 %v341
      %v662 = vunpack.c.h.b16 %v341
      %v663 = vunpack.c.l.b16 %v342
      %v664 = vunpack.c.l.b16 %v343
      %v665 = vunpack.c.h.b16 %v343
      %v666 = vunpack.c.l.b16 %v344
      %v667 = vunpack.c.h.b16 %v344
      %v668 = vunpack.c.l.b16 %v345
      %v669 = vunpack.c.l.b16 %v346
      %v670 = vunpack.c.h.b16 %v346
      %v671 = vunpack.c.l.b16 %v347
      %v672 = vunpack.c.h.b16 %v347
      %v673 = vunpack.c.l.b16 %v348
      %v674 = vunpack.c.l.b16 %v349
      %v675 = vunpack.c.h.b16 %v349
      %v676 = vunpack.c.l.b16 %v350
      %v677 = vunpack.c.h.b16 %v350
      %v678 = vunpack.c.l.b16 %v351
      %v679 = vunpack.c.l.b16 %v352
      %v680 = vunpack.c.h.b16 %v352
      %v681 = vunpack.c.l.b16 %v353
      %v682 = vunpack.c.h.b16 %v353
      %v683 = vunpack.c.l.b16 %v354
      %v684 = vunpack.c.l.b16 %v355
      %v685 = vunpack.c.h.b16 %v355
      %v686 = vunpack.c.l.b16 %v356
      %v687 = vunpack.c.h.b16 %v356
      %v688 = vunpack.c.l.b16 %v357
      %v689 = vunpack.c.l.b16 %v358
      %v690 = vunpack.c.h.b16 %v358
      %v691 = vunpack.c.l.b16 %v359
      %v692 = vunpack.c.h.b16 %v359
      %v693 = vunpack.c.l.b16 %v360
      %v694 = vunpack.c.l.b16 %v361
      %v695 = vunpack.c.h.b16 %v361
      %v696 = vunpack.c.l.b16 %v362
      %v697 = vunpack.c.h.b16 %v362
      %v698 = vunpack.c.l.b16 %v363
      %v699 = vpack.c.b16 %v544, %v539
      %v700 = vpack.c.b16 %v545, %v540
      %v701 = vpack.c.b16 %v546, %v541
      %v702 = vpack.c.b16 %v547, %v542
      %v703 = vpack.c.b16 %v548, %v543
      %v704 = vpack.c.b16 %v554, %v549
      %v705 = vpack.c.b16 %v555, %v550
      %v706 = vpack.c.b16 %v556, %v551
      %v707 = vpack.c.b16 %v557, %v552
      %v708 = vpack.c.b16 %v558, %v553
      %v709 = vpack.c.b16 %v564, %v559
      %v710 = vpack.c.b16 %v565, %v560
      %v711 = vpack.c.b16 %v566, %v561
      %v712 = vpack.c.b16 %v567, %v562
      %v713 = vpack.c.b16 %v568, %v563
      %v714 = vpack.c.b16 %v574, %v569
      %v715 = vpack.c.b16 %v575, %v570
      %v716 = vpack.c.b16 %v576, %v571
      %v717 = vpack.c.b16 %v577, %v572
      %v718 = vpack.c.b16 %v578, %v573
      %v719 = vpack.c.b16 %v584, %v579
      %v720 = vpack.c.b16 %v585, %v580
      %v721 = vpack.c.b16 %v586, %v581
      %v722 = vpack.c.b16 %v587, %v582
      %v723 = vpack.c.b16 %v588, %v583
      %v724 = vpack.c.b16 %v594, %v589
      %v725 = vpack.c.b16 %v595, %v590
      %v726 = vpack.c.b16 %v596, %v591
      %v727 = vpack.c.b16 %v597, %v592
      %v728 = vpack.c.b16 %v598, %v593
      %v729 = vpack.c.b16 %v604, %v599
      %v730 = vpack.c.b16 %v605, %v600
      %v731 = vpack.c.b16 %v606, %v601
      %v732 = vpack.c.b16 %v607, %v602
      %v733 = vpack.c.b16 %v608, %v603
      %v734 = vpack.c.b16 %v614, %v609
      %v735 = vpack.c.b16 %v615, %v610
      %v736 = vpack.c.b16 %v616, %v611
      %v737 = vpack.c.b16 %v617, %v612
      %v738 = vpack.c.b16 %v618, %v613
      %v739 = vpack.c.b16 %v624, %v619
      %v740 = vpack.c.b16 %v625, %v620
      %v741 = vpack.c.b16 %v626, %v621
      %v742 = vpack.c.b16 %v627, %v622
      %v743 = vpack.c.b16 %v628, %v623
      %v744 = vpack.c.b16 %v634, %v629
      %v745 = vpack.c.b16 %v635, %v630
      %v746 = vpack.c.b16 %v636, %v631
      %v747 = vpack.c.b16 %v637, %v632
      %v748 = vpack.c.b16 %v638, %v633
      %v749 = vpack.c.b16 %v644, %v639
      %v750 = vpack.c.b16 %v645, %v640
      %v751 = vpack.c.b16 %v646, %v641
      %v752 = vpack.c.b16 %v647, %v642
      %v753 = vpack.c.b16 %v648, %v643
      %v754 = vpack.c.b16 %v654, %v649
      %v755 = vpack.c.b16 %v655, %v650
      %v756 = vpack.c.b16 %v656, %v651
      %v757 = vpack.c.b16 %v657, %v652
      %v758 = vpack.c.b16 %v658, %v653
      %v759 = vpack.c.b16 %v664, %v659
      %v760 = vpack.c.b16 %v665, %v660
      %v761 = vpack.c.b16 %v666, %v661
      %v762 = vpack.c.b16 %v667, %v662
      %v763 = vpack.c.b16 %v668, %v663
      %v764 = vpack.c.b16 %v674, %v669
      %v765 = vpack.c.b16 %v675, %v670
      %v766 = vpack.c.b16 %v676, %v671
      %v767 = vpack.c.b16 %v677, %v672
      %v768 = vpack.c.b16 %v678, %v673
      %v769 = vpack.c.b16 %v684, %v679
      %v770 = vpack.c.b16 %v685, %v680
      %v771 = vpack.c.b16 %v686, %v681
      %v772 = vpack.c.b16 %v687, %v682
      %v773 = vpack.c.b16 %v688, %v683
      %v774 = vpack.c.b16 %v694, %v689
      %v775 = vpack.c.b16 %v695, %v690
      %v776 = vpack.c.b16 %v696, %v691
      %v777 = vpack.c.b16 %v697, %v692
      %v778 = vpack.c.b16 %v698, %v693
      %v915 = vunpack.c.l.b16 %v364
      %v916 = vunpack.c.l.b16 %v365
      %v917 = vunpack.c.l.b16 %v366
      %v918 = vunpack.c.l.b16 %v367
      %v919 = vunpack.c.l.b16 %v368
      %v920 = vunpack.c.l.b16 %v369
      %v921 = vunpack.c.l.b16 %v370
      %v922 = vunpack.c.l.b16 %v371
      %v923 = vunpack.c.l.b16 %v372
      %v924 = vunpack.c.l.b16 %v373
      %v925 = vunpack.c.l.b16 %v374
      %v926 = vunpack.c.l.b16 %v375
      %v927 = vunpack.c.l.b16 %v376
      %v928 = vunpack.c.l.b16 %v377
      %v929 = vunpack.c.l.b16 %v378
      %v930 = vunpack.c.l.b16 %v379
      %v931 = vunpack.c.l.b16 %v380
      %v932 = vunpack.c.l.b16 %v381
      %v933 = vunpack.c.l.b16 %v382
      %v934 = vunpack.c.l.b16 %v383
      %v935 = vunpack.c.l.b16 %v384
      %v936 = vunpack.c.l.b16 %v385
      %v937 = vunpack.c.l.b16 %v386
      %v938 = vunpack.c.l.b16 %v387
      %v939 = vunpack.c.l.b16 %v388
      %v940 = vunpack.c.l.b16 %v389
      %v941 = vunpack.c.l.b16 %v390
      %v942 = vunpack.c.l.b16 %v391
      %v943 = vunpack.c.l.b16 %v392
      %v944 = vunpack.c.l.b16 %v393
      %v945 = vunpack.c.l.b16 %v394
      %v946 = vunpack.c.l.b16 %v395
      %v947 = vunpack.c.l.b16 %v396
      %v948 = vunpack.c.l.b16 %v397
      %v949 = vunpack.c.l.b16 %v398
      %v950 = vunpack.c.l.b16 %v399
      %v951 = vunpack.c.l.b16 %v400
      %v952 = vunpack.c.l.b16 %v401
      %v953 = vunpack.c.l.b16 %v402
      %v954 = vunpack.c.l.b16 %v403
      %v955 = vunpack.c.l.b16 %v404
      %v956 = vunpack.c.l.b16 %v405
      %v957 = vunpack.c.l.b16 %v406
      %v958 = vunpack.c.l.b16 %v407
      %v959 = vunpack.c.l.b16 %v408
      %v960 = vunpack.c.l.b16 %v409
      %v961 = vunpack.c.l.b16 %v410
      %v962 = vunpack.c.l.b16 %v411
      %v963 = vunpack.c.l.b16 %v412
      %v964 = vunpack.c.l.b16 %v413
      %v965 = vunpack.c.l.b16 %v414
      %v966 = vunpack.c.l.b16 %v415
      %v967 = vunpack.c.l.b16 %v416
      %v968 = vunpack.c.l.b16 %v417
      %v969 = vunpack.c.l.b16 %v418
      %v970 = vunpack.c.l.b16 %v419
      %v971 = vunpack.c.l.b16 %v420
      %v972 = vunpack.c.l.b16 %v421
      %v973 = vunpack.c.l.b16 %v422
      %v974 = vunpack.c.l.b16 %v423
      %v975 = vunpack.c.l.b16 %v424
      %v976 = vunpack.c.l.b16 %v425
      %v977 = vunpack.c.l.b16 %v426
      %v978 = vunpack.c.l.b16 %v427
      %v979 = vunpack.c.l.b16 %v428
      %v980 = vunpack.c.l.b16 %v429
      %v981 = vunpack.c.l.b16 %v430
      %v982 = vunpack.c.l.b16 %v431
      %v983 = vunpack.c.l.b16 %v432
      %v984 = vunpack.c.l.b16 %v433
      %v985 = vunpack.c.l.b16 %v434
      %v986 = vunpack.c.l.b16 %v435
      %v987 = vpack.c.b16 %v916, %v915
      %v988 = vpack.c.b16 %v918, %v917
      %v989 = vpack.c.b16 %v920, %v919
      %v990 = vpack.c.b16 %v922, %v921
      %v991 = vpack.c.b16 %v924, %v923
      %v992 = vpack.c.b16 %v926, %v925
      %v993 = vpack.c.b16 %v928, %v927
      %v994 = vpack.c.b16 %v930, %v929
      %v995 = vpack.c.b16 %v932, %v931
      %v996 = vpack.c.b16 %v934, %v933
      %v997 = vpack.c.b16 %v936, %v935
      %v998 = vpack.c.b16 %v938, %v937
      %v999 = vpack.c.b16 %v940, %v939
      %v1000 = vpack.c.b16 %v942, %v941
      %v1001 = vpack.c.b16 %v944, %v943
      %v1002 = vpack.c.b16 %v946, %v945
      %v1003 = vpack.c.b16 %v948, %v947
      %v1004 = vpack.c.b16 %v950, %v949
      %v1005 = vpack.c.b16 %v952, %v951
      %v1006 = vpack.c.b16 %v954, %v953
      %v1007 = vpack.c.b16 %v956, %v955
      %v1008 = vpack.c.b16 %v958, %v957
      %v1009 = vpack.c.b16 %v960, %v959
      %v1010 = vpack.c.b16 %v962, %v961
      %v1011 = vpack.c.b16 %v964, %v963
      %v1012 = vpack.c.b16 %v966, %v965
      %v1013 = vpack.c.b16 %v968, %v967
      %v1014 = vpack.c.b16 %v970, %v969
      %v1015 = vpack.c.b16 %v972, %v971
      %v1016 = vpack.c.b16 %v974, %v973
      %v1017 = vpack.c.b16 %v976, %v975
      %v1018 = vpack.c.b16 %v978, %v977
      %v1019 = vpack.c.b16 %v980, %v979
      %v1020 = vpack.c.b16 %v982, %v981
      %v1021 = vpack.c.b16 %v984, %v983
      %v1022 = vpack.c.b16 %v986, %v985
      %vm1059 = vcmask 523264
      %v1061 = vsel %vm1059, %v703, 0
      %v1064 = vsel %vm1059, %v708, 0
      %v1067 = vsel %vm1059, %v713, 0
      %v1070 = vsel %vm1059, %v718, 0
      %v1073 = vsel %vm1059, %v723, 0
      %v1076 = vsel %vm1059, %v728, 0
      %v1079 = vsel %vm1059, %v733, 0
      %v1082 = vsel %vm1059, %v738, 0
      %v1085 = vsel %vm1059, %v743, 0
      %v1088 = vsel %vm1059, %v748, 0
      %v1091 = vsel %vm1059, %v753, 0
      %v1094 = vsel %vm1059, %v758, 0
      %v1097 = vsel %vm1059, %v763, 0
      %v1100 = vsel %vm1059, %v768, 0
      %v1103 = vsel %vm1059, %v773, 0
      %v1106 = vsel %vm1059, %v778, 0
      %1108 = vmatprep.subr.bf16.mxu0 0
      %1109 = vmatpush1.bf16.msra.mxu0 %v987
      %1110 = vmatprep.subr.bf16.mxu0 0
      %1111 = vmatpush1.bf16.msra.mxu0 %v988
      %1112 = vmatprep.subr.bf16.mxu0 0
      %1113 = vmatpush1.bf16.msra.mxu0 %v989
      %1114 = vmatprep.subr.bf16.mxu0 0
      %1115 = vmatpush1.bf16.msra.mxu0 %v990
      %1116 = vmatprep.subr.bf16.mxu0 0
      %1117 = vmatpush1.bf16.msra.mxu0 %v991
      %1118 = vmatprep.subr.bf16.mxu0 0
      %1119 = vmatpush1.bf16.msra.mxu0 %v992
      %1120 = vmatprep.subr.bf16.mxu0 0
      %1121 = vmatpush1.bf16.msra.mxu0 %v993
      %1122 = vmatprep.subr.bf16.mxu0 0
      %1123 = vmatpush1.bf16.msra.mxu0 %v994
      %1124 = vmatprep.subr.bf16.mxu0 0
      %1125 = vmatpush1.bf16.msra.mxu0 %v995
      %1126 = vmatprep.subr.bf16.mxu0 0
      %1127 = vmatpush1.bf16.msra.mxu0 %v996
      %1128 = vmatprep.subr.bf16.mxu0 0
      %1129 = vmatpush1.bf16.msra.mxu0 %v997
      %1130 = vmatprep.subr.bf16.mxu0 0
      %1131 = vmatpush1.bf16.msra.mxu0 %v998
      %1132 = vmatprep.subr.bf16.mxu0 0
      %1133 = vmatpush1.bf16.msra.mxu0 %v999
      %1134 = vmatprep.subr.bf16.mxu0 0
      %1135 = vmatpush1.bf16.msra.mxu0 %v1000
      %1136 = vmatprep.subr.bf16.mxu0 0
      %1137 = vmatpush1.bf16.msra.mxu0 %v1001
      %1138 = vmatprep.subr.bf16.mxu0 0
      %1139 = vmatpush1.bf16.msra.mxu0 %v1002
      %1140 = vmatprep.mubr.bf16.mxu0 %v700
      %1141 = vmatmul.mubr.bf16.gmra.mrb[0].mxu0 %v699
      %v1142 = vpop.f32.mrb[0].mxu0
      %v1143 = vadd.f32 %v441, %v1142
      %v1144 = vpop.f32.mrb[0].mxu0
      %v1145 = vpop.f32.mrb[0].mxu0
      %v1146 = vadd.f32 %v441, %v1145
      %v1147 = vpop.f32.mrb[0].mxu0
      %1148 = vmatprep.mubr.bf16.mxu0 %v705
      %1149 = vmatmul.mubr.bf16.gmra.mrb[0].mxu0 %v704
      %v1150 = vpop.f32.mrb[0].mxu0
      %v1151 = vadd.f32 %v441, %v1150
      %v1152 = vpop.f32.mrb[0].mxu0
      %v1153 = vpop.f32.mrb[0].mxu0
      %v1154 = vadd.f32 %v441, %v1153
      %v1155 = vpop.f32.mrb[0].mxu0
      %1156 = vmatprep.mubr.bf16.mxu0 %v710
      %1157 = vmatmul.mubr.bf16.gmra.mrb[0].mxu0 %v709
      %v1158 = vpop.f32.mrb[0].mxu0
      %v1159 = vadd.f32 %v441, %v1158
      %v1160 = vpop.f32.mrb[0].mxu0
      %v1161 = vpop.f32.mrb[0].mxu0
      %v1162 = vadd.f32 %v441, %v1161
      %v1163 = vpop.f32.mrb[0].mxu0
      %1164 = vmatprep.mubr.bf16.mxu0 %v715
      %1165 = vmatmul.mubr.bf16.gmra.mrb[0].mxu0 %v714
      %v1166 = vpop.f32.mrb[0].mxu0
      %v1167 = vadd.f32 %v441, %v1166
      %v1168 = vpop.f32.mrb[0].mxu0
      %v1169 = vpop.f32.mrb[0].mxu0
      %v1170 = vadd.f32 %v441, %v1169
      %v1171 = vpop.f32.mrb[0].mxu0
      %1172 = vmatprep.mubr.bf16.mxu0 %v720
      %1173 = vmatmul.mubr.bf16.gmra.mrb[0].mxu0 %v719
      %v1174 = vpop.f32.mrb[0].mxu0
      %v1175 = vadd.f32 %v441, %v1174
      %v1176 = vpop.f32.mrb[0].mxu0
      %v1177 = vpop.f32.mrb[0].mxu0
      %v1178 = vadd.f32 %v441, %v1177
      %v1179 = vpop.f32.mrb[0].mxu0
      %1180 = vmatprep.mubr.bf16.mxu0 %v725
      %1181 = vmatmul.mubr.bf16.gmra.mrb[0].mxu0 %v724
      %v1182 = vpop.f32.mrb[0].mxu0
      %v1183 = vadd.f32 %v441, %v1182
      %v1184 = vpop.f32.mrb[0].mxu0
      %v1185 = vpop.f32.mrb[0].mxu0
      %v1186 = vadd.f32 %v441, %v1185
      %v1187 = vpop.f32.mrb[0].mxu0
      %1188 = vmatprep.mubr.bf16.mxu0 %v730
      %1189 = vmatmul.mubr.bf16.gmra.mrb[0].mxu0 %v729
      %v1190 = vpop.f32.mrb[0].mxu0
      %v1191 = vadd.f32 %v441, %v1190
      %v1192 = vpop.f32.mrb[0].mxu0
      %v1193 = vpop.f32.mrb[0].mxu0
      %v1194 = vadd.f32 %v441, %v1193
      %v1195 = vpop.f32.mrb[0].mxu0
      %1196 = vmatprep.mubr.bf16.mxu0 %v735
      %1197 = vmatmul.mubr.bf16.gmra.mrb[0].mxu0 %v734
      %v1198 = vpop.f32.mrb[0].mxu0
      %v1199 = vadd.f32 %v441, %v1198
      %v1200 = vpop.f32.mrb[0].mxu0
      %v1201 = vpop.f32.mrb[0].mxu0
      %v1202 = vadd.f32 %v441, %v1201
      %v1203 = vpop.f32.mrb[0].mxu0
      %1204 = vmatprep.mubr.bf16.mxu0 %v740
      %1205 = vmatmul.mubr.bf16.gmra.mrb[0].mxu0 %v739
      %v1206 = vpop.f32.mrb[0].mxu0
      %v1207 = vadd.f32 %v441, %v1206
      %v1208 = vpop.f32.mrb[0].mxu0
      %v1209 = vpop.f32.mrb[0].mxu0
      %v1210 = vadd.f32 %v441, %v1209
      %v1211 = vpop.f32.mrb[0].mxu0
      %1212 = vmatprep.mubr.bf16.mxu0 %v745
      %1213 = vmatmul.mubr.bf16.gmra.mrb[0].mxu0 %v744
      %v1214 = vpop.f32.mrb[0].mxu0
      %v1215 = vadd.f32 %v441, %v1214
      %v1216 = vpop.f32.mrb[0].mxu0
      %v1217 = vpop.f32.mrb[0].mxu0
      %v1218 = vadd.f32 %v441, %v1217
      %v1219 = vpop.f32.mrb[0].mxu0
      %1220 = vmatprep.mubr.bf16.mxu0 %v750
      %1221 = vmatmul.mubr.bf16.gmra.mrb[0].mxu0 %v749
      %v1222 = vpop.f32.mrb[0].mxu0
      %v1223 = vadd.f32 %v441, %v1222
      %v1224 = vpop.f32.mrb[0].mxu0
      %v1225 = vpop.f32.mrb[0].mxu0
      %v1226 = vadd.f32 %v441, %v1225
      %v1227 = vpop.f32.mrb[0].mxu0
      %1228 = vmatprep.mubr.bf16.mxu0 %v755
      %1229 = vmatmul.mubr.bf16.gmra.mrb[0].mxu0 %v754
      %v1230 = vpop.f32.mrb[0].mxu0
      %v1231 = vadd.f32 %v441, %v1230
      %v1232 = vpop.f32.mrb[0].mxu0
      %v1233 = vpop.f32.mrb[0].mxu0
      %v1234 = vadd.f32 %v441, %v1233
      %v1235 = vpop.f32.mrb[0].mxu0
      %1236 = vmatprep.mubr.bf16.mxu0 %v760
      %1237 = vmatmul.mubr.bf16.gmra.mrb[0].mxu0 %v759
      %v1238 = vpop.f32.mrb[0].mxu0
      %v1239 = vadd.f32 %v441, %v1238
      %v1240 = vpop.f32.mrb[0].mxu0
      %v1241 = vpop.f32.mrb[0].mxu0
      %v1242 = vadd.f32 %v441, %v1241
      %v1243 = vpop.f32.mrb[0].mxu0
      %1244 = vmatprep.mubr.bf16.mxu0 %v765
      %1245 = vmatmul.mubr.bf16.gmra.mrb[0].mxu0 %v764
      %v1246 = vpop.f32.mrb[0].mxu0
      %v1247 = vadd.f32 %v441, %v1246
      %v1248 = vpop.f32.mrb[0].mxu0
      %v1249 = vpop.f32.mrb[0].mxu0
      %v1250 = vadd.f32 %v441, %v1249
      %v1251 = vpop.f32.mrb[0].mxu0
      %1252 = vmatprep.mubr.bf16.mxu0 %v770
      %1253 = vmatmul.mubr.bf16.gmra.mrb[0].mxu0 %v769
      %v1254 = vpop.f32.mrb[0].mxu0
      %v1255 = vadd.f32 %v441, %v1254
      %v1256 = vpop.f32.mrb[0].mxu0
      %v1257 = vpop.f32.mrb[0].mxu0
      %v1258 = vadd.f32 %v441, %v1257
      %v1259 = vpop.f32.mrb[0].mxu0
      %1260 = vmatprep.mubr.bf16.mxu0 %v775
      %1261 = vmatmul.mubr.bf16.gmra.mrb[0].mxu0 %v774
      %v1262 = vpop.f32.mrb[0].mxu0
      %v1263 = vadd.f32 %v441, %v1262
      %v1264 = vpop.f32.mrb[0].mxu0
      %v1265 = vpop.f32.mrb[0].mxu0
      %v1266 = vadd.f32 %v441, %v1265
      %v1267 = vpop.f32.mrb[0].mxu0
      %1268 = vdwg.mxu0
      %1269 = vmatprep.subr.bf16.mxu0 0
      %1270 = vmatpush1.bf16.msra.mxu0 %v1003
      %1271 = vmatprep.subr.bf16.mxu0 0
      %1272 = vmatpush1.bf16.msra.mxu0 %v1004
      %1273 = vmatprep.subr.bf16.mxu0 0
      %1274 = vmatpush1.bf16.msra.mxu0 %v1005
      %1275 = vmatprep.subr.bf16.mxu0 0
      %1276 = vmatpush1.bf16.msra.mxu0 %v1006
      %1277 = vmatprep.subr.bf16.mxu0 0
      %1278 = vmatpush1.bf16.msra.mxu0 %v1007
      %1279 = vmatprep.subr.bf16.mxu0 0
      %1280 = vmatpush1.bf16.msra.mxu0 %v1008
      %1281 = vmatprep.subr.bf16.mxu0 0
      %1282 = vmatpush1.bf16.msra.mxu0 %v1009
      %1283 = vmatprep.subr.bf16.mxu0 0
      %1284 = vmatpush1.bf16.msra.mxu0 %v1010
      %1285 = vmatprep.subr.bf16.mxu0 0
      %1286 = vmatpush1.bf16.msra.mxu0 %v1011
      %1287 = vmatprep.subr.bf16.mxu0 0
      %1288 = vmatpush1.bf16.msra.mxu0 %v1012
      %1289 = vmatprep.subr.bf16.mxu0 0
      %1290 = vmatpush1.bf16.msra.mxu0 %v1013
      %1291 = vmatprep.subr.bf16.mxu0 0
      %1292 = vmatpush1.bf16.msra.mxu0 %v1014
      %1293 = vmatprep.subr.bf16.mxu0 0
      %1294 = vmatpush1.bf16.msra.mxu0 %v1015
      %1295 = vmatprep.subr.bf16.mxu0 0
      %1296 = vmatpush1.bf16.msra.mxu0 %v1016
      %1297 = vmatprep.subr.bf16.mxu0 0
      %1298 = vmatpush1.bf16.msra.mxu0 %v1017
      %1299 = vmatprep.subr.bf16.mxu0 0
      %1300 = vmatpush1.bf16.msra.mxu0 %v1018
      %1301 = vmatprep.mubr.bf16.mxu0 %v702
      %1302 = vmatmul.mubr.bf16.gmra.mrb[0].mxu0 %v701
      %v1303 = vpop.f32.mrb[0].mxu0
      %v1304 = vadd.f32 %v1143, %v1303
      %v1305 = vpop.f32.mrb[0].mxu0
      %v1306 = vpop.f32.mrb[0].mxu0
      %v1307 = vadd.f32 %v1146, %v1306
      %v1308 = vpop.f32.mrb[0].mxu0
      %1309 = vmatprep.mubr.bf16.mxu0 %v707
      %1310 = vmatmul.mubr.bf16.gmra.mrb[0].mxu0 %v706
      %v1311 = vpop.f32.mrb[0].mxu0
      %v1312 = vadd.f32 %v1151, %v1311
      %v1313 = vpop.f32.mrb[0].mxu0
      %v1314 = vpop.f32.mrb[0].mxu0
      %v1315 = vadd.f32 %v1154, %v1314
      %v1316 = vpop.f32.mrb[0].mxu0
      %1317 = vmatprep.mubr.bf16.mxu0 %v712
      %1318 = vmatmul.mubr.bf16.gmra.mrb[0].mxu0 %v711
      %v1319 = vpop.f32.mrb[0].mxu0
      %v1320 = vadd.f32 %v1159, %v1319
      %v1321 = vpop.f32.mrb[0].mxu0
      %v1322 = vpop.f32.mrb[0].mxu0
      %v1323 = vadd.f32 %v1162, %v1322
      %v1324 = vpop.f32.mrb[0].mxu0
      %1325 = vmatprep.mubr.bf16.mxu0 %v717
      %1326 = vmatmul.mubr.bf16.gmra.mrb[0].mxu0 %v716
      %v1327 = vpop.f32.mrb[0].mxu0
      %v1328 = vadd.f32 %v1167, %v1327
      %v1329 = vpop.f32.mrb[0].mxu0
      %v1330 = vpop.f32.mrb[0].mxu0
      %v1331 = vadd.f32 %v1170, %v1330
      %v1332 = vpop.f32.mrb[0].mxu0
      %1333 = vmatprep.mubr.bf16.mxu0 %v722
      %1334 = vmatmul.mubr.bf16.gmra.mrb[0].mxu0 %v721
      %v1335 = vpop.f32.mrb[0].mxu0
      %v1336 = vadd.f32 %v1175, %v1335
      %v1337 = vpop.f32.mrb[0].mxu0
      %v1338 = vpop.f32.mrb[0].mxu0
      %v1339 = vadd.f32 %v1178, %v1338
      %v1340 = vpop.f32.mrb[0].mxu0
      %1341 = vmatprep.mubr.bf16.mxu0 %v727
      %1342 = vmatmul.mubr.bf16.gmra.mrb[0].mxu0 %v726
      %v1343 = vpop.f32.mrb[0].mxu0
      %v1344 = vadd.f32 %v1183, %v1343
      %v1345 = vpop.f32.mrb[0].mxu0
      %v1346 = vpop.f32.mrb[0].mxu0
      %v1347 = vadd.f32 %v1186, %v1346
      %v1348 = vpop.f32.mrb[0].mxu0
      %1349 = vmatprep.mubr.bf16.mxu0 %v732
      %1350 = vmatmul.mubr.bf16.gmra.mrb[0].mxu0 %v731
      %v1351 = vpop.f32.mrb[0].mxu0
      %v1352 = vadd.f32 %v1191, %v1351
      %v1353 = vpop.f32.mrb[0].mxu0
      %v1354 = vpop.f32.mrb[0].mxu0
      %v1355 = vadd.f32 %v1194, %v1354
      %v1356 = vpop.f32.mrb[0].mxu0
      %1357 = vmatprep.mubr.bf16.mxu0 %v737
      %1358 = vmatmul.mubr.bf16.gmra.mrb[0].mxu0 %v736
      %v1359 = vpop.f32.mrb[0].mxu0
      %v1360 = vadd.f32 %v1199, %v1359
      %v1361 = vpop.f32.mrb[0].mxu0
      %v1362 = vpop.f32.mrb[0].mxu0
      %v1363 = vadd.f32 %v1202, %v1362
      %v1364 = vpop.f32.mrb[0].mxu0
      %1365 = vmatprep.mubr.bf16.mxu0 %v742
      %1366 = vmatmul.mubr.bf16.gmra.mrb[0].mxu0 %v741
      %v1367 = vpop.f32.mrb[0].mxu0
      %v1368 = vadd.f32 %v1207, %v1367
      %v1369 = vpop.f32.mrb[0].mxu0
      %v1370 = vpop.f32.mrb[0].mxu0
      %v1371 = vadd.f32 %v1210, %v1370
      %v1372 = vpop.f32.mrb[0].mxu0
      %1373 = vmatprep.mubr.bf16.mxu0 %v747
      %1374 = vmatmul.mubr.bf16.gmra.mrb[0].mxu0 %v746
      %v1375 = vpop.f32.mrb[0].mxu0
      %v1376 = vadd.f32 %v1215, %v1375
      %v1377 = vpop.f32.mrb[0].mxu0
      %v1378 = vpop.f32.mrb[0].mxu0
      %v1379 = vadd.f32 %v1218, %v1378
      %v1380 = vpop.f32.mrb[0].mxu0
      %1381 = vmatprep.mubr.bf16.mxu0 %v752
      %1382 = vmatmul.mubr.bf16.gmra.mrb[0].mxu0 %v751
      %v1383 = vpop.f32.mrb[0].mxu0
      %v1384 = vadd.f32 %v1223, %v1383
      %v1385 = vpop.f32.mrb[0].mxu0
      %v1386 = vpop.f32.mrb[0].mxu0
      %v1387 = vadd.f32 %v1226, %v1386
      %v1388 = vpop.f32.mrb[0].mxu0
      %1389 = vmatprep.mubr.bf16.mxu0 %v757
      %1390 = vmatmul.mubr.bf16.gmra.mrb[0].mxu0 %v756
      %v1391 = vpop.f32.mrb[0].mxu0
      %v1392 = vadd.f32 %v1231, %v1391
      %v1393 = vpop.f32.mrb[0].mxu0
      %v1394 = vpop.f32.mrb[0].mxu0
      %v1395 = vadd.f32 %v1234, %v1394
      %v1396 = vpop.f32.mrb[0].mxu0
      %1397 = vmatprep.mubr.bf16.mxu0 %v762
      %1398 = vmatmul.mubr.bf16.gmra.mrb[0].mxu0 %v761
      %v1399 = vpop.f32.mrb[0].mxu0
      %v1400 = vadd.f32 %v1239, %v1399
      %v1401 = vpop.f32.mrb[0].mxu0
      %v1402 = vpop.f32.mrb[0].mxu0
      %v1403 = vadd.f32 %v1242, %v1402
      %v1404 = vpop.f32.mrb[0].mxu0
      %1405 = vmatprep.mubr.bf16.mxu0 %v767
      %1406 = vmatmul.mubr.bf16.gmra.mrb[0].mxu0 %v766
      %v1407 = vpop.f32.mrb[0].mxu0
      %v1408 = vadd.f32 %v1247, %v1407
      %v1409 = vpop.f32.mrb[0].mxu0
      %v1410 = vpop.f32.mrb[0].mxu0
      %v1411 = vadd.f32 %v1250, %v1410
      %v1412 = vpop.f32.mrb[0].mxu0
      %1413 = vmatprep.mubr.bf16.mxu0 %v772
      %1414 = vmatmul.mubr.bf16.gmra.mrb[0].mxu0 %v771
      %v1415 = vpop.f32.mrb[0].mxu0
      %v1416 = vadd.f32 %v1255, %v1415
      %v1417 = vpop.f32.mrb[0].mxu0
      %v1418 = vpop.f32.mrb[0].mxu0
      %v1419 = vadd.f32 %v1258, %v1418
      %v1420 = vpop.f32.mrb[0].mxu0
      %1421 = vmatprep.mubr.bf16.mxu0 %v777
      %1422 = vmatmul.mubr.bf16.gmra.mrb[0].mxu0 %v776
      %v1423 = vpop.f32.mrb[0].mxu0
      %v1424 = vadd.f32 %v1263, %v1423
      %v1425 = vpop.f32.mrb[0].mxu0
      %v1426 = vpop.f32.mrb[0].mxu0
      %v1427 = vadd.f32 %v1266, %v1426
      %v1428 = vpop.f32.mrb[0].mxu0
      %1429 = vdwg.mxu0
      %1430 = vmatprep.subr.bf16.mxu0 0
      %1431 = vmatpush1.bf16.msra.mxu0 %v1019
      %1432 = vmatprep.subr.bf16.mxu0 0
      %1433 = vmatpush1.bf16.msra.mxu0 %v1020
      %1434 = vmatprep.subr.bf16.mxu0 0
      %1435 = vmatpush1.bf16.msra.mxu0 %v1021
      %1436 = vmatprep.subr.bf16.mxu0 0
      %1437 = vmatpush1.bf16.msra.mxu0 %v1022
      %1438 = vmatprep.subr.bf16.mxu0 0
      %1439 = vmatpush1.bf16.msra.mxu0 0
      %1440 = vmatprep.subr.bf16.mxu0 0
      %1441 = vmatpush1.bf16.msra.mxu0 0
      %1442 = vmatprep.subr.bf16.mxu0 0
      %1443 = vmatpush1.bf16.msra.mxu0 0
      %1444 = vmatprep.subr.bf16.mxu0 0
      %1445 = vmatpush1.bf16.msra.mxu0 0
      %1446 = vmatprep.subr.bf16.mxu0 0
      %1447 = vmatpush1.bf16.msra.mxu0 0
      %1448 = vmatprep.subr.bf16.mxu0 0
      %1449 = vmatpush1.bf16.msra.mxu0 0
      %1450 = vmatprep.subr.bf16.mxu0 0
      %1451 = vmatpush1.bf16.msra.mxu0 0
      %1452 = vmatprep.subr.bf16.mxu0 0
      %1453 = vmatpush1.bf16.msra.mxu0 0
      %1454 = vmatprep.subr.bf16.mxu0 0
      %1455 = vmatpush1.bf16.msra.mxu0 0
      %1456 = vmatprep.subr.bf16.mxu0 0
      %1457 = vmatpush1.bf16.msra.mxu0 0
      %1458 = vmatprep.subr.bf16.mxu0 0
      %1459 = vmatpush1.bf16.msra.mxu0 0
      %1460 = vmatprep.subr.bf16.mxu0 0
      %1461 = vmatpush1.bf16.msra.mxu0 0
      %1462 = vmatprep.mubr.bf16.mxu0 0
      %1463 = vmatmul.mubr.bf16.gmra.mrb[0].mxu0 %v1061
      %v1464 = vpop.f32.mrb[0].mxu0
      %v1465 = vadd.f32 %v1304, %v1464
      %v1466 = vpop.f32.mrb[0].mxu0
      %v1467 = vpop.f32.mrb[0].mxu0
      %v1468 = vadd.f32 %v1307, %v1467
      %v1469 = vpop.f32.mrb[0].mxu0
      %1470 = vmatprep.mubr.bf16.mxu0 0
      %1471 = vmatmul.mubr.bf16.gmra.mrb[0].mxu0 %v1064
      %v1472 = vpop.f32.mrb[0].mxu0
      %v1473 = vadd.f32 %v1312, %v1472
      %v1474 = vpop.f32.mrb[0].mxu0
      %v1475 = vpop.f32.mrb[0].mxu0
      %v1476 = vadd.f32 %v1315, %v1475
      %v1477 = vpop.f32.mrb[0].mxu0
      %1478 = vmatprep.mubr.bf16.mxu0 0
      %1479 = vmatmul.mubr.bf16.gmra.mrb[0].mxu0 %v1067
      %v1480 = vpop.f32.mrb[0].mxu0
      %v1481 = vadd.f32 %v1320, %v1480
      %v1482 = vpop.f32.mrb[0].mxu0
      %v1483 = vpop.f32.mrb[0].mxu0
      %v1484 = vadd.f32 %v1323, %v1483
      %v1485 = vpop.f32.mrb[0].mxu0
      %1486 = vmatprep.mubr.bf16.mxu0 0
      %1487 = vmatmul.mubr.bf16.gmra.mrb[0].mxu0 %v1070
      %v1488 = vpop.f32.mrb[0].mxu0
      %v1489 = vadd.f32 %v1328, %v1488
      %v1490 = vpop.f32.mrb[0].mxu0
      %v1491 = vpop.f32.mrb[0].mxu0
      %v1492 = vadd.f32 %v1331, %v1491
      %v1493 = vpop.f32.mrb[0].mxu0
      %1494 = vmatprep.mubr.bf16.mxu0 0
      %1495 = vmatmul.mubr.bf16.gmra.mrb[0].mxu0 %v1073
      %v1496 = vpop.f32.mrb[0].mxu0
      %v1497 = vadd.f32 %v1336, %v1496
      %v1498 = vpop.f32.mrb[0].mxu0
      %v1499 = vpop.f32.mrb[0].mxu0
      %v1500 = vadd.f32 %v1339, %v1499
      %v1501 = vpop.f32.mrb[0].mxu0
      %1502 = vmatprep.mubr.bf16.mxu0 0
      %1503 = vmatmul.mubr.bf16.gmra.mrb[0].mxu0 %v1076
      %v1504 = vpop.f32.mrb[0].mxu0
      %v1505 = vadd.f32 %v1344, %v1504
      %v1506 = vpop.f32.mrb[0].mxu0
      %v1507 = vpop.f32.mrb[0].mxu0
      %v1508 = vadd.f32 %v1347, %v1507
      %v1509 = vpop.f32.mrb[0].mxu0
      %1510 = vmatprep.mubr.bf16.mxu0 0
      %1511 = vmatmul.mubr.bf16.gmra.mrb[0].mxu0 %v1079
      %v1512 = vpop.f32.mrb[0].mxu0
      %v1513 = vadd.f32 %v1352, %v1512
      %v1514 = vpop.f32.mrb[0].mxu0
      %v1515 = vpop.f32.mrb[0].mxu0
      %v1516 = vadd.f32 %v1355, %v1515
      %v1517 = vpop.f32.mrb[0].mxu0
      %1518 = vmatprep.mubr.bf16.mxu0 0
      %1519 = vmatmul.mubr.bf16.gmra.mrb[0].mxu0 %v1082
      %v1520 = vpop.f32.mrb[0].mxu0
      %v1521 = vadd.f32 %v1360, %v1520
      %v1522 = vpop.f32.mrb[0].mxu0
      %v1523 = vpop.f32.mrb[0].mxu0
      %v1524 = vadd.f32 %v1363, %v1523
      %v1525 = vpop.f32.mrb[0].mxu0
      %1526 = vmatprep.mubr.bf16.mxu0 0
      %1527 = vmatmul.mubr.bf16.gmra.mrb[0].mxu0 %v1085
      %v1528 = vpop.f32.mrb[0].mxu0
      %v1529 = vadd.f32 %v1368, %v1528
      %v1530 = vpop.f32.mrb[0].mxu0
      %v1531 = vpop.f32.mrb[0].mxu0
      %v1532 = vadd.f32 %v1371, %v1531
      %v1533 = vpop.f32.mrb[0].mxu0
      %1534 = vmatprep.mubr.bf16.mxu0 0
      %1535 = vmatmul.mubr.bf16.gmra.mrb[0].mxu0 %v1088
      %v1536 = vpop.f32.mrb[0].mxu0
      %v1537 = vadd.f32 %v1376, %v1536
      %v1538 = vpop.f32.mrb[0].mxu0
      %v1539 = vpop.f32.mrb[0].mxu0
      %v1540 = vadd.f32 %v1379, %v1539
      %v1541 = vpop.f32.mrb[0].mxu0
      %1542 = vmatprep.mubr.bf16.mxu0 0
      %1543 = vmatmul.mubr.bf16.gmra.mrb[0].mxu0 %v1091
      %v1544 = vpop.f32.mrb[0].mxu0
      %v1545 = vadd.f32 %v1384, %v1544
      %v1546 = vpop.f32.mrb[0].mxu0
      %v1547 = vpop.f32.mrb[0].mxu0
      %v1548 = vadd.f32 %v1387, %v1547
      %v1549 = vpop.f32.mrb[0].mxu0
      %1550 = vmatprep.mubr.bf16.mxu0 0
      %1551 = vmatmul.mubr.bf16.gmra.mrb[0].mxu0 %v1094
      %v1552 = vpop.f32.mrb[0].mxu0
      %v1553 = vadd.f32 %v1392, %v1552
      %v1554 = vpop.f32.mrb[0].mxu0
      %v1555 = vpop.f32.mrb[0].mxu0
      %v1556 = vadd.f32 %v1395, %v1555
      %v1557 = vpop.f32.mrb[0].mxu0
      %1558 = vmatprep.mubr.bf16.mxu0 0
      %1559 = vmatmul.mubr.bf16.gmra.mrb[0].mxu0 %v1097
      %v1560 = vpop.f32.mrb[0].mxu0
      %v1561 = vadd.f32 %v1400, %v1560
      %v1562 = vpop.f32.mrb[0].mxu0
      %v1563 = vpop.f32.mrb[0].mxu0
      %v1564 = vadd.f32 %v1403, %v1563
      %v1565 = vpop.f32.mrb[0].mxu0
      %1566 = vmatprep.mubr.bf16.mxu0 0
      %1567 = vmatmul.mubr.bf16.gmra.mrb[0].mxu0 %v1100
      %v1568 = vpop.f32.mrb[0].mxu0
      %v1569 = vadd.f32 %v1408, %v1568
      %v1570 = vpop.f32.mrb[0].mxu0
      %v1571 = vpop.f32.mrb[0].mxu0
      %v1572 = vadd.f32 %v1411, %v1571
      %v1573 = vpop.f32.mrb[0].mxu0
      %1574 = vmatprep.mubr.bf16.mxu0 0
      %1575 = vmatmul.mubr.bf16.gmra.mrb[0].mxu0 %v1103
      %v1576 = vpop.f32.mrb[0].mxu0
      %v1577 = vadd.f32 %v1416, %v1576
      %v1578 = vpop.f32.mrb[0].mxu0
      %v1579 = vpop.f32.mrb[0].mxu0
      %v1580 = vadd.f32 %v1419, %v1579
      %v1581 = vpop.f32.mrb[0].mxu0
      %1582 = vmatprep.mubr.bf16.mxu0 0
      %1583 = vmatmul.mubr.bf16.gmra.mrb[0].mxu0 %v1106
      %v1584 = vpop.f32.mrb[0].mxu0
      %v1585 = vadd.f32 %v1424, %v1584
      %v1586 = vpop.f32.mrb[0].mxu0
      %v1587 = vpop.f32.mrb[0].mxu0
      %v1588 = vadd.f32 %v1427, %v1587
      %v1589 = vpop.f32.mrb[0].mxu0
      %1590 = vdwg.mxu0
      %v1591 = vmax.f32 %v1465, 0.0
      %v1592 = vmax.f32 %v1468, 0.0
      %v1593 = vmax.f32 %v1473, 0.0
      %v1594 = vmax.f32 %v1476, 0.0
      %v1595 = vmax.f32 %v1481, 0.0
      %v1596 = vmax.f32 %v1484, 0.0
      %v1597 = vmax.f32 %v1489, 0.0
      %v1598 = vmax.f32 %v1492, 0.0
      %v1599 = vmax.f32 %v1497, 0.0
      %v1600 = vmax.f32 %v1500, 0.0
      %v1601 = vmax.f32 %v1505, 0.0
      %v1602 = vmax.f32 %v1508, 0.0
      %v1603 = vmax.f32 %v1513, 0.0
      %v1604 = vmax.f32 %v1516, 0.0
      %v1605 = vmax.f32 %v1521, 0.0
      %v1606 = vmax.f32 %v1524, 0.0
      %v1607 = vmax.f32 %v1529, 0.0
      %v1608 = vmax.f32 %v1532, 0.0
      %v1609 = vmax.f32 %v1537, 0.0
      %v1610 = vmax.f32 %v1540, 0.0
      %v1611 = vmax.f32 %v1545, 0.0
      %v1612 = vmax.f32 %v1548, 0.0
      %v1613 = vmax.f32 %v1553, 0.0
      %v1614 = vmax.f32 %v1556, 0.0
      %v1615 = vmax.f32 %v1561, 0.0
      %v1616 = vmax.f32 %v1564, 0.0
      %v1617 = vmax.f32 %v1569, 0.0
      %v1618 = vmax.f32 %v1572, 0.0
      %v1619 = vmax.f32 %v1577, 0.0
      %v1620 = vmax.f32 %v1580, 0.0
      %v1621 = vmax.f32 %v1585, 0.0
      %v1622 = vmax.f32 %v1588, 0.0
      %v1623 = vpack.c.bf16 %v1592, %v1591
      %v1624 = vpack.c.bf16 %v1594, %v1593
      %v1625 = vpack.c.bf16 %v1596, %v1595
      %v1626 = vpack.c.bf16 %v1598, %v1597
      %v1627 = vpack.c.bf16 %v1600, %v1599
      %v1628 = vpack.c.bf16 %v1602, %v1601
      %v1629 = vpack.c.bf16 %v1604, %v1603
      %v1630 = vpack.c.bf16 %v1606, %v1605
      %v1631 = vpack.c.bf16 %v1608, %v1607
      %v1632 = vpack.c.bf16 %v1610, %v1609
      %v1633 = vpack.c.bf16 %v1612, %v1611
      %v1634 = vpack.c.bf16 %v1614, %v1613
      %v1635 = vpack.c.bf16 %v1616, %v1615
      %v1636 = vpack.c.bf16 %v1618, %v1617
      %v1637 = vpack.c.bf16 %v1620, %v1619
      %v1638 = vpack.c.bf16 %v1622, %v1621
      %v1655 = vunpack.c.l.b16 %v1623
      %v1656 = vunpack.c.h.b16 %v1623
      %v1657 = vunpack.c.l.b16 %v1624
      %v1658 = vunpack.c.h.b16 %v1624
      %v1659 = vunpack.c.l.b16 %v1625
      %v1660 = vunpack.c.h.b16 %v1625
      %v1661 = vunpack.c.l.b16 %v1626
      %v1662 = vunpack.c.h.b16 %v1626
      %v1663 = vunpack.c.l.b16 %v1627
      %v1664 = vunpack.c.h.b16 %v1627
      %v1665 = vunpack.c.l.b16 %v1628
      %v1666 = vunpack.c.h.b16 %v1628
      %v1667 = vunpack.c.l.b16 %v1629
      %v1668 = vunpack.c.h.b16 %v1629
      %v1669 = vunpack.c.l.b16 %v1630
      %v1670 = vunpack.c.h.b16 %v1630
      %v1671 = vunpack.c.l.b16 %v1631
      %v1672 = vunpack.c.h.b16 %v1631
      %v1673 = vunpack.c.l.b16 %v1632
      %v1674 = vunpack.c.h.b16 %v1632
      %v1675 = vunpack.c.l.b16 %v1633
      %v1676 = vunpack.c.h.b16 %v1633
      %v1677 = vunpack.c.l.b16 %v1634
      %v1678 = vunpack.c.h.b16 %v1634
      %v1679 = vunpack.c.l.b16 %v1635
      %v1680 = vunpack.c.h.b16 %v1635
      %v1681 = vunpack.c.l.b16 %v1636
      %v1682 = vunpack.c.h.b16 %v1636
      %v1683 = vunpack.c.l.b16 %v1637
      %v1684 = vunpack.c.h.b16 %v1637
      %v1685 = vunpack.c.l.b16 %v1638
      %v1686 = vunpack.c.h.b16 %v1638
      %v1687 = vpack.c.b16 %v1655, %v1655
      %v1688 = vpack.c.b16 %v1656, %v1656
      %v1689 = vpack.c.b16 %v1657, %v1657
      %v1690 = vpack.c.b16 %v1658, %v1658
      %v1691 = vpack.c.b16 %v1659, %v1659
      %v1692 = vpack.c.b16 %v1660, %v1660
      %v1693 = vpack.c.b16 %v1661, %v1661
      %v1694 = vpack.c.b16 %v1662, %v1662
      %v1695 = vpack.c.b16 %v1663, %v1663
      %v1696 = vpack.c.b16 %v1664, %v1664
      %v1697 = vpack.c.b16 %v1665, %v1665
      %v1698 = vpack.c.b16 %v1666, %v1666
      %v1699 = vpack.c.b16 %v1667, %v1667
      %v1700 = vpack.c.b16 %v1668, %v1668
      %v1701 = vpack.c.b16 %v1669, %v1669
      %v1702 = vpack.c.b16 %v1670, %v1670
      %v1703 = vpack.c.b16 %v1671, %v1671
      %v1704 = vpack.c.b16 %v1672, %v1672
      %v1705 = vpack.c.b16 %v1673, %v1673
      %v1706 = vpack.c.b16 %v1674, %v1674
      %v1707 = vpack.c.b16 %v1675, %v1675
      %v1708 = vpack.c.b16 %v1676, %v1676
      %v1709 = vpack.c.b16 %v1677, %v1677
      %v1710 = vpack.c.b16 %v1678, %v1678
      %v1711 = vpack.c.b16 %v1679, %v1679
      %v1712 = vpack.c.b16 %v1680, %v1680
      %v1713 = vpack.c.b16 %v1681, %v1681
      %v1714 = vpack.c.b16 %v1682, %v1682
      %v1715 = vpack.c.b16 %v1683, %v1683
      %v1716 = vpack.c.b16 %v1684, %v1684
      %v1717 = vpack.c.b16 %v1685, %v1685
      %v1718 = vpack.c.b16 %v1686, %v1686
      %vm1751 = vcmask 519168
      %1752 = vst.msk [vmem:[%s265] sm:$0xf] %vm1751, %v1687
      %1753 = vst.msk [vmem:[%s265 + $0x4] sm:$0xf] %vm1751, %v1688
      %1754 = vst.msk [vmem:[%s265 + $0x8] sm:$0xf] %vm1751, %v1689
      %1755 = vst.msk [vmem:[%s265 + $0xc] sm:$0xf] %vm1751, %v1690
      %1756 = vst.msk [vmem:[%s265 + $0x10] sm:$0xf] %vm1751, %v1691
      %1757 = vst.msk [vmem:[%s265 + $0x14] sm:$0xf] %vm1751, %v1692
      %1758 = vst.msk [vmem:[%s265 + $0x18] sm:$0xf] %vm1751, %v1693
      %1759 = vst.msk [vmem:[%s265 + $0x1c] sm:$0xf] %vm1751, %v1694
      %1760 = vst.msk [vmem:[%s265 + $0x20] sm:$0xf] %vm1751, %v1695
      %1761 = vst.msk [vmem:[%s265 + $0x24] sm:$0xf] %vm1751, %v1696
      %1762 = vst.msk [vmem:[%s265 + $0x28] sm:$0xf] %vm1751, %v1697
      %1763 = vst.msk [vmem:[%s265 + $0x2c] sm:$0xf] %vm1751, %v1698
      %1764 = vst.msk [vmem:[%s265 + $0x30] sm:$0xf] %vm1751, %v1699
      %1765 = vst.msk [vmem:[%s265 + $0x34] sm:$0xf] %vm1751, %v1700
      %1766 = vst.msk [vmem:[%s265 + $0x38] sm:$0xf] %vm1751, %v1701
      %1767 = vst.msk [vmem:[%s265 + $0x3c] sm:$0xf] %vm1751, %v1702
      %1768 = vst.msk [vmem:[%s265 + $0x40] sm:$0xf] %vm1751, %v1703
      %1769 = vst.msk [vmem:[%s265 + $0x44] sm:$0xf] %vm1751, %v1704
      %1770 = vst.msk [vmem:[%s265 + $0x48] sm:$0xf] %vm1751, %v1705
      %1771 = vst.msk [vmem:[%s265 + $0x4c] sm:$0xf] %vm1751, %v1706
      %1772 = vst.msk [vmem:[%s265 + $0x50] sm:$0xf] %vm1751, %v1707
      %1773 = vst.msk [vmem:[%s265 + $0x54] sm:$0xf] %vm1751, %v1708
      %1774 = vst.msk [vmem:[%s265 + $0x58] sm:$0xf] %vm1751, %v1709
      %1775 = vst.msk [vmem:[%s265 + $0x5c] sm:$0xf] %vm1751, %v1710
      %1776 = vst.msk [vmem:[%s265 + $0x60] sm:$0xf] %vm1751, %v1711
      %1777 = vst.msk [vmem:[%s265 + $0x64] sm:$0xf] %vm1751, %v1712
      %1778 = vst.msk [vmem:[%s265 + $0x68] sm:$0xf] %vm1751, %v1713
      %1779 = vst.msk [vmem:[%s265 + $0x6c] sm:$0xf] %vm1751, %v1714
      %1780 = vst.msk [vmem:[%s265 + $0x70] sm:$0xf] %vm1751, %v1715
      %1781 = vst.msk [vmem:[%s265 + $0x74] sm:$0xf] %vm1751, %v1716
      %1782 = vst.msk [vmem:[%s265 + $0x78] sm:$0xf] %vm1751, %v1717
      %1783 = vst.msk [vmem:[%s265 + $0x7c] sm:$0xf] %vm1751, %v1718
      %s1784 = smul.u32 32, %s19
      %p1785 = scmp.lt.s32.totalorder %s1784, 223
      %s1786 = scalar_select %p1785, %s1784, 223
      %p1787 = scmp.lt.s32.totalorder %s20, 0
      %s1788 = scalar_select %p1787, %s20, 0
      %s1789 = sadd.s32 %s1788, %s1786
      %s1790 = smul.addr %s1789, 4
      %s1791 = scalar_lea.vmem %s3, %s1790
      // Predicated region
      $region33: #{svhn_forward.6} parent=31 // pred_check
        %p1792 = pneg %p135
      $region34: #{svhn_forward.6} parent=31 // pred_check_branch
        %1794 = sbr.rel (%p1792) target = $region36
      $region35: #{svhn_forward.6} parent=31 // pred_region
        %s1795 = smul.u32 32, %s19
      $region36: #{svhn_forward.6} parent=31 // pred_fallthru
        _
    $region32: #{svhn_forward.6} parent=5 // pred_fallthru
      _
    %p1796 = scmp.le.s32.totalorder 2, %s9
    // Predicated region
    $region37: #{svhn_forward.6} parent=5 // pred_check
      %p1797 = pneg %p1796
    $region38: #{svhn_forward.6} parent=5 // pred_check_branch
      %1799 = sbr.rel (%p1797) target = $region40
    $region39: #{svhn_forward.6} parent=5 // pred_region
      %s1800 = ssub.s32 %s9, 2
      // Predicated region
      $region41: #{svhn_forward.6} parent=39 // pred_check
        %p1801 = pneg %p141
      $region42: #{svhn_forward.6} parent=39 // pred_check_branch
        %1803 = sbr.rel (%p1801) target = $region44
      $region43: #{svhn_forward.6} parent=39 // pred_region
        %s1804 = smul.u32 32, %s22
        %p1805 = scmp.lt.s32.totalorder %s1804, 223
        %s1806 = scalar_select %p1805, %s1804, 223
        %p1807 = scmp.lt.s32.totalorder %s23, 0
        %s1808 = scalar_select %p1807, %s23, 0
        %s1809 = sadd.s32 %s1808, %s1806
        %s1810 = smul.addr %s1809, 4
        %s1811 = scalar_lea.vmem %s3, %s1810
      $region44: #{svhn_forward.6} parent=39 // pred_fallthru
        _
    $region40: #{svhn_forward.6} parent=5 // pred_fallthru
      _
  $region6: #{svhn_forward.6} parent=0 // loop_footer
    %s13 = sadd.s32 1, %s9
  $region7: #{svhn_forward.6} parent=0 // loop_footer_branch
    %8 = sbr.rel target = $region3
  $region8: #{svhn_forward.6} parent=0 // loop_exit
    _

// kernel: svhn_forward.7
$region0: #{svhn_forward.7}
  #allocation0 [shape = 'u32[]', space=smem, size = 0x4, offset = 0x4, fixed_abs, tag = 'smem constant byte address 0x4 - core index']
  #allocation1 [shape = 'u32[144,128]{1,0:T(1,128)}', space=vmem, size = 0x12000, scoped, tag = 'internal scratch']
  %s0 = inlined_call_operand.vmem [shape: bf16[2,14,2,14,128], index: 0, kind: input, shape index: {}]
  %s1 = inlined_call_operand.vmem [shape: bf16[2,14,14,64], index: 1, kind: output, shape index: {}]
  %s2 = sld [smem:[#allocation0]]
  $region14: #{svhn_forward.7} parent=0
    _
  %s4 = ssub.s32 1, %s2
  %s5 = scalar_select 0, %s4, %s2
  // Predicated region
  $region2: #{svhn_forward.7} parent=0 // pred_check
    _
  $region3: #{svhn_forward.7} parent=0 // pred_check_branch
    %7 = sbr.rel (0) target = $region5
  $region4: #{svhn_forward.7} parent=0 // pred_region
    _
  $region5: #{svhn_forward.7} parent=0 // pred_fallthru
    _
  %v8 = vld [vmem:[%s0] sm:$0xf]
  %v9 = vld [vmem:[%s0 + $0x4] sm:$0x7]
  %v10 = vld [vmem:[%s0 + $0x8] sm:$0xf]
  %v11 = vld [vmem:[%s0 + $0xc] sm:$0x7]
  %v12 = vld [vmem:[%s0 + $0x10] sm:$0xf]
  %v13 = vld [vmem:[%s0 + $0x14] sm:$0x7]
  %v14 = vld [vmem:[%s0 + $0x18] sm:$0xf]
  %v15 = vld [vmem:[%s0 + $0x1c] sm:$0x7]
  %v16 = vld [vmem:[%s0 + $0x20] sm:$0xf]
  %v17 = vld [vmem:[%s0 + $0x24] sm:$0x7]
  %v18 = vld [vmem:[%s0 + $0x28] sm:$0xf]
  %v19 = vld [vmem:[%s0 + $0x2c] sm:$0x7]
  %v20 = vld [vmem:[%s0 + $0x30] sm:$0xf]
  %v21 = vld [vmem:[%s0 + $0x34] sm:$0x7]
  %v22 = vld [vmem:[%s0 + $0x38] sm:$0xf]
  %v23 = vld [vmem:[%s0 + $0x3c] sm:$0x7]
  %v24 = vld [vmem:[%s0 + $0x40] sm:$0xf]
  %v25 = vld [vmem:[%s0 + $0x44] sm:$0x7]
  %v26 = vld [vmem:[%s0 + $0x48] sm:$0xf]
  %v27 = vld [vmem:[%s0 + $0x4c] sm:$0x7]
  %v28 = vld [vmem:[%s0 + $0x50] sm:$0xf]
  %v29 = vld [vmem:[%s0 + $0x54] sm:$0x7]
  %v30 = vld [vmem:[%s0 + $0x58] sm:$0xf]
  %v31 = vld [vmem:[%s0 + $0x5c] sm:$0x7]
  %v32 = vld [vmem:[%s0 + $0x60] sm:$0xf]
  %v33 = vld [vmem:[%s0 + $0x64] sm:$0x7]
  %v34 = vld [vmem:[%s0 + $0x68] sm:$0xf]
  %v35 = vld [vmem:[%s0 + $0x6c] sm:$0x7]
  %v36 = vld [vmem:[%s0 + $0x70] sm:$0xf]
  %v37 = vld [vmem:[%s0 + $0x74] sm:$0x7]
  %v38 = vld [vmem:[%s0 + $0x78] sm:$0xf]
  %v39 = vld [vmem:[%s0 + $0x7c] sm:$0x7]
  %v40 = vld [vmem:[%s0 + $0x80] sm:$0xf]
  %v41 = vld [vmem:[%s0 + $0x84] sm:$0x7]
  %v42 = vld [vmem:[%s0 + $0x88] sm:$0xf]
  %v43 = vld [vmem:[%s0 + $0x8c] sm:$0x7]
  %v44 = vld [vmem:[%s0 + $0x90] sm:$0xf]
  %v45 = vld [vmem:[%s0 + $0x94] sm:$0x7]
  %v46 = vld [vmem:[%s0 + $0x98] sm:$0xf]
  %v47 = vld [vmem:[%s0 + $0x9c] sm:$0x7]
  %v48 = vld [vmem:[%s0 + $0xa0] sm:$0xf]
  %v49 = vld [vmem:[%s0 + $0xa4] sm:$0x7]
  %v50 = vld [vmem:[%s0 + $0xa8] sm:$0xf]
  %v51 = vld [vmem:[%s0 + $0xac] sm:$0x7]
  %v52 = vld [vmem:[%s0 + $0xb0] sm:$0xf]
  %v53 = vld [vmem:[%s0 + $0xb4] sm:$0x7]
  %v54 = vld [vmem:[%s0 + $0xb8] sm:$0xf]
  %v55 = vld [vmem:[%s0 + $0xbc] sm:$0x7]
  %v56 = vld [vmem:[%s0 + $0xc0] sm:$0xf]
  %v57 = vld [vmem:[%s0 + $0xc4] sm:$0x7]
  %v58 = vld [vmem:[%s0 + $0xc8] sm:$0xf]
  %v59 = vld [vmem:[%s0 + $0xcc] sm:$0x7]
  %v60 = vld [vmem:[%s0 + $0xd0] sm:$0xf]
  %v61 = vld [vmem:[%s0 + $0xd4] sm:$0x7]
  %v62 = vld [vmem:[%s0 + $0xd8] sm:$0xf]
  %v63 = vld [vmem:[%s0 + $0xdc] sm:$0x7]
  %v64 = vld [vmem:[%s0 + $0xe0] sm:$0xf]
  %v65 = vld [vmem:[%s0 + $0xe4] sm:$0x7]
  %v66 = vld [vmem:[%s0 + $0xe8] sm:$0xf]
  %v67 = vld [vmem:[%s0 + $0xec] sm:$0x7]
  %v68 = vld [vmem:[%s0 + $0xf0] sm:$0xf]
  %v69 = vld [vmem:[%s0 + $0xf4] sm:$0x7]
  %v70 = vld [vmem:[%s0 + $0xf8] sm:$0xf]
  %v71 = vld [vmem:[%s0 + $0xfc] sm:$0x7]
  %v72 = vld [vmem:[%s0 + $0x100] sm:$0xf]
  %v73 = vld [vmem:[%s0 + $0x104] sm:$0x7]
  %v74 = vld [vmem:[%s0 + $0x108] sm:$0xf]
  %v75 = vld [vmem:[%s0 + $0x10c] sm:$0x7]
  %v76 = vld [vmem:[%s0 + $0x110] sm:$0xf]
  %v77 = vld [vmem:[%s0 + $0x114] sm:$0x7]
  %v78 = vld [vmem:[%s0 + $0x118] sm:$0xf]
  %v79 = vld [vmem:[%s0 + $0x11c] sm:$0x7]
  %v80 = vld [vmem:[%s0 + $0x120] sm:$0xf]
  %v81 = vld [vmem:[%s0 + $0x124] sm:$0x7]
  %v82 = vld [vmem:[%s0 + $0x128] sm:$0xf]
  %v83 = vld [vmem:[%s0 + $0x12c] sm:$0x7]
  %v84 = vld [vmem:[%s0 + $0x130] sm:$0xf]
  %v85 = vld [vmem:[%s0 + $0x134] sm:$0x7]
  %v86 = vld [vmem:[%s0 + $0x138] sm:$0xf]
  %v87 = vld [vmem:[%s0 + $0x13c] sm:$0x7]
  %v88 = vld [vmem:[%s0 + $0x140] sm:$0xf]
  %v89 = vld [vmem:[%s0 + $0x144] sm:$0x7]
  %v90 = vld [vmem:[%s0 + $0x148] sm:$0xf]
  %v91 = vld [vmem:[%s0 + $0x14c] sm:$0x7]
  %v92 = vld [vmem:[%s0 + $0x150] sm:$0xf]
  %v93 = vld [vmem:[%s0 + $0x154] sm:$0x7]
  %v94 = vld [vmem:[%s0 + $0x158] sm:$0xf]
  %v95 = vld [vmem:[%s0 + $0x15c] sm:$0x7]
  %v96 = vld [vmem:[%s0 + $0x160] sm:$0xf]
  %v97 = vld [vmem:[%s0 + $0x164] sm:$0x7]
  %v98 = vld [vmem:[%s0 + $0x168] sm:$0xf]
  %v99 = vld [vmem:[%s0 + $0x16c] sm:$0x7]
  %v100 = vld [vmem:[%s0 + $0x170] sm:$0xf]
  %v101 = vld [vmem:[%s0 + $0x174] sm:$0x7]
  %v102 = vld [vmem:[%s0 + $0x178] sm:$0xf]
  %v103 = vld [vmem:[%s0 + $0x17c] sm:$0x7]
  %v104 = vld [vmem:[%s0 + $0x180] sm:$0xf]
  %v105 = vld [vmem:[%s0 + $0x184] sm:$0x7]
  %v106 = vld [vmem:[%s0 + $0x188] sm:$0xf]
  %v107 = vld [vmem:[%s0 + $0x18c] sm:$0x7]
  %v108 = vld [vmem:[%s0 + $0x190] sm:$0xf]
  %v109 = vld [vmem:[%s0 + $0x194] sm:$0x7]
  %v110 = vld [vmem:[%s0 + $0x198] sm:$0xf]
  %v111 = vld [vmem:[%s0 + $0x19c] sm:$0x7]
  %v112 = vld [vmem:[%s0 + $0x1a0] sm:$0xf]
  %v113 = vld [vmem:[%s0 + $0x1a4] sm:$0x7]
  %v114 = vld [vmem:[%s0 + $0x1a8] sm:$0xf]
  %v115 = vld [vmem:[%s0 + $0x1ac] sm:$0x7]
  %v116 = vld [vmem:[%s0 + $0x1b0] sm:$0xf]
  %v117 = vld [vmem:[%s0 + $0x1b4] sm:$0x7]
  %v118 = vld [vmem:[%s0 + $0x1b8] sm:$0xf]
  %v119 = vld [vmem:[%s0 + $0x1bc] sm:$0x7]
  %v120 = vmax.bf16 %v8, %v10
  %v121 = vmax.bf16 %v9, %v11
  %v122 = vmax.bf16 %v12, %v14
  %v123 = vmax.bf16 %v13, %v15
  %v124 = vmax.bf16 %v16, %v18
  %v125 = vmax.bf16 %v17, %v19
  %v126 = vmax.bf16 %v20, %v22
  %v127 = vmax.bf16 %v21, %v23
  %v128 = vmax.bf16 %v24, %v26
  %v129 = vmax.bf16 %v25, %v27
  %v130 = vmax.bf16 %v28, %v30
  %v131 = vmax.bf16 %v29, %v31
  %v132 = vmax.bf16 %v32, %v34
  %v133 = vmax.bf16 %v33, %v35
  %v134 = vmax.bf16 %v36, %v38
  %v135 = vmax.bf16 %v37, %v39
  %v136 = vmax.bf16 %v40, %v42
  %v137 = vmax.bf16 %v41, %v43
  %v138 = vmax.bf16 %v44, %v46
  %v139 = vmax.bf16 %v45, %v47
  %v140 = vmax.bf16 %v48, %v50
  %v141 = vmax.bf16 %v49, %v51
  %v142 = vmax.bf16 %v52, %v54
  %v143 = vmax.bf16 %v53, %v55
  %v144 = vmax.bf16 %v56, %v58
  %v145 = vmax.bf16 %v57, %v59
  %v146 = vmax.bf16 %v60, %v62
  %v147 = vmax.bf16 %v61, %v63
  %v148 = vmax.bf16 %v64, %v66
  %v149 = vmax.bf16 %v65, %v67
  %v150 = vmax.bf16 %v68, %v70
  %v151 = vmax.bf16 %v69, %v71
  %v152 = vmax.bf16 %v72, %v74
  %v153 = vmax.bf16 %v73, %v75
  %v154 = vmax.bf16 %v76, %v78
  %v155 = vmax.bf16 %v77, %v79
  %v156 = vmax.bf16 %v80, %v82
  %v157 = vmax.bf16 %v81, %v83
  %v158 = vmax.bf16 %v84, %v86
  %v159 = vmax.bf16 %v85, %v87
  %v160 = vmax.bf16 %v88, %v90
  %v161 = vmax.bf16 %v89, %v91
  %v162 = vmax.bf16 %v92, %v94
  %v163 = vmax.bf16 %v93, %v95
  %v164 = vmax.bf16 %v96, %v98
  %v165 = vmax.bf16 %v97, %v99
  %v166 = vmax.bf16 %v100, %v102
  %v167 = vmax.bf16 %v101, %v103
  %v168 = vmax.bf16 %v104, %v106
  %v169 = vmax.bf16 %v105, %v107
  %v170 = vmax.bf16 %v108, %v110
  %v171 = vmax.bf16 %v109, %v111
  %v172 = vmax.bf16 %v112, %v114
  %v173 = vmax.bf16 %v113, %v115
  %v174 = vmax.bf16 %v116, %v118
  %v175 = vmax.bf16 %v117, %v119
  %232 = vrot.lane.b32.xlu0 %v120, 64
  %v233 = vpop.permute.xlu0 %232
  %234 = vrot.lane.b32.xlu0 %v121, 64
  %v235 = vpop.permute.xlu0 %234
  %236 = vrot.lane.b32.xlu0 %v122, 64
  %v237 = vpop.permute.xlu0 %236
  %238 = vrot.lane.b32.xlu0 %v123, 64
  %v239 = vpop.permute.xlu0 %238
  %240 = vrot.lane.b32.xlu0 %v124, 64
  %v241 = vpop.permute.xlu0 %240
  %242 = vrot.lane.b32.xlu0 %v125, 64
  %v243 = vpop.permute.xlu0 %242
  %244 = vrot.lane.b32.xlu0 %v126, 64
  %v245 = vpop.permute.xlu0 %244
  %246 = vrot.lane.b32.xlu0 %v127, 64
  %v247 = vpop.permute.xlu0 %246
  %248 = vrot.lane.b32.xlu0 %v128, 64
  %v249 = vpop.permute.xlu0 %248
  %250 = vrot.lane.b32.xlu0 %v129, 64
  %v251 = vpop.permute.xlu0 %250
  %252 = vrot.lane.b32.xlu0 %v130, 64
  %v253 = vpop.permute.xlu0 %252
  %254 = vrot.lane.b32.xlu0 %v131, 64
  %v255 = vpop.permute.xlu0 %254
  %256 = vrot.lane.b32.xlu0 %v132, 64
  %v257 = vpop.permute.xlu0 %256
  %258 = vrot.lane.b32.xlu0 %v133, 64
  %v259 = vpop.permute.xlu0 %258
  %260 = vrot.lane.b32.xlu0 %v134, 64
  %v261 = vpop.permute.xlu0 %260
  %262 = vrot.lane.b32.xlu0 %v135, 64
  %v263 = vpop.permute.xlu0 %262
  %264 = vrot.lane.b32.xlu0 %v136, 64
  %v265 = vpop.permute.xlu0 %264
  %266 = vrot.lane.b32.xlu0 %v137, 64
  %v267 = vpop.permute.xlu0 %266
  %268 = vrot.lane.b32.xlu0 %v138, 64
  %v269 = vpop.permute.xlu0 %268
  %270 = vrot.lane.b32.xlu0 %v139, 64
  %v271 = vpop.permute.xlu0 %270
  %272 = vrot.lane.b32.xlu0 %v140, 64
  %v273 = vpop.permute.xlu0 %272
  %274 = vrot.lane.b32.xlu0 %v141, 64
  %v275 = vpop.permute.xlu0 %274
  %276 = vrot.lane.b32.xlu0 %v142, 64
  %v277 = vpop.permute.xlu0 %276
  %278 = vrot.lane.b32.xlu0 %v143, 64
  %v279 = vpop.permute.xlu0 %278
  %280 = vrot.lane.b32.xlu0 %v144, 64
  %v281 = vpop.permute.xlu0 %280
  %282 = vrot.lane.b32.xlu0 %v145, 64
  %v283 = vpop.permute.xlu0 %282
  %284 = vrot.lane.b32.xlu0 %v146, 64
  %v285 = vpop.permute.xlu0 %284
  %286 = vrot.lane.b32.xlu0 %v147, 64
  %v287 = vpop.permute.xlu0 %286
  %288 = vrot.lane.b32.xlu0 %v148, 64
  %v289 = vpop.permute.xlu0 %288
  %290 = vrot.lane.b32.xlu0 %v149, 64
  %v291 = vpop.permute.xlu0 %290
  %292 = vrot.lane.b32.xlu0 %v150, 64
  %v293 = vpop.permute.xlu0 %292
  %294 = vrot.lane.b32.xlu0 %v151, 64
  %v295 = vpop.permute.xlu0 %294
  %296 = vrot.lane.b32.xlu0 %v152, 64
  %v297 = vpop.permute.xlu0 %296
  %298 = vrot.lane.b32.xlu0 %v153, 64
  %v299 = vpop.permute.xlu0 %298
  %300 = vrot.lane.b32.xlu0 %v154, 64
  %v301 = vpop.permute.xlu0 %300
  %302 = vrot.lane.b32.xlu0 %v155, 64
  %v303 = vpop.permute.xlu0 %302
  %304 = vrot.lane.b32.xlu0 %v156, 64
  %v305 = vpop.permute.xlu0 %304
  %306 = vrot.lane.b32.xlu0 %v157, 64
  %v307 = vpop.permute.xlu0 %306
  %308 = vrot.lane.b32.xlu0 %v158, 64
  %v309 = vpop.permute.xlu0 %308
  %310 = vrot.lane.b32.xlu0 %v159, 64
  %v311 = vpop.permute.xlu0 %310
  %312 = vrot.lane.b32.xlu0 %v160, 64
  %v313 = vpop.permute.xlu0 %312
  %314 = vrot.lane.b32.xlu0 %v161, 64
  %v315 = vpop.permute.xlu0 %314
  %316 = vrot.lane.b32.xlu0 %v162, 64
  %v317 = vpop.permute.xlu0 %316
  %318 = vrot.lane.b32.xlu0 %v163, 64
  %v319 = vpop.permute.xlu0 %318
  %320 = vrot.lane.b32.xlu0 %v164, 64
  %v321 = vpop.permute.xlu0 %320
  %322 = vrot.lane.b32.xlu0 %v165, 64
  %v323 = vpop.permute.xlu0 %322
  %324 = vrot.lane.b32.xlu0 %v166, 64
  %v325 = vpop.permute.xlu0 %324
  %326 = vrot.lane.b32.xlu0 %v167, 64
  %v327 = vpop.permute.xlu0 %326
  %328 = vrot.lane.b32.xlu0 %v168, 64
  %v329 = vpop.permute.xlu0 %328
  %330 = vrot.lane.b32.xlu0 %v169, 64
  %v331 = vpop.permute.xlu0 %330
  %332 = vrot.lane.b32.xlu0 %v170, 64
  %v333 = vpop.permute.xlu0 %332
  %334 = vrot.lane.b32.xlu0 %v171, 64
  %v335 = vpop.permute.xlu0 %334
  %336 = vrot.lane.b32.xlu0 %v172, 64
  %v337 = vpop.permute.xlu0 %336
  %338 = vrot.lane.b32.xlu0 %v173, 64
  %v339 = vpop.permute.xlu0 %338
  %340 = vrot.lane.b32.xlu0 %v174, 64
  %v341 = vpop.permute.xlu0 %340
  %342 = vrot.lane.b32.xlu0 %v175, 64
  %v343 = vpop.permute.xlu0 %342
  %v400 = vmax.bf16 %v120, %v233
  %v401 = vmax.bf16 %v121, %v235
  %v402 = vmax.bf16 %v122, %v237
  %v403 = vmax.bf16 %v123, %v239
  %v404 = vmax.bf16 %v124, %v241
  %v405 = vmax.bf16 %v125, %v243
  %v406 = vmax.bf16 %v126, %v245
  %v407 = vmax.bf16 %v127, %v247
  %v408 = vmax.bf16 %v128, %v249
  %v409 = vmax.bf16 %v129, %v251
  %v410 = vmax.bf16 %v130, %v253
  %v411 = vmax.bf16 %v131, %v255
  %v412 = vmax.bf16 %v132, %v257
  %v413 = vmax.bf16 %v133, %v259
  %v414 = vmax.bf16 %v134, %v261
  %v415 = vmax.bf16 %v135, %v263
  %v416 = vmax.bf16 %v136, %v265
  %v417 = vmax.bf16 %v137, %v267
  %v418 = vmax.bf16 %v138, %v269
  %v419 = vmax.bf16 %v139, %v271
  %v420 = vmax.bf16 %v140, %v273
  %v421 = vmax.bf16 %v141, %v275
  %v422 = vmax.bf16 %v142, %v277
  %v423 = vmax.bf16 %v143, %v279
  %v424 = vmax.bf16 %v144, %v281
  %v425 = vmax.bf16 %v145, %v283
  %v426 = vmax.bf16 %v146, %v285
  %v427 = vmax.bf16 %v147, %v287
  %v428 = vmax.bf16 %v148, %v289
  %v429 = vmax.bf16 %v149, %v291
  %v430 = vmax.bf16 %v150, %v293
  %v431 = vmax.bf16 %v151, %v295
  %v432 = vmax.bf16 %v152, %v297
  %v433 = vmax.bf16 %v153, %v299
  %v434 = vmax.bf16 %v154, %v301
  %v435 = vmax.bf16 %v155, %v303
  %v436 = vmax.bf16 %v156, %v305
  %v437 = vmax.bf16 %v157, %v307
  %v438 = vmax.bf16 %v158, %v309
  %v439 = vmax.bf16 %v159, %v311
  %v440 = vmax.bf16 %v160, %v313
  %v441 = vmax.bf16 %v161, %v315
  %v442 = vmax.bf16 %v162, %v317
  %v443 = vmax.bf16 %v163, %v319
  %v444 = vmax.bf16 %v164, %v321
  %v445 = vmax.bf16 %v165, %v323
  %v446 = vmax.bf16 %v166, %v325
  %v447 = vmax.bf16 %v167, %v327
  %v448 = vmax.bf16 %v168, %v329
  %v449 = vmax.bf16 %v169, %v331
  %v450 = vmax.bf16 %v170, %v333
  %v451 = vmax.bf16 %v171, %v335
  %v452 = vmax.bf16 %v172, %v337
  %v453 = vmax.bf16 %v173, %v339
  %v454 = vmax.bf16 %v174, %v341
  %v455 = vmax.bf16 %v175, %v343
  %vm456 = vcmask 519168
  %457 = vst.msk [vmem:[%s1] sm:$0xf] %vm456, %v400
  %vm458 = vcmask 518144
  %459 = vst.msk [vmem:[%s1 + $0x4] sm:$0x7] %vm458, %v401
  %460 = vst.msk [vmem:[%s1 + $0x8] sm:$0xf] %vm456, %v402
  %461 = vst.msk [vmem:[%s1 + $0xc] sm:$0x7] %vm458, %v403
  %462 = vst.msk [vmem:[%s1 + $0x10] sm:$0xf] %vm456, %v404
  %463 = vst.msk [vmem:[%s1 + $0x14] sm:$0x7] %vm458, %v405
  %464 = vst.msk [vmem:[%s1 + $0x18] sm:$0xf] %vm456, %v406
  %465 = vst.msk [vmem:[%s1 + $0x1c] sm:$0x7] %vm458, %v407
  %466 = vst.msk [vmem:[%s1 + $0x20] sm:$0xf] %vm456, %v408
  %467 = vst.msk [vmem:[%s1 + $0x24] sm:$0x7] %vm458, %v409
  %468 = vst.msk [vmem:[%s1 + $0x28] sm:$0xf] %vm456, %v410
  %469 = vst.msk [vmem:[%s1 + $0x2c] sm:$0x7] %vm458, %v411
  %470 = vst.msk [vmem:[%s1 + $0x30] sm:$0xf] %vm456, %v412
  %471 = vst.msk [vmem:[%s1 + $0x34] sm:$0x7] %vm458, %v413
  %472 = vst.msk [vmem:[%s1 + $0x38] sm:$0xf] %vm456, %v414
  %473 = vst.msk [vmem:[%s1 + $0x3c] sm:$0x7] %vm458, %v415
  %474 = vst.msk [vmem:[%s1 + $0x40] sm:$0xf] %vm456, %v416
  %475 = vst.msk [vmem:[%s1 + $0x44] sm:$0x7] %vm458, %v417
  %476 = vst.msk [vmem:[%s1 + $0x48] sm:$0xf] %vm456, %v418
  %477 = vst.msk [vmem:[%s1 + $0x4c] sm:$0x7] %vm458, %v419
  %478 = vst.msk [vmem:[%s1 + $0x50] sm:$0xf] %vm456, %v420
  %479 = vst.msk [vmem:[%s1 + $0x54] sm:$0x7] %vm458, %v421
  %480 = vst.msk [vmem:[%s1 + $0x58] sm:$0xf] %vm456, %v422
  %481 = vst.msk [vmem:[%s1 + $0x5c] sm:$0x7] %vm458, %v423
  %482 = vst.msk [vmem:[%s1 + $0x60] sm:$0xf] %vm456, %v424
  %483 = vst.msk [vmem:[%s1 + $0x64] sm:$0x7] %vm458, %v425
  %484 = vst.msk [vmem:[%s1 + $0x68] sm:$0xf] %vm456, %v426
  %485 = vst.msk [vmem:[%s1 + $0x6c] sm:$0x7] %vm458, %v427
  %486 = vst.msk [vmem:[%s1 + $0x70] sm:$0xf] %vm456, %v428
  %487 = vst.msk [vmem:[%s1 + $0x74] sm:$0x7] %vm458, %v429
  %488 = vst.msk [vmem:[%s1 + $0x78] sm:$0xf] %vm456, %v430
  %489 = vst.msk [vmem:[%s1 + $0x7c] sm:$0x7] %vm458, %v431
  %490 = vst.msk [vmem:[%s1 + $0x80] sm:$0xf] %vm456, %v432
  %491 = vst.msk [vmem:[%s1 + $0x84] sm:$0x7] %vm458, %v433
  %492 = vst.msk [vmem:[%s1 + $0x88] sm:$0xf] %vm456, %v434
  %493 = vst.msk [vmem:[%s1 + $0x8c] sm:$0x7] %vm458, %v435
  %494 = vst.msk [vmem:[%s1 + $0x90] sm:$0xf] %vm456, %v436
  %495 = vst.msk [vmem:[%s1 + $0x94] sm:$0x7] %vm458, %v437
  %496 = vst.msk [vmem:[%s1 + $0x98] sm:$0xf] %vm456, %v438
  %497 = vst.msk [vmem:[%s1 + $0x9c] sm:$0x7] %vm458, %v439
  %498 = vst.msk [vmem:[%s1 + $0xa0] sm:$0xf] %vm456, %v440
  %499 = vst.msk [vmem:[%s1 + $0xa4] sm:$0x7] %vm458, %v441
  %500 = vst.msk [vmem:[%s1 + $0xa8] sm:$0xf] %vm456, %v442
  %501 = vst.msk [vmem:[%s1 + $0xac] sm:$0x7] %vm458, %v443
  %502 = vst.msk [vmem:[%s1 + $0xb0] sm:$0xf] %vm456, %v444
  %503 = vst.msk [vmem:[%s1 + $0xb4] sm:$0x7] %vm458, %v445
  %504 = vst.msk [vmem:[%s1 + $0xb8] sm:$0xf] %vm456, %v446
  %505 = vst.msk [vmem:[%s1 + $0xbc] sm:$0x7] %vm458, %v447
  %506 = vst.msk [vmem:[%s1 + $0xc0] sm:$0xf] %vm456, %v448
  %507 = vst.msk [vmem:[%s1 + $0xc4] sm:$0x7] %vm458, %v449
  %508 = vst.msk [vmem:[%s1 + $0xc8] sm:$0xf] %vm456, %v450
  %509 = vst.msk [vmem:[%s1 + $0xcc] sm:$0x7] %vm458, %v451
  %510 = vst.msk [vmem:[%s1 + $0xd0] sm:$0xf] %vm456, %v452
  %511 = vst.msk [vmem:[%s1 + $0xd4] sm:$0x7] %vm458, %v453
  %512 = vst.msk [vmem:[%s1 + $0xd8] sm:$0xf] %vm456, %v454
  %513 = vst.msk [vmem:[%s1 + $0xdc] sm:$0x7] %vm458, %v455
  // Predicated region
  $region6: #{svhn_forward.7} parent=0 // pred_check
    _
  $region7: #{svhn_forward.7} parent=0 // pred_check_branch
    %515 = sbr.rel (0) target = $region9
  $region8: #{svhn_forward.7} parent=0 // pred_region
    _
  $region9: #{svhn_forward.7} parent=0 // pred_fallthru
    _
  // Predicated region
  $region10: #{svhn_forward.7} parent=0 // pred_check
    _
  $region11: #{svhn_forward.7} parent=0 // pred_check_branch
    %517 = sbr.rel (0) target = $region13
  $region12: #{svhn_forward.7} parent=0 // pred_region
    _
  $region13: #{svhn_forward.7} parent=0 // pred_fallthru
    _

// kernel: svhn_forward.9
$region0: #{svhn_forward.9}
  #allocation0 [shape = 'u32[]', space=smem, size = 0x4, offset = 0x4, fixed_abs, tag = 'smem constant byte address 0x4 - core index']
  #allocation1 [shape = 'u32[144,128]{1,0:T(1,128)}', space=vmem, size = 0x12000, scoped, tag = 'internal scratch']
  %s0 = inlined_call_operand.vmem [shape: f32[16,512], index: 0, kind: input, shape index: {}]
  %s1 = inlined_call_operand.vmem [shape: bf16[512,128], index: 1, kind: input, shape index: {}]
  %s2 = inlined_call_operand.vmem [shape: f32[1,128], index: 2, kind: input, shape index: {}]
  %s3 = inlined_call_operand.vmem [shape: f32[128,128], index: 3, kind: input, shape index: {}]
  %s4 = inlined_call_operand.vmem [shape: f32[1,128], index: 4, kind: input, shape index: {}]
  %s5 = inlined_call_operand.vmem [shape: f32[16,128], index: 5, kind: output, shape index: {}]
  %s6 = sld [smem:[#allocation0]]
  $region30: #{svhn_forward.9} parent=0
    _
  %s8 = ssub.s32 1, %s6
  %s9 = scalar_select 0, %s8, %s6
  // Predicated region
  $region2: #{svhn_forward.9} parent=0 // pred_check
    _
  $region3: #{svhn_forward.9} parent=0 // pred_check_branch
    %11 = sbr.rel (0) target = $region5
  $region4: #{svhn_forward.9} parent=0 // pred_region
    _
  $region5: #{svhn_forward.9} parent=0 // pred_fallthru
    _
  // Predicated region
  $region6: #{svhn_forward.9} parent=0 // pred_check
    _
  $region7: #{svhn_forward.9} parent=0 // pred_check_branch
    %13 = sbr.rel (0) target = $region9
  $region8: #{svhn_forward.9} parent=0 // pred_region
    _
  $region9: #{svhn_forward.9} parent=0 // pred_fallthru
    _
  // Predicated region
  $region10: #{svhn_forward.9} parent=0 // pred_check
    _
  $region11: #{svhn_forward.9} parent=0 // pred_check_branch
    %15 = sbr.rel (0) target = $region13
  $region12: #{svhn_forward.9} parent=0 // pred_region
    _
  $region13: #{svhn_forward.9} parent=0 // pred_fallthru
    _
  // Predicated region
  $region14: #{svhn_forward.9} parent=0 // pred_check
    _
  $region15: #{svhn_forward.9} parent=0 // pred_check_branch
    %17 = sbr.rel (0) target = $region17
  $region16: #{svhn_forward.9} parent=0 // pred_region
    _
  $region17: #{svhn_forward.9} parent=0 // pred_fallthru
    _
  // Predicated region
  $region18: #{svhn_forward.9} parent=0 // pred_check
    _
  $region19: #{svhn_forward.9} parent=0 // pred_check_branch
    %19 = sbr.rel (0) target = $region21
  $region20: #{svhn_forward.9} parent=0 // pred_region
    _
  $region21: #{svhn_forward.9} parent=0 // pred_fallthru
    _
  %v21 = vld [vmem:[%s0] sm:$0xff]
  %v22 = vld [vmem:[%s0 + $0x8] sm:$0xff]
  %v23 = vld [vmem:[%s0 + $0x10] sm:$0xff]
  %v24 = vld [vmem:[%s0 + $0x18] sm:$0xff]
  %v25 = vld [vmem:[%s0 + $0x20] sm:$0xff]
  %v26 = vld [vmem:[%s0 + $0x28] sm:$0xff]
  %v27 = vld [vmem:[%s0 + $0x30] sm:$0xff]
  %v28 = vld [vmem:[%s0 + $0x38] sm:$0xff]
  %v29 = vpack.c.bf16 %v25, %v21
  %v30 = vpack.c.bf16 %v26, %v22
  %v31 = vpack.c.bf16 %v27, %v23
  %v32 = vpack.c.bf16 %v28, %v24
  %v33 = vld [vmem:[%s1] sm:$0xf]
  %v34 = vld [vmem:[%s1 + $0x4] sm:$0xf]
  %v35 = vld [vmem:[%s1 + $0x8] sm:$0xf]
  %v36 = vld [vmem:[%s1 + $0xc] sm:$0xf]
  %v37 = vld [vmem:[%s1 + $0x10] sm:$0xf]
  %v38 = vld [vmem:[%s1 + $0x14] sm:$0xf]
  %v39 = vld [vmem:[%s1 + $0x18] sm:$0xf]
  %v40 = vld [vmem:[%s1 + $0x1c] sm:$0xf]
  %v41 = vld [vmem:[%s1 + $0x20] sm:$0xf]
  %v42 = vld [vmem:[%s1 + $0x24] sm:$0xf]
  %v43 = vld [vmem:[%s1 + $0x28] sm:$0xf]
  %v44 = vld [vmem:[%s1 + $0x2c] sm:$0xf]
  %v45 = vld [vmem:[%s1 + $0x30] sm:$0xf]
  %v46 = vld [vmem:[%s1 + $0x34] sm:$0xf]
  %v47 = vld [vmem:[%s1 + $0x38] sm:$0xf]
  %v48 = vld [vmem:[%s1 + $0x3c] sm:$0xf]
  %v49 = vld [vmem:[%s1 + $0x40] sm:$0xf]
  %v50 = vld [vmem:[%s1 + $0x44] sm:$0xf]
  %v51 = vld [vmem:[%s1 + $0x48] sm:$0xf]
  %v52 = vld [vmem:[%s1 + $0x4c] sm:$0xf]
  %v53 = vld [vmem:[%s1 + $0x50] sm:$0xf]
  %v54 = vld [vmem:[%s1 + $0x54] sm:$0xf]
  %v55 = vld [vmem:[%s1 + $0x58] sm:$0xf]
  %v56 = vld [vmem:[%s1 + $0x5c] sm:$0xf]
  %v57 = vld [vmem:[%s1 + $0x60] sm:$0xf]
  %v58 = vld [vmem:[%s1 + $0x64] sm:$0xf]
  %v59 = vld [vmem:[%s1 + $0x68] sm:$0xf]
  %v60 = vld [vmem:[%s1 + $0x6c] sm:$0xf]
  %v61 = vld [vmem:[%s1 + $0x70] sm:$0xf]
  %v62 = vld [vmem:[%s1 + $0x74] sm:$0xf]
  %v63 = vld [vmem:[%s1 + $0x78] sm:$0xf]
  %v64 = vld [vmem:[%s1 + $0x7c] sm:$0xf]
  %v65 = vld [vmem:[%s1 + $0x80] sm:$0xf]
  %v66 = vld [vmem:[%s1 + $0x84] sm:$0xf]
  %v67 = vld [vmem:[%s1 + $0x88] sm:$0xf]
  %v68 = vld [vmem:[%s1 + $0x8c] sm:$0xf]
  %v69 = vld [vmem:[%s1 + $0x90] sm:$0xf]
  %v70 = vld [vmem:[%s1 + $0x94] sm:$0xf]
  %v71 = vld [vmem:[%s1 + $0x98] sm:$0xf]
  %v72 = vld [vmem:[%s1 + $0x9c] sm:$0xf]
  %v73 = vld [vmem:[%s1 + $0xa0] sm:$0xf]
  %v74 = vld [vmem:[%s1 + $0xa4] sm:$0xf]
  %v75 = vld [vmem:[%s1 + $0xa8] sm:$0xf]
  %v76 = vld [vmem:[%s1 + $0xac] sm:$0xf]
  %v77 = vld [vmem:[%s1 + $0xb0] sm:$0xf]
  %v78 = vld [vmem:[%s1 + $0xb4] sm:$0xf]
  %v79 = vld [vmem:[%s1 + $0xb8] sm:$0xf]
  %v80 = vld [vmem:[%s1 + $0xbc] sm:$0xf]
  %v81 = vld [vmem:[%s1 + $0xc0] sm:$0xf]
  %v82 = vld [vmem:[%s1 + $0xc4] sm:$0xf]
  %v83 = vld [vmem:[%s1 + $0xc8] sm:$0xf]
  %v84 = vld [vmem:[%s1 + $0xcc] sm:$0xf]
  %v85 = vld [vmem:[%s1 + $0xd0] sm:$0xf]
  %v86 = vld [vmem:[%s1 + $0xd4] sm:$0xf]
  %v87 = vld [vmem:[%s1 + $0xd8] sm:$0xf]
  %v88 = vld [vmem:[%s1 + $0xdc] sm:$0xf]
  %v89 = vld [vmem:[%s1 + $0xe0] sm:$0xf]
  %v90 = vld [vmem:[%s1 + $0xe4] sm:$0xf]
  %v91 = vld [vmem:[%s1 + $0xe8] sm:$0xf]
  %v92 = vld [vmem:[%s1 + $0xec] sm:$0xf]
  %v93 = vld [vmem:[%s1 + $0xf0] sm:$0xf]
  %v94 = vld [vmem:[%s1 + $0xf4] sm:$0xf]
  %v95 = vld [vmem:[%s1 + $0xf8] sm:$0xf]
  %v96 = vld [vmem:[%s1 + $0xfc] sm:$0xf]
  %v97 = vld [vmem:[%s2] sm:$0x1]
  %v99 = vlaneseq
  %v100 = vshrl.u32 %v99, 7
  %v101 = vsub.s32 0, %v100
  %v102 = vrot.slane %v97, %v101
  %v168 = vunpack.c.l.b16 %v33
  %v169 = vunpack.c.l.b16 %v34
  %v170 = vunpack.c.l.b16 %v35
  %v171 = vunpack.c.l.b16 %v36
  %v172 = vunpack.c.l.b16 %v37
  %v173 = vunpack.c.l.b16 %v38
  %v174 = vunpack.c.l.b16 %v39
  %v175 = vunpack.c.l.b16 %v40
  %v176 = vunpack.c.l.b16 %v41
  %v177 = vunpack.c.l.b16 %v42
  %v178 = vunpack.c.l.b16 %v43
  %v179 = vunpack.c.l.b16 %v44
  %v180 = vunpack.c.l.b16 %v45
  %v181 = vunpack.c.l.b16 %v46
  %v182 = vunpack.c.l.b16 %v47
  %v183 = vunpack.c.l.b16 %v48
  %v184 = vunpack.c.l.b16 %v49
  %v185 = vunpack.c.l.b16 %v50
  %v186 = vunpack.c.l.b16 %v51
  %v187 = vunpack.c.l.b16 %v52
  %v188 = vunpack.c.l.b16 %v53
  %v189 = vunpack.c.l.b16 %v54
  %v190 = vunpack.c.l.b16 %v55
  %v191 = vunpack.c.l.b16 %v56
  %v192 = vunpack.c.l.b16 %v57
  %v193 = vunpack.c.l.b16 %v58
  %v194 = vunpack.c.l.b16 %v59
  %v195 = vunpack.c.l.b16 %v60
  %v196 = vunpack.c.l.b16 %v61
  %v197 = vunpack.c.l.b16 %v62
  %v198 = vunpack.c.l.b16 %v63
  %v199 = vunpack.c.l.b16 %v64
  %v200 = vunpack.c.l.b16 %v65
  %v201 = vunpack.c.l.b16 %v66
  %v202 = vunpack.c.l.b16 %v67
  %v203 = vunpack.c.l.b16 %v68
  %v204 = vunpack.c.l.b16 %v69
  %v205 = vunpack.c.l.b16 %v70
  %v206 = vunpack.c.l.b16 %v71
  %v207 = vunpack.c.l.b16 %v72
  %v208 = vunpack.c.l.b16 %v73
  %v209 = vunpack.c.l.b16 %v74
  %v210 = vunpack.c.l.b16 %v75
  %v211 = vunpack.c.l.b16 %v76
  %v212 = vunpack.c.l.b16 %v77
  %v213 = vunpack.c.l.b16 %v78
  %v214 = vunpack.c.l.b16 %v79
  %v215 = vunpack.c.l.b16 %v80
  %v216 = vunpack.c.l.b16 %v81
  %v217 = vunpack.c.l.b16 %v82
  %v218 = vunpack.c.l.b16 %v83
  %v219 = vunpack.c.l.b16 %v84
  %v220 = vunpack.c.l.b16 %v85
  %v221 = vunpack.c.l.b16 %v86
  %v222 = vunpack.c.l.b16 %v87
  %v223 = vunpack.c.l.b16 %v88
  %v224 = vunpack.c.l.b16 %v89
  %v225 = vunpack.c.l.b16 %v90
  %v226 = vunpack.c.l.b16 %v91
  %v227 = vunpack.c.l.b16 %v92
  %v228 = vunpack.c.l.b16 %v93
  %v229 = vunpack.c.l.b16 %v94
  %v230 = vunpack.c.l.b16 %v95
  %v231 = vunpack.c.l.b16 %v96
  %v232 = vpack.c.b16 %v169, %v168
  %v233 = vpack.c.b16 %v171, %v170
  %v234 = vpack.c.b16 %v173, %v172
  %v235 = vpack.c.b16 %v175, %v174
  %v236 = vpack.c.b16 %v177, %v176
  %v237 = vpack.c.b16 %v179, %v178
  %v238 = vpack.c.b16 %v181, %v180
  %v239 = vpack.c.b16 %v183, %v182
  %v240 = vpack.c.b16 %v185, %v184
  %v241 = vpack.c.b16 %v187, %v186
  %v242 = vpack.c.b16 %v189, %v188
  %v243 = vpack.c.b16 %v191, %v190
  %v244 = vpack.c.b16 %v193, %v192
  %v245 = vpack.c.b16 %v195, %v194
  %v246 = vpack.c.b16 %v197, %v196
  %v247 = vpack.c.b16 %v199, %v198
  %v248 = vpack.c.b16 %v201, %v200
  %v249 = vpack.c.b16 %v203, %v202
  %v250 = vpack.c.b16 %v205, %v204
  %v251 = vpack.c.b16 %v207, %v206
  %v252 = vpack.c.b16 %v209, %v208
  %v253 = vpack.c.b16 %v211, %v210
  %v254 = vpack.c.b16 %v213, %v212
  %v255 = vpack.c.b16 %v215, %v214
  %v256 = vpack.c.b16 %v217, %v216
  %v257 = vpack.c.b16 %v219, %v218
  %v258 = vpack.c.b16 %v221, %v220
  %v259 = vpack.c.b16 %v223, %v222
  %v260 = vpack.c.b16 %v225, %v224
  %v261 = vpack.c.b16 %v227, %v226
  %v262 = vpack.c.b16 %v229, %v228
  %v263 = vpack.c.b16 %v231, %v230
  %296 = vmatprep.subr.bf16.mxu0 0
  %297 = vmatpush1.bf16.msra.mxu0 %v232
  %298 = vmatprep.subr.bf16.mxu0 0
  %299 = vmatpush1.bf16.msra.mxu0 %v233
  %300 = vmatprep.subr.bf16.mxu0 0
  %301 = vmatpush1.bf16.msra.mxu0 %v234
  %302 = vmatprep.subr.bf16.mxu0 0
  %303 = vmatpush1.bf16.msra.mxu0 %v235
  %304 = vmatprep.subr.bf16.mxu0 0
  %305 = vmatpush1.bf16.msra.mxu0 %v236
  %306 = vmatprep.subr.bf16.mxu0 0
  %307 = vmatpush1.bf16.msra.mxu0 %v237
  %308 = vmatprep.subr.bf16.mxu0 0
  %309 = vmatpush1.bf16.msra.mxu0 %v238
  %310 = vmatprep.subr.bf16.mxu0 0
  %311 = vmatpush1.bf16.msra.mxu0 %v239
  %312 = vmatprep.subr.bf16.mxu0 0
  %313 = vmatpush1.bf16.msra.mxu0 %v240
  %314 = vmatprep.subr.bf16.mxu0 0
  %315 = vmatpush1.bf16.msra.mxu0 %v241
  %316 = vmatprep.subr.bf16.mxu0 0
  %317 = vmatpush1.bf16.msra.mxu0 %v242
  %318 = vmatprep.subr.bf16.mxu0 0
  %319 = vmatpush1.bf16.msra.mxu0 %v243
  %320 = vmatprep.subr.bf16.mxu0 0
  %321 = vmatpush1.bf16.msra.mxu0 %v244
  %322 = vmatprep.subr.bf16.mxu0 0
  %323 = vmatpush1.bf16.msra.mxu0 %v245
  %324 = vmatprep.subr.bf16.mxu0 0
  %325 = vmatpush1.bf16.msra.mxu0 %v246
  %326 = vmatprep.subr.bf16.mxu0 0
  %327 = vmatpush1.bf16.msra.mxu0 %v247
  %328 = vmatprep.mubr.bf16.mxu0 %v30
  %329 = vmatmul.mubr.bf16.gmra.mrb[0].mxu0 %v29
  %v330 = vpop.f32.mrb[0].mxu0
  %v331 = vadd.f32 %v102, %v330
  %v332 = vpop.f32.mrb[0].mxu0
  %v333 = vpop.f32.mrb[0].mxu0
  %v334 = vadd.f32 %v102, %v333
  %v335 = vpop.f32.mrb[0].mxu0
  %336 = vdwg.mxu0
  %337 = vmatprep.subr.bf16.mxu0 0
  %338 = vmatpush1.bf16.msra.mxu0 %v248
  %339 = vmatprep.subr.bf16.mxu0 0
  %340 = vmatpush1.bf16.msra.mxu0 %v249
  %341 = vmatprep.subr.bf16.mxu0 0
  %342 = vmatpush1.bf16.msra.mxu0 %v250
  %343 = vmatprep.subr.bf16.mxu0 0
  %344 = vmatpush1.bf16.msra.mxu0 %v251
  %345 = vmatprep.subr.bf16.mxu0 0
  %346 = vmatpush1.bf16.msra.mxu0 %v252
  %347 = vmatprep.subr.bf16.mxu0 0
  %348 = vmatpush1.bf16.msra.mxu0 %v253
  %349 = vmatprep.subr.bf16.mxu0 0
  %350 = vmatpush1.bf16.msra.mxu0 %v254
  %351 = vmatprep.subr.bf16.mxu0 0
  %352 = vmatpush1.bf16.msra.mxu0 %v255
  %353 = vmatprep.subr.bf16.mxu0 0
  %354 = vmatpush1.bf16.msra.mxu0 %v256
  %355 = vmatprep.subr.bf16.mxu0 0
  %356 = vmatpush1.bf16.msra.mxu0 %v257
  %357 = vmatprep.subr.bf16.mxu0 0
  %358 = vmatpush1.bf16.msra.mxu0 %v258
  %359 = vmatprep.subr.bf16.mxu0 0
  %360 = vmatpush1.bf16.msra.mxu0 %v259
  %361 = vmatprep.subr.bf16.mxu0 0
  %362 = vmatpush1.bf16.msra.mxu0 %v260
  %363 = vmatprep.subr.bf16.mxu0 0
  %364 = vmatpush1.bf16.msra.mxu0 %v261
  %365 = vmatprep.subr.bf16.mxu0 0
  %366 = vmatpush1.bf16.msra.mxu0 %v262
  %367 = vmatprep.subr.bf16.mxu0 0
  %368 = vmatpush1.bf16.msra.mxu0 %v263
  %369 = vmatprep.mubr.bf16.mxu0 %v32
  %370 = vmatmul.mubr.bf16.gmra.mrb[0].mxu0 %v31
  %v371 = vpop.f32.mrb[0].mxu0
  %v372 = vadd.f32 %v331, %v371
  %v373 = vpop.f32.mrb[0].mxu0
  %v374 = vpop.f32.mrb[0].mxu0
  %v375 = vadd.f32 %v334, %v374
  %v376 = vpop.f32.mrb[0].mxu0
  %377 = vdwg.mxu0
  %v378 = vmax.f32 %v372, 0.0
  %v379 = vmax.f32 %v375, 0.0
  %v380 = vld [vmem:[%s3] sm:$0xff]
  %v381 = vld [vmem:[%s3 + $0x8] sm:$0xff]
  %v382 = vld [vmem:[%s3 + $0x10] sm:$0xff]
  %v383 = vld [vmem:[%s3 + $0x18] sm:$0xff]
  %v384 = vld [vmem:[%s3 + $0x20] sm:$0xff]
  %v385 = vld [vmem:[%s3 + $0x28] sm:$0xff]
  %v386 = vld [vmem:[%s3 + $0x30] sm:$0xff]
  %v387 = vld [vmem:[%s3 + $0x38] sm:$0xff]
  %v388 = vld [vmem:[%s3 + $0x40] sm:$0xff]
  %v389 = vld [vmem:[%s3 + $0x48] sm:$0xff]
  %v390 = vld [vmem:[%s3 + $0x50] sm:$0xff]
  %v391 = vld [vmem:[%s3 + $0x58] sm:$0xff]
  %v392 = vld [vmem:[%s3 + $0x60] sm:$0xff]
  %v393 = vld [vmem:[%s3 + $0x68] sm:$0xff]
  %v394 = vld [vmem:[%s3 + $0x70] sm:$0xff]
  %v395 = vld [vmem:[%s3 + $0x78] sm:$0xff]
  %v396 = vld [vmem:[%s4] sm:$0x1]
  %v398 = vlaneseq
  %v399 = vshrl.u32 %v398, 7
  %v400 = vsub.s32 0, %v399
  %v401 = vrot.slane %v396, %v400
  %403 = vmatprep.subr.mxu0 0.0
  %404 = vmatpush1.msra.mxu0 %v380
  %405 = vmatprep.subr.mxu0 0.0
  %406 = vmatpush1.msra.mxu0 %v381
  %407 = vmatprep.subr.mxu0 0.0
  %408 = vmatpush1.msra.mxu0 %v382
  %409 = vmatprep.subr.mxu0 0.0
  %410 = vmatpush1.msra.mxu0 %v383
  %411 = vmatprep.subr.mxu0 0.0
  %412 = vmatpush1.msra.mxu0 %v384
  %413 = vmatprep.subr.mxu0 0.0
  %414 = vmatpush1.msra.mxu0 %v385
  %415 = vmatprep.subr.mxu0 0.0
  %416 = vmatpush1.msra.mxu0 %v386
  %417 = vmatprep.subr.mxu0 0.0
  %418 = vmatpush1.msra.mxu0 %v387
  %419 = vmatprep.subr.mxu0 0.0
  %420 = vmatpush1.msra.mxu0 %v388
  %421 = vmatprep.subr.mxu0 0.0
  %422 = vmatpush1.msra.mxu0 %v389
  %423 = vmatprep.subr.mxu0 0.0
  %424 = vmatpush1.msra.mxu0 %v390
  %425 = vmatprep.subr.mxu0 0.0
  %426 = vmatpush1.msra.mxu0 %v391
  %427 = vmatprep.subr.mxu0 0.0
  %428 = vmatpush1.msra.mxu0 %v392
  %429 = vmatprep.subr.mxu0 0.0
  %430 = vmatpush1.msra.mxu0 %v393
  %431 = vmatprep.subr.mxu0 0.0
  %432 = vmatpush1.msra.mxu0 %v394
  %433 = vmatprep.subr.mxu0 0.0
  %434 = vmatpush1.msra.mxu0 %v395
  %435 = vmatprep.subr.mxu0 0.0
  %436 = vmatpush1.msra.mxu0 0.0
  %437 = vmatprep.subr.mxu0 0.0
  %438 = vmatpush1.msra.mxu0 0.0
  %439 = vmatprep.subr.mxu0 0.0
  %440 = vmatpush1.msra.mxu0 0.0
  %441 = vmatprep.subr.mxu0 0.0
  %442 = vmatpush1.msra.mxu0 0.0
  %443 = vmatprep.subr.mxu0 0.0
  %444 = vmatpush1.msra.mxu0 0.0
  %445 = vmatprep.subr.mxu0 0.0
  %446 = vmatpush1.msra.mxu0 0.0
  %447 = vmatprep.subr.mxu0 0.0
  %448 = vmatpush1.msra.mxu0 0.0
  %449 = vmatprep.subr.mxu0 0.0
  %450 = vmatpush1.msra.mxu0 0.0
  %451 = vmatprep.subr.mxu0 0.0
  %452 = vmatpush1.msra.mxu0 0.0
  %453 = vmatprep.subr.mxu0 0.0
  %454 = vmatpush1.msra.mxu0 0.0
  %455 = vmatprep.subr.mxu0 0.0
  %456 = vmatpush1.msra.mxu0 0.0
  %457 = vmatprep.subr.mxu0 0.0
  %458 = vmatpush1.msra.mxu0 0.0
  %459 = vmatprep.subr.mxu0 0.0
  %460 = vmatpush1.msra.mxu0 0.0
  %461 = vmatprep.subr.mxu0 0.0
  %462 = vmatpush1.msra.mxu0 0.0
  %463 = vmatprep.subr.mxu0 0.0
  %464 = vmatpush1.msra.mxu0 0.0
  %465 = vmatprep.subr.mxu0 0.0
  %466 = vmatpush1.msra.mxu0 0.0
  %467 = vmatprep.mubr.f32.mxu0 0.0
  %468 = vmatmul.mubr.f32.gmra.mrb[0].mxu0 %v378
  %v469 = vpop.f32.mrb[0].mxu0
  %v470 = vadd.f32 %v401, %v469
  %v471 = vpop.f32.mrb[0].mxu0
  %472 = vmatprep.mubr.f32.mxu0 0.0
  %473 = vmatmul.mubr.f32.gmra.mrb[0].mxu0 %v379
  %v474 = vpop.f32.mrb[0].mxu0
  %v475 = vadd.f32 %v401, %v474
  %v476 = vpop.f32.mrb[0].mxu0
  %477 = vdwg.mxu0
  %478 = vmax.xlane.f32.xlu0 %v470
  %v479 = vpop.xlane.xlu0 %478
  %480 = vmax.xlane.f32.xlu0 %v475
  %v481 = vpop.xlane.xlu0 %480
  %v482 = vsub.f32 %v470, %v479
  %v483 = vsub.f32 %v475, %v481
  %v484 = vmul.f32 %v482, 1.442695
  %v485 = vpow.pop %v484
  %v486 = vmul.f32 %v483, 1.442695
  %v487 = vpow.pop %v486
  %488 = vadd.xlane.f32.xlu0 %v485
  %v489 = vpop.xlane.xlu0 %488
  %490 = vadd.xlane.f32.xlu0 %v487
  %v491 = vpop.xlane.xlu0 %490
  %v492 = vlog2.pop %v489
  %v493 = vmul.f32 %v492, 0.6931472
  %v494 = vlog2.pop %v491
  %v495 = vmul.f32 %v494, 0.6931472
  %v496 = vsub.f32 %v482, %v493
  %v497 = vsub.f32 %v483, %v495
  %498 = vst [vmem:[%s5] sm:$0xff] %v496
  %499 = vst [vmem:[%s5 + $0x8] sm:$0xff] %v497
  // Predicated region
  $region22: #{svhn_forward.9} parent=0 // pred_check
    _
  $region23: #{svhn_forward.9} parent=0 // pred_check_branch
    %501 = sbr.rel (0) target = $region25
  $region24: #{svhn_forward.9} parent=0 // pred_region
    _
  $region25: #{svhn_forward.9} parent=0 // pred_fallthru
    _
  // Predicated region
  $region26: #{svhn_forward.9} parent=0 // pred_check
    _
  $region27: #{svhn_forward.9} parent=0 // pred_check_branch
    %503 = sbr.rel (0) target = $region29
  $region28: #{svhn_forward.9} parent=0 // pred_region
    _
  $region29: #{svhn_forward.9} parent=0 // pred_fallthru
    _

// kernel: svhn_forward.8
$region0: #{svhn_forward.8}
  #allocation0 [shape = 'u32[]', space=smem, size = 0x4, offset = 0x4, fixed_abs, tag = 'smem constant byte address 0x4 - core index']
  #allocation1 [shape = 'u32[144,128]{1,0:T(1,128)}', space=vmem, size = 0x12000, scoped, tag = 'internal scratch']
  %s0 = inlined_call_operand.vmem [shape: bf16[16,12544], index: 0, kind: input, shape index: {}]
  %s1 = inlined_call_operand.vmem [shape: bf16[12544,512], index: 1, kind: input, shape index: {}]
  %s2 = inlined_call_operand.vmem [shape: f32[1,512], index: 2, kind: input, shape index: {}]
  %s3 = inlined_call_operand.vmem [shape: f32[16,512], index: 3, kind: output, shape index: {}]
  %s4 = sld [smem:[#allocation0]]
  $region133: #{svhn_forward.8} parent=0
    _
  %s6 = ssub.s32 1, %s4
  %s7 = scalar_select 0, %s6, %s4
  $region1: #{svhn_forward.8} parent=0
    #allocation2 [shape = 'u8[114688]{0}', space=vmem, size = 0x1c000, scoped, tag = 'input window, operand 0']
    #allocation3 [shape = 'u8[1835008]{0}', space=vmem, size = 0x1c0000, scoped, tag = 'input window, operand 1']
    #allocation4 [shape = 'u8[32768]{0}', space=vmem, size = 0x8000, scoped, tag = 'output window, operand 0']
    loop: start=0, step=1, limit=16
    $region2: #{svhn_forward.8} parent=1 // loop_pre_header
      _
    $region3: #{svhn_forward.8} parent=1 // loop_header
      %s9 = sphi 0, %s13
      %p10 = scmp.ge.s32.totalorder %s9, 16
      %s16 = sphi 0, %s35
      %s17 = sphi 0, %s31
      %s18 = sphi 0, %s27
      %s19 = sphi 0, %s16
      %s20 = sphi 0, %s17
      %s21 = sphi 0, %s18
      %s22 = sphi 0, %s19
      %s23 = sphi 0, %s20
      %s24 = sphi 0, %s21
      %s40 = sphi 0, %s42
      %s43 = sphi 0, %s40
      %s44 = sphi 0, %s43
      %s60 = sphi 0, %s44
      %s68 = sphi 0, %s70
      %s71 = sphi 0, %s68
      %s72 = sphi 0, %s71
      %s88 = sphi 0, %s72
      %s94 = sphi 0, %s96
      %s97 = sphi 0, %s94
      %s98 = sphi 0, %s97
      %s114 = sphi 0, %s98
      %s122 = sphi 0, %s124
      %s125 = sphi 0, %s122
      %s126 = sphi 0, %s125
      %s142 = sphi 0, %s126
    $region4: #{svhn_forward.8} parent=1 // loop_header_branch
      %12 = sbr.rel (%p10) target = $region8
    $region5: #{svhn_forward.8} parent=1 // loop_body
      %s14 = ssub.s32 %s9, 1
      %s15 = ssub.s32 %s9, 2
      %s25 = sadd.s32 1, %s18
      %p26 = scmp.ge.s32.totalorder %s25, 7
      %s27 = scalar_select %p26, 0, %s25
      %s28 = sadd.s32 1, %s17
      %s29 = scalar_select %p26, %s28, %s17
      %p30 = scmp.ge.s32.totalorder %s29, 2
      %s31 = scalar_select %p30, 0, %s29
      %s32 = sadd.s32 1, %s16
      %s33 = scalar_select %p30, %s32, %s16
      %p34 = scmp.ge.s32.totalorder %s33, 1
      %s35 = scalar_select %p34, 0, %s33
      %s36 = ssub.s32 %s16, %s35
      %s37 = ssub.s32 %s18, %s27
      %s38 = sor.u32 %s36, %s37
      %p39 = scmp.eq.s32.totalorder %s38, 0
      %s41 = sadd.s32 %s40, 1
      %s42 = scalar_select %p39, %s40, %s41
      %p45 = pneg %p39
      %p46 = scmp.eq.s32.totalorder %s9, 13
      %p47 = por %p45, %p46
      %p48 = scmp.ne.s32.totalorder %s40, %s43
      %p49 = scmp.eq.s32.totalorder %s9, 0
      %p50 = por %p48, %p49
      %p51 = scmp.ne.s32.totalorder %s40, %s43
      %p52 = scmp.eq.s32.totalorder %s14, 13
      %p53 = por %p51, %p52
      %p54 = scmp.ne.s32.totalorder %s43, %s44
      %p55 = scmp.eq.s32.totalorder %s14, 0
      %p56 = por %p54, %p55
      %p57 = scmp.ne.s32.totalorder %s43, %s44
      %p58 = scmp.eq.s32.totalorder %s15, 13
      %p59 = por %p57, %p58
      %p61 = scmp.ne.s32.totalorder %s44, %s60
      %p62 = scmp.eq.s32.totalorder %s15, 0
      %p63 = por %p61, %p62
      %s64 = ssub.s32 %s18, %s27
      %s65 = ssub.s32 %s17, %s31
      %s66 = sor.u32 %s64, %s65
      %p67 = scmp.eq.s32.totalorder %s66, 0
      %s69 = sadd.s32 %s68, 1
      %s70 = scalar_select %p67, %s68, %s69
      %p73 = pneg %p67
      %p74 = scmp.eq.s32.totalorder %s9, 13
      %p75 = por %p73, %p74
      %p76 = scmp.ne.s32.totalorder %s68, %s71
      %p77 = scmp.eq.s32.totalorder %s9, 0
      %p78 = por %p76, %p77
      %p79 = scmp.ne.s32.totalorder %s68, %s71
      %p80 = scmp.eq.s32.totalorder %s14, 13
      %p81 = por %p79, %p80
      %p82 = scmp.ne.s32.totalorder %s71, %s72
      %p83 = scmp.eq.s32.totalorder %s14, 0
      %p84 = por %p82, %p83
      %p85 = scmp.ne.s32.totalorder %s71, %s72
      %p86 = scmp.eq.s32.totalorder %s15, 13
      %p87 = por %p85, %p86
      %p89 = scmp.ne.s32.totalorder %s72, %s88
      %p90 = scmp.eq.s32.totalorder %s15, 0
      %p91 = por %p89, %p90
      %s92 = ssub.s32 %s17, %s31
      %p93 = scmp.eq.s32.totalorder %s92, 0
      %s95 = sadd.s32 %s94, 1
      %s96 = scalar_select %p93, %s94, %s95
      %p99 = pneg %p93
      %p100 = scmp.eq.s32.totalorder %s9, 13
      %p101 = por %p99, %p100
      %p102 = scmp.ne.s32.totalorder %s94, %s97
      %p103 = scmp.eq.s32.totalorder %s9, 0
      %p104 = por %p102, %p103
      %p105 = scmp.ne.s32.totalorder %s94, %s97
      %p106 = scmp.eq.s32.totalorder %s14, 13
      %p107 = por %p105, %p106
      %p108 = scmp.ne.s32.totalorder %s97, %s98
      %p109 = scmp.eq.s32.totalorder %s14, 0
      %p110 = por %p108, %p109
      %p111 = scmp.ne.s32.totalorder %s97, %s98
      %p112 = scmp.eq.s32.totalorder %s15, 13
      %p113 = por %p111, %p112
      %p115 = scmp.ne.s32.totalorder %s98, %s114
      %p116 = scmp.eq.s32.totalorder %s15, 0
      %p117 = por %p115, %p116
      %s118 = ssub.s32 %s16, %s35
      %s119 = ssub.s32 %s17, %s31
      %s120 = sor.u32 %s118, %s119
      %p121 = scmp.eq.s32.totalorder %s120, 0
      %s123 = sadd.s32 %s122, 1
      %s124 = scalar_select %p121, %s122, %s123
      %p127 = pneg %p121
      %p128 = scmp.eq.s32.totalorder %s9, 13
      %p129 = por %p127, %p128
      %p130 = scmp.ne.s32.totalorder %s122, %s125
      %p131 = scmp.eq.s32.totalorder %s9, 0
      %p132 = por %p130, %p131
      %p133 = scmp.ne.s32.totalorder %s122, %s125
      %p134 = scmp.eq.s32.totalorder %s14, 13
      %p135 = por %p133, %p134
      %p136 = scmp.ne.s32.totalorder %s125, %s126
      %p137 = scmp.eq.s32.totalorder %s14, 0
      %p138 = por %p136, %p137
      %p139 = scmp.ne.s32.totalorder %s125, %s126
      %p140 = scmp.eq.s32.totalorder %s15, 13
      %p141 = por %p139, %p140
      %p143 = scmp.ne.s32.totalorder %s126, %s142
      %p144 = scmp.eq.s32.totalorder %s15, 0
      %p145 = por %p143, %p144
      %p146 = scmp.le.s32.totalorder 1, %s9
      %p147 = scmp.lt.s32.totalorder %s9, 15
      %p148 = pnand %p146, %p147
      %p149 = pneg %p148
      // Predicated region
      $region9: #{svhn_forward.8} parent=5 // pred_check
        _
      $region10: #{svhn_forward.8} parent=5 // pred_check_branch
        %151 = sbr.rel (%p148) target = $region12
      $region11: #{svhn_forward.8} parent=5 // pred_region
        %s152 = ssub.s32 %s9, 1
      $region12: #{svhn_forward.8} parent=5 // pred_fallthru
        _
      %p153 = scmp.lt.s32.totalorder %s9, 14
      // Predicated region
      $region13: #{svhn_forward.8} parent=5 // pred_check
        %p154 = pneg %p153
      $region14: #{svhn_forward.8} parent=5 // pred_check_branch
        %156 = sbr.rel (%p154) target = $region16
      $region15: #{svhn_forward.8} parent=5 // pred_region
        // Predicated region
        $region17: #{svhn_forward.8} parent=15 // pred_check
          %p157 = pneg %p50
        $region18: #{svhn_forward.8} parent=15 // pred_check_branch
          %159 = sbr.rel (%p157) target = $region20
        $region19: #{svhn_forward.8} parent=15 // pred_region
          %s160 = sand.u32 %s40, 1
          %s161 = sand.u32 %s40, 1
          %s162 = smul.addr %s161, 112
          %s163 = scalar_lea.vmem [#allocation2], %s162
          %s164 = smul.u32 2, %s16
          %s165 = smul.u32 14, %s18
          %s166 = smul.addr %s164, 98
          %s167 = sadd.s32 %s165, %s166
          %s168 = smul.addr %s167, 4
          %s169 = scalar_lea.vmem %s0, %s168
          // Predicated region
          $region21: #{svhn_forward.8} parent=19 // pred_check
            _
          $region22: #{svhn_forward.8} parent=19 // pred_check_branch
            %171 = sbr.rel (0) target = $region24
          $region23: #{svhn_forward.8} parent=19 // pred_region
            // Predicated region
            $region25: #{svhn_forward.8} parent=23 // pred_check
              _
            $region26: #{svhn_forward.8} parent=23 // pred_check_branch
              %173 = sbr.rel (0) target = $region28
            $region27: #{svhn_forward.8} parent=23 // pred_region
              loop: start=0, step=1, limit=1
              $region29: #{svhn_forward.8} parent=27 // loop_pre_header
                _
              $region30: #{svhn_forward.8} parent=27 // loop_header
                %s175 = sphi 0, %s179
                %p176 = scmp.ge.s32.totalorder %s175, 1
                %s180 = sphi %s169, %s169
                %s181 = sphi %s163, %s163
              $region31: #{svhn_forward.8} parent=27 // loop_header_branch
                %178 = sbr.rel (%p176) target = $region35
              $region32: #{svhn_forward.8} parent=27 // loop_body
                %v182 = vld [vmem:[%s180] sm:$0xff]
                %183 = vst [vmem:[%s181] sm:$0xff] %v182
                %v184 = vld [vmem:[%s180 + $0x8] sm:$0xff]
                %185 = vst [vmem:[%s181 + $0x8] sm:$0xff] %v184
                %v186 = vld [vmem:[%s180 + $0x10] sm:$0xff]
                %187 = vst [vmem:[%s181 + $0x10] sm:$0xff] %v186
                %v188 = vld [vmem:[%s180 + $0x18] sm:$0xff]
                %189 = vst [vmem:[%s181 + $0x18] sm:$0xff] %v188
                %v190 = vld [vmem:[%s180 + $0x20] sm:$0xff]
                %191 = vst [vmem:[%s181 + $0x20] sm:$0xff] %v190
                %v192 = vld [vmem:[%s180 + $0x28] sm:$0xff]
                %193 = vst [vmem:[%s181 + $0x28] sm:$0xff] %v192
                %v194 = vld [vmem:[%s180 + $0x30] sm:$0xff]
                %195 = vst [vmem:[%s181 + $0x30] sm:$0xff] %v194
                %v196 = vld [vmem:[%s180 + $0x188] sm:$0xff]
                %197 = vst [vmem:[%s181 + $0x38] sm:$0xff] %v196
                %v198 = vld [vmem:[%s180 + $0x190] sm:$0xff]
                %199 = vst [vmem:[%s181 + $0x40] sm:$0xff] %v198
                %v200 = vld [vmem:[%s180 + $0x198] sm:$0xff]
                %201 = vst [vmem:[%s181 + $0x48] sm:$0xff] %v200
                %v202 = vld [vmem:[%s180 + $0x1a0] sm:$0xff]
                %203 = vst [vmem:[%s181 + $0x50] sm:$0xff] %v202
                %v204 = vld [vmem:[%s180 + $0x1a8] sm:$0xff]
                %205 = vst [vmem:[%s181 + $0x58] sm:$0xff] %v204
                %v206 = vld [vmem:[%s180 + $0x1b0] sm:$0xff]
                %207 = vst [vmem:[%s181 + $0x60] sm:$0xff] %v206
                %v208 = vld [vmem:[%s180 + $0x1b8] sm:$0xff]
                %209 = vst [vmem:[%s181 + $0x68] sm:$0xff] %v208
              $region33: #{svhn_forward.8} parent=27 // loop_footer
                %s179 = sadd.s32 1, %s175
              $region34: #{svhn_forward.8} parent=27 // loop_footer_branch
                %174 = sbr.rel target = $region30
              $region35: #{svhn_forward.8} parent=27 // loop_exit
                _
            $region28: #{svhn_forward.8} parent=23 // pred_fallthru
              _
            // Predicated region
            $region36: #{svhn_forward.8} parent=23 // pred_check
              _
            $region37: #{svhn_forward.8} parent=23 // pred_check_branch
              %211 = sbr.rel target = $region39
            $region38: #{svhn_forward.8} parent=23 // pred_region
              _
            $region39: #{svhn_forward.8} parent=23 // pred_fallthru
              _
          $region24: #{svhn_forward.8} parent=19 // pred_fallthru
            _
          %212 = vnop
        $region20: #{svhn_forward.8} parent=15 // pred_fallthru
          _
        // Predicated region
        $region40: #{svhn_forward.8} parent=15 // pred_check
          %p213 = pneg %p78
        $region41: #{svhn_forward.8} parent=15 // pred_check_branch
          %215 = sbr.rel (%p213) target = $region43
        $region42: #{svhn_forward.8} parent=15 // pred_region
          %s216 = sand.u32 %s68, 1
          %s217 = sand.u32 %s68, 1
          %s218 = smul.addr %s217, 1792
          %s219 = scalar_lea.vmem [#allocation3], %s218
          %s220 = smul.u32 224, %s18
          %s221 = smul.u32 2, %s17
          %s222 = smul.addr %s220, 4
          %s223 = sadd.s32 %s221, %s222
          %s224 = smul.addr %s223, 4
          %s225 = scalar_lea.vmem %s1, %s224
          // Predicated region
          $region44: #{svhn_forward.8} parent=42 // pred_check
            _
          $region45: #{svhn_forward.8} parent=42 // pred_check_branch
            %227 = sbr.rel (0) target = $region47
          $region46: #{svhn_forward.8} parent=42 // pred_region
            // Predicated region
            $region48: #{svhn_forward.8} parent=46 // pred_check
              _
            $region49: #{svhn_forward.8} parent=46 // pred_check_branch
              %229 = sbr.rel (0) target = $region51
            $region50: #{svhn_forward.8} parent=46 // pred_region
              // Predicated region
              $region63: #{svhn_forward.8} parent=50 // pred_check
                _
              $region64: #{svhn_forward.8} parent=50 // pred_check_branch
                %690 = sbr.rel (0) target = $region66
              $region65: #{svhn_forward.8} parent=50 // pred_region
                loop: start=0, step=1, limit=1
                $region67: #{svhn_forward.8} parent=65 // loop_pre_header
                  _
                $region68: #{svhn_forward.8} parent=65 // loop_header
                  %s692 = sphi 0, %s696
                  %p693 = scmp.ge.s32.totalorder %s692, 1
                  %s697 = sphi %s225, %s225
                  %s698 = sphi %s219, %s219
                $region69: #{svhn_forward.8} parent=65 // loop_header_branch
                  %695 = sbr.rel (%p693) target = $region73
                $region70: #{svhn_forward.8} parent=65 // loop_body
                  %v699 = vld [vmem:[%s697] sm:$0xff]
                  %700 = vst [vmem:[%s698] sm:$0xff] %v699
                  %v701 = vld [vmem:[%s697 + $0x10] sm:$0xff]
                  %702 = vst [vmem:[%s698 + $0x8] sm:$0xff] %v701
                  %v703 = vld [vmem:[%s697 + $0x20] sm:$0xff]
                  %704 = vst [vmem:[%s698 + $0x10] sm:$0xff] %v703
                  %v705 = vld [vmem:[%s697 + $0x30] sm:$0xff]
                  %706 = vst [vmem:[%s698 + $0x18] sm:$0xff] %v705
                  %v707 = vld [vmem:[%s697 + $0x40] sm:$0xff]
                  %708 = vst [vmem:[%s698 + $0x20] sm:$0xff] %v707
                  %v709 = vld [vmem:[%s697 + $0x50] sm:$0xff]
                  %710 = vst [vmem:[%s698 + $0x28] sm:$0xff] %v709
                  %v711 = vld [vmem:[%s697 + $0x60] sm:$0xff]
                  %712 = vst [vmem:[%s698 + $0x30] sm:$0xff] %v711
                  %v713 = vld [vmem:[%s697 + $0x70] sm:$0xff]
                  %714 = vst [vmem:[%s698 + $0x38] sm:$0xff] %v713
                  %v715 = vld [vmem:[%s697 + $0x80] sm:$0xff]
                  %716 = vst [vmem:[%s698 + $0x40] sm:$0xff] %v715
                  %v717 = vld [vmem:[%s697 + $0x90] sm:$0xff]
                  %718 = vst [vmem:[%s698 + $0x48] sm:$0xff] %v717
                  %v719 = vld [vmem:[%s697 + $0xa0] sm:$0xff]
                  %720 = vst [vmem:[%s698 + $0x50] sm:$0xff] %v719
                  %v721 = vld [vmem:[%s697 + $0xb0] sm:$0xff]
                  %722 = vst [vmem:[%s698 + $0x58] sm:$0xff] %v721
                  %v723 = vld [vmem:[%s697 + $0xc0] sm:$0xff]
                  %724 = vst [vmem:[%s698 + $0x60] sm:$0xff] %v723
                  %v725 = vld [vmem:[%s697 + $0xd0] sm:$0xff]
                  %726 = vst [vmem:[%s698 + $0x68] sm:$0xff] %v725
                  %v727 = vld [vmem:[%s697 + $0xe0] sm:$0xff]
                  %728 = vst [vmem:[%s698 + $0x70] sm:$0xff] %v727
                  %v729 = vld [vmem:[%s697 + $0xf0] sm:$0xff]
                  %730 = vst [vmem:[%s698 + $0x78] sm:$0xff] %v729
                  %v731 = vld [vmem:[%s697 + $0x100] sm:$0xff]
                  %732 = vst [vmem:[%s698 + $0x80] sm:$0xff] %v731
                  %v733 = vld [vmem:[%s697 + $0x110] sm:$0xff]
                  %734 = vst [vmem:[%s698 + $0x88] sm:$0xff] %v733
                  %v735 = vld [vmem:[%s697 + $0x120] sm:$0xff]
                  %736 = vst [vmem:[%s698 + $0x90] sm:$0xff] %v735
                  %v737 = vld [vmem:[%s697 + $0x130] sm:$0xff]
                  %738 = vst [vmem:[%s698 + $0x98] sm:$0xff] %v737
                  %v739 = vld [vmem:[%s697 + $0x140] sm:$0xff]
                  %740 = vst [vmem:[%s698 + $0xa0] sm:$0xff] %v739
                  %v741 = vld [vmem:[%s697 + $0x150] sm:$0xff]
                  %742 = vst [vmem:[%s698 + $0xa8] sm:$0xff] %v741
                  %v743 = vld [vmem:[%s697 + $0x160] sm:$0xff]
                  %744 = vst [vmem:[%s698 + $0xb0] sm:$0xff] %v743
                  %v745 = vld [vmem:[%s697 + $0x170] sm:$0xff]
                  %746 = vst [vmem:[%s698 + $0xb8] sm:$0xff] %v745
                  %v747 = vld [vmem:[%s697 + $0x180] sm:$0xff]
                  %748 = vst [vmem:[%s698 + $0xc0] sm:$0xff] %v747
                  %v749 = vld [vmem:[%s697 + $0x190] sm:$0xff]
                  %750 = vst [vmem:[%s698 + $0xc8] sm:$0xff] %v749
                  %v751 = vld [vmem:[%s697 + $0x1a0] sm:$0xff]
                  %752 = vst [vmem:[%s698 + $0xd0] sm:$0xff] %v751
                  %v753 = vld [vmem:[%s697 + $0x1b0] sm:$0xff]
                  %754 = vst [vmem:[%s698 + $0xd8] sm:$0xff] %v753
                  %v755 = vld [vmem:[%s697 + $0x1c0] sm:$0xff]
                  %756 = vst [vmem:[%s698 + $0xe0] sm:$0xff] %v755
                  %v757 = vld [vmem:[%s697 + $0x1d0] sm:$0xff]
                  %758 = vst [vmem:[%s698 + $0xe8] sm:$0xff] %v757
                  %v759 = vld [vmem:[%s697 + $0x1e0] sm:$0xff]
                  %760 = vst [vmem:[%s698 + $0xf0] sm:$0xff] %v759
                  %v761 = vld [vmem:[%s697 + $0x1f0] sm:$0xff]
                  %762 = vst [vmem:[%s698 + $0xf8] sm:$0xff] %v761
                  %v763 = vld [vmem:[%s697 + $0x200] sm:$0xff]
                  %764 = vst [vmem:[%s698 + $0x100] sm:$0xff] %v763
                  %v765 = vld [vmem:[%s697 + $0x210] sm:$0xff]
                  %766 = vst [vmem:[%s698 + $0x108] sm:$0xff] %v765
                  %v767 = vld [vmem:[%s697 + $0x220] sm:$0xff]
                  %768 = vst [vmem:[%s698 + $0x110] sm:$0xff] %v767
                  %v769 = vld [vmem:[%s697 + $0x230] sm:$0xff]
                  %770 = vst [vmem:[%s698 + $0x118] sm:$0xff] %v769
                  %v771 = vld [vmem:[%s697 + $0x240] sm:$0xff]
                  %772 = vst [vmem:[%s698 + $0x120] sm:$0xff] %v771
                  %v773 = vld [vmem:[%s697 + $0x250] sm:$0xff]
                  %774 = vst [vmem:[%s698 + $0x128] sm:$0xff] %v773
                  %v775 = vld [vmem:[%s697 + $0x260] sm:$0xff]
                  %776 = vst [vmem:[%s698 + $0x130] sm:$0xff] %v775
                  %v777 = vld [vmem:[%s697 + $0x270] sm:$0xff]
                  %778 = vst [vmem:[%s698 + $0x138] sm:$0xff] %v777
                  %v779 = vld [vmem:[%s697 + $0x280] sm:$0xff]
                  %780 = vst [vmem:[%s698 + $0x140] sm:$0xff] %v779
                  %v781 = vld [vmem:[%s697 + $0x290] sm:$0xff]
                  %782 = vst [vmem:[%s698 + $0x148] sm:$0xff] %v781
                  %v783 = vld [vmem:[%s697 + $0x2a0] sm:$0xff]
                  %784 = vst [vmem:[%s698 + $0x150] sm:$0xff] %v783
                  %v785 = vld [vmem:[%s697 + $0x2b0] sm:$0xff]
                  %786 = vst [vmem:[%s698 + $0x158] sm:$0xff] %v785
                  %v787 = vld [vmem:[%s697 + $0x2c0] sm:$0xff]
                  %788 = vst [vmem:[%s698 + $0x160] sm:$0xff] %v787
                  %v789 = vld [vmem:[%s697 + $0x2d0] sm:$0xff]
                  %790 = vst [vmem:[%s698 + $0x168] sm:$0xff] %v789
                  %v791 = vld [vmem:[%s697 + $0x2e0] sm:$0xff]
                  %792 = vst [vmem:[%s698 + $0x170] sm:$0xff] %v791
                  %v793 = vld [vmem:[%s697 + $0x2f0] sm:$0xff]
                  %794 = vst [vmem:[%s698 + $0x178] sm:$0xff] %v793
                  %v795 = vld [vmem:[%s697 + $0x300] sm:$0xff]
                  %796 = vst [vmem:[%s698 + $0x180] sm:$0xff] %v795
                  %v797 = vld [vmem:[%s697 + $0x310] sm:$0xff]
                  %798 = vst [vmem:[%s698 + $0x188] sm:$0xff] %v797
                  %v799 = vld [vmem:[%s697 + $0x320] sm:$0xff]
                  %800 = vst [vmem:[%s698 + $0x190] sm:$0xff] %v799
                  %v801 = vld [vmem:[%s697 + $0x330] sm:$0xff]
                  %802 = vst [vmem:[%s698 + $0x198] sm:$0xff] %v801
                  %v803 = vld [vmem:[%s697 + $0x340] sm:$0xff]
                  %804 = vst [vmem:[%s698 + $0x1a0] sm:$0xff] %v803
                  %v805 = vld [vmem:[%s697 + $0x350] sm:$0xff]
                  %806 = vst [vmem:[%s698 + $0x1a8] sm:$0xff] %v805
                  %v807 = vld [vmem:[%s697 + $0x360] sm:$0xff]
                  %808 = vst [vmem:[%s698 + $0x1b0] sm:$0xff] %v807
                  %v809 = vld [vmem:[%s697 + $0x370] sm:$0xff]
                  %810 = vst [vmem:[%s698 + $0x1b8] sm:$0xff] %v809
                  %v811 = vld [vmem:[%s697 + $0x380] sm:$0xff]
                  %812 = vst [vmem:[%s698 + $0x1c0] sm:$0xff] %v811
                  %v813 = vld [vmem:[%s697 + $0x390] sm:$0xff]
                  %814 = vst [vmem:[%s698 + $0x1c8] sm:$0xff] %v813
                  %v815 = vld [vmem:[%s697 + $0x3a0] sm:$0xff]
                  %816 = vst [vmem:[%s698 + $0x1d0] sm:$0xff] %v815
                  %v817 = vld [vmem:[%s697 + $0x3b0] sm:$0xff]
                  %818 = vst [vmem:[%s698 + $0x1d8] sm:$0xff] %v817
                  %v819 = vld [vmem:[%s697 + $0x3c0] sm:$0xff]
                  %820 = vst [vmem:[%s698 + $0x1e0] sm:$0xff] %v819
                  %v821 = vld [vmem:[%s697 + $0x3d0] sm:$0xff]
                  %822 = vst [vmem:[%s698 + $0x1e8] sm:$0xff] %v821
                  %v823 = vld [vmem:[%s697 + $0x3e0] sm:$0xff]
                  %824 = vst [vmem:[%s698 + $0x1f0] sm:$0xff] %v823
                  %v825 = vld [vmem:[%s697 + $0x3f0] sm:$0xff]
                  %826 = vst [vmem:[%s698 + $0x1f8] sm:$0xff] %v825
                  %v827 = vld [vmem:[%s697 + $0x400] sm:$0xff]
                  %828 = vst [vmem:[%s698 + $0x200] sm:$0xff] %v827
                  %v829 = vld [vmem:[%s697 + $0x410] sm:$0xff]
                  %830 = vst [vmem:[%s698 + $0x208] sm:$0xff] %v829
                  %v831 = vld [vmem:[%s697 + $0x420] sm:$0xff]
                  %832 = vst [vmem:[%s698 + $0x210] sm:$0xff] %v831
                  %v833 = vld [vmem:[%s697 + $0x430] sm:$0xff]
                  %834 = vst [vmem:[%s698 + $0x218] sm:$0xff] %v833
                  %v835 = vld [vmem:[%s697 + $0x440] sm:$0xff]
                  %836 = vst [vmem:[%s698 + $0x220] sm:$0xff] %v835
                  %v837 = vld [vmem:[%s697 + $0x450] sm:$0xff]
                  %838 = vst [vmem:[%s698 + $0x228] sm:$0xff] %v837
                  %v839 = vld [vmem:[%s697 + $0x460] sm:$0xff]
                  %840 = vst [vmem:[%s698 + $0x230] sm:$0xff] %v839
                  %v841 = vld [vmem:[%s697 + $0x470] sm:$0xff]
                  %842 = vst [vmem:[%s698 + $0x238] sm:$0xff] %v841
                  %v843 = vld [vmem:[%s697 + $0x480] sm:$0xff]
                  %844 = vst [vmem:[%s698 + $0x240] sm:$0xff] %v843
                  %v845 = vld [vmem:[%s697 + $0x490] sm:$0xff]
                  %846 = vst [vmem:[%s698 + $0x248] sm:$0xff] %v845
                  %v847 = vld [vmem:[%s697 + $0x4a0] sm:$0xff]
                  %848 = vst [vmem:[%s698 + $0x250] sm:$0xff] %v847
                  %v849 = vld [vmem:[%s697 + $0x4b0] sm:$0xff]
                  %850 = vst [vmem:[%s698 + $0x258] sm:$0xff] %v849
                  %v851 = vld [vmem:[%s697 + $0x4c0] sm:$0xff]
                  %852 = vst [vmem:[%s698 + $0x260] sm:$0xff] %v851
                  %v853 = vld [vmem:[%s697 + $0x4d0] sm:$0xff]
                  %854 = vst [vmem:[%s698 + $0x268] sm:$0xff] %v853
                  %v855 = vld [vmem:[%s697 + $0x4e0] sm:$0xff]
                  %856 = vst [vmem:[%s698 + $0x270] sm:$0xff] %v855
                  %v857 = vld [vmem:[%s697 + $0x4f0] sm:$0xff]
                  %858 = vst [vmem:[%s698 + $0x278] sm:$0xff] %v857
                  %v859 = vld [vmem:[%s697 + $0x500] sm:$0xff]
                  %860 = vst [vmem:[%s698 + $0x280] sm:$0xff] %v859
                  %v861 = vld [vmem:[%s697 + $0x510] sm:$0xff]
                  %862 = vst [vmem:[%s698 + $0x288] sm:$0xff] %v861
                  %v863 = vld [vmem:[%s697 + $0x520] sm:$0xff]
                  %864 = vst [vmem:[%s698 + $0x290] sm:$0xff] %v863
                  %v865 = vld [vmem:[%s697 + $0x530] sm:$0xff]
                  %866 = vst [vmem:[%s698 + $0x298] sm:$0xff] %v865
                  %v867 = vld [vmem:[%s697 + $0x540] sm:$0xff]
                  %868 = vst [vmem:[%s698 + $0x2a0] sm:$0xff] %v867
                  %v869 = vld [vmem:[%s697 + $0x550] sm:$0xff]
                  %870 = vst [vmem:[%s698 + $0x2a8] sm:$0xff] %v869
                  %v871 = vld [vmem:[%s697 + $0x560] sm:$0xff]
                  %872 = vst [vmem:[%s698 + $0x2b0] sm:$0xff] %v871
                  %v873 = vld [vmem:[%s697 + $0x570] sm:$0xff]
                  %874 = vst [vmem:[%s698 + $0x2b8] sm:$0xff] %v873
                  %v875 = vld [vmem:[%s697 + $0x580] sm:$0xff]
                  %876 = vst [vmem:[%s698 + $0x2c0] sm:$0xff] %v875
                  %v877 = vld [vmem:[%s697 + $0x590] sm:$0xff]
                  %878 = vst [vmem:[%s698 + $0x2c8] sm:$0xff] %v877
                  %v879 = vld [vmem:[%s697 + $0x5a0] sm:$0xff]
                  %880 = vst [vmem:[%s698 + $0x2d0] sm:$0xff] %v879
                  %v881 = vld [vmem:[%s697 + $0x5b0] sm:$0xff]
                  %882 = vst [vmem:[%s698 + $0x2d8] sm:$0xff] %v881
                  %v883 = vld [vmem:[%s697 + $0x5c0] sm:$0xff]
                  %884 = vst [vmem:[%s698 + $0x2e0] sm:$0xff] %v883
                  %v885 = vld [vmem:[%s697 + $0x5d0] sm:$0xff]
                  %886 = vst [vmem:[%s698 + $0x2e8] sm:$0xff] %v885
                  %v887 = vld [vmem:[%s697 + $0x5e0] sm:$0xff]
                  %888 = vst [vmem:[%s698 + $0x2f0] sm:$0xff] %v887
                  %v889 = vld [vmem:[%s697 + $0x5f0] sm:$0xff]
                  %890 = vst [vmem:[%s698 + $0x2f8] sm:$0xff] %v889
                  %v891 = vld [vmem:[%s697 + $0x600] sm:$0xff]
                  %892 = vst [vmem:[%s698 + $0x300] sm:$0xff] %v891
                  %v893 = vld [vmem:[%s697 + $0x610] sm:$0xff]
                  %894 = vst [vmem:[%s698 + $0x308] sm:$0xff] %v893
                  %v895 = vld [vmem:[%s697 + $0x620] sm:$0xff]
                  %896 = vst [vmem:[%s698 + $0x310] sm:$0xff] %v895
                  %v897 = vld [vmem:[%s697 + $0x630] sm:$0xff]
                  %898 = vst [vmem:[%s698 + $0x318] sm:$0xff] %v897
                  %v899 = vld [vmem:[%s697 + $0x640] sm:$0xff]
                  %900 = vst [vmem:[%s698 + $0x320] sm:$0xff] %v899
                  %v901 = vld [vmem:[%s697 + $0x650] sm:$0xff]
                  %902 = vst [vmem:[%s698 + $0x328] sm:$0xff] %v901
                  %v903 = vld [vmem:[%s697 + $0x660] sm:$0xff]
                  %904 = vst [vmem:[%s698 + $0x330] sm:$0xff] %v903
                  %v905 = vld [vmem:[%s697 + $0x670] sm:$0xff]
                  %906 = vst [vmem:[%s698 + $0x338] sm:$0xff] %v905
                  %v907 = vld [vmem:[%s697 + $0x680] sm:$0xff]
                  %908 = vst [vmem:[%s698 + $0x340] sm:$0xff] %v907
                  %v909 = vld [vmem:[%s697 + $0x690] sm:$0xff]
                  %910 = vst [vmem:[%s698 + $0x348] sm:$0xff] %v909
                  %v911 = vld [vmem:[%s697 + $0x6a0] sm:$0xff]
                  %912 = vst [vmem:[%s698 + $0x350] sm:$0xff] %v911
                  %v913 = vld [vmem:[%s697 + $0x6b0] sm:$0xff]
                  %914 = vst [vmem:[%s698 + $0x358] sm:$0xff] %v913
                  %v915 = vld [vmem:[%s697 + $0x6c0] sm:$0xff]
                  %916 = vst [vmem:[%s698 + $0x360] sm:$0xff] %v915
                  %v917 = vld [vmem:[%s697 + $0x6d0] sm:$0xff]
                  %918 = vst [vmem:[%s698 + $0x368] sm:$0xff] %v917
                  %v919 = vld [vmem:[%s697 + $0x6e0] sm:$0xff]
                  %920 = vst [vmem:[%s698 + $0x370] sm:$0xff] %v919
                  %v921 = vld [vmem:[%s697 + $0x6f0] sm:$0xff]
                  %922 = vst [vmem:[%s698 + $0x378] sm:$0xff] %v921
                  %v923 = vld [vmem:[%s697 + $0x700] sm:$0xff]
                  %924 = vst [vmem:[%s698 + $0x380] sm:$0xff] %v923
                  %v925 = vld [vmem:[%s697 + $0x710] sm:$0xff]
                  %926 = vst [vmem:[%s698 + $0x388] sm:$0xff] %v925
                  %v927 = vld [vmem:[%s697 + $0x720] sm:$0xff]
                  %928 = vst [vmem:[%s698 + $0x390] sm:$0xff] %v927
                  %v929 = vld [vmem:[%s697 + $0x730] sm:$0xff]
                  %930 = vst [vmem:[%s698 + $0x398] sm:$0xff] %v929
                  %v931 = vld [vmem:[%s697 + $0x740] sm:$0xff]
                  %932 = vst [vmem:[%s698 + $0x3a0] sm:$0xff] %v931
                  %v933 = vld [vmem:[%s697 + $0x750] sm:$0xff]
                  %934 = vst [vmem:[%s698 + $0x3a8] sm:$0xff] %v933
                  %v935 = vld [vmem:[%s697 + $0x760] sm:$0xff]
                  %936 = vst [vmem:[%s698 + $0x3b0] sm:$0xff] %v935
                  %v937 = vld [vmem:[%s697 + $0x770] sm:$0xff]
                  %938 = vst [vmem:[%s698 + $0x3b8] sm:$0xff] %v937
                  %v939 = vld [vmem:[%s697 + $0x780] sm:$0xff]
                  %940 = vst [vmem:[%s698 + $0x3c0] sm:$0xff] %v939
                  %v941 = vld [vmem:[%s697 + $0x790] sm:$0xff]
                  %942 = vst [vmem:[%s698 + $0x3c8] sm:$0xff] %v941
                  %v943 = vld [vmem:[%s697 + $0x7a0] sm:$0xff]
                  %944 = vst [vmem:[%s698 + $0x3d0] sm:$0xff] %v943
                  %v945 = vld [vmem:[%s697 + $0x7b0] sm:$0xff]
                  %946 = vst [vmem:[%s698 + $0x3d8] sm:$0xff] %v945
                  %v947 = vld [vmem:[%s697 + $0x7c0] sm:$0xff]
                  %948 = vst [vmem:[%s698 + $0x3e0] sm:$0xff] %v947
                  %v949 = vld [vmem:[%s697 + $0x7d0] sm:$0xff]
                  %950 = vst [vmem:[%s698 + $0x3e8] sm:$0xff] %v949
                  %v951 = vld [vmem:[%s697 + $0x7e0] sm:$0xff]
                  %952 = vst [vmem:[%s698 + $0x3f0] sm:$0xff] %v951
                  %v953 = vld [vmem:[%s697 + $0x7f0] sm:$0xff]
                  %954 = vst [vmem:[%s698 + $0x3f8] sm:$0xff] %v953
                  %v955 = vld [vmem:[%s697 + $0x800] sm:$0xff]
                  %956 = vst [vmem:[%s698 + $0x400] sm:$0xff] %v955
                  %v957 = vld [vmem:[%s697 + $0x810] sm:$0xff]
                  %958 = vst [vmem:[%s698 + $0x408] sm:$0xff] %v957
                  %v959 = vld [vmem:[%s697 + $0x820] sm:$0xff]
                  %960 = vst [vmem:[%s698 + $0x410] sm:$0xff] %v959
                  %v961 = vld [vmem:[%s697 + $0x830] sm:$0xff]
                  %962 = vst [vmem:[%s698 + $0x418] sm:$0xff] %v961
                  %v963 = vld [vmem:[%s697 + $0x840] sm:$0xff]
                  %964 = vst [vmem:[%s698 + $0x420] sm:$0xff] %v963
                  %v965 = vld [vmem:[%s697 + $0x850] sm:$0xff]
                  %966 = vst [vmem:[%s698 + $0x428] sm:$0xff] %v965
                  %v967 = vld [vmem:[%s697 + $0x860] sm:$0xff]
                  %968 = vst [vmem:[%s698 + $0x430] sm:$0xff] %v967
                  %v969 = vld [vmem:[%s697 + $0x870] sm:$0xff]
                  %970 = vst [vmem:[%s698 + $0x438] sm:$0xff] %v969
                  %v971 = vld [vmem:[%s697 + $0x880] sm:$0xff]
                  %972 = vst [vmem:[%s698 + $0x440] sm:$0xff] %v971
                  %v973 = vld [vmem:[%s697 + $0x890] sm:$0xff]
                  %974 = vst [vmem:[%s698 + $0x448] sm:$0xff] %v973
                  %v975 = vld [vmem:[%s697 + $0x8a0] sm:$0xff]
                  %976 = vst [vmem:[%s698 + $0x450] sm:$0xff] %v975
                  %v977 = vld [vmem:[%s697 + $0x8b0] sm:$0xff]
                  %978 = vst [vmem:[%s698 + $0x458] sm:$0xff] %v977
                  %v979 = vld [vmem:[%s697 + $0x8c0] sm:$0xff]
                  %980 = vst [vmem:[%s698 + $0x460] sm:$0xff] %v979
                  %v981 = vld [vmem:[%s697 + $0x8d0] sm:$0xff]
                  %982 = vst [vmem:[%s698 + $0x468] sm:$0xff] %v981
                  %v983 = vld [vmem:[%s697 + $0x8e0] sm:$0xff]
                  %984 = vst [vmem:[%s698 + $0x470] sm:$0xff] %v983
                  %v985 = vld [vmem:[%s697 + $0x8f0] sm:$0xff]
                  %986 = vst [vmem:[%s698 + $0x478] sm:$0xff] %v985
                  %v987 = vld [vmem:[%s697 + $0x900] sm:$0xff]
                  %988 = vst [vmem:[%s698 + $0x480] sm:$0xff] %v987
                  %v989 = vld [vmem:[%s697 + $0x910] sm:$0xff]
                  %990 = vst [vmem:[%s698 + $0x488] sm:$0xff] %v989
                  %v991 = vld [vmem:[%s697 + $0x920] sm:$0xff]
                  %992 = vst [vmem:[%s698 + $0x490] sm:$0xff] %v991
                  %v993 = vld [vmem:[%s697 + $0x930] sm:$0xff]
                  %994 = vst [vmem:[%s698 + $0x498] sm:$0xff] %v993
                  %v995 = vld [vmem:[%s697 + $0x940] sm:$0xff]
                  %996 = vst [vmem:[%s698 + $0x4a0] sm:$0xff] %v995
                  %v997 = vld [vmem:[%s697 + $0x950] sm:$0xff]
                  %998 = vst [vmem:[%s698 + $0x4a8] sm:$0xff] %v997
                  %v999 = vld [vmem:[%s697 + $0x960] sm:$0xff]
                  %1000 = vst [vmem:[%s698 + $0x4b0] sm:$0xff] %v999
                  %v1001 = vld [vmem:[%s697 + $0x970] sm:$0xff]
                  %1002 = vst [vmem:[%s698 + $0x4b8] sm:$0xff] %v1001
                  %v1003 = vld [vmem:[%s697 + $0x980] sm:$0xff]
                  %1004 = vst [vmem:[%s698 + $0x4c0] sm:$0xff] %v1003
                  %v1005 = vld [vmem:[%s697 + $0x990] sm:$0xff]
                  %1006 = vst [vmem:[%s698 + $0x4c8] sm:$0xff] %v1005
                  %v1007 = vld [vmem:[%s697 + $0x9a0] sm:$0xff]
                  %1008 = vst [vmem:[%s698 + $0x4d0] sm:$0xff] %v1007
                  %v1009 = vld [vmem:[%s697 + $0x9b0] sm:$0xff]
                  %1010 = vst [vmem:[%s698 + $0x4d8] sm:$0xff] %v1009
                  %v1011 = vld [vmem:[%s697 + $0x9c0] sm:$0xff]
                  %1012 = vst [vmem:[%s698 + $0x4e0] sm:$0xff] %v1011
                  %v1013 = vld [vmem:[%s697 + $0x9d0] sm:$0xff]
                  %1014 = vst [vmem:[%s698 + $0x4e8] sm:$0xff] %v1013
                  %v1015 = vld [vmem:[%s697 + $0x9e0] sm:$0xff]
                  %1016 = vst [vmem:[%s698 + $0x4f0] sm:$0xff] %v1015
                  %v1017 = vld [vmem:[%s697 + $0x9f0] sm:$0xff]
                  %1018 = vst [vmem:[%s698 + $0x4f8] sm:$0xff] %v1017
                  %v1019 = vld [vmem:[%s697 + $0xa00] sm:$0xff]
                  %1020 = vst [vmem:[%s698 + $0x500] sm:$0xff] %v1019
                  %v1021 = vld [vmem:[%s697 + $0xa10] sm:$0xff]
                  %1022 = vst [vmem:[%s698 + $0x508] sm:$0xff] %v1021
                  %v1023 = vld [vmem:[%s697 + $0xa20] sm:$0xff]
                  %1024 = vst [vmem:[%s698 + $0x510] sm:$0xff] %v1023
                  %v1025 = vld [vmem:[%s697 + $0xa30] sm:$0xff]
                  %1026 = vst [vmem:[%s698 + $0x518] sm:$0xff] %v1025
                  %v1027 = vld [vmem:[%s697 + $0xa40] sm:$0xff]
                  %1028 = vst [vmem:[%s698 + $0x520] sm:$0xff] %v1027
                  %v1029 = vld [vmem:[%s697 + $0xa50] sm:$0xff]
                  %1030 = vst [vmem:[%s698 + $0x528] sm:$0xff] %v1029
                  %v1031 = vld [vmem:[%s697 + $0xa60] sm:$0xff]
                  %1032 = vst [vmem:[%s698 + $0x530] sm:$0xff] %v1031
                  %v1033 = vld [vmem:[%s697 + $0xa70] sm:$0xff]
                  %1034 = vst [vmem:[%s698 + $0x538] sm:$0xff] %v1033
                  %v1035 = vld [vmem:[%s697 + $0xa80] sm:$0xff]
                  %1036 = vst [vmem:[%s698 + $0x540] sm:$0xff] %v1035
                  %v1037 = vld [vmem:[%s697 + $0xa90] sm:$0xff]
                  %1038 = vst [vmem:[%s698 + $0x548] sm:$0xff] %v1037
                  %v1039 = vld [vmem:[%s697 + $0xaa0] sm:$0xff]
                  %1040 = vst [vmem:[%s698 + $0x550] sm:$0xff] %v1039
                  %v1041 = vld [vmem:[%s697 + $0xab0] sm:$0xff]
                  %1042 = vst [vmem:[%s698 + $0x558] sm:$0xff] %v1041
                  %v1043 = vld [vmem:[%s697 + $0xac0] sm:$0xff]
                  %1044 = vst [vmem:[%s698 + $0x560] sm:$0xff] %v1043
                  %v1045 = vld [vmem:[%s697 + $0xad0] sm:$0xff]
                  %1046 = vst [vmem:[%s698 + $0x568] sm:$0xff] %v1045
                  %v1047 = vld [vmem:[%s697 + $0xae0] sm:$0xff]
                  %1048 = vst [vmem:[%s698 + $0x570] sm:$0xff] %v1047
                  %v1049 = vld [vmem:[%s697 + $0xaf0] sm:$0xff]
                  %1050 = vst [vmem:[%s698 + $0x578] sm:$0xff] %v1049
                  %v1051 = vld [vmem:[%s697 + $0xb00] sm:$0xff]
                  %1052 = vst [vmem:[%s698 + $0x580] sm:$0xff] %v1051
                  %v1053 = vld [vmem:[%s697 + $0xb10] sm:$0xff]
                  %1054 = vst [vmem:[%s698 + $0x588] sm:$0xff] %v1053
                  %v1055 = vld [vmem:[%s697 + $0xb20] sm:$0xff]
                  %1056 = vst [vmem:[%s698 + $0x590] sm:$0xff] %v1055
                  %v1057 = vld [vmem:[%s697 + $0xb30] sm:$0xff]
                  %1058 = vst [vmem:[%s698 + $0x598] sm:$0xff] %v1057
                  %v1059 = vld [vmem:[%s697 + $0xb40] sm:$0xff]
                  %1060 = vst [vmem:[%s698 + $0x5a0] sm:$0xff] %v1059
                  %v1061 = vld [vmem:[%s697 + $0xb50] sm:$0xff]
                  %1062 = vst [vmem:[%s698 + $0x5a8] sm:$0xff] %v1061
                  %v1063 = vld [vmem:[%s697 + $0xb60] sm:$0xff]
                  %1064 = vst [vmem:[%s698 + $0x5b0] sm:$0xff] %v1063
                  %v1065 = vld [vmem:[%s697 + $0xb70] sm:$0xff]
                  %1066 = vst [vmem:[%s698 + $0x5b8] sm:$0xff] %v1065
                  %v1067 = vld [vmem:[%s697 + $0xb80] sm:$0xff]
                  %1068 = vst [vmem:[%s698 + $0x5c0] sm:$0xff] %v1067
                  %v1069 = vld [vmem:[%s697 + $0xb90] sm:$0xff]
                  %1070 = vst [vmem:[%s698 + $0x5c8] sm:$0xff] %v1069
                  %v1071 = vld [vmem:[%s697 + $0xba0] sm:$0xff]
                  %1072 = vst [vmem:[%s698 + $0x5d0] sm:$0xff] %v1071
                  %v1073 = vld [vmem:[%s697 + $0xbb0] sm:$0xff]
                  %1074 = vst [vmem:[%s698 + $0x5d8] sm:$0xff] %v1073
                  %v1075 = vld [vmem:[%s697 + $0xbc0] sm:$0xff]
                  %1076 = vst [vmem:[%s698 + $0x5e0] sm:$0xff] %v1075
                  %v1077 = vld [vmem:[%s697 + $0xbd0] sm:$0xff]
                  %1078 = vst [vmem:[%s698 + $0x5e8] sm:$0xff] %v1077
                  %v1079 = vld [vmem:[%s697 + $0xbe0] sm:$0xff]
                  %1080 = vst [vmem:[%s698 + $0x5f0] sm:$0xff] %v1079
                  %v1081 = vld [vmem:[%s697 + $0xbf0] sm:$0xff]
                  %1082 = vst [vmem:[%s698 + $0x5f8] sm:$0xff] %v1081
                  %v1083 = vld [vmem:[%s697 + $0xc00] sm:$0xff]
                  %1084 = vst [vmem:[%s698 + $0x600] sm:$0xff] %v1083
                  %v1085 = vld [vmem:[%s697 + $0xc10] sm:$0xff]
                  %1086 = vst [vmem:[%s698 + $0x608] sm:$0xff] %v1085
                  %v1087 = vld [vmem:[%s697 + $0xc20] sm:$0xff]
                  %1088 = vst [vmem:[%s698 + $0x610] sm:$0xff] %v1087
                  %v1089 = vld [vmem:[%s697 + $0xc30] sm:$0xff]
                  %1090 = vst [vmem:[%s698 + $0x618] sm:$0xff] %v1089
                  %v1091 = vld [vmem:[%s697 + $0xc40] sm:$0xff]
                  %1092 = vst [vmem:[%s698 + $0x620] sm:$0xff] %v1091
                  %v1093 = vld [vmem:[%s697 + $0xc50] sm:$0xff]
                  %1094 = vst [vmem:[%s698 + $0x628] sm:$0xff] %v1093
                  %v1095 = vld [vmem:[%s697 + $0xc60] sm:$0xff]
                  %1096 = vst [vmem:[%s698 + $0x630] sm:$0xff] %v1095
                  %v1097 = vld [vmem:[%s697 + $0xc70] sm:$0xff]
                  %1098 = vst [vmem:[%s698 + $0x638] sm:$0xff] %v1097
                  %v1099 = vld [vmem:[%s697 + $0xc80] sm:$0xff]
                  %1100 = vst [vmem:[%s698 + $0x640] sm:$0xff] %v1099
                  %v1101 = vld [vmem:[%s697 + $0xc90] sm:$0xff]
                  %1102 = vst [vmem:[%s698 + $0x648] sm:$0xff] %v1101
                  %v1103 = vld [vmem:[%s697 + $0xca0] sm:$0xff]
                  %1104 = vst [vmem:[%s698 + $0x650] sm:$0xff] %v1103
                  %v1105 = vld [vmem:[%s697 + $0xcb0] sm:$0xff]
                  %1106 = vst [vmem:[%s698 + $0x658] sm:$0xff] %v1105
                  %v1107 = vld [vmem:[%s697 + $0xcc0] sm:$0xff]
                  %1108 = vst [vmem:[%s698 + $0x660] sm:$0xff] %v1107
                  %v1109 = vld [vmem:[%s697 + $0xcd0] sm:$0xff]
                  %1110 = vst [vmem:[%s698 + $0x668] sm:$0xff] %v1109
                  %v1111 = vld [vmem:[%s697 + $0xce0] sm:$0xff]
                  %1112 = vst [vmem:[%s698 + $0x670] sm:$0xff] %v1111
                  %v1113 = vld [vmem:[%s697 + $0xcf0] sm:$0xff]
                  %1114 = vst [vmem:[%s698 + $0x678] sm:$0xff] %v1113
                  %v1115 = vld [vmem:[%s697 + $0xd00] sm:$0xff]
                  %1116 = vst [vmem:[%s698 + $0x680] sm:$0xff] %v1115
                  %v1117 = vld [vmem:[%s697 + $0xd10] sm:$0xff]
                  %1118 = vst [vmem:[%s698 + $0x688] sm:$0xff] %v1117
                  %v1119 = vld [vmem:[%s697 + $0xd20] sm:$0xff]
                  %1120 = vst [vmem:[%s698 + $0x690] sm:$0xff] %v1119
                  %v1121 = vld [vmem:[%s697 + $0xd30] sm:$0xff]
                  %1122 = vst [vmem:[%s698 + $0x698] sm:$0xff] %v1121
                  %v1123 = vld [vmem:[%s697 + $0xd40] sm:$0xff]
                  %1124 = vst [vmem:[%s698 + $0x6a0] sm:$0xff] %v1123
                  %v1125 = vld [vmem:[%s697 + $0xd50] sm:$0xff]
                  %1126 = vst [vmem:[%s698 + $0x6a8] sm:$0xff] %v1125
                  %v1127 = vld [vmem:[%s697 + $0xd60] sm:$0xff]
                  %1128 = vst [vmem:[%s698 + $0x6b0] sm:$0xff] %v1127
                  %v1129 = vld [vmem:[%s697 + $0xd70] sm:$0xff]
                  %1130 = vst [vmem:[%s698 + $0x6b8] sm:$0xff] %v1129
                  %v1131 = vld [vmem:[%s697 + $0xd80] sm:$0xff]
                  %1132 = vst [vmem:[%s698 + $0x6c0] sm:$0xff] %v1131
                  %v1133 = vld [vmem:[%s697 + $0xd90] sm:$0xff]
                  %1134 = vst [vmem:[%s698 + $0x6c8] sm:$0xff] %v1133
                  %v1135 = vld [vmem:[%s697 + $0xda0] sm:$0xff]
                  %1136 = vst [vmem:[%s698 + $0x6d0] sm:$0xff] %v1135
                  %v1137 = vld [vmem:[%s697 + $0xdb0] sm:$0xff]
                  %1138 = vst [vmem:[%s698 + $0x6d8] sm:$0xff] %v1137
                  %v1139 = vld [vmem:[%s697 + $0xdc0] sm:$0xff]
                  %1140 = vst [vmem:[%s698 + $0x6e0] sm:$0xff] %v1139
                  %v1141 = vld [vmem:[%s697 + $0xdd0] sm:$0xff]
                  %1142 = vst [vmem:[%s698 + $0x6e8] sm:$0xff] %v1141
                  %v1143 = vld [vmem:[%s697 + $0xde0] sm:$0xff]
                  %1144 = vst [vmem:[%s698 + $0x6f0] sm:$0xff] %v1143
                  %v1145 = vld [vmem:[%s697 + $0xdf0] sm:$0xff]
                  %1146 = vst [vmem:[%s698 + $0x6f8] sm:$0xff] %v1145
                $region71: #{svhn_forward.8} parent=65 // loop_footer
                  %s696 = sadd.s32 1, %s692
                $region72: #{svhn_forward.8} parent=65 // loop_footer_branch
                  %691 = sbr.rel target = $region68
                $region73: #{svhn_forward.8} parent=65 // loop_exit
                  _
              $region66: #{svhn_forward.8} parent=50 // pred_fallthru
                _
              // Predicated region
              $region74: #{svhn_forward.8} parent=50 // pred_check
                _
              $region75: #{svhn_forward.8} parent=50 // pred_check_branch
                %1148 = sbr.rel target = $region77
              $region76: #{svhn_forward.8} parent=50 // pred_region
                _
              $region77: #{svhn_forward.8} parent=50 // pred_fallthru
                _
            $region51: #{svhn_forward.8} parent=46 // pred_fallthru
              _
            // Predicated region
            $region52: #{svhn_forward.8} parent=46 // pred_check
              _
            $region53: #{svhn_forward.8} parent=46 // pred_check_branch
              %231 = sbr.rel target = $region55
            $region54: #{svhn_forward.8} parent=46 // pred_region
              loop: start=0, step=1, limit=1
              $region56: #{svhn_forward.8} parent=54 // loop_pre_header
                _
              $region57: #{svhn_forward.8} parent=54 // loop_header
                %s234 = sphi 0, %s238
                %p235 = scmp.ge.s32.totalorder %s234, 1
                %s239 = sphi %s225, %s225
                %s240 = sphi %s219, %s219
              $region58: #{svhn_forward.8} parent=54 // loop_header_branch
                %237 = sbr.rel (%p235) target = $region62
              $region59: #{svhn_forward.8} parent=54 // loop_body
                %v241 = vld [vmem:[%s239] sm:$0xff]
                %242 = vst [vmem:[%s240] sm:$0xff] %v241
                %v243 = vld [vmem:[%s239 + $0x10] sm:$0xff]
                %244 = vst [vmem:[%s240 + $0x8] sm:$0xff] %v243
                %v245 = vld [vmem:[%s239 + $0x20] sm:$0xff]
                %246 = vst [vmem:[%s240 + $0x10] sm:$0xff] %v245
                %v247 = vld [vmem:[%s239 + $0x30] sm:$0xff]
                %248 = vst [vmem:[%s240 + $0x18] sm:$0xff] %v247
                %v249 = vld [vmem:[%s239 + $0x40] sm:$0xff]
                %250 = vst [vmem:[%s240 + $0x20] sm:$0xff] %v249
                %v251 = vld [vmem:[%s239 + $0x50] sm:$0xff]
                %252 = vst [vmem:[%s240 + $0x28] sm:$0xff] %v251
                %v253 = vld [vmem:[%s239 + $0x60] sm:$0xff]
                %254 = vst [vmem:[%s240 + $0x30] sm:$0xff] %v253
                %v255 = vld [vmem:[%s239 + $0x70] sm:$0xff]
                %256 = vst [vmem:[%s240 + $0x38] sm:$0xff] %v255
                %v257 = vld [vmem:[%s239 + $0x80] sm:$0xff]
                %258 = vst [vmem:[%s240 + $0x40] sm:$0xff] %v257
                %v259 = vld [vmem:[%s239 + $0x90] sm:$0xff]
                %260 = vst [vmem:[%s240 + $0x48] sm:$0xff] %v259
                %v261 = vld [vmem:[%s239 + $0xa0] sm:$0xff]
                %262 = vst [vmem:[%s240 + $0x50] sm:$0xff] %v261
                %v263 = vld [vmem:[%s239 + $0xb0] sm:$0xff]
                %264 = vst [vmem:[%s240 + $0x58] sm:$0xff] %v263
                %v265 = vld [vmem:[%s239 + $0xc0] sm:$0xff]
                %266 = vst [vmem:[%s240 + $0x60] sm:$0xff] %v265
                %v267 = vld [vmem:[%s239 + $0xd0] sm:$0xff]
                %268 = vst [vmem:[%s240 + $0x68] sm:$0xff] %v267
                %v269 = vld [vmem:[%s239 + $0xe0] sm:$0xff]
                %270 = vst [vmem:[%s240 + $0x70] sm:$0xff] %v269
                %v271 = vld [vmem:[%s239 + $0xf0] sm:$0xff]
                %272 = vst [vmem:[%s240 + $0x78] sm:$0xff] %v271
                %v273 = vld [vmem:[%s239 + $0x100] sm:$0xff]
                %274 = vst [vmem:[%s240 + $0x80] sm:$0xff] %v273
                %v275 = vld [vmem:[%s239 + $0x110] sm:$0xff]
                %276 = vst [vmem:[%s240 + $0x88] sm:$0xff] %v275
                %v277 = vld [vmem:[%s239 + $0x120] sm:$0xff]
                %278 = vst [vmem:[%s240 + $0x90] sm:$0xff] %v277
                %v279 = vld [vmem:[%s239 + $0x130] sm:$0xff]
                %280 = vst [vmem:[%s240 + $0x98] sm:$0xff] %v279
                %v281 = vld [vmem:[%s239 + $0x140] sm:$0xff]
                %282 = vst [vmem:[%s240 + $0xa0] sm:$0xff] %v281
                %v283 = vld [vmem:[%s239 + $0x150] sm:$0xff]
                %284 = vst [vmem:[%s240 + $0xa8] sm:$0xff] %v283
                %v285 = vld [vmem:[%s239 + $0x160] sm:$0xff]
                %286 = vst [vmem:[%s240 + $0xb0] sm:$0xff] %v285
                %v287 = vld [vmem:[%s239 + $0x170] sm:$0xff]
                %288 = vst [vmem:[%s240 + $0xb8] sm:$0xff] %v287
                %v289 = vld [vmem:[%s239 + $0x180] sm:$0xff]
                %290 = vst [vmem:[%s240 + $0xc0] sm:$0xff] %v289
                %v291 = vld [vmem:[%s239 + $0x190] sm:$0xff]
                %292 = vst [vmem:[%s240 + $0xc8] sm:$0xff] %v291
                %v293 = vld [vmem:[%s239 + $0x1a0] sm:$0xff]
                %294 = vst [vmem:[%s240 + $0xd0] sm:$0xff] %v293
                %v295 = vld [vmem:[%s239 + $0x1b0] sm:$0xff]
                %296 = vst [vmem:[%s240 + $0xd8] sm:$0xff] %v295
                %v297 = vld [vmem:[%s239 + $0x1c0] sm:$0xff]
                %298 = vst [vmem:[%s240 + $0xe0] sm:$0xff] %v297
                %v299 = vld [vmem:[%s239 + $0x1d0] sm:$0xff]
                %300 = vst [vmem:[%s240 + $0xe8] sm:$0xff] %v299
                %v301 = vld [vmem:[%s239 + $0x1e0] sm:$0xff]
                %302 = vst [vmem:[%s240 + $0xf0] sm:$0xff] %v301
                %v303 = vld [vmem:[%s239 + $0x1f0] sm:$0xff]
                %304 = vst [vmem:[%s240 + $0xf8] sm:$0xff] %v303
                %v305 = vld [vmem:[%s239 + $0x200] sm:$0xff]
                %306 = vst [vmem:[%s240 + $0x100] sm:$0xff] %v305
                %v307 = vld [vmem:[%s239 + $0x210] sm:$0xff]
                %308 = vst [vmem:[%s240 + $0x108] sm:$0xff] %v307
                %v309 = vld [vmem:[%s239 + $0x220] sm:$0xff]
                %310 = vst [vmem:[%s240 + $0x110] sm:$0xff] %v309
                %v311 = vld [vmem:[%s239 + $0x230] sm:$0xff]
                %312 = vst [vmem:[%s240 + $0x118] sm:$0xff] %v311
                %v313 = vld [vmem:[%s239 + $0x240] sm:$0xff]
                %314 = vst [vmem:[%s240 + $0x120] sm:$0xff] %v313
                %v315 = vld [vmem:[%s239 + $0x250] sm:$0xff]
                %316 = vst [vmem:[%s240 + $0x128] sm:$0xff] %v315
                %v317 = vld [vmem:[%s239 + $0x260] sm:$0xff]
                %318 = vst [vmem:[%s240 + $0x130] sm:$0xff] %v317
                %v319 = vld [vmem:[%s239 + $0x270] sm:$0xff]
                %320 = vst [vmem:[%s240 + $0x138] sm:$0xff] %v319
                %v321 = vld [vmem:[%s239 + $0x280] sm:$0xff]
                %322 = vst [vmem:[%s240 + $0x140] sm:$0xff] %v321
                %v323 = vld [vmem:[%s239 + $0x290] sm:$0xff]
                %324 = vst [vmem:[%s240 + $0x148] sm:$0xff] %v323
                %v325 = vld [vmem:[%s239 + $0x2a0] sm:$0xff]
                %326 = vst [vmem:[%s240 + $0x150] sm:$0xff] %v325
                %v327 = vld [vmem:[%s239 + $0x2b0] sm:$0xff]
                %328 = vst [vmem:[%s240 + $0x158] sm:$0xff] %v327
                %v329 = vld [vmem:[%s239 + $0x2c0] sm:$0xff]
                %330 = vst [vmem:[%s240 + $0x160] sm:$0xff] %v329
                %v331 = vld [vmem:[%s239 + $0x2d0] sm:$0xff]
                %332 = vst [vmem:[%s240 + $0x168] sm:$0xff] %v331
                %v333 = vld [vmem:[%s239 + $0x2e0] sm:$0xff]
                %334 = vst [vmem:[%s240 + $0x170] sm:$0xff] %v333
                %v335 = vld [vmem:[%s239 + $0x2f0] sm:$0xff]
                %336 = vst [vmem:[%s240 + $0x178] sm:$0xff] %v335
                %v337 = vld [vmem:[%s239 + $0x300] sm:$0xff]
                %338 = vst [vmem:[%s240 + $0x180] sm:$0xff] %v337
                %v339 = vld [vmem:[%s239 + $0x310] sm:$0xff]
                %340 = vst [vmem:[%s240 + $0x188] sm:$0xff] %v339
                %v341 = vld [vmem:[%s239 + $0x320] sm:$0xff]
                %342 = vst [vmem:[%s240 + $0x190] sm:$0xff] %v341
                %v343 = vld [vmem:[%s239 + $0x330] sm:$0xff]
                %344 = vst [vmem:[%s240 + $0x198] sm:$0xff] %v343
                %v345 = vld [vmem:[%s239 + $0x340] sm:$0xff]
                %346 = vst [vmem:[%s240 + $0x1a0] sm:$0xff] %v345
                %v347 = vld [vmem:[%s239 + $0x350] sm:$0xff]
                %348 = vst [vmem:[%s240 + $0x1a8] sm:$0xff] %v347
                %v349 = vld [vmem:[%s239 + $0x360] sm:$0xff]
                %350 = vst [vmem:[%s240 + $0x1b0] sm:$0xff] %v349
                %v351 = vld [vmem:[%s239 + $0x370] sm:$0xff]
                %352 = vst [vmem:[%s240 + $0x1b8] sm:$0xff] %v351
                %v353 = vld [vmem:[%s239 + $0x380] sm:$0xff]
                %354 = vst [vmem:[%s240 + $0x1c0] sm:$0xff] %v353
                %v355 = vld [vmem:[%s239 + $0x390] sm:$0xff]
                %356 = vst [vmem:[%s240 + $0x1c8] sm:$0xff] %v355
                %v357 = vld [vmem:[%s239 + $0x3a0] sm:$0xff]
                %358 = vst [vmem:[%s240 + $0x1d0] sm:$0xff] %v357
                %v359 = vld [vmem:[%s239 + $0x3b0] sm:$0xff]
                %360 = vst [vmem:[%s240 + $0x1d8] sm:$0xff] %v359
                %v361 = vld [vmem:[%s239 + $0x3c0] sm:$0xff]
                %362 = vst [vmem:[%s240 + $0x1e0] sm:$0xff] %v361
                %v363 = vld [vmem:[%s239 + $0x3d0] sm:$0xff]
                %364 = vst [vmem:[%s240 + $0x1e8] sm:$0xff] %v363
                %v365 = vld [vmem:[%s239 + $0x3e0] sm:$0xff]
                %366 = vst [vmem:[%s240 + $0x1f0] sm:$0xff] %v365
                %v367 = vld [vmem:[%s239 + $0x3f0] sm:$0xff]
                %368 = vst [vmem:[%s240 + $0x1f8] sm:$0xff] %v367
                %v369 = vld [vmem:[%s239 + $0x400] sm:$0xff]
                %370 = vst [vmem:[%s240 + $0x200] sm:$0xff] %v369
                %v371 = vld [vmem:[%s239 + $0x410] sm:$0xff]
                %372 = vst [vmem:[%s240 + $0x208] sm:$0xff] %v371
                %v373 = vld [vmem:[%s239 + $0x420] sm:$0xff]
                %374 = vst [vmem:[%s240 + $0x210] sm:$0xff] %v373
                %v375 = vld [vmem:[%s239 + $0x430] sm:$0xff]
                %376 = vst [vmem:[%s240 + $0x218] sm:$0xff] %v375
                %v377 = vld [vmem:[%s239 + $0x440] sm:$0xff]
                %378 = vst [vmem:[%s240 + $0x220] sm:$0xff] %v377
                %v379 = vld [vmem:[%s239 + $0x450] sm:$0xff]
                %380 = vst [vmem:[%s240 + $0x228] sm:$0xff] %v379
                %v381 = vld [vmem:[%s239 + $0x460] sm:$0xff]
                %382 = vst [vmem:[%s240 + $0x230] sm:$0xff] %v381
                %v383 = vld [vmem:[%s239 + $0x470] sm:$0xff]
                %384 = vst [vmem:[%s240 + $0x238] sm:$0xff] %v383
                %v385 = vld [vmem:[%s239 + $0x480] sm:$0xff]
                %386 = vst [vmem:[%s240 + $0x240] sm:$0xff] %v385
                %v387 = vld [vmem:[%s239 + $0x490] sm:$0xff]
                %388 = vst [vmem:[%s240 + $0x248] sm:$0xff] %v387
                %v389 = vld [vmem:[%s239 + $0x4a0] sm:$0xff]
                %390 = vst [vmem:[%s240 + $0x250] sm:$0xff] %v389
                %v391 = vld [vmem:[%s239 + $0x4b0] sm:$0xff]
                %392 = vst [vmem:[%s240 + $0x258] sm:$0xff] %v391
                %v393 = vld [vmem:[%s239 + $0x4c0] sm:$0xff]
                %394 = vst [vmem:[%s240 + $0x260] sm:$0xff] %v393
                %v395 = vld [vmem:[%s239 + $0x4d0] sm:$0xff]
                %396 = vst [vmem:[%s240 + $0x268] sm:$0xff] %v395
                %v397 = vld [vmem:[%s239 + $0x4e0] sm:$0xff]
                %398 = vst [vmem:[%s240 + $0x270] sm:$0xff] %v397
                %v399 = vld [vmem:[%s239 + $0x4f0] sm:$0xff]
                %400 = vst [vmem:[%s240 + $0x278] sm:$0xff] %v399
                %v401 = vld [vmem:[%s239 + $0x500] sm:$0xff]
                %402 = vst [vmem:[%s240 + $0x280] sm:$0xff] %v401
                %v403 = vld [vmem:[%s239 + $0x510] sm:$0xff]
                %404 = vst [vmem:[%s240 + $0x288] sm:$0xff] %v403
                %v405 = vld [vmem:[%s239 + $0x520] sm:$0xff]
                %406 = vst [vmem:[%s240 + $0x290] sm:$0xff] %v405
                %v407 = vld [vmem:[%s239 + $0x530] sm:$0xff]
                %408 = vst [vmem:[%s240 + $0x298] sm:$0xff] %v407
                %v409 = vld [vmem:[%s239 + $0x540] sm:$0xff]
                %410 = vst [vmem:[%s240 + $0x2a0] sm:$0xff] %v409
                %v411 = vld [vmem:[%s239 + $0x550] sm:$0xff]
                %412 = vst [vmem:[%s240 + $0x2a8] sm:$0xff] %v411
                %v413 = vld [vmem:[%s239 + $0x560] sm:$0xff]
                %414 = vst [vmem:[%s240 + $0x2b0] sm:$0xff] %v413
                %v415 = vld [vmem:[%s239 + $0x570] sm:$0xff]
                %416 = vst [vmem:[%s240 + $0x2b8] sm:$0xff] %v415
                %v417 = vld [vmem:[%s239 + $0x580] sm:$0xff]
                %418 = vst [vmem:[%s240 + $0x2c0] sm:$0xff] %v417
                %v419 = vld [vmem:[%s239 + $0x590] sm:$0xff]
                %420 = vst [vmem:[%s240 + $0x2c8] sm:$0xff] %v419
                %v421 = vld [vmem:[%s239 + $0x5a0] sm:$0xff]
                %422 = vst [vmem:[%s240 + $0x2d0] sm:$0xff] %v421
                %v423 = vld [vmem:[%s239 + $0x5b0] sm:$0xff]
                %424 = vst [vmem:[%s240 + $0x2d8] sm:$0xff] %v423
                %v425 = vld [vmem:[%s239 + $0x5c0] sm:$0xff]
                %426 = vst [vmem:[%s240 + $0x2e0] sm:$0xff] %v425
                %v427 = vld [vmem:[%s239 + $0x5d0] sm:$0xff]
                %428 = vst [vmem:[%s240 + $0x2e8] sm:$0xff] %v427
                %v429 = vld [vmem:[%s239 + $0x5e0] sm:$0xff]
                %430 = vst [vmem:[%s240 + $0x2f0] sm:$0xff] %v429
                %v431 = vld [vmem:[%s239 + $0x5f0] sm:$0xff]
                %432 = vst [vmem:[%s240 + $0x2f8] sm:$0xff] %v431
                %v433 = vld [vmem:[%s239 + $0x600] sm:$0xff]
                %434 = vst [vmem:[%s240 + $0x300] sm:$0xff] %v433
                %v435 = vld [vmem:[%s239 + $0x610] sm:$0xff]
                %436 = vst [vmem:[%s240 + $0x308] sm:$0xff] %v435
                %v437 = vld [vmem:[%s239 + $0x620] sm:$0xff]
                %438 = vst [vmem:[%s240 + $0x310] sm:$0xff] %v437
                %v439 = vld [vmem:[%s239 + $0x630] sm:$0xff]
                %440 = vst [vmem:[%s240 + $0x318] sm:$0xff] %v439
                %v441 = vld [vmem:[%s239 + $0x640] sm:$0xff]
                %442 = vst [vmem:[%s240 + $0x320] sm:$0xff] %v441
                %v443 = vld [vmem:[%s239 + $0x650] sm:$0xff]
                %444 = vst [vmem:[%s240 + $0x328] sm:$0xff] %v443
                %v445 = vld [vmem:[%s239 + $0x660] sm:$0xff]
                %446 = vst [vmem:[%s240 + $0x330] sm:$0xff] %v445
                %v447 = vld [vmem:[%s239 + $0x670] sm:$0xff]
                %448 = vst [vmem:[%s240 + $0x338] sm:$0xff] %v447
                %v449 = vld [vmem:[%s239 + $0x680] sm:$0xff]
                %450 = vst [vmem:[%s240 + $0x340] sm:$0xff] %v449
                %v451 = vld [vmem:[%s239 + $0x690] sm:$0xff]
                %452 = vst [vmem:[%s240 + $0x348] sm:$0xff] %v451
                %v453 = vld [vmem:[%s239 + $0x6a0] sm:$0xff]
                %454 = vst [vmem:[%s240 + $0x350] sm:$0xff] %v453
                %v455 = vld [vmem:[%s239 + $0x6b0] sm:$0xff]
                %456 = vst [vmem:[%s240 + $0x358] sm:$0xff] %v455
                %v457 = vld [vmem:[%s239 + $0x6c0] sm:$0xff]
                %458 = vst [vmem:[%s240 + $0x360] sm:$0xff] %v457
                %v459 = vld [vmem:[%s239 + $0x6d0] sm:$0xff]
                %460 = vst [vmem:[%s240 + $0x368] sm:$0xff] %v459
                %v461 = vld [vmem:[%s239 + $0x6e0] sm:$0xff]
                %462 = vst [vmem:[%s240 + $0x370] sm:$0xff] %v461
                %v463 = vld [vmem:[%s239 + $0x6f0] sm:$0xff]
                %464 = vst [vmem:[%s240 + $0x378] sm:$0xff] %v463
                %v465 = vld [vmem:[%s239 + $0x700] sm:$0xff]
                %466 = vst [vmem:[%s240 + $0x380] sm:$0xff] %v465
                %v467 = vld [vmem:[%s239 + $0x710] sm:$0xff]
                %468 = vst [vmem:[%s240 + $0x388] sm:$0xff] %v467
                %v469 = vld [vmem:[%s239 + $0x720] sm:$0xff]
                %470 = vst [vmem:[%s240 + $0x390] sm:$0xff] %v469
                %v471 = vld [vmem:[%s239 + $0x730] sm:$0xff]
                %472 = vst [vmem:[%s240 + $0x398] sm:$0xff] %v471
                %v473 = vld [vmem:[%s239 + $0x740] sm:$0xff]
                %474 = vst [vmem:[%s240 + $0x3a0] sm:$0xff] %v473
                %v475 = vld [vmem:[%s239 + $0x750] sm:$0xff]
                %476 = vst [vmem:[%s240 + $0x3a8] sm:$0xff] %v475
                %v477 = vld [vmem:[%s239 + $0x760] sm:$0xff]
                %478 = vst [vmem:[%s240 + $0x3b0] sm:$0xff] %v477
                %v479 = vld [vmem:[%s239 + $0x770] sm:$0xff]
                %480 = vst [vmem:[%s240 + $0x3b8] sm:$0xff] %v479
                %v481 = vld [vmem:[%s239 + $0x780] sm:$0xff]
                %482 = vst [vmem:[%s240 + $0x3c0] sm:$0xff] %v481
                %v483 = vld [vmem:[%s239 + $0x790] sm:$0xff]
                %484 = vst [vmem:[%s240 + $0x3c8] sm:$0xff] %v483
                %v485 = vld [vmem:[%s239 + $0x7a0] sm:$0xff]
                %486 = vst [vmem:[%s240 + $0x3d0] sm:$0xff] %v485
                %v487 = vld [vmem:[%s239 + $0x7b0] sm:$0xff]
                %488 = vst [vmem:[%s240 + $0x3d8] sm:$0xff] %v487
                %v489 = vld [vmem:[%s239 + $0x7c0] sm:$0xff]
                %490 = vst [vmem:[%s240 + $0x3e0] sm:$0xff] %v489
                %v491 = vld [vmem:[%s239 + $0x7d0] sm:$0xff]
                %492 = vst [vmem:[%s240 + $0x3e8] sm:$0xff] %v491
                %v493 = vld [vmem:[%s239 + $0x7e0] sm:$0xff]
                %494 = vst [vmem:[%s240 + $0x3f0] sm:$0xff] %v493
                %v495 = vld [vmem:[%s239 + $0x7f0] sm:$0xff]
                %496 = vst [vmem:[%s240 + $0x3f8] sm:$0xff] %v495
                %v497 = vld [vmem:[%s239 + $0x800] sm:$0xff]
                %498 = vst [vmem:[%s240 + $0x400] sm:$0xff] %v497
                %v499 = vld [vmem:[%s239 + $0x810] sm:$0xff]
                %500 = vst [vmem:[%s240 + $0x408] sm:$0xff] %v499
                %v501 = vld [vmem:[%s239 + $0x820] sm:$0xff]
                %502 = vst [vmem:[%s240 + $0x410] sm:$0xff] %v501
                %v503 = vld [vmem:[%s239 + $0x830] sm:$0xff]
                %504 = vst [vmem:[%s240 + $0x418] sm:$0xff] %v503
                %v505 = vld [vmem:[%s239 + $0x840] sm:$0xff]
                %506 = vst [vmem:[%s240 + $0x420] sm:$0xff] %v505
                %v507 = vld [vmem:[%s239 + $0x850] sm:$0xff]
                %508 = vst [vmem:[%s240 + $0x428] sm:$0xff] %v507
                %v509 = vld [vmem:[%s239 + $0x860] sm:$0xff]
                %510 = vst [vmem:[%s240 + $0x430] sm:$0xff] %v509
                %v511 = vld [vmem:[%s239 + $0x870] sm:$0xff]
                %512 = vst [vmem:[%s240 + $0x438] sm:$0xff] %v511
                %v513 = vld [vmem:[%s239 + $0x880] sm:$0xff]
                %514 = vst [vmem:[%s240 + $0x440] sm:$0xff] %v513
                %v515 = vld [vmem:[%s239 + $0x890] sm:$0xff]
                %516 = vst [vmem:[%s240 + $0x448] sm:$0xff] %v515
                %v517 = vld [vmem:[%s239 + $0x8a0] sm:$0xff]
                %518 = vst [vmem:[%s240 + $0x450] sm:$0xff] %v517
                %v519 = vld [vmem:[%s239 + $0x8b0] sm:$0xff]
                %520 = vst [vmem:[%s240 + $0x458] sm:$0xff] %v519
                %v521 = vld [vmem:[%s239 + $0x8c0] sm:$0xff]
                %522 = vst [vmem:[%s240 + $0x460] sm:$0xff] %v521
                %v523 = vld [vmem:[%s239 + $0x8d0] sm:$0xff]
                %524 = vst [vmem:[%s240 + $0x468] sm:$0xff] %v523
                %v525 = vld [vmem:[%s239 + $0x8e0] sm:$0xff]
                %526 = vst [vmem:[%s240 + $0x470] sm:$0xff] %v525
                %v527 = vld [vmem:[%s239 + $0x8f0] sm:$0xff]
                %528 = vst [vmem:[%s240 + $0x478] sm:$0xff] %v527
                %v529 = vld [vmem:[%s239 + $0x900] sm:$0xff]
                %530 = vst [vmem:[%s240 + $0x480] sm:$0xff] %v529
                %v531 = vld [vmem:[%s239 + $0x910] sm:$0xff]
                %532 = vst [vmem:[%s240 + $0x488] sm:$0xff] %v531
                %v533 = vld [vmem:[%s239 + $0x920] sm:$0xff]
                %534 = vst [vmem:[%s240 + $0x490] sm:$0xff] %v533
                %v535 = vld [vmem:[%s239 + $0x930] sm:$0xff]
                %536 = vst [vmem:[%s240 + $0x498] sm:$0xff] %v535
                %v537 = vld [vmem:[%s239 + $0x940] sm:$0xff]
                %538 = vst [vmem:[%s240 + $0x4a0] sm:$0xff] %v537
                %v539 = vld [vmem:[%s239 + $0x950] sm:$0xff]
                %540 = vst [vmem:[%s240 + $0x4a8] sm:$0xff] %v539
                %v541 = vld [vmem:[%s239 + $0x960] sm:$0xff]
                %542 = vst [vmem:[%s240 + $0x4b0] sm:$0xff] %v541
                %v543 = vld [vmem:[%s239 + $0x970] sm:$0xff]
                %544 = vst [vmem:[%s240 + $0x4b8] sm:$0xff] %v543
                %v545 = vld [vmem:[%s239 + $0x980] sm:$0xff]
                %546 = vst [vmem:[%s240 + $0x4c0] sm:$0xff] %v545
                %v547 = vld [vmem:[%s239 + $0x990] sm:$0xff]
                %548 = vst [vmem:[%s240 + $0x4c8] sm:$0xff] %v547
                %v549 = vld [vmem:[%s239 + $0x9a0] sm:$0xff]
                %550 = vst [vmem:[%s240 + $0x4d0] sm:$0xff] %v549
                %v551 = vld [vmem:[%s239 + $0x9b0] sm:$0xff]
                %552 = vst [vmem:[%s240 + $0x4d8] sm:$0xff] %v551
                %v553 = vld [vmem:[%s239 + $0x9c0] sm:$0xff]
                %554 = vst [vmem:[%s240 + $0x4e0] sm:$0xff] %v553
                %v555 = vld [vmem:[%s239 + $0x9d0] sm:$0xff]
                %556 = vst [vmem:[%s240 + $0x4e8] sm:$0xff] %v555
                %v557 = vld [vmem:[%s239 + $0x9e0] sm:$0xff]
                %558 = vst [vmem:[%s240 + $0x4f0] sm:$0xff] %v557
                %v559 = vld [vmem:[%s239 + $0x9f0] sm:$0xff]
                %560 = vst [vmem:[%s240 + $0x4f8] sm:$0xff] %v559
                %v561 = vld [vmem:[%s239 + $0xa00] sm:$0xff]
                %562 = vst [vmem:[%s240 + $0x500] sm:$0xff] %v561
                %v563 = vld [vmem:[%s239 + $0xa10] sm:$0xff]
                %564 = vst [vmem:[%s240 + $0x508] sm:$0xff] %v563
                %v565 = vld [vmem:[%s239 + $0xa20] sm:$0xff]
                %566 = vst [vmem:[%s240 + $0x510] sm:$0xff] %v565
                %v567 = vld [vmem:[%s239 + $0xa30] sm:$0xff]
                %568 = vst [vmem:[%s240 + $0x518] sm:$0xff] %v567
                %v569 = vld [vmem:[%s239 + $0xa40] sm:$0xff]
                %570 = vst [vmem:[%s240 + $0x520] sm:$0xff] %v569
                %v571 = vld [vmem:[%s239 + $0xa50] sm:$0xff]
                %572 = vst [vmem:[%s240 + $0x528] sm:$0xff] %v571
                %v573 = vld [vmem:[%s239 + $0xa60] sm:$0xff]
                %574 = vst [vmem:[%s240 + $0x530] sm:$0xff] %v573
                %v575 = vld [vmem:[%s239 + $0xa70] sm:$0xff]
                %576 = vst [vmem:[%s240 + $0x538] sm:$0xff] %v575
                %v577 = vld [vmem:[%s239 + $0xa80] sm:$0xff]
                %578 = vst [vmem:[%s240 + $0x540] sm:$0xff] %v577
                %v579 = vld [vmem:[%s239 + $0xa90] sm:$0xff]
                %580 = vst [vmem:[%s240 + $0x548] sm:$0xff] %v579
                %v581 = vld [vmem:[%s239 + $0xaa0] sm:$0xff]
                %582 = vst [vmem:[%s240 + $0x550] sm:$0xff] %v581
                %v583 = vld [vmem:[%s239 + $0xab0] sm:$0xff]
                %584 = vst [vmem:[%s240 + $0x558] sm:$0xff] %v583
                %v585 = vld [vmem:[%s239 + $0xac0] sm:$0xff]
                %586 = vst [vmem:[%s240 + $0x560] sm:$0xff] %v585
                %v587 = vld [vmem:[%s239 + $0xad0] sm:$0xff]
                %588 = vst [vmem:[%s240 + $0x568] sm:$0xff] %v587
                %v589 = vld [vmem:[%s239 + $0xae0] sm:$0xff]
                %590 = vst [vmem:[%s240 + $0x570] sm:$0xff] %v589
                %v591 = vld [vmem:[%s239 + $0xaf0] sm:$0xff]
                %592 = vst [vmem:[%s240 + $0x578] sm:$0xff] %v591
                %v593 = vld [vmem:[%s239 + $0xb00] sm:$0xff]
                %594 = vst [vmem:[%s240 + $0x580] sm:$0xff] %v593
                %v595 = vld [vmem:[%s239 + $0xb10] sm:$0xff]
                %596 = vst [vmem:[%s240 + $0x588] sm:$0xff] %v595
                %v597 = vld [vmem:[%s239 + $0xb20] sm:$0xff]
                %598 = vst [vmem:[%s240 + $0x590] sm:$0xff] %v597
                %v599 = vld [vmem:[%s239 + $0xb30] sm:$0xff]
                %600 = vst [vmem:[%s240 + $0x598] sm:$0xff] %v599
                %v601 = vld [vmem:[%s239 + $0xb40] sm:$0xff]
                %602 = vst [vmem:[%s240 + $0x5a0] sm:$0xff] %v601
                %v603 = vld [vmem:[%s239 + $0xb50] sm:$0xff]
                %604 = vst [vmem:[%s240 + $0x5a8] sm:$0xff] %v603
                %v605 = vld [vmem:[%s239 + $0xb60] sm:$0xff]
                %606 = vst [vmem:[%s240 + $0x5b0] sm:$0xff] %v605
                %v607 = vld [vmem:[%s239 + $0xb70] sm:$0xff]
                %608 = vst [vmem:[%s240 + $0x5b8] sm:$0xff] %v607
                %v609 = vld [vmem:[%s239 + $0xb80] sm:$0xff]
                %610 = vst [vmem:[%s240 + $0x5c0] sm:$0xff] %v609
                %v611 = vld [vmem:[%s239 + $0xb90] sm:$0xff]
                %612 = vst [vmem:[%s240 + $0x5c8] sm:$0xff] %v611
                %v613 = vld [vmem:[%s239 + $0xba0] sm:$0xff]
                %614 = vst [vmem:[%s240 + $0x5d0] sm:$0xff] %v613
                %v615 = vld [vmem:[%s239 + $0xbb0] sm:$0xff]
                %616 = vst [vmem:[%s240 + $0x5d8] sm:$0xff] %v615
                %v617 = vld [vmem:[%s239 + $0xbc0] sm:$0xff]
                %618 = vst [vmem:[%s240 + $0x5e0] sm:$0xff] %v617
                %v619 = vld [vmem:[%s239 + $0xbd0] sm:$0xff]
                %620 = vst [vmem:[%s240 + $0x5e8] sm:$0xff] %v619
                %v621 = vld [vmem:[%s239 + $0xbe0] sm:$0xff]
                %622 = vst [vmem:[%s240 + $0x5f0] sm:$0xff] %v621
                %v623 = vld [vmem:[%s239 + $0xbf0] sm:$0xff]
                %624 = vst [vmem:[%s240 + $0x5f8] sm:$0xff] %v623
                %v625 = vld [vmem:[%s239 + $0xc00] sm:$0xff]
                %626 = vst [vmem:[%s240 + $0x600] sm:$0xff] %v625
                %v627 = vld [vmem:[%s239 + $0xc10] sm:$0xff]
                %628 = vst [vmem:[%s240 + $0x608] sm:$0xff] %v627
                %v629 = vld [vmem:[%s239 + $0xc20] sm:$0xff]
                %630 = vst [vmem:[%s240 + $0x610] sm:$0xff] %v629
                %v631 = vld [vmem:[%s239 + $0xc30] sm:$0xff]
                %632 = vst [vmem:[%s240 + $0x618] sm:$0xff] %v631
                %v633 = vld [vmem:[%s239 + $0xc40] sm:$0xff]
                %634 = vst [vmem:[%s240 + $0x620] sm:$0xff] %v633
                %v635 = vld [vmem:[%s239 + $0xc50] sm:$0xff]
                %636 = vst [vmem:[%s240 + $0x628] sm:$0xff] %v635
                %v637 = vld [vmem:[%s239 + $0xc60] sm:$0xff]
                %638 = vst [vmem:[%s240 + $0x630] sm:$0xff] %v637
                %v639 = vld [vmem:[%s239 + $0xc70] sm:$0xff]
                %640 = vst [vmem:[%s240 + $0x638] sm:$0xff] %v639
                %v641 = vld [vmem:[%s239 + $0xc80] sm:$0xff]
                %642 = vst [vmem:[%s240 + $0x640] sm:$0xff] %v641
                %v643 = vld [vmem:[%s239 + $0xc90] sm:$0xff]
                %644 = vst [vmem:[%s240 + $0x648] sm:$0xff] %v643
                %v645 = vld [vmem:[%s239 + $0xca0] sm:$0xff]
                %646 = vst [vmem:[%s240 + $0x650] sm:$0xff] %v645
                %v647 = vld [vmem:[%s239 + $0xcb0] sm:$0xff]
                %648 = vst [vmem:[%s240 + $0x658] sm:$0xff] %v647
                %v649 = vld [vmem:[%s239 + $0xcc0] sm:$0xff]
                %650 = vst [vmem:[%s240 + $0x660] sm:$0xff] %v649
                %v651 = vld [vmem:[%s239 + $0xcd0] sm:$0xff]
                %652 = vst [vmem:[%s240 + $0x668] sm:$0xff] %v651
                %v653 = vld [vmem:[%s239 + $0xce0] sm:$0xff]
                %654 = vst [vmem:[%s240 + $0x670] sm:$0xff] %v653
                %v655 = vld [vmem:[%s239 + $0xcf0] sm:$0xff]
                %656 = vst [vmem:[%s240 + $0x678] sm:$0xff] %v655
                %v657 = vld [vmem:[%s239 + $0xd00] sm:$0xff]
                %658 = vst [vmem:[%s240 + $0x680] sm:$0xff] %v657
                %v659 = vld [vmem:[%s239 + $0xd10] sm:$0xff]
                %660 = vst [vmem:[%s240 + $0x688] sm:$0xff] %v659
                %v661 = vld [vmem:[%s239 + $0xd20] sm:$0xff]
                %662 = vst [vmem:[%s240 + $0x690] sm:$0xff] %v661
                %v663 = vld [vmem:[%s239 + $0xd30] sm:$0xff]
                %664 = vst [vmem:[%s240 + $0x698] sm:$0xff] %v663
                %v665 = vld [vmem:[%s239 + $0xd40] sm:$0xff]
                %666 = vst [vmem:[%s240 + $0x6a0] sm:$0xff] %v665
                %v667 = vld [vmem:[%s239 + $0xd50] sm:$0xff]
                %668 = vst [vmem:[%s240 + $0x6a8] sm:$0xff] %v667
                %v669 = vld [vmem:[%s239 + $0xd60] sm:$0xff]
                %670 = vst [vmem:[%s240 + $0x6b0] sm:$0xff] %v669
                %v671 = vld [vmem:[%s239 + $0xd70] sm:$0xff]
                %672 = vst [vmem:[%s240 + $0x6b8] sm:$0xff] %v671
                %v673 = vld [vmem:[%s239 + $0xd80] sm:$0xff]
                %674 = vst [vmem:[%s240 + $0x6c0] sm:$0xff] %v673
                %v675 = vld [vmem:[%s239 + $0xd90] sm:$0xff]
                %676 = vst [vmem:[%s240 + $0x6c8] sm:$0xff] %v675
                %v677 = vld [vmem:[%s239 + $0xda0] sm:$0xff]
                %678 = vst [vmem:[%s240 + $0x6d0] sm:$0xff] %v677
                %v679 = vld [vmem:[%s239 + $0xdb0] sm:$0xff]
                %680 = vst [vmem:[%s240 + $0x6d8] sm:$0xff] %v679
                %v681 = vld [vmem:[%s239 + $0xdc0] sm:$0xff]
                %682 = vst [vmem:[%s240 + $0x6e0] sm:$0xff] %v681
                %v683 = vld [vmem:[%s239 + $0xdd0] sm:$0xff]
                %684 = vst [vmem:[%s240 + $0x6e8] sm:$0xff] %v683
                %v685 = vld [vmem:[%s239 + $0xde0] sm:$0xff]
                %686 = vst [vmem:[%s240 + $0x6f0] sm:$0xff] %v685
                %v687 = vld [vmem:[%s239 + $0xdf0] sm:$0xff]
                %688 = vst [vmem:[%s240 + $0x6f8] sm:$0xff] %v687
              $region60: #{svhn_forward.8} parent=54 // loop_footer
                %s238 = sadd.s32 1, %s234
              $region61: #{svhn_forward.8} parent=54 // loop_footer_branch
                %233 = sbr.rel target = $region57
              $region62: #{svhn_forward.8} parent=54 // loop_exit
                _
            $region55: #{svhn_forward.8} parent=46 // pred_fallthru
              _
          $region47: #{svhn_forward.8} parent=42 // pred_fallthru
            _
          %1149 = vnop
        $region43: #{svhn_forward.8} parent=15 // pred_fallthru
          _
        // Predicated region
        $region78: #{svhn_forward.8} parent=15 // pred_check
          %p1150 = pneg %p104
        $region79: #{svhn_forward.8} parent=15 // pred_check_branch
          %1152 = sbr.rel (%p1150) target = $region81
        $region80: #{svhn_forward.8} parent=15 // pred_region
          %s1153 = smul.u32 2, %s17
          %p1154 = scmp.lt.s32.totalorder %s1153, 3
          %s1155 = scalar_select %p1154, %s1153, 3
          %s1156 = scalar_lea.vmem %s2, %s1155
          %s1157 = smul.u32 2, %s17
        $region81: #{svhn_forward.8} parent=15 // pred_fallthru
          _
      $region16: #{svhn_forward.8} parent=5 // pred_fallthru
        _
      %p1158 = scmp.le.s32.totalorder 1, %s9
      %p1159 = scmp.lt.s32.totalorder %s9, 15
      %p1160 = pnand %p1158, %p1159
      %p1161 = pneg %p1160
      // Predicated region
      $region82: #{svhn_forward.8} parent=5 // pred_check
        _
      $region83: #{svhn_forward.8} parent=5 // pred_check_branch
        %1163 = sbr.rel (%p1160) target = $region85
      $region84: #{svhn_forward.8} parent=5 // pred_region
        %s1164 = ssub.s32 %s9, 1
        %s1165 = sand.u32 %s43, 1
        %s1166 = sand.u32 %s43, 1
        %s1167 = smul.addr %s1166, 112
        %s1168 = scalar_lea.vmem [#allocation2], %s1167
        // Predicated region
        $region86: #{svhn_forward.8} parent=84 // pred_check
          %p1169 = pneg %p56
        $region87: #{svhn_forward.8} parent=84 // pred_check_branch
          %1171 = sbr.rel (%p1169) target = $region89
        $region88: #{svhn_forward.8} parent=84 // pred_region
          _
        $region89: #{svhn_forward.8} parent=84 // pred_fallthru
          _
        %s1172 = sand.u32 %s71, 1
        %s1173 = sand.u32 %s71, 1
        %s1174 = smul.addr %s1173, 1792
        %s1175 = scalar_lea.vmem [#allocation3], %s1174
        // Predicated region
        $region90: #{svhn_forward.8} parent=84 // pred_check
          %p1176 = pneg %p84
        $region91: #{svhn_forward.8} parent=84 // pred_check_branch
          %1178 = sbr.rel (%p1176) target = $region93
        $region92: #{svhn_forward.8} parent=84 // pred_region
          _
        $region93: #{svhn_forward.8} parent=84 // pred_fallthru
          _
        %s1179 = sand.u32 %s43, 1
        %s1180 = sand.u32 %s43, 1
        %s1181 = smul.addr %s1180, 112
        %s1182 = scalar_lea.vmem [#allocation2], %s1181
        %p1183 = pneg %p56
        %p1184 = pneg %p53
        %s1185 = sand.u32 %s71, 1
        %s1186 = sand.u32 %s71, 1
        %s1187 = smul.addr %s1186, 1792
        %s1188 = scalar_lea.vmem [#allocation3], %s1187
        %p1189 = pneg %p84
        %p1190 = pneg %p81
        %s1191 = smul.u32 2, %s20
        %p1192 = scmp.lt.s32.totalorder %s1191, 3
        %s1193 = scalar_select %p1192, %s1191, 3
        %s1194 = scalar_lea.vmem %s2, %s1193
        %p1195 = pneg %p110
        %p1196 = pneg %p107
        %p1197 = pneg %p138
        %p1198 = pneg %p135
        %s1199 = sand.u32 %s125, 1
        %s1200 = sand.u32 %s125, 1
        %s1201 = smul.addr %s1200, 32
        %s1202 = scalar_lea.vmem [#allocation4], %s1201
        %s1203 = smul.u32 2, %s19
        %s1204 = smul.u32 14, %s21
        %s1205 = smul.u32 224, %s21
        %s1206 = smul.u32 2, %s20
        %s1207 = smul.u32 2, %s20
        %p1208 = scmp.lt.s32.totalorder %s1207, 3
        %s1209 = scalar_select %p1208, %s1207, 3
        %s1210 = scalar_lea.vmem %s2, %s1209
        %s1211 = smul.u32 2, %s20
        %s1212 = smul.u32 2, %s19
        %s1213 = smul.u32 2, %s20
        %p1214 = scmp.eq.s32.totalorder %s21, 0
        // Predicated region
        $region94: #{svhn_forward.8} parent=84 // pred_check
          %p1215 = pneg %p1214
        $region95: #{svhn_forward.8} parent=84 // pred_check_branch
          %1217 = sbr.rel (%p1215) target = $region97
        $region96: #{svhn_forward.8} parent=84 // pred_region
          %1218 = vst [vmem:[%s1202] sm:$0xff] 0.0
          %1219 = vst [vmem:[%s1202 + $0x8] sm:$0xff] 0.0
          %1220 = vst [vmem:[%s1202 + $0x10] sm:$0xff] 0.0
          %1221 = vst [vmem:[%s1202 + $0x18] sm:$0xff] 0.0
        $region97: #{svhn_forward.8} parent=84 // pred_fallthru
          _
        %v1222 = vld [vmem:[%s1202] sm:$0xff]
        %v1223 = vld [vmem:[%s1202 + $0x8] sm:$0xff]
        %v1224 = vld [vmem:[%s1202 + $0x10] sm:$0xff]
        %v1225 = vld [vmem:[%s1202 + $0x18] sm:$0xff]
        %v1226 = vld [vmem:[%s1168] sm:$0xff]
        %v1227 = vld [vmem:[%s1168 + $0x8] sm:$0xff]
        %v1228 = vld [vmem:[%s1168 + $0x10] sm:$0xff]
        %v1229 = vld [vmem:[%s1168 + $0x18] sm:$0xff]
        %v1230 = vld [vmem:[%s1168 + $0x20] sm:$0xff]
        %v1231 = vld [vmem:[%s1168 + $0x28] sm:$0xff]
        %v1232 = vld [vmem:[%s1168 + $0x30] sm:$0xff]
        %v1233 = vld [vmem:[%s1168 + $0x38] sm:$0xff]
        %v1234 = vld [vmem:[%s1168 + $0x40] sm:$0xff]
        %v1235 = vld [vmem:[%s1168 + $0x48] sm:$0xff]
        %v1236 = vld [vmem:[%s1168 + $0x50] sm:$0xff]
        %v1237 = vld [vmem:[%s1168 + $0x58] sm:$0xff]
        %v1238 = vld [vmem:[%s1168 + $0x60] sm:$0xff]
        %v1239 = vld [vmem:[%s1168 + $0x68] sm:$0xff]
        %v1240 = vld [vmem:[%s1175] sm:$0xff]
        %v1241 = vld [vmem:[%s1175 + $0x8] sm:$0xff]
        %v1242 = vld [vmem:[%s1175 + $0x10] sm:$0xff]
        %v1243 = vld [vmem:[%s1175 + $0x18] sm:$0xff]
        %v1244 = vld [vmem:[%s1175 + $0x20] sm:$0xff]
        %v1245 = vld [vmem:[%s1175 + $0x28] sm:$0xff]
        %v1246 = vld [vmem:[%s1175 + $0x30] sm:$0xff]
        %v1247 = vld [vmem:[%s1175 + $0x38] sm:$0xff]
        %v1248 = vld [vmem:[%s1175 + $0x40] sm:$0xff]
        %v1249 = vld [vmem:[%s1175 + $0x48] sm:$0xff]
        %v1250 = vld [vmem:[%s1175 + $0x50] sm:$0xff]
        %v1251 = vld [vmem:[%s1175 + $0x58] sm:$0xff]
        %v1252 = vld [vmem:[%s1175 + $0x60] sm:$0xff]
        %v1253 = vld [vmem:[%s1175 + $0x68] sm:$0xff]
        %v1254 = vld [vmem:[%s1175 + $0x70] sm:$0xff]
        %v1255 = vld [vmem:[%s1175 + $0x78] sm:$0xff]
        %v1256 = vld [vmem:[%s1175 + $0x80] sm:$0xff]
        %v1257 = vld [vmem:[%s1175 + $0x88] sm:$0xff]
        %v1258 = vld [vmem:[%s1175 + $0x90] sm:$0xff]
        %v1259 = vld [vmem:[%s1175 + $0x98] sm:$0xff]
        %v1260 = vld [vmem:[%s1175 + $0xa0] sm:$0xff]
        %v1261 = vld [vmem:[%s1175 + $0xa8] sm:$0xff]
        %v1262 = vld [vmem:[%s1175 + $0xb0] sm:$0xff]
        %v1263 = vld [vmem:[%s1175 + $0xb8] sm:$0xff]
        %v1264 = vld [vmem:[%s1175 + $0xc0] sm:$0xff]
        %v1265 = vld [vmem:[%s1175 + $0xc8] sm:$0xff]
        %v1266 = vld [vmem:[%s1175 + $0xd0] sm:$0xff]
        %v1267 = vld [vmem:[%s1175 + $0xd8] sm:$0xff]
        %v1268 = vld [vmem:[%s1175 + $0xe0] sm:$0xff]
        %v1269 = vld [vmem:[%s1175 + $0xe8] sm:$0xff]
        %v1270 = vld [vmem:[%s1175 + $0xf0] sm:$0xff]
        %v1271 = vld [vmem:[%s1175 + $0xf8] sm:$0xff]
        %v1272 = vld [vmem:[%s1175 + $0x100] sm:$0xff]
        %v1273 = vld [vmem:[%s1175 + $0x108] sm:$0xff]
        %v1274 = vld [vmem:[%s1175 + $0x110] sm:$0xff]
        %v1275 = vld [vmem:[%s1175 + $0x118] sm:$0xff]
        %v1276 = vld [vmem:[%s1175 + $0x120] sm:$0xff]
        %v1277 = vld [vmem:[%s1175 + $0x128] sm:$0xff]
        %v1278 = vld [vmem:[%s1175 + $0x130] sm:$0xff]
        %v1279 = vld [vmem:[%s1175 + $0x138] sm:$0xff]
        %v1280 = vld [vmem:[%s1175 + $0x140] sm:$0xff]
        %v1281 = vld [vmem:[%s1175 + $0x148] sm:$0xff]
        %v1282 = vld [vmem:[%s1175 + $0x150] sm:$0xff]
        %v1283 = vld [vmem:[%s1175 + $0x158] sm:$0xff]
        %v1284 = vld [vmem:[%s1175 + $0x160] sm:$0xff]
        %v1285 = vld [vmem:[%s1175 + $0x168] sm:$0xff]
        %v1286 = vld [vmem:[%s1175 + $0x170] sm:$0xff]
        %v1287 = vld [vmem:[%s1175 + $0x178] sm:$0xff]
        %v1288 = vld [vmem:[%s1175 + $0x180] sm:$0xff]
        %v1289 = vld [vmem:[%s1175 + $0x188] sm:$0xff]
        %v1290 = vld [vmem:[%s1175 + $0x190] sm:$0xff]
        %v1291 = vld [vmem:[%s1175 + $0x198] sm:$0xff]
        %v1292 = vld [vmem:[%s1175 + $0x1a0] sm:$0xff]
        %v1293 = vld [vmem:[%s1175 + $0x1a8] sm:$0xff]
        %v1294 = vld [vmem:[%s1175 + $0x1b0] sm:$0xff]
        %v1295 = vld [vmem:[%s1175 + $0x1b8] sm:$0xff]
        %v1296 = vld [vmem:[%s1175 + $0x1c0] sm:$0xff]
        %v1297 = vld [vmem:[%s1175 + $0x1c8] sm:$0xff]
        %v1298 = vld [vmem:[%s1175 + $0x1d0] sm:$0xff]
        %v1299 = vld [vmem:[%s1175 + $0x1d8] sm:$0xff]
        %v1300 = vld [vmem:[%s1175 + $0x1e0] sm:$0xff]
        %v1301 = vld [vmem:[%s1175 + $0x1e8] sm:$0xff]
        %v1302 = vld [vmem:[%s1175 + $0x1f0] sm:$0xff]
        %v1303 = vld [vmem:[%s1175 + $0x1f8] sm:$0xff]
        %v1304 = vld [vmem:[%s1175 + $0x200] sm:$0xff]
        %v1305 = vld [vmem:[%s1175 + $0x208] sm:$0xff]
        %v1306 = vld [vmem:[%s1175 + $0x210] sm:$0xff]
        %v1307 = vld [vmem:[%s1175 + $0x218] sm:$0xff]
        %v1308 = vld [vmem:[%s1175 + $0x220] sm:$0xff]
        %v1309 = vld [vmem:[%s1175 + $0x228] sm:$0xff]
        %v1310 = vld [vmem:[%s1175 + $0x230] sm:$0xff]
        %v1311 = vld [vmem:[%s1175 + $0x238] sm:$0xff]
        %v1312 = vld [vmem:[%s1175 + $0x240] sm:$0xff]
        %v1313 = vld [vmem:[%s1175 + $0x248] sm:$0xff]
        %v1314 = vld [vmem:[%s1175 + $0x250] sm:$0xff]
        %v1315 = vld [vmem:[%s1175 + $0x258] sm:$0xff]
        %v1316 = vld [vmem:[%s1175 + $0x260] sm:$0xff]
        %v1317 = vld [vmem:[%s1175 + $0x268] sm:$0xff]
        %v1318 = vld [vmem:[%s1175 + $0x270] sm:$0xff]
        %v1319 = vld [vmem:[%s1175 + $0x278] sm:$0xff]
        %v1320 = vld [vmem:[%s1175 + $0x280] sm:$0xff]
        %v1321 = vld [vmem:[%s1175 + $0x288] sm:$0xff]
        %v1322 = vld [vmem:[%s1175 + $0x290] sm:$0xff]
        %v1323 = vld [vmem:[%s1175 + $0x298] sm:$0xff]
        %v1324 = vld [vmem:[%s1175 + $0x2a0] sm:$0xff]
        %v1325 = vld [vmem:[%s1175 + $0x2a8] sm:$0xff]
        %v1326 = vld [vmem:[%s1175 + $0x2b0] sm:$0xff]
        %v1327 = vld [vmem:[%s1175 + $0x2b8] sm:$0xff]
        %v1328 = vld [vmem:[%s1175 + $0x2c0] sm:$0xff]
        %v1329 = vld [vmem:[%s1175 + $0x2c8] sm:$0xff]
        %v1330 = vld [vmem:[%s1175 + $0x2d0] sm:$0xff]
        %v1331 = vld [vmem:[%s1175 + $0x2d8] sm:$0xff]
        %v1332 = vld [vmem:[%s1175 + $0x2e0] sm:$0xff]
        %v1333 = vld [vmem:[%s1175 + $0x2e8] sm:$0xff]
        %v1334 = vld [vmem:[%s1175 + $0x2f0] sm:$0xff]
        %v1335 = vld [vmem:[%s1175 + $0x2f8] sm:$0xff]
        %v1336 = vld [vmem:[%s1175 + $0x300] sm:$0xff]
        %v1337 = vld [vmem:[%s1175 + $0x308] sm:$0xff]
        %v1338 = vld [vmem:[%s1175 + $0x310] sm:$0xff]
        %v1339 = vld [vmem:[%s1175 + $0x318] sm:$0xff]
        %v1340 = vld [vmem:[%s1175 + $0x320] sm:$0xff]
        %v1341 = vld [vmem:[%s1175 + $0x328] sm:$0xff]
        %v1342 = vld [vmem:[%s1175 + $0x330] sm:$0xff]
        %v1343 = vld [vmem:[%s1175 + $0x338] sm:$0xff]
        %v1344 = vld [vmem:[%s1175 + $0x340] sm:$0xff]
        %v1345 = vld [vmem:[%s1175 + $0x348] sm:$0xff]
        %v1346 = vld [vmem:[%s1175 + $0x350] sm:$0xff]
        %v1347 = vld [vmem:[%s1175 + $0x358] sm:$0xff]
        %v1348 = vld [vmem:[%s1175 + $0x360] sm:$0xff]
        %v1349 = vld [vmem:[%s1175 + $0x368] sm:$0xff]
        %v1350 = vld [vmem:[%s1175 + $0x370] sm:$0xff]
        %v1351 = vld [vmem:[%s1175 + $0x378] sm:$0xff]
        %v1352 = vld [vmem:[%s1175 + $0x380] sm:$0xff]
        %v1353 = vld [vmem:[%s1175 + $0x388] sm:$0xff]
        %v1354 = vld [vmem:[%s1175 + $0x390] sm:$0xff]
        %v1355 = vld [vmem:[%s1175 + $0x398] sm:$0xff]
        %v1356 = vld [vmem:[%s1175 + $0x3a0] sm:$0xff]
        %v1357 = vld [vmem:[%s1175 + $0x3a8] sm:$0xff]
        %v1358 = vld [vmem:[%s1175 + $0x3b0] sm:$0xff]
        %v1359 = vld [vmem:[%s1175 + $0x3b8] sm:$0xff]
        %v1360 = vld [vmem:[%s1175 + $0x3c0] sm:$0xff]
        %v1361 = vld [vmem:[%s1175 + $0x3c8] sm:$0xff]
        %v1362 = vld [vmem:[%s1175 + $0x3d0] sm:$0xff]
        %v1363 = vld [vmem:[%s1175 + $0x3d8] sm:$0xff]
        %v1364 = vld [vmem:[%s1175 + $0x3e0] sm:$0xff]
        %v1365 = vld [vmem:[%s1175 + $0x3e8] sm:$0xff]
        %v1366 = vld [vmem:[%s1175 + $0x3f0] sm:$0xff]
        %v1367 = vld [vmem:[%s1175 + $0x3f8] sm:$0xff]
        %v1368 = vld [vmem:[%s1175 + $0x400] sm:$0xff]
        %v1369 = vld [vmem:[%s1175 + $0x408] sm:$0xff]
        %v1370 = vld [vmem:[%s1175 + $0x410] sm:$0xff]
        %v1371 = vld [vmem:[%s1175 + $0x418] sm:$0xff]
        %v1372 = vld [vmem:[%s1175 + $0x420] sm:$0xff]
        %v1373 = vld [vmem:[%s1175 + $0x428] sm:$0xff]
        %v1374 = vld [vmem:[%s1175 + $0x430] sm:$0xff]
        %v1375 = vld [vmem:[%s1175 + $0x438] sm:$0xff]
        %v1376 = vld [vmem:[%s1175 + $0x440] sm:$0xff]
        %v1377 = vld [vmem:[%s1175 + $0x448] sm:$0xff]
        %v1378 = vld [vmem:[%s1175 + $0x450] sm:$0xff]
        %v1379 = vld [vmem:[%s1175 + $0x458] sm:$0xff]
        %v1380 = vld [vmem:[%s1175 + $0x460] sm:$0xff]
        %v1381 = vld [vmem:[%s1175 + $0x468] sm:$0xff]
        %v1382 = vld [vmem:[%s1175 + $0x470] sm:$0xff]
        %v1383 = vld [vmem:[%s1175 + $0x478] sm:$0xff]
        %v1384 = vld [vmem:[%s1175 + $0x480] sm:$0xff]
        %v1385 = vld [vmem:[%s1175 + $0x488] sm:$0xff]
        %v1386 = vld [vmem:[%s1175 + $0x490] sm:$0xff]
        %v1387 = vld [vmem:[%s1175 + $0x498] sm:$0xff]
        %v1388 = vld [vmem:[%s1175 + $0x4a0] sm:$0xff]
        %v1389 = vld [vmem:[%s1175 + $0x4a8] sm:$0xff]
        %v1390 = vld [vmem:[%s1175 + $0x4b0] sm:$0xff]
        %v1391 = vld [vmem:[%s1175 + $0x4b8] sm:$0xff]
        %v1392 = vld [vmem:[%s1175 + $0x4c0] sm:$0xff]
        %v1393 = vld [vmem:[%s1175 + $0x4c8] sm:$0xff]
        %v1394 = vld [vmem:[%s1175 + $0x4d0] sm:$0xff]
        %v1395 = vld [vmem:[%s1175 + $0x4d8] sm:$0xff]
        %v1396 = vld [vmem:[%s1175 + $0x4e0] sm:$0xff]
        %v1397 = vld [vmem:[%s1175 + $0x4e8] sm:$0xff]
        %v1398 = vld [vmem:[%s1175 + $0x4f0] sm:$0xff]
        %v1399 = vld [vmem:[%s1175 + $0x4f8] sm:$0xff]
        %v1400 = vld [vmem:[%s1175 + $0x500] sm:$0xff]
        %v1401 = vld [vmem:[%s1175 + $0x508] sm:$0xff]
        %v1402 = vld [vmem:[%s1175 + $0x510] sm:$0xff]
        %v1403 = vld [vmem:[%s1175 + $0x518] sm:$0xff]
        %v1404 = vld [vmem:[%s1175 + $0x520] sm:$0xff]
        %v1405 = vld [vmem:[%s1175 + $0x528] sm:$0xff]
        %v1406 = vld [vmem:[%s1175 + $0x530] sm:$0xff]
        %v1407 = vld [vmem:[%s1175 + $0x538] sm:$0xff]
        %v1408 = vld [vmem:[%s1175 + $0x540] sm:$0xff]
        %v1409 = vld [vmem:[%s1175 + $0x548] sm:$0xff]
        %v1410 = vld [vmem:[%s1175 + $0x550] sm:$0xff]
        %v1411 = vld [vmem:[%s1175 + $0x558] sm:$0xff]
        %v1412 = vld [vmem:[%s1175 + $0x560] sm:$0xff]
        %v1413 = vld [vmem:[%s1175 + $0x568] sm:$0xff]
        %v1414 = vld [vmem:[%s1175 + $0x570] sm:$0xff]
        %v1415 = vld [vmem:[%s1175 + $0x578] sm:$0xff]
        %v1416 = vld [vmem:[%s1175 + $0x580] sm:$0xff]
        %v1417 = vld [vmem:[%s1175 + $0x588] sm:$0xff]
        %v1418 = vld [vmem:[%s1175 + $0x590] sm:$0xff]
        %v1419 = vld [vmem:[%s1175 + $0x598] sm:$0xff]
        %v1420 = vld [vmem:[%s1175 + $0x5a0] sm:$0xff]
        %v1421 = vld [vmem:[%s1175 + $0x5a8] sm:$0xff]
        %v1422 = vld [vmem:[%s1175 + $0x5b0] sm:$0xff]
        %v1423 = vld [vmem:[%s1175 + $0x5b8] sm:$0xff]
        %v1424 = vld [vmem:[%s1175 + $0x5c0] sm:$0xff]
        %v1425 = vld [vmem:[%s1175 + $0x5c8] sm:$0xff]
        %v1426 = vld [vmem:[%s1175 + $0x5d0] sm:$0xff]
        %v1427 = vld [vmem:[%s1175 + $0x5d8] sm:$0xff]
        %v1428 = vld [vmem:[%s1175 + $0x5e0] sm:$0xff]
        %v1429 = vld [vmem:[%s1175 + $0x5e8] sm:$0xff]
        %v1430 = vld [vmem:[%s1175 + $0x5f0] sm:$0xff]
        %v1431 = vld [vmem:[%s1175 + $0x5f8] sm:$0xff]
        %v1432 = vld [vmem:[%s1175 + $0x600] sm:$0xff]
        %v1433 = vld [vmem:[%s1175 + $0x608] sm:$0xff]
        %v1434 = vld [vmem:[%s1175 + $0x610] sm:$0xff]
        %v1435 = vld [vmem:[%s1175 + $0x618] sm:$0xff]
        %v1436 = vld [vmem:[%s1175 + $0x620] sm:$0xff]
        %v1437 = vld [vmem:[%s1175 + $0x628] sm:$0xff]
        %v1438 = vld [vmem:[%s1175 + $0x630] sm:$0xff]
        %v1439 = vld [vmem:[%s1175 + $0x638] sm:$0xff]
        %v1440 = vld [vmem:[%s1175 + $0x640] sm:$0xff]
        %v1441 = vld [vmem:[%s1175 + $0x648] sm:$0xff]
        %v1442 = vld [vmem:[%s1175 + $0x650] sm:$0xff]
        %v1443 = vld [vmem:[%s1175 + $0x658] sm:$0xff]
        %v1444 = vld [vmem:[%s1175 + $0x660] sm:$0xff]
        %v1445 = vld [vmem:[%s1175 + $0x668] sm:$0xff]
        %v1446 = vld [vmem:[%s1175 + $0x670] sm:$0xff]
        %v1447 = vld [vmem:[%s1175 + $0x678] sm:$0xff]
        %v1448 = vld [vmem:[%s1175 + $0x680] sm:$0xff]
        %v1449 = vld [vmem:[%s1175 + $0x688] sm:$0xff]
        %v1450 = vld [vmem:[%s1175 + $0x690] sm:$0xff]
        %v1451 = vld [vmem:[%s1175 + $0x698] sm:$0xff]
        %v1452 = vld [vmem:[%s1175 + $0x6a0] sm:$0xff]
        %v1453 = vld [vmem:[%s1175 + $0x6a8] sm:$0xff]
        %v1454 = vld [vmem:[%s1175 + $0x6b0] sm:$0xff]
        %v1455 = vld [vmem:[%s1175 + $0x6b8] sm:$0xff]
        %v1456 = vld [vmem:[%s1175 + $0x6c0] sm:$0xff]
        %v1457 = vld [vmem:[%s1175 + $0x6c8] sm:$0xff]
        %v1458 = vld [vmem:[%s1175 + $0x6d0] sm:$0xff]
        %v1459 = vld [vmem:[%s1175 + $0x6d8] sm:$0xff]
        %v1460 = vld [vmem:[%s1175 + $0x6e0] sm:$0xff]
        %v1461 = vld [vmem:[%s1175 + $0x6e8] sm:$0xff]
        %v1462 = vld [vmem:[%s1175 + $0x6f0] sm:$0xff]
        %v1463 = vld [vmem:[%s1175 + $0x6f8] sm:$0xff]
        %v1478 = vunpack.c.l.b16 %v1226
        %v1479 = vunpack.c.h.b16 %v1226
        %v1480 = vunpack.c.l.b16 %v1227
        %v1481 = vunpack.c.h.b16 %v1227
        %v1482 = vunpack.c.l.b16 %v1228
        %v1483 = vunpack.c.h.b16 %v1228
        %v1484 = vunpack.c.l.b16 %v1229
        %v1485 = vunpack.c.h.b16 %v1229
        %v1486 = vunpack.c.l.b16 %v1230
        %v1487 = vunpack.c.h.b16 %v1230
        %v1488 = vunpack.c.l.b16 %v1231
        %v1489 = vunpack.c.h.b16 %v1231
        %v1490 = vunpack.c.l.b16 %v1232
        %v1491 = vunpack.c.h.b16 %v1232
        %v1492 = vunpack.c.l.b16 %v1233
        %v1493 = vunpack.c.h.b16 %v1233
        %v1494 = vunpack.c.l.b16 %v1234
        %v1495 = vunpack.c.h.b16 %v1234
        %v1496 = vunpack.c.l.b16 %v1235
        %v1497 = vunpack.c.h.b16 %v1235
        %v1498 = vunpack.c.l.b16 %v1236
        %v1499 = vunpack.c.h.b16 %v1236
        %v1500 = vunpack.c.l.b16 %v1237
        %v1501 = vunpack.c.h.b16 %v1237
        %v1502 = vunpack.c.l.b16 %v1238
        %v1503 = vunpack.c.h.b16 %v1238
        %v1504 = vunpack.c.l.b16 %v1239
        %v1505 = vunpack.c.h.b16 %v1239
        %v1506 = vpack.c.b16 %v1492, %v1478
        %v1507 = vpack.c.b16 %v1493, %v1479
        %v1508 = vpack.c.b16 %v1494, %v1480
        %v1509 = vpack.c.b16 %v1495, %v1481
        %v1510 = vpack.c.b16 %v1496, %v1482
        %v1511 = vpack.c.b16 %v1497, %v1483
        %v1512 = vpack.c.b16 %v1498, %v1484
        %v1513 = vpack.c.b16 %v1499, %v1485
        %v1514 = vpack.c.b16 %v1500, %v1486
        %v1515 = vpack.c.b16 %v1501, %v1487
        %v1516 = vpack.c.b16 %v1502, %v1488
        %v1517 = vpack.c.b16 %v1503, %v1489
        %v1518 = vpack.c.b16 %v1504, %v1490
        %v1519 = vpack.c.b16 %v1505, %v1491
        %v1758 = vunpack.c.l.b16 %v1240
        %v1759 = vunpack.c.h.b16 %v1240
        %v1760 = vunpack.c.l.b16 %v1241
        %v1761 = vunpack.c.h.b16 %v1241
        %v1762 = vunpack.c.l.b16 %v1242
        %v1763 = vunpack.c.h.b16 %v1242
        %v1764 = vunpack.c.l.b16 %v1243
        %v1765 = vunpack.c.h.b16 %v1243
        %v1766 = vunpack.c.l.b16 %v1244
        %v1767 = vunpack.c.h.b16 %v1244
        %v1768 = vunpack.c.l.b16 %v1245
        %v1769 = vunpack.c.h.b16 %v1245
        %v1770 = vunpack.c.l.b16 %v1246
        %v1771 = vunpack.c.h.b16 %v1246
        %v1772 = vunpack.c.l.b16 %v1247
        %v1773 = vunpack.c.h.b16 %v1247
        %v1774 = vunpack.c.l.b16 %v1248
        %v1775 = vunpack.c.h.b16 %v1248
        %v1776 = vunpack.c.l.b16 %v1249
        %v1777 = vunpack.c.h.b16 %v1249
        %v1778 = vunpack.c.l.b16 %v1250
        %v1779 = vunpack.c.h.b16 %v1250
        %v1780 = vunpack.c.l.b16 %v1251
        %v1781 = vunpack.c.h.b16 %v1251
        %v1782 = vunpack.c.l.b16 %v1252
        %v1783 = vunpack.c.h.b16 %v1252
        %v1784 = vunpack.c.l.b16 %v1253
        %v1785 = vunpack.c.h.b16 %v1253
        %v1786 = vunpack.c.l.b16 %v1254
        %v1787 = vunpack.c.h.b16 %v1254
        %v1788 = vunpack.c.l.b16 %v1255
        %v1789 = vunpack.c.h.b16 %v1255
        %v1790 = vunpack.c.l.b16 %v1256
        %v1791 = vunpack.c.h.b16 %v1256
        %v1792 = vunpack.c.l.b16 %v1257
        %v1793 = vunpack.c.h.b16 %v1257
        %v1794 = vunpack.c.l.b16 %v1258
        %v1795 = vunpack.c.h.b16 %v1258
        %v1796 = vunpack.c.l.b16 %v1259
        %v1797 = vunpack.c.h.b16 %v1259
        %v1798 = vunpack.c.l.b16 %v1260
        %v1799 = vunpack.c.h.b16 %v1260
        %v1800 = vunpack.c.l.b16 %v1261
        %v1801 = vunpack.c.h.b16 %v1261
        %v1802 = vunpack.c.l.b16 %v1262
        %v1803 = vunpack.c.h.b16 %v1262
        %v1804 = vunpack.c.l.b16 %v1263
        %v1805 = vunpack.c.h.b16 %v1263
        %v1806 = vunpack.c.l.b16 %v1264
        %v1807 = vunpack.c.h.b16 %v1264
        %v1808 = vunpack.c.l.b16 %v1265
        %v1809 = vunpack.c.h.b16 %v1265
        %v1810 = vunpack.c.l.b16 %v1266
        %v1811 = vunpack.c.h.b16 %v1266
        %v1812 = vunpack.c.l.b16 %v1267
        %v1813 = vunpack.c.h.b16 %v1267
        %v1814 = vunpack.c.l.b16 %v1268
        %v1815 = vunpack.c.h.b16 %v1268
        %v1816 = vunpack.c.l.b16 %v1269
        %v1817 = vunpack.c.h.b16 %v1269
        %v1818 = vunpack.c.l.b16 %v1270
        %v1819 = vunpack.c.h.b16 %v1270
        %v1820 = vunpack.c.l.b16 %v1271
        %v1821 = vunpack.c.h.b16 %v1271
        %v1822 = vunpack.c.l.b16 %v1272
        %v1823 = vunpack.c.h.b16 %v1272
        %v1824 = vunpack.c.l.b16 %v1273
        %v1825 = vunpack.c.h.b16 %v1273
        %v1826 = vunpack.c.l.b16 %v1274
        %v1827 = vunpack.c.h.b16 %v1274
        %v1828 = vunpack.c.l.b16 %v1275
        %v1829 = vunpack.c.h.b16 %v1275
        %v1830 = vunpack.c.l.b16 %v1276
        %v1831 = vunpack.c.h.b16 %v1276
        %v1832 = vunpack.c.l.b16 %v1277
        %v1833 = vunpack.c.h.b16 %v1277
        %v1834 = vunpack.c.l.b16 %v1278
        %v1835 = vunpack.c.h.b16 %v1278
        %v1836 = vunpack.c.l.b16 %v1279
        %v1837 = vunpack.c.h.b16 %v1279
        %v1838 = vunpack.c.l.b16 %v1280
        %v1839 = vunpack.c.h.b16 %v1280
        %v1840 = vunpack.c.l.b16 %v1281
        %v1841 = vunpack.c.h.b16 %v1281
        %v1842 = vunpack.c.l.b16 %v1282
        %v1843 = vunpack.c.h.b16 %v1282
        %v1844 = vunpack.c.l.b16 %v1283
        %v1845 = vunpack.c.h.b16 %v1283
        %v1846 = vunpack.c.l.b16 %v1284
        %v1847 = vunpack.c.h.b16 %v1284
        %v1848 = vunpack.c.l.b16 %v1285
        %v1849 = vunpack.c.h.b16 %v1285
        %v1850 = vunpack.c.l.b16 %v1286
        %v1851 = vunpack.c.h.b16 %v1286
        %v1852 = vunpack.c.l.b16 %v1287
        %v1853 = vunpack.c.h.b16 %v1287
        %v1854 = vunpack.c.l.b16 %v1288
        %v1855 = vunpack.c.h.b16 %v1288
        %v1856 = vunpack.c.l.b16 %v1289
        %v1857 = vunpack.c.h.b16 %v1289
        %v1858 = vunpack.c.l.b16 %v1290
        %v1859 = vunpack.c.h.b16 %v1290
        %v1860 = vunpack.c.l.b16 %v1291
        %v1861 = vunpack.c.h.b16 %v1291
        %v1862 = vunpack.c.l.b16 %v1292
        %v1863 = vunpack.c.h.b16 %v1292
        %v1864 = vunpack.c.l.b16 %v1293
        %v1865 = vunpack.c.h.b16 %v1293
        %v1866 = vunpack.c.l.b16 %v1294
        %v1867 = vunpack.c.h.b16 %v1294
        %v1868 = vunpack.c.l.b16 %v1295
        %v1869 = vunpack.c.h.b16 %v1295
        %v1870 = vunpack.c.l.b16 %v1296
        %v1871 = vunpack.c.h.b16 %v1296
        %v1872 = vunpack.c.l.b16 %v1297
        %v1873 = vunpack.c.h.b16 %v1297
        %v1874 = vunpack.c.l.b16 %v1298
        %v1875 = vunpack.c.h.b16 %v1298
        %v1876 = vunpack.c.l.b16 %v1299
        %v1877 = vunpack.c.h.b16 %v1299
        %v1878 = vunpack.c.l.b16 %v1300
        %v1879 = vunpack.c.h.b16 %v1300
        %v1880 = vunpack.c.l.b16 %v1301
        %v1881 = vunpack.c.h.b16 %v1301
        %v1882 = vunpack.c.l.b16 %v1302
        %v1883 = vunpack.c.h.b16 %v1302
        %v1884 = vunpack.c.l.b16 %v1303
        %v1885 = vunpack.c.h.b16 %v1303
        %v1886 = vunpack.c.l.b16 %v1304
        %v1887 = vunpack.c.h.b16 %v1304
        %v1888 = vunpack.c.l.b16 %v1305
        %v1889 = vunpack.c.h.b16 %v1305
        %v1890 = vunpack.c.l.b16 %v1306
        %v1891 = vunpack.c.h.b16 %v1306
        %v1892 = vunpack.c.l.b16 %v1307
        %v1893 = vunpack.c.h.b16 %v1307
        %v1894 = vunpack.c.l.b16 %v1308
        %v1895 = vunpack.c.h.b16 %v1308
        %v1896 = vunpack.c.l.b16 %v1309
        %v1897 = vunpack.c.h.b16 %v1309
        %v1898 = vunpack.c.l.b16 %v1310
        %v1899 = vunpack.c.h.b16 %v1310
        %v1900 = vunpack.c.l.b16 %v1311
        %v1901 = vunpack.c.h.b16 %v1311
        %v1902 = vunpack.c.l.b16 %v1312
        %v1903 = vunpack.c.h.b16 %v1312
        %v1904 = vunpack.c.l.b16 %v1313
        %v1905 = vunpack.c.h.b16 %v1313
        %v1906 = vunpack.c.l.b16 %v1314
        %v1907 = vunpack.c.h.b16 %v1314
        %v1908 = vunpack.c.l.b16 %v1315
        %v1909 = vunpack.c.h.b16 %v1315
        %v1910 = vunpack.c.l.b16 %v1316
        %v1911 = vunpack.c.h.b16 %v1316
        %v1912 = vunpack.c.l.b16 %v1317
        %v1913 = vunpack.c.h.b16 %v1317
        %v1914 = vunpack.c.l.b16 %v1318
        %v1915 = vunpack.c.h.b16 %v1318
        %v1916 = vunpack.c.l.b16 %v1319
        %v1917 = vunpack.c.h.b16 %v1319
        %v1918 = vunpack.c.l.b16 %v1320
        %v1919 = vunpack.c.h.b16 %v1320
        %v1920 = vunpack.c.l.b16 %v1321
        %v1921 = vunpack.c.h.b16 %v1321
        %v1922 = vunpack.c.l.b16 %v1322
        %v1923 = vunpack.c.h.b16 %v1322
        %v1924 = vunpack.c.l.b16 %v1323
        %v1925 = vunpack.c.h.b16 %v1323
        %v1926 = vunpack.c.l.b16 %v1324
        %v1927 = vunpack.c.h.b16 %v1324
        %v1928 = vunpack.c.l.b16 %v1325
        %v1929 = vunpack.c.h.b16 %v1325
        %v1930 = vunpack.c.l.b16 %v1326
        %v1931 = vunpack.c.h.b16 %v1326
        %v1932 = vunpack.c.l.b16 %v1327
        %v1933 = vunpack.c.h.b16 %v1327
        %v1934 = vunpack.c.l.b16 %v1328
        %v1935 = vunpack.c.h.b16 %v1328
        %v1936 = vunpack.c.l.b16 %v1329
        %v1937 = vunpack.c.h.b16 %v1329
        %v1938 = vunpack.c.l.b16 %v1330
        %v1939 = vunpack.c.h.b16 %v1330
        %v1940 = vunpack.c.l.b16 %v1331
        %v1941 = vunpack.c.h.b16 %v1331
        %v1942 = vunpack.c.l.b16 %v1332
        %v1943 = vunpack.c.h.b16 %v1332
        %v1944 = vunpack.c.l.b16 %v1333
        %v1945 = vunpack.c.h.b16 %v1333
        %v1946 = vunpack.c.l.b16 %v1334
        %v1947 = vunpack.c.h.b16 %v1334
        %v1948 = vunpack.c.l.b16 %v1335
        %v1949 = vunpack.c.h.b16 %v1335
        %v1950 = vunpack.c.l.b16 %v1336
        %v1951 = vunpack.c.h.b16 %v1336
        %v1952 = vunpack.c.l.b16 %v1337
        %v1953 = vunpack.c.h.b16 %v1337
        %v1954 = vunpack.c.l.b16 %v1338
        %v1955 = vunpack.c.h.b16 %v1338
        %v1956 = vunpack.c.l.b16 %v1339
        %v1957 = vunpack.c.h.b16 %v1339
        %v1958 = vunpack.c.l.b16 %v1340
        %v1959 = vunpack.c.h.b16 %v1340
        %v1960 = vunpack.c.l.b16 %v1341
        %v1961 = vunpack.c.h.b16 %v1341
        %v1962 = vunpack.c.l.b16 %v1342
        %v1963 = vunpack.c.h.b16 %v1342
        %v1964 = vunpack.c.l.b16 %v1343
        %v1965 = vunpack.c.h.b16 %v1343
        %v1966 = vunpack.c.l.b16 %v1344
        %v1967 = vunpack.c.h.b16 %v1344
        %v1968 = vunpack.c.l.b16 %v1345
        %v1969 = vunpack.c.h.b16 %v1345
        %v1970 = vunpack.c.l.b16 %v1346
        %v1971 = vunpack.c.h.b16 %v1346
        %v1972 = vunpack.c.l.b16 %v1347
        %v1973 = vunpack.c.h.b16 %v1347
        %v1974 = vunpack.c.l.b16 %v1348
        %v1975 = vunpack.c.h.b16 %v1348
        %v1976 = vunpack.c.l.b16 %v1349
        %v1977 = vunpack.c.h.b16 %v1349
        %v1978 = vunpack.c.l.b16 %v1350
        %v1979 = vunpack.c.h.b16 %v1350
        %v1980 = vunpack.c.l.b16 %v1351
        %v1981 = vunpack.c.h.b16 %v1351
        %v1982 = vunpack.c.l.b16 %v1352
        %v1983 = vunpack.c.h.b16 %v1352
        %v1984 = vunpack.c.l.b16 %v1353
        %v1985 = vunpack.c.h.b16 %v1353
        %v1986 = vunpack.c.l.b16 %v1354
        %v1987 = vunpack.c.h.b16 %v1354
        %v1988 = vunpack.c.l.b16 %v1355
        %v1989 = vunpack.c.h.b16 %v1355
        %v1990 = vunpack.c.l.b16 %v1356
        %v1991 = vunpack.c.h.b16 %v1356
        %v1992 = vunpack.c.l.b16 %v1357
        %v1993 = vunpack.c.h.b16 %v1357
        %v1994 = vunpack.c.l.b16 %v1358
        %v1995 = vunpack.c.h.b16 %v1358
        %v1996 = vunpack.c.l.b16 %v1359
        %v1997 = vunpack.c.h.b16 %v1359
        %v1998 = vunpack.c.l.b16 %v1360
        %v1999 = vunpack.c.h.b16 %v1360
        %v2000 = vunpack.c.l.b16 %v1361
        %v2001 = vunpack.c.h.b16 %v1361
        %v2002 = vunpack.c.l.b16 %v1362
        %v2003 = vunpack.c.h.b16 %v1362
        %v2004 = vunpack.c.l.b16 %v1363
        %v2005 = vunpack.c.h.b16 %v1363
        %v2006 = vunpack.c.l.b16 %v1364
        %v2007 = vunpack.c.h.b16 %v1364
        %v2008 = vunpack.c.l.b16 %v1365
        %v2009 = vunpack.c.h.b16 %v1365
        %v2010 = vunpack.c.l.b16 %v1366
        %v2011 = vunpack.c.h.b16 %v1366
        %v2012 = vunpack.c.l.b16 %v1367
        %v2013 = vunpack.c.h.b16 %v1367
        %v2014 = vunpack.c.l.b16 %v1368
        %v2015 = vunpack.c.h.b16 %v1368
        %v2016 = vunpack.c.l.b16 %v1369
        %v2017 = vunpack.c.h.b16 %v1369
        %v2018 = vunpack.c.l.b16 %v1370
        %v2019 = vunpack.c.h.b16 %v1370
        %v2020 = vunpack.c.l.b16 %v1371
        %v2021 = vunpack.c.h.b16 %v1371
        %v2022 = vunpack.c.l.b16 %v1372
        %v2023 = vunpack.c.h.b16 %v1372
        %v2024 = vunpack.c.l.b16 %v1373
        %v2025 = vunpack.c.h.b16 %v1373
        %v2026 = vunpack.c.l.b16 %v1374
        %v2027 = vunpack.c.h.b16 %v1374
        %v2028 = vunpack.c.l.b16 %v1375
        %v2029 = vunpack.c.h.b16 %v1375
        %v2030 = vunpack.c.l.b16 %v1376
        %v2031 = vunpack.c.h.b16 %v1376
        %v2032 = vunpack.c.l.b16 %v1377
        %v2033 = vunpack.c.h.b16 %v1377
        %v2034 = vunpack.c.l.b16 %v1378
        %v2035 = vunpack.c.h.b16 %v1378
        %v2036 = vunpack.c.l.b16 %v1379
        %v2037 = vunpack.c.h.b16 %v1379
        %v2038 = vunpack.c.l.b16 %v1380
        %v2039 = vunpack.c.h.b16 %v1380
        %v2040 = vunpack.c.l.b16 %v1381
        %v2041 = vunpack.c.h.b16 %v1381
        %v2042 = vunpack.c.l.b16 %v1382
        %v2043 = vunpack.c.h.b16 %v1382
        %v2044 = vunpack.c.l.b16 %v1383
        %v2045 = vunpack.c.h.b16 %v1383
        %v2046 = vunpack.c.l.b16 %v1384
        %v2047 = vunpack.c.h.b16 %v1384
        %v2048 = vunpack.c.l.b16 %v1385
        %v2049 = vunpack.c.h.b16 %v1385
        %v2050 = vunpack.c.l.b16 %v1386
        %v2051 = vunpack.c.h.b16 %v1386
        %v2052 = vunpack.c.l.b16 %v1387
        %v2053 = vunpack.c.h.b16 %v1387
        %v2054 = vunpack.c.l.b16 %v1388
        %v2055 = vunpack.c.h.b16 %v1388
        %v2056 = vunpack.c.l.b16 %v1389
        %v2057 = vunpack.c.h.b16 %v1389
        %v2058 = vunpack.c.l.b16 %v1390
        %v2059 = vunpack.c.h.b16 %v1390
        %v2060 = vunpack.c.l.b16 %v1391
        %v2061 = vunpack.c.h.b16 %v1391
        %v2062 = vunpack.c.l.b16 %v1392
        %v2063 = vunpack.c.h.b16 %v1392
        %v2064 = vunpack.c.l.b16 %v1393
        %v2065 = vunpack.c.h.b16 %v1393
        %v2066 = vunpack.c.l.b16 %v1394
        %v2067 = vunpack.c.h.b16 %v1394
        %v2068 = vunpack.c.l.b16 %v1395
        %v2069 = vunpack.c.h.b16 %v1395
        %v2070 = vunpack.c.l.b16 %v1396
        %v2071 = vunpack.c.h.b16 %v1396
        %v2072 = vunpack.c.l.b16 %v1397
        %v2073 = vunpack.c.h.b16 %v1397
        %v2074 = vunpack.c.l.b16 %v1398
        %v2075 = vunpack.c.h.b16 %v1398
        %v2076 = vunpack.c.l.b16 %v1399
        %v2077 = vunpack.c.h.b16 %v1399
        %v2078 = vunpack.c.l.b16 %v1400
        %v2079 = vunpack.c.h.b16 %v1400
        %v2080 = vunpack.c.l.b16 %v1401
        %v2081 = vunpack.c.h.b16 %v1401
        %v2082 = vunpack.c.l.b16 %v1402
        %v2083 = vunpack.c.h.b16 %v1402
        %v2084 = vunpack.c.l.b16 %v1403
        %v2085 = vunpack.c.h.b16 %v1403
        %v2086 = vunpack.c.l.b16 %v1404
        %v2087 = vunpack.c.h.b16 %v1404
        %v2088 = vunpack.c.l.b16 %v1405
        %v2089 = vunpack.c.h.b16 %v1405
        %v2090 = vunpack.c.l.b16 %v1406
        %v2091 = vunpack.c.h.b16 %v1406
        %v2092 = vunpack.c.l.b16 %v1407
        %v2093 = vunpack.c.h.b16 %v1407
        %v2094 = vunpack.c.l.b16 %v1408
        %v2095 = vunpack.c.h.b16 %v1408
        %v2096 = vunpack.c.l.b16 %v1409
        %v2097 = vunpack.c.h.b16 %v1409
        %v2098 = vunpack.c.l.b16 %v1410
        %v2099 = vunpack.c.h.b16 %v1410
        %v2100 = vunpack.c.l.b16 %v1411
        %v2101 = vunpack.c.h.b16 %v1411
        %v2102 = vunpack.c.l.b16 %v1412
        %v2103 = vunpack.c.h.b16 %v1412
        %v2104 = vunpack.c.l.b16 %v1413
        %v2105 = vunpack.c.h.b16 %v1413
        %v2106 = vunpack.c.l.b16 %v1414
        %v2107 = vunpack.c.h.b16 %v1414
        %v2108 = vunpack.c.l.b16 %v1415
        %v2109 = vunpack.c.h.b16 %v1415
        %v2110 = vunpack.c.l.b16 %v1416
        %v2111 = vunpack.c.h.b16 %v1416
        %v2112 = vunpack.c.l.b16 %v1417
        %v2113 = vunpack.c.h.b16 %v1417
        %v2114 = vunpack.c.l.b16 %v1418
        %v2115 = vunpack.c.h.b16 %v1418
        %v2116 = vunpack.c.l.b16 %v1419
        %v2117 = vunpack.c.h.b16 %v1419
        %v2118 = vunpack.c.l.b16 %v1420
        %v2119 = vunpack.c.h.b16 %v1420
        %v2120 = vunpack.c.l.b16 %v1421
        %v2121 = vunpack.c.h.b16 %v1421
        %v2122 = vunpack.c.l.b16 %v1422
        %v2123 = vunpack.c.h.b16 %v1422
        %v2124 = vunpack.c.l.b16 %v1423
        %v2125 = vunpack.c.h.b16 %v1423
        %v2126 = vunpack.c.l.b16 %v1424
        %v2127 = vunpack.c.h.b16 %v1424
        %v2128 = vunpack.c.l.b16 %v1425
        %v2129 = vunpack.c.h.b16 %v1425
        %v2130 = vunpack.c.l.b16 %v1426
        %v2131 = vunpack.c.h.b16 %v1426
        %v2132 = vunpack.c.l.b16 %v1427
        %v2133 = vunpack.c.h.b16 %v1427
        %v2134 = vunpack.c.l.b16 %v1428
        %v2135 = vunpack.c.h.b16 %v1428
        %v2136 = vunpack.c.l.b16 %v1429
        %v2137 = vunpack.c.h.b16 %v1429
        %v2138 = vunpack.c.l.b16 %v1430
        %v2139 = vunpack.c.h.b16 %v1430
        %v2140 = vunpack.c.l.b16 %v1431
        %v2141 = vunpack.c.h.b16 %v1431
        %v2142 = vunpack.c.l.b16 %v1432
        %v2143 = vunpack.c.h.b16 %v1432
        %v2144 = vunpack.c.l.b16 %v1433
        %v2145 = vunpack.c.h.b16 %v1433
        %v2146 = vunpack.c.l.b16 %v1434
        %v2147 = vunpack.c.h.b16 %v1434
        %v2148 = vunpack.c.l.b16 %v1435
        %v2149 = vunpack.c.h.b16 %v1435
        %v2150 = vunpack.c.l.b16 %v1436
        %v2151 = vunpack.c.h.b16 %v1436
        %v2152 = vunpack.c.l.b16 %v1437
        %v2153 = vunpack.c.h.b16 %v1437
        %v2154 = vunpack.c.l.b16 %v1438
        %v2155 = vunpack.c.h.b16 %v1438
        %v2156 = vunpack.c.l.b16 %v1439
        %v2157 = vunpack.c.h.b16 %v1439
        %v2158 = vunpack.c.l.b16 %v1440
        %v2159 = vunpack.c.h.b16 %v1440
        %v2160 = vunpack.c.l.b16 %v1441
        %v2161 = vunpack.c.h.b16 %v1441
        %v2162 = vunpack.c.l.b16 %v1442
        %v2163 = vunpack.c.h.b16 %v1442
        %v2164 = vunpack.c.l.b16 %v1443
        %v2165 = vunpack.c.h.b16 %v1443
        %v2166 = vunpack.c.l.b16 %v1444
        %v2167 = vunpack.c.h.b16 %v1444
        %v2168 = vunpack.c.l.b16 %v1445
        %v2169 = vunpack.c.h.b16 %v1445
        %v2170 = vunpack.c.l.b16 %v1446
        %v2171 = vunpack.c.h.b16 %v1446
        %v2172 = vunpack.c.l.b16 %v1447
        %v2173 = vunpack.c.h.b16 %v1447
        %v2174 = vunpack.c.l.b16 %v1448
        %v2175 = vunpack.c.h.b16 %v1448
        %v2176 = vunpack.c.l.b16 %v1449
        %v2177 = vunpack.c.h.b16 %v1449
        %v2178 = vunpack.c.l.b16 %v1450
        %v2179 = vunpack.c.h.b16 %v1450
        %v2180 = vunpack.c.l.b16 %v1451
        %v2181 = vunpack.c.h.b16 %v1451
        %v2182 = vunpack.c.l.b16 %v1452
        %v2183 = vunpack.c.h.b16 %v1452
        %v2184 = vunpack.c.l.b16 %v1453
        %v2185 = vunpack.c.h.b16 %v1453
        %v2186 = vunpack.c.l.b16 %v1454
        %v2187 = vunpack.c.h.b16 %v1454
        %v2188 = vunpack.c.l.b16 %v1455
        %v2189 = vunpack.c.h.b16 %v1455
        %v2190 = vunpack.c.l.b16 %v1456
        %v2191 = vunpack.c.h.b16 %v1456
        %v2192 = vunpack.c.l.b16 %v1457
        %v2193 = vunpack.c.h.b16 %v1457
        %v2194 = vunpack.c.l.b16 %v1458
        %v2195 = vunpack.c.h.b16 %v1458
        %v2196 = vunpack.c.l.b16 %v1459
        %v2197 = vunpack.c.h.b16 %v1459
        %v2198 = vunpack.c.l.b16 %v1460
        %v2199 = vunpack.c.h.b16 %v1460
        %v2200 = vunpack.c.l.b16 %v1461
        %v2201 = vunpack.c.h.b16 %v1461
        %v2202 = vunpack.c.l.b16 %v1462
        %v2203 = vunpack.c.h.b16 %v1462
        %v2204 = vunpack.c.l.b16 %v1463
        %v2205 = vunpack.c.h.b16 %v1463
        %v2206 = vpack.c.b16 %v1760, %v1758
        %v2207 = vpack.c.b16 %v1761, %v1759
        %v2208 = vpack.c.b16 %v1764, %v1762
        %v2209 = vpack.c.b16 %v1765, %v1763
        %v2210 = vpack.c.b16 %v1768, %v1766
        %v2211 = vpack.c.b16 %v1769, %v1767
        %v2212 = vpack.c.b16 %v1772, %v1770
        %v2213 = vpack.c.b16 %v1773, %v1771
        %v2214 = vpack.c.b16 %v1776, %v1774
        %v2215 = vpack.c.b16 %v1777, %v1775
        %v2216 = vpack.c.b16 %v1780, %v1778
        %v2217 = vpack.c.b16 %v1781, %v1779
        %v2218 = vpack.c.b16 %v1784, %v1782
        %v2219 = vpack.c.b16 %v1785, %v1783
        %v2220 = vpack.c.b16 %v1788, %v1786
        %v2221 = vpack.c.b16 %v1789, %v1787
        %v2222 = vpack.c.b16 %v1792, %v1790
        %v2223 = vpack.c.b16 %v1793, %v1791
        %v2224 = vpack.c.b16 %v1796, %v1794
        %v2225 = vpack.c.b16 %v1797, %v1795
        %v2226 = vpack.c.b16 %v1800, %v1798
        %v2227 = vpack.c.b16 %v1801, %v1799
        %v2228 = vpack.c.b16 %v1804, %v1802
        %v2229 = vpack.c.b16 %v1805, %v1803
        %v2230 = vpack.c.b16 %v1808, %v1806
        %v2231 = vpack.c.b16 %v1809, %v1807
        %v2232 = vpack.c.b16 %v1812, %v1810
        %v2233 = vpack.c.b16 %v1813, %v1811
        %v2234 = vpack.c.b16 %v1816, %v1814
        %v2235 = vpack.c.b16 %v1817, %v1815
        %v2236 = vpack.c.b16 %v1820, %v1818
        %v2237 = vpack.c.b16 %v1821, %v1819
        %v2238 = vpack.c.b16 %v1824, %v1822
        %v2239 = vpack.c.b16 %v1825, %v1823
        %v2240 = vpack.c.b16 %v1828, %v1826
        %v2241 = vpack.c.b16 %v1829, %v1827
        %v2242 = vpack.c.b16 %v1832, %v1830
        %v2243 = vpack.c.b16 %v1833, %v1831
        %v2244 = vpack.c.b16 %v1836, %v1834
        %v2245 = vpack.c.b16 %v1837, %v1835
        %v2246 = vpack.c.b16 %v1840, %v1838
        %v2247 = vpack.c.b16 %v1841, %v1839
        %v2248 = vpack.c.b16 %v1844, %v1842
        %v2249 = vpack.c.b16 %v1845, %v1843
        %v2250 = vpack.c.b16 %v1848, %v1846
        %v2251 = vpack.c.b16 %v1849, %v1847
        %v2252 = vpack.c.b16 %v1852, %v1850
        %v2253 = vpack.c.b16 %v1853, %v1851
        %v2254 = vpack.c.b16 %v1856, %v1854
        %v2255 = vpack.c.b16 %v1857, %v1855
        %v2256 = vpack.c.b16 %v1860, %v1858
        %v2257 = vpack.c.b16 %v1861, %v1859
        %v2258 = vpack.c.b16 %v1864, %v1862
        %v2259 = vpack.c.b16 %v1865, %v1863
        %v2260 = vpack.c.b16 %v1868, %v1866
        %v2261 = vpack.c.b16 %v1869, %v1867
        %v2262 = vpack.c.b16 %v1872, %v1870
        %v2263 = vpack.c.b16 %v1873, %v1871
        %v2264 = vpack.c.b16 %v1876, %v1874
        %v2265 = vpack.c.b16 %v1877, %v1875
        %v2266 = vpack.c.b16 %v1880, %v1878
        %v2267 = vpack.c.b16 %v1881, %v1879
        %v2268 = vpack.c.b16 %v1884, %v1882
        %v2269 = vpack.c.b16 %v1885, %v1883
        %v2270 = vpack.c.b16 %v1888, %v1886
        %v2271 = vpack.c.b16 %v1889, %v1887
        %v2272 = vpack.c.b16 %v1892, %v1890
        %v2273 = vpack.c.b16 %v1893, %v1891
        %v2274 = vpack.c.b16 %v1896, %v1894
        %v2275 = vpack.c.b16 %v1897, %v1895
        %v2276 = vpack.c.b16 %v1900, %v1898
        %v2277 = vpack.c.b16 %v1901, %v1899
        %v2278 = vpack.c.b16 %v1904, %v1902
        %v2279 = vpack.c.b16 %v1905, %v1903
        %v2280 = vpack.c.b16 %v1908, %v1906
        %v2281 = vpack.c.b16 %v1909, %v1907
        %v2282 = vpack.c.b16 %v1912, %v1910
        %v2283 = vpack.c.b16 %v1913, %v1911
        %v2284 = vpack.c.b16 %v1916, %v1914
        %v2285 = vpack.c.b16 %v1917, %v1915
        %v2286 = vpack.c.b16 %v1920, %v1918
        %v2287 = vpack.c.b16 %v1921, %v1919
        %v2288 = vpack.c.b16 %v1924, %v1922
        %v2289 = vpack.c.b16 %v1925, %v1923
        %v2290 = vpack.c.b16 %v1928, %v1926
        %v2291 = vpack.c.b16 %v1929, %v1927
        %v2292 = vpack.c.b16 %v1932, %v1930
        %v2293 = vpack.c.b16 %v1933, %v1931
        %v2294 = vpack.c.b16 %v1936, %v1934
        %v2295 = vpack.c.b16 %v1937, %v1935
        %v2296 = vpack.c.b16 %v1940, %v1938
        %v2297 = vpack.c.b16 %v1941, %v1939
        %v2298 = vpack.c.b16 %v1944, %v1942
        %v2299 = vpack.c.b16 %v1945, %v1943
        %v2300 = vpack.c.b16 %v1948, %v1946
        %v2301 = vpack.c.b16 %v1949, %v1947
        %v2302 = vpack.c.b16 %v1952, %v1950
        %v2303 = vpack.c.b16 %v1953, %v1951
        %v2304 = vpack.c.b16 %v1956, %v1954
        %v2305 = vpack.c.b16 %v1957, %v1955
        %v2306 = vpack.c.b16 %v1960, %v1958
        %v2307 = vpack.c.b16 %v1961, %v1959
        %v2308 = vpack.c.b16 %v1964, %v1962
        %v2309 = vpack.c.b16 %v1965, %v1963
        %v2310 = vpack.c.b16 %v1968, %v1966
        %v2311 = vpack.c.b16 %v1969, %v1967
        %v2312 = vpack.c.b16 %v1972, %v1970
        %v2313 = vpack.c.b16 %v1973, %v1971
        %v2314 = vpack.c.b16 %v1976, %v1974
        %v2315 = vpack.c.b16 %v1977, %v1975
        %v2316 = vpack.c.b16 %v1980, %v1978
        %v2317 = vpack.c.b16 %v1981, %v1979
        %v2318 = vpack.c.b16 %v1984, %v1982
        %v2319 = vpack.c.b16 %v1985, %v1983
        %v2320 = vpack.c.b16 %v1988, %v1986
        %v2321 = vpack.c.b16 %v1989, %v1987
        %v2322 = vpack.c.b16 %v1992, %v1990
        %v2323 = vpack.c.b16 %v1993, %v1991
        %v2324 = vpack.c.b16 %v1996, %v1994
        %v2325 = vpack.c.b16 %v1997, %v1995
        %v2326 = vpack.c.b16 %v2000, %v1998
        %v2327 = vpack.c.b16 %v2001, %v1999
        %v2328 = vpack.c.b16 %v2004, %v2002
        %v2329 = vpack.c.b16 %v2005, %v2003
        %v2330 = vpack.c.b16 %v2008, %v2006
        %v2331 = vpack.c.b16 %v2009, %v2007
        %v2332 = vpack.c.b16 %v2012, %v2010
        %v2333 = vpack.c.b16 %v2013, %v2011
        %v2334 = vpack.c.b16 %v2016, %v2014
        %v2335 = vpack.c.b16 %v2017, %v2015
        %v2336 = vpack.c.b16 %v2020, %v2018
        %v2337 = vpack.c.b16 %v2021, %v2019
        %v2338 = vpack.c.b16 %v2024, %v2022
        %v2339 = vpack.c.b16 %v2025, %v2023
        %v2340 = vpack.c.b16 %v2028, %v2026
        %v2341 = vpack.c.b16 %v2029, %v2027
        %v2342 = vpack.c.b16 %v2032, %v2030
        %v2343 = vpack.c.b16 %v2033, %v2031
        %v2344 = vpack.c.b16 %v2036, %v2034
        %v2345 = vpack.c.b16 %v2037, %v2035
        %v2346 = vpack.c.b16 %v2040, %v2038
        %v2347 = vpack.c.b16 %v2041, %v2039
        %v2348 = vpack.c.b16 %v2044, %v2042
        %v2349 = vpack.c.b16 %v2045, %v2043
        %v2350 = vpack.c.b16 %v2048, %v2046
        %v2351 = vpack.c.b16 %v2049, %v2047
        %v2352 = vpack.c.b16 %v2052, %v2050
        %v2353 = vpack.c.b16 %v2053, %v2051
        %v2354 = vpack.c.b16 %v2056, %v2054
        %v2355 = vpack.c.b16 %v2057, %v2055
        %v2356 = vpack.c.b16 %v2060, %v2058
        %v2357 = vpack.c.b16 %v2061, %v2059
        %v2358 = vpack.c.b16 %v2064, %v2062
        %v2359 = vpack.c.b16 %v2065, %v2063
        %v2360 = vpack.c.b16 %v2068, %v2066
        %v2361 = vpack.c.b16 %v2069, %v2067
        %v2362 = vpack.c.b16 %v2072, %v2070
        %v2363 = vpack.c.b16 %v2073, %v2071
        %v2364 = vpack.c.b16 %v2076, %v2074
        %v2365 = vpack.c.b16 %v2077, %v2075
        %v2366 = vpack.c.b16 %v2080, %v2078
        %v2367 = vpack.c.b16 %v2081, %v2079
        %v2368 = vpack.c.b16 %v2084, %v2082
        %v2369 = vpack.c.b16 %v2085, %v2083
        %v2370 = vpack.c.b16 %v2088, %v2086
        %v2371 = vpack.c.b16 %v2089, %v2087
        %v2372 = vpack.c.b16 %v2092, %v2090
        %v2373 = vpack.c.b16 %v2093, %v2091
        %v2374 = vpack.c.b16 %v2096, %v2094
        %v2375 = vpack.c.b16 %v2097, %v2095
        %v2376 = vpack.c.b16 %v2100, %v2098
        %v2377 = vpack.c.b16 %v2101, %v2099
        %v2378 = vpack.c.b16 %v2104, %v2102
        %v2379 = vpack.c.b16 %v2105, %v2103
        %v2380 = vpack.c.b16 %v2108, %v2106
        %v2381 = vpack.c.b16 %v2109, %v2107
        %v2382 = vpack.c.b16 %v2112, %v2110
        %v2383 = vpack.c.b16 %v2113, %v2111
        %v2384 = vpack.c.b16 %v2116, %v2114
        %v2385 = vpack.c.b16 %v2117, %v2115
        %v2386 = vpack.c.b16 %v2120, %v2118
        %v2387 = vpack.c.b16 %v2121, %v2119
        %v2388 = vpack.c.b16 %v2124, %v2122
        %v2389 = vpack.c.b16 %v2125, %v2123
        %v2390 = vpack.c.b16 %v2128, %v2126
        %v2391 = vpack.c.b16 %v2129, %v2127
        %v2392 = vpack.c.b16 %v2132, %v2130
        %v2393 = vpack.c.b16 %v2133, %v2131
        %v2394 = vpack.c.b16 %v2136, %v2134
        %v2395 = vpack.c.b16 %v2137, %v2135
        %v2396 = vpack.c.b16 %v2140, %v2138
        %v2397 = vpack.c.b16 %v2141, %v2139
        %v2398 = vpack.c.b16 %v2144, %v2142
        %v2399 = vpack.c.b16 %v2145, %v2143
        %v2400 = vpack.c.b16 %v2148, %v2146
        %v2401 = vpack.c.b16 %v2149, %v2147
        %v2402 = vpack.c.b16 %v2152, %v2150
        %v2403 = vpack.c.b16 %v2153, %v2151
        %v2404 = vpack.c.b16 %v2156, %v2154
        %v2405 = vpack.c.b16 %v2157, %v2155
        %v2406 = vpack.c.b16 %v2160, %v2158
        %v2407 = vpack.c.b16 %v2161, %v2159
        %v2408 = vpack.c.b16 %v2164, %v2162
        %v2409 = vpack.c.b16 %v2165, %v2163
        %v2410 = vpack.c.b16 %v2168, %v2166
        %v2411 = vpack.c.b16 %v2169, %v2167
        %v2412 = vpack.c.b16 %v2172, %v2170
        %v2413 = vpack.c.b16 %v2173, %v2171
        %v2414 = vpack.c.b16 %v2176, %v2174
        %v2415 = vpack.c.b16 %v2177, %v2175
        %v2416 = vpack.c.b16 %v2180, %v2178
        %v2417 = vpack.c.b16 %v2181, %v2179
        %v2418 = vpack.c.b16 %v2184, %v2182
        %v2419 = vpack.c.b16 %v2185, %v2183
        %v2420 = vpack.c.b16 %v2188, %v2186
        %v2421 = vpack.c.b16 %v2189, %v2187
        %v2422 = vpack.c.b16 %v2192, %v2190
        %v2423 = vpack.c.b16 %v2193, %v2191
        %v2424 = vpack.c.b16 %v2196, %v2194
        %v2425 = vpack.c.b16 %v2197, %v2195
        %v2426 = vpack.c.b16 %v2200, %v2198
        %v2427 = vpack.c.b16 %v2201, %v2199
        %v2428 = vpack.c.b16 %v2204, %v2202
        %v2429 = vpack.c.b16 %v2205, %v2203
        %2654 = vmatprep.subr.bf16.mxu0 %v2207
        %2655 = vmatpush1.bf16.msra.mxu0 %v2206
        %2656 = vmatprep.subr.bf16.mxu0 %v2209
        %2657 = vmatpush1.bf16.msra.mxu0 %v2208
        %2658 = vmatprep.subr.bf16.mxu0 %v2211
        %2659 = vmatpush1.bf16.msra.mxu0 %v2210
        %2660 = vmatprep.subr.bf16.mxu0 %v2213
        %2661 = vmatpush1.bf16.msra.mxu0 %v2212
        %2662 = vmatprep.subr.bf16.mxu0 %v2215
        %2663 = vmatpush1.bf16.msra.mxu0 %v2214
        %2664 = vmatprep.subr.bf16.mxu0 %v2217
        %2665 = vmatpush1.bf16.msra.mxu0 %v2216
        %2666 = vmatprep.subr.bf16.mxu0 %v2219
        %2667 = vmatpush1.bf16.msra.mxu0 %v2218
        %2668 = vmatprep.subr.bf16.mxu0 %v2221
        %2669 = vmatpush1.bf16.msra.mxu0 %v2220
        %2670 = vmatprep.subr.bf16.mxu0 %v2223
        %2671 = vmatpush1.bf16.msra.mxu0 %v2222
        %2672 = vmatprep.subr.bf16.mxu0 %v2225
        %2673 = vmatpush1.bf16.msra.mxu0 %v2224
        %2674 = vmatprep.subr.bf16.mxu0 %v2227
        %2675 = vmatpush1.bf16.msra.mxu0 %v2226
        %2676 = vmatprep.subr.bf16.mxu0 %v2229
        %2677 = vmatpush1.bf16.msra.mxu0 %v2228
        %2678 = vmatprep.subr.bf16.mxu0 %v2231
        %2679 = vmatpush1.bf16.msra.mxu0 %v2230
        %2680 = vmatprep.subr.bf16.mxu0 %v2233
        %2681 = vmatpush1.bf16.msra.mxu0 %v2232
        %2682 = vmatprep.subr.bf16.mxu0 %v2235
        %2683 = vmatpush1.bf16.msra.mxu0 %v2234
        %2684 = vmatprep.subr.bf16.mxu0 %v2237
        %2685 = vmatpush1.bf16.msra.mxu0 %v2236
        %2686 = vmatprep.mubr.bf16.mxu0 %v1507
        %2687 = vmatmul.mubr.bf16.gmra.mrb[0].mxu0 %v1506
        %v2688 = vpop.f32.mrb[0].mxu0
        %v2689 = vadd.f32 0.0, %v2688
        %v2690 = vpop.f32.mrb[0].mxu0
        %v2691 = vadd.f32 0.0, %v2690
        %v2692 = vpop.f32.mrb[0].mxu0
        %v2693 = vadd.f32 0.0, %v2692
        %v2694 = vpop.f32.mrb[0].mxu0
        %v2695 = vadd.f32 0.0, %v2694
        %2696 = vdwg.mxu0
        %2697 = vmatprep.subr.bf16.mxu0 %v2239
        %2698 = vmatpush1.bf16.msra.mxu0 %v2238
        %2699 = vmatprep.subr.bf16.mxu0 %v2241
        %2700 = vmatpush1.bf16.msra.mxu0 %v2240
        %2701 = vmatprep.subr.bf16.mxu0 %v2243
        %2702 = vmatpush1.bf16.msra.mxu0 %v2242
        %2703 = vmatprep.subr.bf16.mxu0 %v2245
        %2704 = vmatpush1.bf16.msra.mxu0 %v2244
        %2705 = vmatprep.subr.bf16.mxu0 %v2247
        %2706 = vmatpush1.bf16.msra.mxu0 %v2246
        %2707 = vmatprep.subr.bf16.mxu0 %v2249
        %2708 = vmatpush1.bf16.msra.mxu0 %v2248
        %2709 = vmatprep.subr.bf16.mxu0 %v2251
        %2710 = vmatpush1.bf16.msra.mxu0 %v2250
        %2711 = vmatprep.subr.bf16.mxu0 %v2253
        %2712 = vmatpush1.bf16.msra.mxu0 %v2252
        %2713 = vmatprep.subr.bf16.mxu0 %v2255
        %2714 = vmatpush1.bf16.msra.mxu0 %v2254
        %2715 = vmatprep.subr.bf16.mxu0 %v2257
        %2716 = vmatpush1.bf16.msra.mxu0 %v2256
        %2717 = vmatprep.subr.bf16.mxu0 %v2259
        %2718 = vmatpush1.bf16.msra.mxu0 %v2258
        %2719 = vmatprep.subr.bf16.mxu0 %v2261
        %2720 = vmatpush1.bf16.msra.mxu0 %v2260
        %2721 = vmatprep.subr.bf16.mxu0 %v2263
        %2722 = vmatpush1.bf16.msra.mxu0 %v2262
        %2723 = vmatprep.subr.bf16.mxu0 %v2265
        %2724 = vmatpush1.bf16.msra.mxu0 %v2264
        %2725 = vmatprep.subr.bf16.mxu0 %v2267
        %2726 = vmatpush1.bf16.msra.mxu0 %v2266
        %2727 = vmatprep.subr.bf16.mxu0 %v2269
        %2728 = vmatpush1.bf16.msra.mxu0 %v2268
        %2729 = vmatprep.mubr.bf16.mxu0 %v1509
        %2730 = vmatmul.mubr.bf16.gmra.mrb[0].mxu0 %v1508
        %v2731 = vpop.f32.mrb[0].mxu0
        %v2732 = vadd.f32 %v2689, %v2731
        %v2733 = vpop.f32.mrb[0].mxu0
        %v2734 = vadd.f32 %v2691, %v2733
        %v2735 = vpop.f32.mrb[0].mxu0
        %v2736 = vadd.f32 %v2693, %v2735
        %v2737 = vpop.f32.mrb[0].mxu0
        %v2738 = vadd.f32 %v2695, %v2737
        %2739 = vdwg.mxu0
        %2740 = vmatprep.subr.bf16.mxu0 %v2271
        %2741 = vmatpush1.bf16.msra.mxu0 %v2270
        %2742 = vmatprep.subr.bf16.mxu0 %v2273
        %2743 = vmatpush1.bf16.msra.mxu0 %v2272
        %2744 = vmatprep.subr.bf16.mxu0 %v2275
        %2745 = vmatpush1.bf16.msra.mxu0 %v2274
        %2746 = vmatprep.subr.bf16.mxu0 %v2277
        %2747 = vmatpush1.bf16.msra.mxu0 %v2276
        %2748 = vmatprep.subr.bf16.mxu0 %v2279
        %2749 = vmatpush1.bf16.msra.mxu0 %v2278
        %2750 = vmatprep.subr.bf16.mxu0 %v2281
        %2751 = vmatpush1.bf16.msra.mxu0 %v2280
        %2752 = vmatprep.subr.bf16.mxu0 %v2283
        %2753 = vmatpush1.bf16.msra.mxu0 %v2282
        %2754 = vmatprep.subr.bf16.mxu0 %v2285
        %2755 = vmatpush1.bf16.msra.mxu0 %v2284
        %2756 = vmatprep.subr.bf16.mxu0 %v2287
        %2757 = vmatpush1.bf16.msra.mxu0 %v2286
        %2758 = vmatprep.subr.bf16.mxu0 %v2289
        %2759 = vmatpush1.bf16.msra.mxu0 %v2288
        %2760 = vmatprep.subr.bf16.mxu0 %v2291
        %2761 = vmatpush1.bf16.msra.mxu0 %v2290
        %2762 = vmatprep.subr.bf16.mxu0 %v2293
        %2763 = vmatpush1.bf16.msra.mxu0 %v2292
        %2764 = vmatprep.subr.bf16.mxu0 %v2295
        %2765 = vmatpush1.bf16.msra.mxu0 %v2294
        %2766 = vmatprep.subr.bf16.mxu0 %v2297
        %2767 = vmatpush1.bf16.msra.mxu0 %v2296
        %2768 = vmatprep.subr.bf16.mxu0 %v2299
        %2769 = vmatpush1.bf16.msra.mxu0 %v2298
        %2770 = vmatprep.subr.bf16.mxu0 %v2301
        %2771 = vmatpush1.bf16.msra.mxu0 %v2300
        %2772 = vmatprep.mubr.bf16.mxu0 %v1511
        %2773 = vmatmul.mubr.bf16.gmra.mrb[0].mxu0 %v1510
        %v2774 = vpop.f32.mrb[0].mxu0
        %v2775 = vadd.f32 %v2732, %v2774
        %v2776 = vpop.f32.mrb[0].mxu0
        %v2777 = vadd.f32 %v2734, %v2776
        %v2778 = vpop.f32.mrb[0].mxu0
        %v2779 = vadd.f32 %v2736, %v2778
        %v2780 = vpop.f32.mrb[0].mxu0
        %v2781 = vadd.f32 %v2738, %v2780
        %2782 = vdwg.mxu0
        %2783 = vmatprep.subr.bf16.mxu0 %v2303
        %2784 = vmatpush1.bf16.msra.mxu0 %v2302
        %2785 = vmatprep.subr.bf16.mxu0 %v2305
        %2786 = vmatpush1.bf16.msra.mxu0 %v2304
        %2787 = vmatprep.subr.bf16.mxu0 %v2307
        %2788 = vmatpush1.bf16.msra.mxu0 %v2306
        %2789 = vmatprep.subr.bf16.mxu0 %v2309
        %2790 = vmatpush1.bf16.msra.mxu0 %v2308
        %2791 = vmatprep.subr.bf16.mxu0 %v2311
        %2792 = vmatpush1.bf16.msra.mxu0 %v2310
        %2793 = vmatprep.subr.bf16.mxu0 %v2313
        %2794 = vmatpush1.bf16.msra.mxu0 %v2312
        %2795 = vmatprep.subr.bf16.mxu0 %v2315
        %2796 = vmatpush1.bf16.msra.mxu0 %v2314
        %2797 = vmatprep.subr.bf16.mxu0 %v2317
        %2798 = vmatpush1.bf16.msra.mxu0 %v2316
        %2799 = vmatprep.subr.bf16.mxu0 %v2319
        %2800 = vmatpush1.bf16.msra.mxu0 %v2318
        %2801 = vmatprep.subr.bf16.mxu0 %v2321
        %2802 = vmatpush1.bf16.msra.mxu0 %v2320
        %2803 = vmatprep.subr.bf16.mxu0 %v2323
        %2804 = vmatpush1.bf16.msra.mxu0 %v2322
        %2805 = vmatprep.subr.bf16.mxu0 %v2325
        %2806 = vmatpush1.bf16.msra.mxu0 %v2324
        %2807 = vmatprep.subr.bf16.mxu0 %v2327
        %2808 = vmatpush1.bf16.msra.mxu0 %v2326
        %2809 = vmatprep.subr.bf16.mxu0 %v2329
        %2810 = vmatpush1.bf16.msra.mxu0 %v2328
        %2811 = vmatprep.subr.bf16.mxu0 %v2331
        %2812 = vmatpush1.bf16.msra.mxu0 %v2330
        %2813 = vmatprep.subr.bf16.mxu0 %v2333
        %2814 = vmatpush1.bf16.msra.mxu0 %v2332
        %2815 = vmatprep.mubr.bf16.mxu0 %v1513
        %2816 = vmatmul.mubr.bf16.gmra.mrb[0].mxu0 %v1512
        %v2817 = vpop.f32.mrb[0].mxu0
        %v2818 = vadd.f32 %v2775, %v2817
        %v2819 = vpop.f32.mrb[0].mxu0
        %v2820 = vadd.f32 %v2777, %v2819
        %v2821 = vpop.f32.mrb[0].mxu0
        %v2822 = vadd.f32 %v2779, %v2821
        %v2823 = vpop.f32.mrb[0].mxu0
        %v2824 = vadd.f32 %v2781, %v2823
        %2825 = vdwg.mxu0
        %2826 = vmatprep.subr.bf16.mxu0 %v2335
        %2827 = vmatpush1.bf16.msra.mxu0 %v2334
        %2828 = vmatprep.subr.bf16.mxu0 %v2337
        %2829 = vmatpush1.bf16.msra.mxu0 %v2336
        %2830 = vmatprep.subr.bf16.mxu0 %v2339
        %2831 = vmatpush1.bf16.msra.mxu0 %v2338
        %2832 = vmatprep.subr.bf16.mxu0 %v2341
        %2833 = vmatpush1.bf16.msra.mxu0 %v2340
        %2834 = vmatprep.subr.bf16.mxu0 %v2343
        %2835 = vmatpush1.bf16.msra.mxu0 %v2342
        %2836 = vmatprep.subr.bf16.mxu0 %v2345
        %2837 = vmatpush1.bf16.msra.mxu0 %v2344
        %2838 = vmatprep.subr.bf16.mxu0 %v2347
        %2839 = vmatpush1.bf16.msra.mxu0 %v2346
        %2840 = vmatprep.subr.bf16.mxu0 %v2349
        %2841 = vmatpush1.bf16.msra.mxu0 %v2348
        %2842 = vmatprep.subr.bf16.mxu0 %v2351
        %2843 = vmatpush1.bf16.msra.mxu0 %v2350
        %2844 = vmatprep.subr.bf16.mxu0 %v2353
        %2845 = vmatpush1.bf16.msra.mxu0 %v2352
        %2846 = vmatprep.subr.bf16.mxu0 %v2355
        %2847 = vmatpush1.bf16.msra.mxu0 %v2354
        %2848 = vmatprep.subr.bf16.mxu0 %v2357
        %2849 = vmatpush1.bf16.msra.mxu0 %v2356
        %2850 = vmatprep.subr.bf16.mxu0 %v2359
        %2851 = vmatpush1.bf16.msra.mxu0 %v2358
        %2852 = vmatprep.subr.bf16.mxu0 %v2361
        %2853 = vmatpush1.bf16.msra.mxu0 %v2360
        %2854 = vmatprep.subr.bf16.mxu0 %v2363
        %2855 = vmatpush1.bf16.msra.mxu0 %v2362
        %2856 = vmatprep.subr.bf16.mxu0 %v2365
        %2857 = vmatpush1.bf16.msra.mxu0 %v2364
        %2858 = vmatprep.mubr.bf16.mxu0 %v1515
        %2859 = vmatmul.mubr.bf16.gmra.mrb[0].mxu0 %v1514
        %v2860 = vpop.f32.mrb[0].mxu0
        %v2861 = vadd.f32 %v2818, %v2860
        %v2862 = vpop.f32.mrb[0].mxu0
        %v2863 = vadd.f32 %v2820, %v2862
        %v2864 = vpop.f32.mrb[0].mxu0
        %v2865 = vadd.f32 %v2822, %v2864
        %v2866 = vpop.f32.mrb[0].mxu0
        %v2867 = vadd.f32 %v2824, %v2866
        %2868 = vdwg.mxu0
        %2869 = vmatprep.subr.bf16.mxu0 %v2367
        %2870 = vmatpush1.bf16.msra.mxu0 %v2366
        %2871 = vmatprep.subr.bf16.mxu0 %v2369
        %2872 = vmatpush1.bf16.msra.mxu0 %v2368
        %2873 = vmatprep.subr.bf16.mxu0 %v2371
        %2874 = vmatpush1.bf16.msra.mxu0 %v2370
        %2875 = vmatprep.subr.bf16.mxu0 %v2373
        %2876 = vmatpush1.bf16.msra.mxu0 %v2372
        %2877 = vmatprep.subr.bf16.mxu0 %v2375
        %2878 = vmatpush1.bf16.msra.mxu0 %v2374
        %2879 = vmatprep.subr.bf16.mxu0 %v2377
        %2880 = vmatpush1.bf16.msra.mxu0 %v2376
        %2881 = vmatprep.subr.bf16.mxu0 %v2379
        %2882 = vmatpush1.bf16.msra.mxu0 %v2378
        %2883 = vmatprep.subr.bf16.mxu0 %v2381
        %2884 = vmatpush1.bf16.msra.mxu0 %v2380
        %2885 = vmatprep.subr.bf16.mxu0 %v2383
        %2886 = vmatpush1.bf16.msra.mxu0 %v2382
        %2887 = vmatprep.subr.bf16.mxu0 %v2385
        %2888 = vmatpush1.bf16.msra.mxu0 %v2384
        %2889 = vmatprep.subr.bf16.mxu0 %v2387
        %2890 = vmatpush1.bf16.msra.mxu0 %v2386
        %2891 = vmatprep.subr.bf16.mxu0 %v2389
        %2892 = vmatpush1.bf16.msra.mxu0 %v2388
        %2893 = vmatprep.subr.bf16.mxu0 %v2391
        %2894 = vmatpush1.bf16.msra.mxu0 %v2390
        %2895 = vmatprep.subr.bf16.mxu0 %v2393
        %2896 = vmatpush1.bf16.msra.mxu0 %v2392
        %2897 = vmatprep.subr.bf16.mxu0 %v2395
        %2898 = vmatpush1.bf16.msra.mxu0 %v2394
        %2899 = vmatprep.subr.bf16.mxu0 %v2397
        %2900 = vmatpush1.bf16.msra.mxu0 %v2396
        %2901 = vmatprep.mubr.bf16.mxu0 %v1517
        %2902 = vmatmul.mubr.bf16.gmra.mrb[0].mxu0 %v1516
        %v2903 = vpop.f32.mrb[0].mxu0
        %v2904 = vadd.f32 %v2861, %v2903
        %v2905 = vpop.f32.mrb[0].mxu0
        %v2906 = vadd.f32 %v2863, %v2905
        %v2907 = vpop.f32.mrb[0].mxu0
        %v2908 = vadd.f32 %v2865, %v2907
        %v2909 = vpop.f32.mrb[0].mxu0
        %v2910 = vadd.f32 %v2867, %v2909
        %2911 = vdwg.mxu0
        %2912 = vmatprep.subr.bf16.mxu0 %v2399
        %2913 = vmatpush1.bf16.msra.mxu0 %v2398
        %2914 = vmatprep.subr.bf16.mxu0 %v2401
        %2915 = vmatpush1.bf16.msra.mxu0 %v2400
        %2916 = vmatprep.subr.bf16.mxu0 %v2403
        %2917 = vmatpush1.bf16.msra.mxu0 %v2402
        %2918 = vmatprep.subr.bf16.mxu0 %v2405
        %2919 = vmatpush1.bf16.msra.mxu0 %v2404
        %2920 = vmatprep.subr.bf16.mxu0 %v2407
        %2921 = vmatpush1.bf16.msra.mxu0 %v2406
        %2922 = vmatprep.subr.bf16.mxu0 %v2409
        %2923 = vmatpush1.bf16.msra.mxu0 %v2408
        %2924 = vmatprep.subr.bf16.mxu0 %v2411
        %2925 = vmatpush1.bf16.msra.mxu0 %v2410
        %2926 = vmatprep.subr.bf16.mxu0 %v2413
        %2927 = vmatpush1.bf16.msra.mxu0 %v2412
        %2928 = vmatprep.subr.bf16.mxu0 %v2415
        %2929 = vmatpush1.bf16.msra.mxu0 %v2414
        %2930 = vmatprep.subr.bf16.mxu0 %v2417
        %2931 = vmatpush1.bf16.msra.mxu0 %v2416
        %2932 = vmatprep.subr.bf16.mxu0 %v2419
        %2933 = vmatpush1.bf16.msra.mxu0 %v2418
        %2934 = vmatprep.subr.bf16.mxu0 %v2421
        %2935 = vmatpush1.bf16.msra.mxu0 %v2420
        %2936 = vmatprep.subr.bf16.mxu0 %v2423
        %2937 = vmatpush1.bf16.msra.mxu0 %v2422
        %2938 = vmatprep.subr.bf16.mxu0 %v2425
        %2939 = vmatpush1.bf16.msra.mxu0 %v2424
        %2940 = vmatprep.subr.bf16.mxu0 %v2427
        %2941 = vmatpush1.bf16.msra.mxu0 %v2426
        %2942 = vmatprep.subr.bf16.mxu0 %v2429
        %2943 = vmatpush1.bf16.msra.mxu0 %v2428
        %2944 = vmatprep.mubr.bf16.mxu0 %v1519
        %2945 = vmatmul.mubr.bf16.gmra.mrb[0].mxu0 %v1518
        %v2946 = vpop.f32.mrb[0].mxu0
        %v2947 = vadd.f32 %v2904, %v2946
        %v2948 = vpop.f32.mrb[0].mxu0
        %v2949 = vadd.f32 %v2906, %v2948
        %v2950 = vpop.f32.mrb[0].mxu0
        %v2951 = vadd.f32 %v2908, %v2950
        %v2952 = vpop.f32.mrb[0].mxu0
        %v2953 = vadd.f32 %v2910, %v2952
        %2954 = vdwg.mxu0
        %v2955 = vadd.f32 %v1222, %v2947
        %v2956 = vadd.f32 %v1223, %v2949
        %v2957 = vadd.f32 %v1224, %v2951
        %v2958 = vadd.f32 %v1225, %v2953
        %2959 = vst [vmem:[%s1202] sm:$0xff] %v2955
        %2960 = vst [vmem:[%s1202 + $0x8] sm:$0xff] %v2956
        %2961 = vst [vmem:[%s1202 + $0x10] sm:$0xff] %v2957
        %2962 = vst [vmem:[%s1202 + $0x18] sm:$0xff] %v2958
        %p2963 = scmp.eq.s32.totalorder %s21, 6
        // Predicated region
        $region98: #{svhn_forward.8} parent=84 // pred_check
          %p2964 = pneg %p2963
        $region99: #{svhn_forward.8} parent=84 // pred_check_branch
          %2966 = sbr.rel (%p2964) target = $region101
        $region100: #{svhn_forward.8} parent=84 // pred_region
          %v2967 = vld [vmem:[%s1202] sm:$0xff]
          %v2968 = vld [vmem:[%s1202 + $0x8] sm:$0xff]
          %v2969 = vld [vmem:[%s1202 + $0x10] sm:$0xff]
          %v2970 = vld [vmem:[%s1202 + $0x18] sm:$0xff]
          %v2971 = vld [vmem:[%s1210] sm:$0x3]
          %v2973 = vlaneseq
          %v2974 = vshrl.u32 %v2973, 7
          %v2975 = vsub.s32 0, %v2974
          %v2976 = vrot.slane %v2971, %v2975
          %v2977 = vlaneseq
          %v2978 = vshrl.u32 %v2977, 7
          %v2979 = vsub.s32 1, %v2978
          %v2980 = vrot.slane %v2971, %v2979
          %v2983 = vadd.f32 %v2967, %v2976
          %v2984 = vadd.f32 %v2968, %v2980
          %v2985 = vadd.f32 %v2969, %v2976
          %v2986 = vadd.f32 %v2970, %v2980
          %v2987 = vmax.f32 %v2983, 0.0
          %v2988 = vmax.f32 %v2984, 0.0
          %v2989 = vmax.f32 %v2985, 0.0
          %v2990 = vmax.f32 %v2986, 0.0
          %2991 = vst [vmem:[%s1202] sm:$0xff] %v2987
          %2992 = vst [vmem:[%s1202 + $0x8] sm:$0xff] %v2988
          %2993 = vst [vmem:[%s1202 + $0x10] sm:$0xff] %v2989
          %2994 = vst [vmem:[%s1202 + $0x18] sm:$0xff] %v2990
        $region101: #{svhn_forward.8} parent=84 // pred_fallthru
          _
        %s2995 = sand.u32 %s125, 1
        %s2996 = sand.u32 %s125, 1
        %s2997 = smul.addr %s2996, 32
        %s2998 = scalar_lea.vmem [#allocation4], %s2997
        // Predicated region
        $region102: #{svhn_forward.8} parent=84 // pred_check
          %p2999 = pneg %p135
        $region103: #{svhn_forward.8} parent=84 // pred_check_branch
          %3001 = sbr.rel (%p2999) target = $region105
        $region104: #{svhn_forward.8} parent=84 // pred_region
          %s3002 = smul.u32 2, %s19
          %s3003 = smul.u32 2, %s20
          %s3004 = smul.addr %s3002, 4
          %s3005 = sadd.s32 %s3003, %s3004
          %s3006 = smul.addr %s3005, 8
          %s3007 = scalar_lea.vmem %s3, %s3006
          // Predicated region
          $region106: #{svhn_forward.8} parent=104 // pred_check
            _
          $region107: #{svhn_forward.8} parent=104 // pred_check_branch
            %3009 = sbr.rel (0) target = $region109
          $region108: #{svhn_forward.8} parent=104 // pred_region
            // Predicated region
            $region110: #{svhn_forward.8} parent=108 // pred_check
              _
            $region111: #{svhn_forward.8} parent=108 // pred_check_branch
              %3011 = sbr.rel (0) target = $region113
            $region112: #{svhn_forward.8} parent=108 // pred_region
              loop: start=0, step=1, limit=1
              $region114: #{svhn_forward.8} parent=112 // loop_pre_header
                _
              $region115: #{svhn_forward.8} parent=112 // loop_header
                %s3013 = sphi 0, %s3017
                %p3014 = scmp.ge.s32.totalorder %s3013, 1
                %s3018 = sphi %s2998, %s2998
                %s3019 = sphi %s3007, %s3007
              $region116: #{svhn_forward.8} parent=112 // loop_header_branch
                %3016 = sbr.rel (%p3014) target = $region120
              $region117: #{svhn_forward.8} parent=112 // loop_body
                %v3020 = vld [vmem:[%s3018] sm:$0xff]
                %3021 = vst [vmem:[%s3019] sm:$0xff] %v3020
                %v3022 = vld [vmem:[%s3018 + $0x8] sm:$0xff]
                %3023 = vst [vmem:[%s3019 + $0x8] sm:$0xff] %v3022
                %v3024 = vld [vmem:[%s3018 + $0x10] sm:$0xff]
                %3025 = vst [vmem:[%s3019 + $0x20] sm:$0xff] %v3024
                %v3026 = vld [vmem:[%s3018 + $0x18] sm:$0xff]
                %3027 = vst [vmem:[%s3019 + $0x28] sm:$0xff] %v3026
              $region118: #{svhn_forward.8} parent=112 // loop_footer
                %s3017 = sadd.s32 1, %s3013
              $region119: #{svhn_forward.8} parent=112 // loop_footer_branch
                %3012 = sbr.rel target = $region115
              $region120: #{svhn_forward.8} parent=112 // loop_exit
                _
            $region113: #{svhn_forward.8} parent=108 // pred_fallthru
              _
            // Predicated region
            $region121: #{svhn_forward.8} parent=108 // pred_check
              _
            $region122: #{svhn_forward.8} parent=108 // pred_check_branch
              %3029 = sbr.rel target = $region124
            $region123: #{svhn_forward.8} parent=108 // pred_region
              _
            $region124: #{svhn_forward.8} parent=108 // pred_fallthru
              _
          $region109: #{svhn_forward.8} parent=104 // pred_fallthru
            _
          %3030 = vnop
        $region105: #{svhn_forward.8} parent=84 // pred_fallthru
          _
      $region85: #{svhn_forward.8} parent=5 // pred_fallthru
        _
      %p3031 = scmp.le.s32.totalorder 2, %s9
      // Predicated region
      $region125: #{svhn_forward.8} parent=5 // pred_check
        %p3032 = pneg %p3031
      $region126: #{svhn_forward.8} parent=5 // pred_check_branch
        %3034 = sbr.rel (%p3032) target = $region128
      $region127: #{svhn_forward.8} parent=5 // pred_region
        %s3035 = ssub.s32 %s9, 2
        // Predicated region
        $region129: #{svhn_forward.8} parent=127 // pred_check
          %p3036 = pneg %p141
        $region130: #{svhn_forward.8} parent=127 // pred_check_branch
          %3038 = sbr.rel (%p3036) target = $region132
        $region131: #{svhn_forward.8} parent=127 // pred_region
          %s3039 = sand.u32 %s126, 1
          %s3040 = sand.u32 %s126, 1
          %s3041 = smul.addr %s3040, 32
          %s3042 = scalar_lea.vmem [#allocation4], %s3041
        $region132: #{svhn_forward.8} parent=127 // pred_fallthru
          _
      $region128: #{svhn_forward.8} parent=5 // pred_fallthru
        _
    $region6: #{svhn_forward.8} parent=1 // loop_footer
      %s13 = sadd.s32 1, %s9
    $region7: #{svhn_forward.8} parent=1 // loop_footer_branch
      %8 = sbr.rel target = $region3
    $region8: #{svhn_forward.8} parent=1 // loop_exit
      _

</llo_original>
